<compile_context>
chip_gen: v7x
topology: tpu7x:2x2x1
jax: 0.10.0
libtpu: 0.0.40
codegen_flags: <defaults>
</compile_context>

<pallas_src>
import functools

import jax
import jax.numpy as jnp
import numpy as np
from jax.experimental import pallas as pl
from jax.experimental.pallas import tpu as pltpu

CHANNEL = 128                                   # per-branch output channels
HIDDEN = 2 * CHANNEL                            # conv1 output channels (256)
IN_C, IN_H, IN_W = 16, 4, 4                     # implied by dense1 in_features = 1792
KS = (2, 3, 4)                                  # branch kernel lengths
N_POS = tuple(IN_W - k + 1 for k in KS)         # conv1 output widths per branch: (3,2,1)
N_SPATIAL = tuple(p * p for p in N_POS)         # conv2 spatial sizes: (9,4,1)
N1 = HIDDEN * sum(N_POS)                        # 1536 conv1 output columns
S_TOT = sum(N_SPATIAL)                          # 14 spatial features per channel
K1 = IN_C * IN_W                                # 64: conv1 contraction dim (no pad)
W2_COLS = CHANNEL * sum(KS)                     # 1152: packed conv2 weight columns
D1_IN = CHANNEL * S_TOT                         # 1792
D1_OUT, D2_OUT = 1024, 128
FC_PAD = 128                                    # fc output padded for a lane-dense store
EPS = 1e-5


# ------------------------------ Pallas kernel --------------------------------
def _convnet_kernel(p1_ref, w1_ref, t1_ref, w2_ref, t2_ref,
                    td1_ref, td2_ref, wfc_ref, tfc_ref,
                    wd1_hbm, wd2_hbm,                       # pl.ANY (HBM) inputs
                    out_ref,
                    wd1_buf, wd2_buf, d1_sems, d2_sem,      # VMEM / DMA-sem scratch
                    *, batch):
    f32, bf16 = jnp.float32, jnp.bfloat16
    mp = p1_ref.shape[0]          # conv row count (h-major, batch-minor), padded to 8
    bp = out_ref.shape[0]         # dense-head rows (batch padded to a sublane group)

    def d1_chunk_copy(s):
        return pltpu.make_async_copy(wd1_hbm.at[s], wd1_buf.at[s], d1_sems.at[s])

    def d2_copy():
        return pltpu.make_async_copy(wd2_hbm, wd2_buf, d2_sem.at[0])

    # Issue every streamed-weight DMA up front so the DMA engine runs while the MXU
    # does the convs; per-chunk semaphores let each d1 partial start as soon as its
    # 128 weight rows have landed.
    for s in range(S_TOT):
        d1_chunk_copy(s).start()
    d2_copy().start()

    # conv1 (+folded BN + ReLU) for all 3 branches / all output columns: one matmul.
    a1 = jnp.dot(p1_ref[...], w1_ref[...], preferred_element_type=f32)
    a1 = jnp.maximum(a1 + t1_ref[...], 0.0)                 # (mp, 1536) f32

    zpad = jnp.zeros((bp - batch, CHANNEL), f32) if bp > batch else None

    # conv2 (+BN+ReLU), one matmul per branch, fused with the streamed d1 matmul.
    h1 = None
    s = 0
    col = 0
    w2_off = 0
    for bi, k in enumerate(KS):
        so = IN_W - k + 1
        # Stack the `so` lane-aligned 256-column slices along rows -> one fat matmul
        # (M = so*mp) against the host-packed (256, k*128) weight for this branch.
        stacked = jnp.concatenate(
            [a1[:, col + wo * HIDDEN: col + (wo + 1) * HIDDEN] for wo in range(so)],
            axis=0)
        part = jnp.dot(stacked.astype(bf16),
                       w2_ref[:, w2_off:w2_off + k * CHANNEL],
                       preferred_element_type=f32)           # (so*mp, k*128)
        shift = t2_ref[bi:bi + 1, :]                         # (1, 128)
        for ho in range(so):
            for wo in range(so):
                r0 = wo * mp + ho * batch
                acc = part[r0:r0 + batch, 0:CHANNEL]
                for dh in range(1, k):
                    r = wo * mp + (ho + dh) * batch
                    acc = acc + part[r:r + batch, dh * CHANNEL:(dh + 1) * CHANNEL]
                block = jnp.maximum(acc + shift, 0.0)        # conv2+BN+ReLU, (B, 128)
                if zpad is not None:                         # pad rows -> whole sublane group
                    block = jnp.concatenate([block, zpad], axis=0)
                block = block.astype(bf16)                   # (bp, 128)
                # d1 partial: wait only for this block's 128 weight rows.
                d1_chunk_copy(s).wait()
                contrib = jnp.dot(block, wd1_buf[s], preferred_element_type=f32)
                h1 = contrib if h1 is None else h1 + contrib
                s += 1
        col += so * HIDDEN
        w2_off += k * CHANNEL

    # Dense head d1 -> d2 -> fc epilogue (wd2 streamed, wfc tiny & resident).
    h = jnp.maximum(h1 + td1_ref[...], 0.0)
    d2_copy().wait()
    h = jnp.dot(h.astype(bf16), wd2_buf[...], preferred_element_type=f32)
    h = jnp.maximum(h + td2_ref[...], 0.0)
    out = jnp.dot(h.astype(bf16), wfc_ref[...], preferred_element_type=f32)
    out_ref[...] = out + tfc_ref[...]


@functools.partial(jax.jit, static_argnames=("num_classes",))
def convnet_forward(x, kw, *, num_classes=4):
    B = x.shape[0]
    assert x.shape[1:] == (IN_C, IN_H, IN_W), x.shape
    m = IN_H * B
    mp = ((m + 7) // 8) * 8
    bp = ((B + 7) // 8) * 8
    # Input "im2col" is a single tiny relayout: rows = (h, b), cols = (c, w); K = 64.
    p1 = x.transpose(2, 0, 1, 3).reshape(m, K1)
    p1 = jnp.pad(p1, ((0, mp - m), (0, 0))).astype(jnp.bfloat16)

    flops = 2 * (mp * K1 * N1
                 + sum((IN_W - k + 1) * mp * HIDDEN * k * CHANNEL for k in KS)
                 + bp * D1_IN * D1_OUT + bp * D1_OUT * D2_OUT + bp * D2_OUT * FC_PAD)
    bytes_accessed = int(sum(int(np.prod(v.shape)) * v.dtype.itemsize
                             for v in kw.values()))
    bytes_accessed += p1.size * 2 + bp * FC_PAD * 4

    out = pl.pallas_call(
        functools.partial(_convnet_kernel, batch=B),
        out_shape=jax.ShapeDtypeStruct((bp, FC_PAD), jnp.float32),
        in_specs=[pl.BlockSpec(memory_space=pltpu.MemorySpace.VMEM)] * 9
                 + [pl.BlockSpec(memory_space=pl.ANY)] * 2,     # wd1, wd2 stay in HBM
        out_specs=pl.BlockSpec(memory_space=pltpu.MemorySpace.VMEM),
        scratch_shapes=[
            pltpu.VMEM((S_TOT, CHANNEL, D1_OUT), jnp.bfloat16),  # streamed wd1 chunks
            pltpu.VMEM((D1_OUT, D2_OUT), jnp.bfloat16),          # streamed wd2
            pltpu.SemaphoreType.DMA((S_TOT,)),
            pltpu.SemaphoreType.DMA((1,)),
        ],
        cost_estimate=pl.CostEstimate(flops=flops, transcendentals=0,
                                      bytes_accessed=bytes_accessed),
    )(p1, kw["w1"], kw["t1"], kw["w2"], kw["t2"],
      kw["td1"], kw["td2"], kw["wfc"], kw["tfc"], kw["wd1"], kw["wd2"])
    return out[:B, :num_classes]


# --------------------- host-side, one-time weight packing --------------------
def pack_kernel_weights(params, num_classes):
    """Rearrange the BN-folded f32 model weights into the fused kernel's operands."""
    assert num_classes <= FC_PAD
    # conv1 of all branches -> one (64, 1536) matrix; column block = (branch, wo, cout).
    W1 = np.zeros((K1, N1), np.float32)
    T1 = np.zeros((1, N1), np.float32)
    # conv2: one (256, 1152) matrix; column block = (branch, dh, cout).
    W2 = np.zeros((HIDDEN, W2_COLS), np.float32)
    T2 = np.zeros((len(KS), CHANNEL), np.float32)
    col = 0
    w2_off = 0
    for bi, (k, br) in enumerate(zip(KS, params["branches"])):
        w1 = np.asarray(br["w1"], np.float32)                 # (256, 16, 1, k)
        t1 = np.asarray(br["t1"], np.float32)
        for wo in range(IN_W - k + 1):
            for c in range(IN_C):
                for dw in range(k):
                    W1[c * IN_W + wo + dw,
                       col + wo * HIDDEN:col + (wo + 1) * HIDDEN] = w1[:, c, 0, dw]
            T1[0, col + wo * HIDDEN:col + (wo + 1) * HIDDEN] = t1
        col += (IN_W - k + 1) * HIDDEN
        w2 = np.asarray(br["w2"], np.float32)                 # (128, 256, k, 1)
        for dh in range(k):
            W2[:, w2_off + dh * CHANNEL:w2_off + (dh + 1) * CHANNEL] = w2[:, :, dh, 0].T
        w2_off += k * CHANNEL
        T2[bi] = np.asarray(br["t2"], np.float32)

    # dense1: reorder rows from the torch flatten order (c*14 + s) into 14 chunks of
    # 128 rows (one per conv2 feature block, channel-minor); math is unchanged.
    d1 = np.asarray(params["d1_w"], np.float32)               # (1792, 1024)
    Wd1 = d1.reshape(CHANNEL, S_TOT, D1_OUT).transpose(1, 0, 2)   # (14, 128, 1024)

    Wfc = np.zeros((D2_OUT, FC_PAD), np.float32)
    Wfc[:, :num_classes] = np.asarray(params["fc_w"], np.float32)
    Tfc = np.zeros((1, FC_PAD), np.float32)
    Tfc[0, :num_classes] = np.asarray(params["fc_t"], np.float32)

    bf16 = jnp.bfloat16
    return dict(
        w1=jnp.asarray(W1, bf16), t1=jnp.asarray(T1),
        w2=jnp.asarray(W2, bf16), t2=jnp.asarray(T2),
        wd1=jnp.asarray(Wd1, bf16),
        td1=jnp.asarray(params["d1_t"]).reshape(1, -1),
        wd2=jnp.asarray(params["d2_w"], bf16),
        td2=jnp.asarray(params["d2_t"]).reshape(1, -1),
        wfc=jnp.asarray(Wfc, bf16), tfc=jnp.asarray(Tfc),
    )


# --------------------------- pure-JAX reference -------------------------------
def _im2col(x, kh, kw):
    B, C, H, W = x.shape
    Ho, Wo = H - kh + 1, W - kw + 1
    cols = []
    for dh in range(kh):
        for dw in range(kw):
            cols.append(x[:, :, dh:dh + Ho, dw:dw + Wo])
    p = jnp.stack(cols, axis=2)              # [B, C, kh*kw, Ho, Wo]
    p = p.transpose(0, 3, 4, 1, 2)           # [B, Ho, Wo, C, kh*kw]
    return p.reshape(B * Ho * Wo, C * kh * kw), Ho, Wo


def ref_forward(x, params, num_classes=4):
    """PyTorch-structured forward (inference-mode BN folded), same bf16 rounding
    points as the kernel so the check can be tight."""
    B = x.shape[0]
    bf16, f32 = jnp.bfloat16, jnp.float32

    def conv_bn_relu(h, w4, t):
        cout, cin, kh, kw = w4.shape
        p, ho, wo = _im2col(h, kh, kw)
        wmat = w4.reshape(cout, cin * kh * kw).T
        y = jnp.dot(p.astype(bf16), wmat.astype(bf16), preferred_element_type=f32)
        y = jnp.maximum(y + t[None, :], 0.0)
        return y.reshape(B, ho, wo, cout).transpose(0, 3, 1, 2)      # NCHW

    outs = []
    for br in params["branches"]:
        h = conv_bn_relu(x, br["w1"], br["t1"])
        h = conv_bn_relu(h, br["w2"], br["t2"])
        outs.append(h.reshape(B, CHANNEL, -1))
    feat = jnp.concatenate(outs, axis=2).reshape(B, -1)              # torch cat/flatten order

    def dense(h, w, t, relu):
        y = jnp.dot(h.astype(bf16), w.astype(bf16), preferred_element_type=f32) + t[None, :]
        return jnp.maximum(y, 0.0) if relu else y

    h = dense(feat, params["d1_w"], params["d1_t"], True)
    h = dense(h, params["d2_w"], params["d2_t"], True)
    return dense(h, params["fc_w"], params["fc_t"], False)


# --------------------------- deterministic params ----------------------------
def init_params(key, num_classes=4):
    """Deterministic params with BN folded into per-channel scale (into the weights)
    and shift (with the conv/linear bias)."""
    # TODO(synk): BatchNorm is folded in inference mode (running stats); training-mode
    # batch statistics are not reproduced.
    keys = iter(jax.random.split(key, 64))

    def nrm(shape, s):
        return s * jax.random.normal(next(keys), shape, jnp.float32)

    def bn_fold(n):
        gamma = 1.0 + nrm((n,), 0.1)
        beta = nrm((n,), 0.1)
        mean = nrm((n,), 0.1)
        var = 0.5 + jax.random.uniform(next(keys), (n,), jnp.float32)
        scale = gamma / jnp.sqrt(var + EPS)
        return scale, beta - mean * scale

    params = {"branches": []}
    for k in KS:
        w1, b1 = nrm((HIDDEN, IN_C, 1, k), 0.05), nrm((HIDDEN,), 0.05)
        s1, sh1 = bn_fold(HIDDEN)
        w2, b2 = nrm((CHANNEL, HIDDEN, k, 1), 0.05), nrm((CHANNEL,), 0.05)
        s2, sh2 = bn_fold(CHANNEL)
        params["branches"].append(dict(
            w1=w1 * s1[:, None, None, None], t1=sh1 + b1 * s1,
            w2=w2 * s2[:, None, None, None], t2=sh2 + b2 * s2))

    w, b = nrm((D1_OUT, D1_IN), 0.05), nrm((D1_OUT,), 0.05)
    s, sh = bn_fold(D1_OUT)
    params["d1_w"], params["d1_t"] = (w * s[:, None]).T, sh + b * s
    w, b = nrm((D2_OUT, D1_OUT), 0.05), nrm((D2_OUT,), 0.05)
    s, sh = bn_fold(D2_OUT)
    params["d2_w"], params["d2_t"] = (w * s[:, None]).T, sh + b * s
    w, b = nrm((num_classes, D2_OUT), 0.05), nrm((num_classes,), 0.05)
    params["fc_w"], params["fc_t"] = w.T, b
    return params


# ---------------------------------- main -------------------------------------
if __name__ == "__main__":
    root = jax.random.PRNGKey(0)
    kx, kp = jax.random.split(root)

    B, NUM_CLASSES = 2, 4
    x = jax.random.normal(kx, (B, IN_C, IN_H, IN_W), jnp.float32)    # NCHW, as PyTorch
    params = init_params(kp, NUM_CLASSES)
    kweights = pack_kernel_weights(params, NUM_CLASSES)

    out = convnet_forward(x, kweights, num_classes=NUM_CLASSES)
    out = jax.block_until_ready(out)
    assert out.shape == (B, NUM_CLASSES), out.shape

    ref = ref_forward(x, params, NUM_CLASSES)
    np.testing.assert_allclose(np.asarray(out), np.asarray(ref), rtol=2e-3, atol=2e-3)
    print("KERNEL_OK")
</pallas_src>

<mosaic_0001>
module attributes {stable_mosaic.version = 11 : i64} {
  func.func @_convnet_kernel(%arg0: memref<8x64xbf16, #tpu.memory_space<vmem>>, %arg1: memref<64x1536xbf16, #tpu.memory_space<vmem>>, %arg2: memref<1x1536xf32, #tpu.memory_space<vmem>>, %arg3: memref<256x1152xbf16, #tpu.memory_space<vmem>>, %arg4: memref<3x128xf32, #tpu.memory_space<vmem>>, %arg5: memref<1x1024xf32, #tpu.memory_space<vmem>>, %arg6: memref<1x128xf32, #tpu.memory_space<vmem>>, %arg7: memref<128x128xbf16, #tpu.memory_space<vmem>>, %arg8: memref<1x128xf32, #tpu.memory_space<vmem>>, %arg9: memref<14x128x1024xbf16, #tpu.memory_space<any>>, %arg10: memref<1024x128xbf16, #tpu.memory_space<any>>, %arg11: memref<8x128xf32, #tpu.memory_space<vmem>>, %arg12: memref<14x128x1024xbf16, #tpu.memory_space<vmem>>, %arg13: memref<1024x128xbf16, #tpu.memory_space<vmem>>, %arg14: memref<14x!tpu.dma_semaphore, #tpu.memory_space<semaphore_mem>>, %arg15: memref<1x!tpu.dma_semaphore, #tpu.memory_space<semaphore_mem>>) attributes {dimension_semantics = [], scalar_prefetch = 0 : i64, scratch_operands = 4 : i64, tpu.core_type = #tpu.core_type<tc>} {
    %c0_i32 = arith.constant 0 : i32
    %c0_i32_0 = arith.constant 0 : i32
    %c0_i32_1 = arith.constant 0 : i32
    %c0_i32_2 = arith.constant 0 : i32
    %c0_i32_3 = arith.constant 0 : i32
    %0 = tpu.memref_slice %arg9[%c0_i32, %c0_i32_2, %c0_i32_3] : memref<14x128x1024xbf16, #tpu.memory_space<any>> -> memref<1x128x1024xbf16, #tpu.memory_space<any>>
    %1 = tpu.memref_squeeze %0 : memref<1x128x1024xbf16, #tpu.memory_space<any>> -> memref<128x1024xbf16, #tpu.memory_space<any>>
    %c0_i32_4 = arith.constant 0 : i32
    %c0_i32_5 = arith.constant 0 : i32
    %2 = tpu.memref_slice %arg12[%c0_i32_0, %c0_i32_4, %c0_i32_5] : memref<14x128x1024xbf16, #tpu.memory_space<vmem>> -> memref<1x128x1024xbf16, #tpu.memory_space<vmem>>
    %3 = tpu.memref_squeeze %2 : memref<1x128x1024xbf16, #tpu.memory_space<vmem>> -> memref<128x1024xbf16, #tpu.memory_space<vmem>>
    %4 = tpu.memref_slice %arg14[%c0_i32_1] : memref<14x!tpu.dma_semaphore, #tpu.memory_space<semaphore_mem>> -> memref<1x!tpu.dma_semaphore, #tpu.memory_space<semaphore_mem>>
    %5 = tpu.memref_squeeze %4 : memref<1x!tpu.dma_semaphore, #tpu.memory_space<semaphore_mem>> -> memref<!tpu.dma_semaphore, #tpu.memory_space<semaphore_mem>>
    tpu.enqueue_dma source(%1 : memref<128x1024xbf16, #tpu.memory_space<any>>) target(%3 : memref<128x1024xbf16, #tpu.memory_space<vmem>>) target_semaphore(%5 : memref<!tpu.dma_semaphore, #tpu.memory_space<semaphore_mem>>)
    %c1_i32 = arith.constant 1 : i32
    %c1_i32_6 = arith.constant 1 : i32
    %c1_i32_7 = arith.constant 1 : i32
    %c0_i32_8 = arith.constant 0 : i32
    %c0_i32_9 = arith.constant 0 : i32
    %6 = tpu.memref_slice %arg9[%c1_i32, %c0_i32_8, %c0_i32_9] : memref<14x128x1024xbf16, #tpu.memory_space<any>> -> memref<1x128x1024xbf16, #tpu.memory_space<any>>
    %7 = tpu.memref_squeeze %6 : memref<1x128x1024xbf16, #tpu.memory_space<any>> -> memref<128x1024xbf16, #tpu.memory_space<any>>
    %c0_i32_10 = arith.constant 0 : i32
    %c0_i32_11 = arith.constant 0 : i32
    %8 = tpu.memref_slice %arg12[%c1_i32_6, %c0_i32_10, %c0_i32_11] : memref<14x128x1024xbf16, #tpu.memory_space<vmem>> -> memref<1x128x1024xbf16, #tpu.memory_space<vmem>>
    %9 = tpu.memref_squeeze %8 : memref<1x128x1024xbf16, #tpu.memory_space<vmem>> -> memref<128x1024xbf16, #tpu.memory_space<vmem>>
    %10 = tpu.memref_slice %arg14[%c1_i32_7] : memref<14x!tpu.dma_semaphore, #tpu.memory_space<semaphore_mem>> -> memref<1x!tpu.dma_semaphore, #tpu.memory_space<semaphore_mem>>
    %11 = tpu.memref_squeeze %10 : memref<1x!tpu.dma_semaphore, #tpu.memory_space<semaphore_mem>> -> memref<!tpu.dma_semaphore, #tpu.memory_space<semaphore_mem>>
    tpu.enqueue_dma source(%7 : memref<128x1024xbf16, #tpu.memory_space<any>>) target(%9 : memref<128x1024xbf16, #tpu.memory_space<vmem>>) target_semaphore(%11 : memref<!tpu.dma_semaphore, #tpu.memory_space<semaphore_mem>>)
    %c2_i32 = arith.constant 2 : i32
    %c2_i32_12 = arith.constant 2 : i32
    %c2_i32_13 = arith.constant 2 : i32
    %c0_i32_14 = arith.constant 0 : i32
    %c0_i32_15 = arith.constant 0 : i32
    %12 = tpu.memref_slice %arg9[%c2_i32, %c0_i32_14, %c0_i32_15] : memref<14x128x1024xbf16, #tpu.memory_space<any>> -> memref<1x128x1024xbf16, #tpu.memory_space<any>>
    %13 = tpu.memref_squeeze %12 : memref<1x128x1024xbf16, #tpu.memory_space<any>> -> memref<128x1024xbf16, #tpu.memory_space<any>>
    %c0_i32_16 = arith.constant 0 : i32
    %c0_i32_17 = arith.constant 0 : i32
    %14 = tpu.memref_slice %arg12[%c2_i32_12, %c0_i32_16, %c0_i32_17] : memref<14x128x1024xbf16, #tpu.memory_space<vmem>> -> memref<1x128x1024xbf16, #tpu.memory_space<vmem>>
    %15 = tpu.memref_squeeze %14 : memref<1x128x1024xbf16, #tpu.memory_space<vmem>> -> memref<128x1024xbf16, #tpu.memory_space<vmem>>
    %16 = tpu.memref_slice %arg14[%c2_i32_13] : memref<14x!tpu.dma_semaphore, #tpu.memory_space<semaphore_mem>> -> memref<1x!tpu.dma_semaphore, #tpu.memory_space<semaphore_mem>>
    %17 = tpu.memref_squeeze %16 : memref<1x!tpu.dma_semaphore, #tpu.memory_space<semaphore_mem>> -> memref<!tpu.dma_semaphore, #tpu.memory_space<semaphore_mem>>
    tpu.enqueue_dma source(%13 : memref<128x1024xbf16, #tpu.memory_space<any>>) target(%15 : memref<128x1024xbf16, #tpu.memory_space<vmem>>) target_semaphore(%17 : memref<!tpu.dma_semaphore, #tpu.memory_space<semaphore_mem>>)
    %c3_i32 = arith.constant 3 : i32
    %c3_i32_18 = arith.constant 3 : i32
    %c3_i32_19 = arith.constant 3 : i32
    %c0_i32_20 = arith.constant 0 : i32
    %c0_i32_21 = arith.constant 0 : i32
    %18 = tpu.memref_slice %arg9[%c3_i32, %c0_i32_20, %c0_i32_21] : memref<14x128x1024xbf16, #tpu.memory_space<any>> -> memref<1x128x1024xbf16, #tpu.memory_space<any>>
    %19 = tpu.memref_squeeze %18 : memref<1x128x1024xbf16, #tpu.memory_space<any>> -> memref<128x1024xbf16, #tpu.memory_space<any>>
    %c0_i32_22 = arith.constant 0 : i32
    %c0_i32_23 = arith.constant 0 : i32
    %20 = tpu.memref_slice %arg12[%c3_i32_18, %c0_i32_22, %c0_i32_23] : memref<14x128x1024xbf16, #tpu.memory_space<vmem>> -> memref<1x128x1024xbf16, #tpu.memory_space<vmem>>
    %21 = tpu.memref_squeeze %20 : memref<1x128x1024xbf16, #tpu.memory_space<vmem>> -> memref<128x1024xbf16, #tpu.memory_space<vmem>>
    %22 = tpu.memref_slice %arg14[%c3_i32_19] : memref<14x!tpu.dma_semaphore, #tpu.memory_space<semaphore_mem>> -> memref<1x!tpu.dma_semaphore, #tpu.memory_space<semaphore_mem>>
    %23 = tpu.memref_squeeze %22 : memref<1x!tpu.dma_semaphore, #tpu.memory_space<semaphore_mem>> -> memref<!tpu.dma_semaphore, #tpu.memory_space<semaphore_mem>>
    tpu.enqueue_dma source(%19 : memref<128x1024xbf16, #tpu.memory_space<any>>) target(%21 : memref<128x1024xbf16, #tpu.memory_space<vmem>>) target_semaphore(%23 : memref<!tpu.dma_semaphore, #tpu.memory_space<semaphore_mem>>)
    %c4_i32 = arith.constant 4 : i32
    %c4_i32_24 = arith.constant 4 : i32
    %c4_i32_25 = arith.constant 4 : i32
    %c0_i32_26 = arith.constant 0 : i32
    %c0_i32_27 = arith.constant 0 : i32
    %24 = tpu.memref_slice %arg9[%c4_i32, %c0_i32_26, %c0_i32_27] : memref<14x128x1024xbf16, #tpu.memory_space<any>> -> memref<1x128x1024xbf16, #tpu.memory_space<any>>
    %25 = tpu.memref_squeeze %24 : memref<1x128x1024xbf16, #tpu.memory_space<any>> -> memref<128x1024xbf16, #tpu.memory_space<any>>
    %c0_i32_28 = arith.constant 0 : i32
    %c0_i32_29 = arith.constant 0 : i32
    %26 = tpu.memref_slice %arg12[%c4_i32_24, %c0_i32_28, %c0_i32_29] : memref<14x128x1024xbf16, #tpu.memory_space<vmem>> -> memref<1x128x1024xbf16, #tpu.memory_space<vmem>>
    %27 = tpu.memref_squeeze %26 : memref<1x128x1024xbf16, #tpu.memory_space<vmem>> -> memref<128x1024xbf16, #tpu.memory_space<vmem>>
    %28 = tpu.memref_slice %arg14[%c4_i32_25] : memref<14x!tpu.dma_semaphore, #tpu.memory_space<semaphore_mem>> -> memref<1x!tpu.dma_semaphore, #tpu.memory_space<semaphore_mem>>
    %29 = tpu.memref_squeeze %28 : memref<1x!tpu.dma_semaphore, #tpu.memory_space<semaphore_mem>> -> memref<!tpu.dma_semaphore, #tpu.memory_space<semaphore_mem>>
    tpu.enqueue_dma source(%25 : memref<128x1024xbf16, #tpu.memory_space<any>>) target(%27 : memref<128x1024xbf16, #tpu.memory_space<vmem>>) target_semaphore(%29 : memref<!tpu.dma_semaphore, #tpu.memory_space<semaphore_mem>>)
    %c5_i32 = arith.constant 5 : i32
    %c5_i32_30 = arith.constant 5 : i32
    %c5_i32_31 = arith.constant 5 : i32
    %c0_i32_32 = arith.constant 0 : i32
    %c0_i32_33 = arith.constant 0 : i32
    %30 = tpu.memref_slice %arg9[%c5_i32, %c0_i32_32, %c0_i32_33] : memref<14x128x1024xbf16, #tpu.memory_space<any>> -> memref<1x128x1024xbf16, #tpu.memory_space<any>>
    %31 = tpu.memref_squeeze %30 : memref<1x128x1024xbf16, #tpu.memory_space<any>> -> memref<128x1024xbf16, #tpu.memory_space<any>>
    %c0_i32_34 = arith.constant 0 : i32
    %c0_i32_35 = arith.constant 0 : i32
    %32 = tpu.memref_slice %arg12[%c5_i32_30, %c0_i32_34, %c0_i32_35] : memref<14x128x1024xbf16, #tpu.memory_space<vmem>> -> memref<1x128x1024xbf16, #tpu.memory_space<vmem>>
    %33 = tpu.memref_squeeze %32 : memref<1x128x1024xbf16, #tpu.memory_space<vmem>> -> memref<128x1024xbf16, #tpu.memory_space<vmem>>
    %34 = tpu.memref_slice %arg14[%c5_i32_31] : memref<14x!tpu.dma_semaphore, #tpu.memory_space<semaphore_mem>> -> memref<1x!tpu.dma_semaphore, #tpu.memory_space<semaphore_mem>>
    %35 = tpu.memref_squeeze %34 : memref<1x!tpu.dma_semaphore, #tpu.memory_space<semaphore_mem>> -> memref<!tpu.dma_semaphore, #tpu.memory_space<semaphore_mem>>
    tpu.enqueue_dma source(%31 : memref<128x1024xbf16, #tpu.memory_space<any>>) target(%33 : memref<128x1024xbf16, #tpu.memory_space<vmem>>) target_semaphore(%35 : memref<!tpu.dma_semaphore, #tpu.memory_space<semaphore_mem>>)
    %c6_i32 = arith.constant 6 : i32
    %c6_i32_36 = arith.constant 6 : i32
    %c6_i32_37 = arith.constant 6 : i32
    %c0_i32_38 = arith.constant 0 : i32
    %c0_i32_39 = arith.constant 0 : i32
    %36 = tpu.memref_slice %arg9[%c6_i32, %c0_i32_38, %c0_i32_39] : memref<14x128x1024xbf16, #tpu.memory_space<any>> -> memref<1x128x1024xbf16, #tpu.memory_space<any>>
    %37 = tpu.memref_squeeze %36 : memref<1x128x1024xbf16, #tpu.memory_space<any>> -> memref<128x1024xbf16, #tpu.memory_space<any>>
    %c0_i32_40 = arith.constant 0 : i32
    %c0_i32_41 = arith.constant 0 : i32
    %38 = tpu.memref_slice %arg12[%c6_i32_36, %c0_i32_40, %c0_i32_41] : memref<14x128x1024xbf16, #tpu.memory_space<vmem>> -> memref<1x128x1024xbf16, #tpu.memory_space<vmem>>
    %39 = tpu.memref_squeeze %38 : memref<1x128x1024xbf16, #tpu.memory_space<vmem>> -> memref<128x1024xbf16, #tpu.memory_space<vmem>>
    %40 = tpu.memref_slice %arg14[%c6_i32_37] : memref<14x!tpu.dma_semaphore, #tpu.memory_space<semaphore_mem>> -> memref<1x!tpu.dma_semaphore, #tpu.memory_space<semaphore_mem>>
    %41 = tpu.memref_squeeze %40 : memref<1x!tpu.dma_semaphore, #tpu.memory_space<semaphore_mem>> -> memref<!tpu.dma_semaphore, #tpu.memory_space<semaphore_mem>>
    tpu.enqueue_dma source(%37 : memref<128x1024xbf16, #tpu.memory_space<any>>) target(%39 : memref<128x1024xbf16, #tpu.memory_space<vmem>>) target_semaphore(%41 : memref<!tpu.dma_semaphore, #tpu.memory_space<semaphore_mem>>)
    %c7_i32 = arith.constant 7 : i32
    %c7_i32_42 = arith.constant 7 : i32
    %c7_i32_43 = arith.constant 7 : i32
    %c0_i32_44 = arith.constant 0 : i32
    %c0_i32_45 = arith.constant 0 : i32
    %42 = tpu.memref_slice %arg9[%c7_i32, %c0_i32_44, %c0_i32_45] : memref<14x128x1024xbf16, #tpu.memory_space<any>> -> memref<1x128x1024xbf16, #tpu.memory_space<any>>
    %43 = tpu.memref_squeeze %42 : memref<1x128x1024xbf16, #tpu.memory_space<any>> -> memref<128x1024xbf16, #tpu.memory_space<any>>
    %c0_i32_46 = arith.constant 0 : i32
    %c0_i32_47 = arith.constant 0 : i32
    %44 = tpu.memref_slice %arg12[%c7_i32_42, %c0_i32_46, %c0_i32_47] : memref<14x128x1024xbf16, #tpu.memory_space<vmem>> -> memref<1x128x1024xbf16, #tpu.memory_space<vmem>>
    %45 = tpu.memref_squeeze %44 : memref<1x128x1024xbf16, #tpu.memory_space<vmem>> -> memref<128x1024xbf16, #tpu.memory_space<vmem>>
    %46 = tpu.memref_slice %arg14[%c7_i32_43] : memref<14x!tpu.dma_semaphore, #tpu.memory_space<semaphore_mem>> -> memref<1x!tpu.dma_semaphore, #tpu.memory_space<semaphore_mem>>
    %47 = tpu.memref_squeeze %46 : memref<1x!tpu.dma_semaphore, #tpu.memory_space<semaphore_mem>> -> memref<!tpu.dma_semaphore, #tpu.memory_space<semaphore_mem>>
    tpu.enqueue_dma source(%43 : memref<128x1024xbf16, #tpu.memory_space<any>>) target(%45 : memref<128x1024xbf16, #tpu.memory_space<vmem>>) target_semaphore(%47 : memref<!tpu.dma_semaphore, #tpu.memory_space<semaphore_mem>>)
    %c8_i32 = arith.constant 8 : i32
    %c8_i32_48 = arith.constant 8 : i32
    %c8_i32_49 = arith.constant 8 : i32
    %c0_i32_50 = arith.constant 0 : i32
    %c0_i32_51 = arith.constant 0 : i32
    %48 = tpu.memref_slice %arg9[%c8_i32, %c0_i32_50, %c0_i32_51] : memref<14x128x1024xbf16, #tpu.memory_space<any>> -> memref<1x128x1024xbf16, #tpu.memory_space<any>>
    %49 = tpu.memref_squeeze %48 : memref<1x128x1024xbf16, #tpu.memory_space<any>> -> memref<128x1024xbf16, #tpu.memory_space<any>>
    %c0_i32_52 = arith.constant 0 : i32
    %c0_i32_53 = arith.constant 0 : i32
    %50 = tpu.memref_slice %arg12[%c8_i32_48, %c0_i32_52, %c0_i32_53] : memref<14x128x1024xbf16, #tpu.memory_space<vmem>> -> memref<1x128x1024xbf16, #tpu.memory_space<vmem>>
    %51 = tpu.memref_squeeze %50 : memref<1x128x1024xbf16, #tpu.memory_space<vmem>> -> memref<128x1024xbf16, #tpu.memory_space<vmem>>
    %52 = tpu.memref_slice %arg14[%c8_i32_49] : memref<14x!tpu.dma_semaphore, #tpu.memory_space<semaphore_mem>> -> memref<1x!tpu.dma_semaphore, #tpu.memory_space<semaphore_mem>>
    %53 = tpu.memref_squeeze %52 : memref<1x!tpu.dma_semaphore, #tpu.memory_space<semaphore_mem>> -> memref<!tpu.dma_semaphore, #tpu.memory_space<semaphore_mem>>
    tpu.enqueue_dma source(%49 : memref<128x1024xbf16, #tpu.memory_space<any>>) target(%51 : memref<128x1024xbf16, #tpu.memory_space<vmem>>) target_semaphore(%53 : memref<!tpu.dma_semaphore, #tpu.memory_space<semaphore_mem>>)
    %c9_i32 = arith.constant 9 : i32
    %c9_i32_54 = arith.constant 9 : i32
    %c9_i32_55 = arith.constant 9 : i32
    %c0_i32_56 = arith.constant 0 : i32
    %c0_i32_57 = arith.constant 0 : i32
    %54 = tpu.memref_slice %arg9[%c9_i32, %c0_i32_56, %c0_i32_57] : memref<14x128x1024xbf16, #tpu.memory_space<any>> -> memref<1x128x1024xbf16, #tpu.memory_space<any>>
    %55 = tpu.memref_squeeze %54 : memref<1x128x1024xbf16, #tpu.memory_space<any>> -> memref<128x1024xbf16, #tpu.memory_space<any>>
    %c0_i32_58 = arith.constant 0 : i32
    %c0_i32_59 = arith.constant 0 : i32
    %56 = tpu.memref_slice %arg12[%c9_i32_54, %c0_i32_58, %c0_i32_59] : memref<14x128x1024xbf16, #tpu.memory_space<vmem>> -> memref<1x128x1024xbf16, #tpu.memory_space<vmem>>
    %57 = tpu.memref_squeeze %56 : memref<1x128x1024xbf16, #tpu.memory_space<vmem>> -> memref<128x1024xbf16, #tpu.memory_space<vmem>>
    %58 = tpu.memref_slice %arg14[%c9_i32_55] : memref<14x!tpu.dma_semaphore, #tpu.memory_space<semaphore_mem>> -> memref<1x!tpu.dma_semaphore, #tpu.memory_space<semaphore_mem>>
    %59 = tpu.memref_squeeze %58 : memref<1x!tpu.dma_semaphore, #tpu.memory_space<semaphore_mem>> -> memref<!tpu.dma_semaphore, #tpu.memory_space<semaphore_mem>>
    tpu.enqueue_dma source(%55 : memref<128x1024xbf16, #tpu.memory_space<any>>) target(%57 : memref<128x1024xbf16, #tpu.memory_space<vmem>>) target_semaphore(%59 : memref<!tpu.dma_semaphore, #tpu.memory_space<semaphore_mem>>)
    %c10_i32 = arith.constant 10 : i32
    %c10_i32_60 = arith.constant 10 : i32
    %c10_i32_61 = arith.constant 10 : i32
    %c0_i32_62 = arith.constant 0 : i32
    %c0_i32_63 = arith.constant 0 : i32
    %60 = tpu.memref_slice %arg9[%c10_i32, %c0_i32_62, %c0_i32_63] : memref<14x128x1024xbf16, #tpu.memory_space<any>> -> memref<1x128x1024xbf16, #tpu.memory_space<any>>
    %61 = tpu.memref_squeeze %60 : memref<1x128x1024xbf16, #tpu.memory_space<any>> -> memref<128x1024xbf16, #tpu.memory_space<any>>
    %c0_i32_64 = arith.constant 0 : i32
    %c0_i32_65 = arith.constant 0 : i32
    %62 = tpu.memref_slice %arg12[%c10_i32_60, %c0_i32_64, %c0_i32_65] : memref<14x128x1024xbf16, #tpu.memory_space<vmem>> -> memref<1x128x1024xbf16, #tpu.memory_space<vmem>>
    %63 = tpu.memref_squeeze %62 : memref<1x128x1024xbf16, #tpu.memory_space<vmem>> -> memref<128x1024xbf16, #tpu.memory_space<vmem>>
    %64 = tpu.memref_slice %arg14[%c10_i32_61] : memref<14x!tpu.dma_semaphore, #tpu.memory_space<semaphore_mem>> -> memref<1x!tpu.dma_semaphore, #tpu.memory_space<semaphore_mem>>
    %65 = tpu.memref_squeeze %64 : memref<1x!tpu.dma_semaphore, #tpu.memory_space<semaphore_mem>> -> memref<!tpu.dma_semaphore, #tpu.memory_space<semaphore_mem>>
    tpu.enqueue_dma source(%61 : memref<128x1024xbf16, #tpu.memory_space<any>>) target(%63 : memref<128x1024xbf16, #tpu.memory_space<vmem>>) target_semaphore(%65 : memref<!tpu.dma_semaphore, #tpu.memory_space<semaphore_mem>>)
    %c11_i32 = arith.constant 11 : i32
    %c11_i32_66 = arith.constant 11 : i32
    %c11_i32_67 = arith.constant 11 : i32
    %c0_i32_68 = arith.constant 0 : i32
    %c0_i32_69 = arith.constant 0 : i32
    %66 = tpu.memref_slice %arg9[%c11_i32, %c0_i32_68, %c0_i32_69] : memref<14x128x1024xbf16, #tpu.memory_space<any>> -> memref<1x128x1024xbf16, #tpu.memory_space<any>>
    %67 = tpu.memref_squeeze %66 : memref<1x128x1024xbf16, #tpu.memory_space<any>> -> memref<128x1024xbf16, #tpu.memory_space<any>>
    %c0_i32_70 = arith.constant 0 : i32
    %c0_i32_71 = arith.constant 0 : i32
    %68 = tpu.memref_slice %arg12[%c11_i32_66, %c0_i32_70, %c0_i32_71] : memref<14x128x1024xbf16, #tpu.memory_space<vmem>> -> memref<1x128x1024xbf16, #tpu.memory_space<vmem>>
    %69 = tpu.memref_squeeze %68 : memref<1x128x1024xbf16, #tpu.memory_space<vmem>> -> memref<128x1024xbf16, #tpu.memory_space<vmem>>
    %70 = tpu.memref_slice %arg14[%c11_i32_67] : memref<14x!tpu.dma_semaphore, #tpu.memory_space<semaphore_mem>> -> memref<1x!tpu.dma_semaphore, #tpu.memory_space<semaphore_mem>>
    %71 = tpu.memref_squeeze %70 : memref<1x!tpu.dma_semaphore, #tpu.memory_space<semaphore_mem>> -> memref<!tpu.dma_semaphore, #tpu.memory_space<semaphore_mem>>
    tpu.enqueue_dma source(%67 : memref<128x1024xbf16, #tpu.memory_space<any>>) target(%69 : memref<128x1024xbf16, #tpu.memory_space<vmem>>) target_semaphore(%71 : memref<!tpu.dma_semaphore, #tpu.memory_space<semaphore_mem>>)
    %c12_i32 = arith.constant 12 : i32
    %c12_i32_72 = arith.constant 12 : i32
    %c12_i32_73 = arith.constant 12 : i32
    %c0_i32_74 = arith.constant 0 : i32
    %c0_i32_75 = arith.constant 0 : i32
    %72 = tpu.memref_slice %arg9[%c12_i32, %c0_i32_74, %c0_i32_75] : memref<14x128x1024xbf16, #tpu.memory_space<any>> -> memref<1x128x1024xbf16, #tpu.memory_space<any>>
    %73 = tpu.memref_squeeze %72 : memref<1x128x1024xbf16, #tpu.memory_space<any>> -> memref<128x1024xbf16, #tpu.memory_space<any>>
    %c0_i32_76 = arith.constant 0 : i32
    %c0_i32_77 = arith.constant 0 : i32
    %74 = tpu.memref_slice %arg12[%c12_i32_72, %c0_i32_76, %c0_i32_77] : memref<14x128x1024xbf16, #tpu.memory_space<vmem>> -> memref<1x128x1024xbf16, #tpu.memory_space<vmem>>
    %75 = tpu.memref_squeeze %74 : memref<1x128x1024xbf16, #tpu.memory_space<vmem>> -> memref<128x1024xbf16, #tpu.memory_space<vmem>>
    %76 = tpu.memref_slice %arg14[%c12_i32_73] : memref<14x!tpu.dma_semaphore, #tpu.memory_space<semaphore_mem>> -> memref<1x!tpu.dma_semaphore, #tpu.memory_space<semaphore_mem>>
    %77 = tpu.memref_squeeze %76 : memref<1x!tpu.dma_semaphore, #tpu.memory_space<semaphore_mem>> -> memref<!tpu.dma_semaphore, #tpu.memory_space<semaphore_mem>>
    tpu.enqueue_dma source(%73 : memref<128x1024xbf16, #tpu.memory_space<any>>) target(%75 : memref<128x1024xbf16, #tpu.memory_space<vmem>>) target_semaphore(%77 : memref<!tpu.dma_semaphore, #tpu.memory_space<semaphore_mem>>)
    %c13_i32 = arith.constant 13 : i32
    %c13_i32_78 = arith.constant 13 : i32
    %c13_i32_79 = arith.constant 13 : i32
    %c0_i32_80 = arith.constant 0 : i32
    %c0_i32_81 = arith.constant 0 : i32
    %78 = tpu.memref_slice %arg9[%c13_i32, %c0_i32_80, %c0_i32_81] : memref<14x128x1024xbf16, #tpu.memory_space<any>> -> memref<1x128x1024xbf16, #tpu.memory_space<any>>
    %79 = tpu.memref_squeeze %78 : memref<1x128x1024xbf16, #tpu.memory_space<any>> -> memref<128x1024xbf16, #tpu.memory_space<any>>
    %c0_i32_82 = arith.constant 0 : i32
    %c0_i32_83 = arith.constant 0 : i32
    %80 = tpu.memref_slice %arg12[%c13_i32_78, %c0_i32_82, %c0_i32_83] : memref<14x128x1024xbf16, #tpu.memory_space<vmem>> -> memref<1x128x1024xbf16, #tpu.memory_space<vmem>>
    %81 = tpu.memref_squeeze %80 : memref<1x128x1024xbf16, #tpu.memory_space<vmem>> -> memref<128x1024xbf16, #tpu.memory_space<vmem>>
    %82 = tpu.memref_slice %arg14[%c13_i32_79] : memref<14x!tpu.dma_semaphore, #tpu.memory_space<semaphore_mem>> -> memref<1x!tpu.dma_semaphore, #tpu.memory_space<semaphore_mem>>
    %83 = tpu.memref_squeeze %82 : memref<1x!tpu.dma_semaphore, #tpu.memory_space<semaphore_mem>> -> memref<!tpu.dma_semaphore, #tpu.memory_space<semaphore_mem>>
    tpu.enqueue_dma source(%79 : memref<128x1024xbf16, #tpu.memory_space<any>>) target(%81 : memref<128x1024xbf16, #tpu.memory_space<vmem>>) target_semaphore(%83 : memref<!tpu.dma_semaphore, #tpu.memory_space<semaphore_mem>>)
    %c0_i32_84 = arith.constant 0 : i32
    %84 = tpu.memref_slice %arg15[%c0_i32_84] : memref<1x!tpu.dma_semaphore, #tpu.memory_space<semaphore_mem>> -> memref<1x!tpu.dma_semaphore, #tpu.memory_space<semaphore_mem>>
    %85 = tpu.memref_squeeze %84 : memref<1x!tpu.dma_semaphore, #tpu.memory_space<semaphore_mem>> -> memref<!tpu.dma_semaphore, #tpu.memory_space<semaphore_mem>>
    tpu.enqueue_dma source(%arg10 : memref<1024x128xbf16, #tpu.memory_space<any>>) target(%arg13 : memref<1024x128xbf16, #tpu.memory_space<vmem>>) target_semaphore(%85 : memref<!tpu.dma_semaphore, #tpu.memory_space<semaphore_mem>>)
    %c0 = arith.constant 0 : index
    %c0_85 = arith.constant 0 : index
    %86 = vector.load %arg0[%c0, %c0_85] : memref<8x64xbf16, #tpu.memory_space<vmem>>, vector<8x64xbf16>
    %c0_86 = arith.constant 0 : index
    %c0_87 = arith.constant 0 : index
    %87 = vector.load %arg1[%c0_86, %c0_87] : memref<64x1536xbf16, #tpu.memory_space<vmem>>, vector<64x1536xbf16>
    %cst = arith.constant dense<0.000000e+00> : vector<8x1536xf32>
    %88 = tpu.matmul %86, %87, %cst {dimension_numbers = #tpu.dot_dimension_numbers<[1], [0], [0], [1], [0, 0, 1, 1], [], []>} : vector<8x64xbf16>, vector<64x1536xbf16>, vector<8x1536xf32> -> vector<8x1536xf32>
    %c0_88 = arith.constant 0 : index
    %c0_89 = arith.constant 0 : index
    %89 = vector.load %arg2[%c0_88, %c0_89] : memref<1x1536xf32, #tpu.memory_space<vmem>>, vector<1x1536xf32>
    %90 = vector.broadcast %89 : vector<1x1536xf32> to vector<8x1536xf32>
    %91 = arith.addf %88, %90 : vector<8x1536xf32>
    %cst_90 = arith.constant 0.000000e+00 : f32
    %92 = vector.broadcast %cst_90 : f32 to vector<8x1536xf32>
    %93 = arith.maximumf %91, %92 : vector<8x1536xf32>
    %cst_91 = arith.constant 0.000000e+00 : f32
    %94 = vector.broadcast %cst_91 : f32 to vector<6x128xf32>
    %95 = vector.extract_strided_slice %93 {offsets = [0, 0], sizes = [8, 256], strides = [1, 1]} : vector<8x1536xf32> to vector<8x256xf32>
    %96 = vector.extract_strided_slice %93 {offsets = [0, 256], sizes = [8, 256], strides = [1, 1]} : vector<8x1536xf32> to vector<8x256xf32>
    %97 = vector.extract_strided_slice %93 {offsets = [0, 512], sizes = [8, 256], strides = [1, 1]} : vector<8x1536xf32> to vector<8x256xf32>
    %98 = tpu.concatenate %95, %96, %97 in 0 : vector<8x256xf32>, vector<8x256xf32>, vector<8x256xf32> -> vector<24x256xf32>
    %99 = arith.truncf %98 : vector<24x256xf32> to vector<24x256xbf16>
    %c0_92 = arith.constant 0 : index
    %c0_93 = arith.constant 0 : index
    %100 = vector.load %arg3[%c0_92, %c0_93] : memref<256x1152xbf16, #tpu.memory_space<vmem>>, vector<256x256xbf16>
    %cst_94 = arith.constant dense<0.000000e+00> : vector<24x256xf32>
    %101 = tpu.matmul %99, %100, %cst_94 {dimension_numbers = #tpu.dot_dimension_numbers<[1], [0], [0], [1], [0, 0, 1, 1], [], []>} : vector<24x256xbf16>, vector<256x256xbf16>, vector<24x256xf32> -> vector<24x256xf32>
    %c0_95 = arith.constant 0 : index
    %c0_96 = arith.constant 0 : index
    %102 = vector.load %arg4[%c0_95, %c0_96] : memref<3x128xf32, #tpu.memory_space<vmem>>, vector<1x128xf32>
    %103 = vector.extract_strided_slice %101 {offsets = [0, 0], sizes = [2, 128], strides = [1, 1]} : vector<24x256xf32> to vector<2x128xf32>
    %104 = vector.extract_strided_slice %101 {offsets = [2, 128], sizes = [2, 128], strides = [1, 1]} : vector<24x256xf32> to vector<2x128xf32>
    %105 = arith.addf %103, %104 : vector<2x128xf32>
    %106 = vector.broadcast %102 : vector<1x128xf32> to vector<2x128xf32>
    %107 = arith.addf %105, %106 : vector<2x128xf32>
    %cst_97 = arith.constant 0.000000e+00 : f32
    %108 = vector.broadcast %cst_97 : f32 to vector<2x128xf32>
    %109 = arith.maximumf %107, %108 : vector<2x128xf32>
    %110 = tpu.concatenate %109, %94 in 0 : vector<2x128xf32>, vector<6x128xf32> -> vector<8x128xf32>
    %111 = arith.truncf %110 : vector<8x128xf32> to vector<8x128xbf16>
    %c0_i32_98 = arith.constant 0 : i32
    %c0_i32_99 = arith.constant 0 : i32
    %c0_i32_100 = arith.constant 0 : i32
    %c0_i32_101 = arith.constant 0 : i32
    %c0_i32_102 = arith.constant 0 : i32
    %112 = tpu.memref_slice %arg9[%c0_i32_98, %c0_i32_101, %c0_i32_102] : memref<14x128x1024xbf16, #tpu.memory_space<any>> -> memref<1x128x1024xbf16, #tpu.memory_space<any>>
    %113 = tpu.memref_squeeze %112 : memref<1x128x1024xbf16, #tpu.memory_space<any>> -> memref<128x1024xbf16, #tpu.memory_space<any>>
    %c0_i32_103 = arith.constant 0 : i32
    %c0_i32_104 = arith.constant 0 : i32
    %114 = tpu.memref_slice %arg12[%c0_i32_99, %c0_i32_103, %c0_i32_104] : memref<14x128x1024xbf16, #tpu.memory_space<vmem>> -> memref<1x128x1024xbf16, #tpu.memory_space<vmem>>
    %115 = tpu.memref_squeeze %114 : memref<1x128x1024xbf16, #tpu.memory_space<vmem>> -> memref<128x1024xbf16, #tpu.memory_space<vmem>>
    %116 = tpu.memref_slice %arg14[%c0_i32_100] : memref<14x!tpu.dma_semaphore, #tpu.memory_space<semaphore_mem>> -> memref<1x!tpu.dma_semaphore, #tpu.memory_space<semaphore_mem>>
    %117 = tpu.memref_squeeze %116 : memref<1x!tpu.dma_semaphore, #tpu.memory_space<semaphore_mem>> -> memref<!tpu.dma_semaphore, #tpu.memory_space<semaphore_mem>>
    tpu.wait_dma2 semaphore(%117 : memref<!tpu.dma_semaphore, #tpu.memory_space<semaphore_mem>>) src(%113 : memref<128x1024xbf16, #tpu.memory_space<any>>) dst(%115 : memref<128x1024xbf16, #tpu.memory_space<vmem>>)
    %c0_105 = arith.constant 0 : index
    %c0_106 = arith.constant 0 : index
    %c0_107 = arith.constant 0 : index
    %118 = vector.load %arg12[%c0_105, %c0_106, %c0_107] : memref<14x128x1024xbf16, #tpu.memory_space<vmem>>, vector<1x128x1024xbf16>
    %119 = vector.shape_cast %118 : vector<1x128x1024xbf16> to vector<128x1024xbf16>
    %cst_108 = arith.constant dense<0.000000e+00> : vector<8x1024xf32>
    %120 = tpu.matmul %111, %119, %cst_108 {dimension_numbers = #tpu.dot_dimension_numbers<[1], [0], [0], [1], [0, 0, 1, 1], [], []>} : vector<8x128xbf16>, vector<128x1024xbf16>, vector<8x1024xf32> -> vector<8x1024xf32>
    %121 = vector.extract_strided_slice %101 {offsets = [8, 0], sizes = [2, 128], strides = [1, 1]} : vector<24x256xf32> to vector<2x128xf32>
    %122 = vector.extract_strided_slice %101 {offsets = [10, 128], sizes = [2, 128], strides = [1, 1]} : vector<24x256xf32> to vector<2x128xf32>
    %123 = arith.addf %121, %122 : vector<2x128xf32>
    %124 = vector.broadcast %102 : vector<1x128xf32> to vector<2x128xf32>
    %125 = arith.addf %123, %124 : vector<2x128xf32>
    %cst_109 = arith.constant 0.000000e+00 : f32
    %126 = vector.broadcast %cst_109 : f32 to vector<2x128xf32>
    %127 = arith.maximumf %125, %126 : vector<2x128xf32>
    %128 = tpu.concatenate %127, %94 in 0 : vector<2x128xf32>, vector<6x128xf32> -> vector<8x128xf32>
    %129 = arith.truncf %128 : vector<8x128xf32> to vector<8x128xbf16>
    %c1_i32_110 = arith.constant 1 : i32
    %c1_i32_111 = arith.constant 1 : i32
    %c1_i32_112 = arith.constant 1 : i32
    %c0_i32_113 = arith.constant 0 : i32
    %c0_i32_114 = arith.constant 0 : i32
    %130 = tpu.memref_slice %arg9[%c1_i32_110, %c0_i32_113, %c0_i32_114] : memref<14x128x1024xbf16, #tpu.memory_space<any>> -> memref<1x128x1024xbf16, #tpu.memory_space<any>>
    %131 = tpu.memref_squeeze %130 : memref<1x128x1024xbf16, #tpu.memory_space<any>> -> memref<128x1024xbf16, #tpu.memory_space<any>>
    %c0_i32_115 = arith.constant 0 : i32
    %c0_i32_116 = arith.constant 0 : i32
    %132 = tpu.memref_slice %arg12[%c1_i32_111, %c0_i32_115, %c0_i32_116] : memref<14x128x1024xbf16, #tpu.memory_space<vmem>> -> memref<1x128x1024xbf16, #tpu.memory_space<vmem>>
    %133 = tpu.memref_squeeze %132 : memref<1x128x1024xbf16, #tpu.memory_space<vmem>> -> memref<128x1024xbf16, #tpu.memory_space<vmem>>
    %134 = tpu.memref_slice %arg14[%c1_i32_112] : memref<14x!tpu.dma_semaphore, #tpu.memory_space<semaphore_mem>> -> memref<1x!tpu.dma_semaphore, #tpu.memory_space<semaphore_mem>>
    %135 = tpu.memref_squeeze %134 : memref<1x!tpu.dma_semaphore, #tpu.memory_space<semaphore_mem>> -> memref<!tpu.dma_semaphore, #tpu.memory_space<semaphore_mem>>
    tpu.wait_dma2 semaphore(%135 : memref<!tpu.dma_semaphore, #tpu.memory_space<semaphore_mem>>) src(%131 : memref<128x1024xbf16, #tpu.memory_space<any>>) dst(%133 : memref<128x1024xbf16, #tpu.memory_space<vmem>>)
    %c1 = arith.constant 1 : index
    %c0_117 = arith.constant 0 : index
    %c0_118 = arith.constant 0 : index
    %136 = vector.load %arg12[%c1, %c0_117, %c0_118] : memref<14x128x1024xbf16, #tpu.memory_space<vmem>>, vector<1x128x1024xbf16>
    %137 = vector.shape_cast %136 : vector<1x128x1024xbf16> to vector<128x1024xbf16>
    %cst_119 = arith.constant dense<0.000000e+00> : vector<8x1024xf32>
    %138 = tpu.matmul %129, %137, %cst_119 {dimension_numbers = #tpu.dot_dimension_numbers<[1], [0], [0], [1], [0, 0, 1, 1], [], []>} : vector<8x128xbf16>, vector<128x1024xbf16>, vector<8x1024xf32> -> vector<8x1024xf32>
    %139 = arith.addf %120, %138 : vector<8x1024xf32>
    %140 = vector.extract_strided_slice %101 {offsets = [16, 0], sizes = [2, 128], strides = [1, 1]} : vector<24x256xf32> to vector<2x128xf32>
    %141 = vector.extract_strided_slice %101 {offsets = [18, 128], sizes = [2, 128], strides = [1, 1]} : vector<24x256xf32> to vector<2x128xf32>
    %142 = arith.addf %140, %141 : vector<2x128xf32>
    %143 = vector.broadcast %102 : vector<1x128xf32> to vector<2x128xf32>
    %144 = arith.addf %142, %143 : vector<2x128xf32>
    %cst_120 = arith.constant 0.000000e+00 : f32
    %145 = vector.broadcast %cst_120 : f32 to vector<2x128xf32>
    %146 = arith.maximumf %144, %145 : vector<2x128xf32>
    %147 = tpu.concatenate %146, %94 in 0 : vector<2x128xf32>, vector<6x128xf32> -> vector<8x128xf32>
    %148 = arith.truncf %147 : vector<8x128xf32> to vector<8x128xbf16>
    %c2_i32_121 = arith.constant 2 : i32
    %c2_i32_122 = arith.constant 2 : i32
    %c2_i32_123 = arith.constant 2 : i32
    %c0_i32_124 = arith.constant 0 : i32
    %c0_i32_125 = arith.constant 0 : i32
    %149 = tpu.memref_slice %arg9[%c2_i32_121, %c0_i32_124, %c0_i32_125] : memref<14x128x1024xbf16, #tpu.memory_space<any>> -> memref<1x128x1024xbf16, #tpu.memory_space<any>>
    %150 = tpu.memref_squeeze %149 : memref<1x128x1024xbf16, #tpu.memory_space<any>> -> memref<128x1024xbf16, #tpu.memory_space<any>>
    %c0_i32_126 = arith.constant 0 : i32
    %c0_i32_127 = arith.constant 0 : i32
    %151 = tpu.memref_slice %arg12[%c2_i32_122, %c0_i32_126, %c0_i32_127] : memref<14x128x1024xbf16, #tpu.memory_space<vmem>> -> memref<1x128x1024xbf16, #tpu.memory_space<vmem>>
    %152 = tpu.memref_squeeze %151 : memref<1x128x1024xbf16, #tpu.memory_space<vmem>> -> memref<128x1024xbf16, #tpu.memory_space<vmem>>
    %153 = tpu.memref_slice %arg14[%c2_i32_123] : memref<14x!tpu.dma_semaphore, #tpu.memory_space<semaphore_mem>> -> memref<1x!tpu.dma_semaphore, #tpu.memory_space<semaphore_mem>>
    %154 = tpu.memref_squeeze %153 : memref<1x!tpu.dma_semaphore, #tpu.memory_space<semaphore_mem>> -> memref<!tpu.dma_semaphore, #tpu.memory_space<semaphore_mem>>
    tpu.wait_dma2 semaphore(%154 : memref<!tpu.dma_semaphore, #tpu.memory_space<semaphore_mem>>) src(%150 : memref<128x1024xbf16, #tpu.memory_space<any>>) dst(%152 : memref<128x1024xbf16, #tpu.memory_space<vmem>>)
    %c2 = arith.constant 2 : index
    %c0_128 = arith.constant 0 : index
    %c0_129 = arith.constant 0 : index
    %155 = vector.load %arg12[%c2, %c0_128, %c0_129] : memref<14x128x1024xbf16, #tpu.memory_space<vmem>>, vector<1x128x1024xbf16>
    %156 = vector.shape_cast %155 : vector<1x128x1024xbf16> to vector<128x1024xbf16>
    %cst_130 = arith.constant dense<0.000000e+00> : vector<8x1024xf32>
    %157 = tpu.matmul %148, %156, %cst_130 {dimension_numbers = #tpu.dot_dimension_numbers<[1], [0], [0], [1], [0, 0, 1, 1], [], []>} : vector<8x128xbf16>, vector<128x1024xbf16>, vector<8x1024xf32> -> vector<8x1024xf32>
    %158 = arith.addf %139, %157 : vector<8x1024xf32>
    %159 = vector.extract_strided_slice %101 {offsets = [2, 0], sizes = [2, 128], strides = [1, 1]} : vector<24x256xf32> to vector<2x128xf32>
    %160 = vector.extract_strided_slice %101 {offsets = [4, 128], sizes = [2, 128], strides = [1, 1]} : vector<24x256xf32> to vector<2x128xf32>
    %161 = arith.addf %159, %160 : vector<2x128xf32>
    %162 = vector.broadcast %102 : vector<1x128xf32> to vector<2x128xf32>
    %163 = arith.addf %161, %162 : vector<2x128xf32>
    %cst_131 = arith.constant 0.000000e+00 : f32
    %164 = vector.broadcast %cst_131 : f32 to vector<2x128xf32>
    %165 = arith.maximumf %163, %164 : vector<2x128xf32>
    %166 = tpu.concatenate %165, %94 in 0 : vector<2x128xf32>, vector<6x128xf32> -> vector<8x128xf32>
    %167 = arith.truncf %166 : vector<8x128xf32> to vector<8x128xbf16>
    %c3_i32_132 = arith.constant 3 : i32
    %c3_i32_133 = arith.constant 3 : i32
    %c3_i32_134 = arith.constant 3 : i32
    %c0_i32_135 = arith.constant 0 : i32
    %c0_i32_136 = arith.constant 0 : i32
    %168 = tpu.memref_slice %arg9[%c3_i32_132, %c0_i32_135, %c0_i32_136] : memref<14x128x1024xbf16, #tpu.memory_space<any>> -> memref<1x128x1024xbf16, #tpu.memory_space<any>>
    %169 = tpu.memref_squeeze %168 : memref<1x128x1024xbf16, #tpu.memory_space<any>> -> memref<128x1024xbf16, #tpu.memory_space<any>>
    %c0_i32_137 = arith.constant 0 : i32
    %c0_i32_138 = arith.constant 0 : i32
    %170 = tpu.memref_slice %arg12[%c3_i32_133, %c0_i32_137, %c0_i32_138] : memref<14x128x1024xbf16, #tpu.memory_space<vmem>> -> memref<1x128x1024xbf16, #tpu.memory_space<vmem>>
    %171 = tpu.memref_squeeze %170 : memref<1x128x1024xbf16, #tpu.memory_space<vmem>> -> memref<128x1024xbf16, #tpu.memory_space<vmem>>
    %172 = tpu.memref_slice %arg14[%c3_i32_134] : memref<14x!tpu.dma_semaphore, #tpu.memory_space<semaphore_mem>> -> memref<1x!tpu.dma_semaphore, #tpu.memory_space<semaphore_mem>>
    %173 = tpu.memref_squeeze %172 : memref<1x!tpu.dma_semaphore, #tpu.memory_space<semaphore_mem>> -> memref<!tpu.dma_semaphore, #tpu.memory_space<semaphore_mem>>
    tpu.wait_dma2 semaphore(%173 : memref<!tpu.dma_semaphore, #tpu.memory_space<semaphore_mem>>) src(%169 : memref<128x1024xbf16, #tpu.memory_space<any>>) dst(%171 : memref<128x1024xbf16, #tpu.memory_space<vmem>>)
    %c3 = arith.constant 3 : index
    %c0_139 = arith.constant 0 : index
    %c0_140 = arith.constant 0 : index
    %174 = vector.load %arg12[%c3, %c0_139, %c0_140] : memref<14x128x1024xbf16, #tpu.memory_space<vmem>>, vector<1x128x1024xbf16>
    %175 = vector.shape_cast %174 : vector<1x128x1024xbf16> to vector<128x1024xbf16>
    %cst_141 = arith.constant dense<0.000000e+00> : vector<8x1024xf32>
    %176 = tpu.matmul %167, %175, %cst_141 {dimension_numbers = #tpu.dot_dimension_numbers<[1], [0], [0], [1], [0, 0, 1, 1], [], []>} : vector<8x128xbf16>, vector<128x1024xbf16>, vector<8x1024xf32> -> vector<8x1024xf32>
    %177 = arith.addf %158, %176 : vector<8x1024xf32>
    %178 = vector.extract_strided_slice %101 {offsets = [10, 0], sizes = [2, 128], strides = [1, 1]} : vector<24x256xf32> to vector<2x128xf32>
    %179 = vector.extract_strided_slice %101 {offsets = [12, 128], sizes = [2, 128], strides = [1, 1]} : vector<24x256xf32> to vector<2x128xf32>
    %180 = arith.addf %178, %179 : vector<2x128xf32>
    %181 = vector.broadcast %102 : vector<1x128xf32> to vector<2x128xf32>
    %182 = arith.addf %180, %181 : vector<2x128xf32>
    %cst_142 = arith.constant 0.000000e+00 : f32
    %183 = vector.broadcast %cst_142 : f32 to vector<2x128xf32>
    %184 = arith.maximumf %182, %183 : vector<2x128xf32>
    %185 = tpu.concatenate %184, %94 in 0 : vector<2x128xf32>, vector<6x128xf32> -> vector<8x128xf32>
    %186 = arith.truncf %185 : vector<8x128xf32> to vector<8x128xbf16>
    %c4_i32_143 = arith.constant 4 : i32
    %c4_i32_144 = arith.constant 4 : i32
    %c4_i32_145 = arith.constant 4 : i32
    %c0_i32_146 = arith.constant 0 : i32
    %c0_i32_147 = arith.constant 0 : i32
    %187 = tpu.memref_slice %arg9[%c4_i32_143, %c0_i32_146, %c0_i32_147] : memref<14x128x1024xbf16, #tpu.memory_space<any>> -> memref<1x128x1024xbf16, #tpu.memory_space<any>>
    %188 = tpu.memref_squeeze %187 : memref<1x128x1024xbf16, #tpu.memory_space<any>> -> memref<128x1024xbf16, #tpu.memory_space<any>>
    %c0_i32_148 = arith.constant 0 : i32
    %c0_i32_149 = arith.constant 0 : i32
    %189 = tpu.memref_slice %arg12[%c4_i32_144, %c0_i32_148, %c0_i32_149] : memref<14x128x1024xbf16, #tpu.memory_space<vmem>> -> memref<1x128x1024xbf16, #tpu.memory_space<vmem>>
    %190 = tpu.memref_squeeze %189 : memref<1x128x1024xbf16, #tpu.memory_space<vmem>> -> memref<128x1024xbf16, #tpu.memory_space<vmem>>
    %191 = tpu.memref_slice %arg14[%c4_i32_145] : memref<14x!tpu.dma_semaphore, #tpu.memory_space<semaphore_mem>> -> memref<1x!tpu.dma_semaphore, #tpu.memory_space<semaphore_mem>>
    %192 = tpu.memref_squeeze %191 : memref<1x!tpu.dma_semaphore, #tpu.memory_space<semaphore_mem>> -> memref<!tpu.dma_semaphore, #tpu.memory_space<semaphore_mem>>
    tpu.wait_dma2 semaphore(%192 : memref<!tpu.dma_semaphore, #tpu.memory_space<semaphore_mem>>) src(%188 : memref<128x1024xbf16, #tpu.memory_space<any>>) dst(%190 : memref<128x1024xbf16, #tpu.memory_space<vmem>>)
    %c4 = arith.constant 4 : index
    %c0_150 = arith.constant 0 : index
    %c0_151 = arith.constant 0 : index
    %193 = vector.load %arg12[%c4, %c0_150, %c0_151] : memref<14x128x1024xbf16, #tpu.memory_space<vmem>>, vector<1x128x1024xbf16>
    %194 = vector.shape_cast %193 : vector<1x128x1024xbf16> to vector<128x1024xbf16>
    %cst_152 = arith.constant dense<0.000000e+00> : vector<8x1024xf32>
    %195 = tpu.matmul %186, %194, %cst_152 {dimension_numbers = #tpu.dot_dimension_numbers<[1], [0], [0], [1], [0, 0, 1, 1], [], []>} : vector<8x128xbf16>, vector<128x1024xbf16>, vector<8x1024xf32> -> vector<8x1024xf32>
    %196 = arith.addf %177, %195 : vector<8x1024xf32>
    %197 = vector.extract_strided_slice %101 {offsets = [18, 0], sizes = [2, 128], strides = [1, 1]} : vector<24x256xf32> to vector<2x128xf32>
    %198 = vector.extract_strided_slice %101 {offsets = [20, 128], sizes = [2, 128], strides = [1, 1]} : vector<24x256xf32> to vector<2x128xf32>
    %199 = arith.addf %197, %198 : vector<2x128xf32>
    %200 = vector.broadcast %102 : vector<1x128xf32> to vector<2x128xf32>
    %201 = arith.addf %199, %200 : vector<2x128xf32>
    %cst_153 = arith.constant 0.000000e+00 : f32
    %202 = vector.broadcast %cst_153 : f32 to vector<2x128xf32>
    %203 = arith.maximumf %201, %202 : vector<2x128xf32>
    %204 = tpu.concatenate %203, %94 in 0 : vector<2x128xf32>, vector<6x128xf32> -> vector<8x128xf32>
    %205 = arith.truncf %204 : vector<8x128xf32> to vector<8x128xbf16>
    %c5_i32_154 = arith.constant 5 : i32
    %c5_i32_155 = arith.constant 5 : i32
    %c5_i32_156 = arith.constant 5 : i32
    %c0_i32_157 = arith.constant 0 : i32
    %c0_i32_158 = arith.constant 0 : i32
    %206 = tpu.memref_slice %arg9[%c5_i32_154, %c0_i32_157, %c0_i32_158] : memref<14x128x1024xbf16, #tpu.memory_space<any>> -> memref<1x128x1024xbf16, #tpu.memory_space<any>>
    %207 = tpu.memref_squeeze %206 : memref<1x128x1024xbf16, #tpu.memory_space<any>> -> memref<128x1024xbf16, #tpu.memory_space<any>>
    %c0_i32_159 = arith.constant 0 : i32
    %c0_i32_160 = arith.constant 0 : i32
    %208 = tpu.memref_slice %arg12[%c5_i32_155, %c0_i32_159, %c0_i32_160] : memref<14x128x1024xbf16, #tpu.memory_space<vmem>> -> memref<1x128x1024xbf16, #tpu.memory_space<vmem>>
    %209 = tpu.memref_squeeze %208 : memref<1x128x1024xbf16, #tpu.memory_space<vmem>> -> memref<128x1024xbf16, #tpu.memory_space<vmem>>
    %210 = tpu.memref_slice %arg14[%c5_i32_156] : memref<14x!tpu.dma_semaphore, #tpu.memory_space<semaphore_mem>> -> memref<1x!tpu.dma_semaphore, #tpu.memory_space<semaphore_mem>>
    %211 = tpu.memref_squeeze %210 : memref<1x!tpu.dma_semaphore, #tpu.memory_space<semaphore_mem>> -> memref<!tpu.dma_semaphore, #tpu.memory_space<semaphore_mem>>
    tpu.wait_dma2 semaphore(%211 : memref<!tpu.dma_semaphore, #tpu.memory_space<semaphore_mem>>) src(%207 : memref<128x1024xbf16, #tpu.memory_space<any>>) dst(%209 : memref<128x1024xbf16, #tpu.memory_space<vmem>>)
    %c5 = arith.constant 5 : index
    %c0_161 = arith.constant 0 : index
    %c0_162 = arith.constant 0 : index
    %212 = vector.load %arg12[%c5, %c0_161, %c0_162] : memref<14x128x1024xbf16, #tpu.memory_space<vmem>>, vector<1x128x1024xbf16>
    %213 = vector.shape_cast %212 : vector<1x128x1024xbf16> to vector<128x1024xbf16>
    %cst_163 = arith.constant dense<0.000000e+00> : vector<8x1024xf32>
    %214 = tpu.matmul %205, %213, %cst_163 {dimension_numbers = #tpu.dot_dimension_numbers<[1], [0], [0], [1], [0, 0, 1, 1], [], []>} : vector<8x128xbf16>, vector<128x1024xbf16>, vector<8x1024xf32> -> vector<8x1024xf32>
    %215 = arith.addf %196, %214 : vector<8x1024xf32>
    %216 = vector.extract_strided_slice %101 {offsets = [4, 0], sizes = [2, 128], strides = [1, 1]} : vector<24x256xf32> to vector<2x128xf32>
    %217 = vector.extract_strided_slice %101 {offsets = [6, 128], sizes = [2, 128], strides = [1, 1]} : vector<24x256xf32> to vector<2x128xf32>
    %218 = arith.addf %216, %217 : vector<2x128xf32>
    %219 = vector.broadcast %102 : vector<1x128xf32> to vector<2x128xf32>
    %220 = arith.addf %218, %219 : vector<2x128xf32>
    %cst_164 = arith.constant 0.000000e+00 : f32
    %221 = vector.broadcast %cst_164 : f32 to vector<2x128xf32>
    %222 = arith.maximumf %220, %221 : vector<2x128xf32>
    %223 = tpu.concatenate %222, %94 in 0 : vector<2x128xf32>, vector<6x128xf32> -> vector<8x128xf32>
    %224 = arith.truncf %223 : vector<8x128xf32> to vector<8x128xbf16>
    %c6_i32_165 = arith.constant 6 : i32
    %c6_i32_166 = arith.constant 6 : i32
    %c6_i32_167 = arith.constant 6 : i32
    %c0_i32_168 = arith.constant 0 : i32
    %c0_i32_169 = arith.constant 0 : i32
    %225 = tpu.memref_slice %arg9[%c6_i32_165, %c0_i32_168, %c0_i32_169] : memref<14x128x1024xbf16, #tpu.memory_space<any>> -> memref<1x128x1024xbf16, #tpu.memory_space<any>>
    %226 = tpu.memref_squeeze %225 : memref<1x128x1024xbf16, #tpu.memory_space<any>> -> memref<128x1024xbf16, #tpu.memory_space<any>>
    %c0_i32_170 = arith.constant 0 : i32
    %c0_i32_171 = arith.constant 0 : i32
    %227 = tpu.memref_slice %arg12[%c6_i32_166, %c0_i32_170, %c0_i32_171] : memref<14x128x1024xbf16, #tpu.memory_space<vmem>> -> memref<1x128x1024xbf16, #tpu.memory_space<vmem>>
    %228 = tpu.memref_squeeze %227 : memref<1x128x1024xbf16, #tpu.memory_space<vmem>> -> memref<128x1024xbf16, #tpu.memory_space<vmem>>
    %229 = tpu.memref_slice %arg14[%c6_i32_167] : memref<14x!tpu.dma_semaphore, #tpu.memory_space<semaphore_mem>> -> memref<1x!tpu.dma_semaphore, #tpu.memory_space<semaphore_mem>>
    %230 = tpu.memref_squeeze %229 : memref<1x!tpu.dma_semaphore, #tpu.memory_space<semaphore_mem>> -> memref<!tpu.dma_semaphore, #tpu.memory_space<semaphore_mem>>
    tpu.wait_dma2 semaphore(%230 : memref<!tpu.dma_semaphore, #tpu.memory_space<semaphore_mem>>) src(%226 : memref<128x1024xbf16, #tpu.memory_space<any>>) dst(%228 : memref<128x1024xbf16, #tpu.memory_space<vmem>>)
    %c6 = arith.constant 6 : index
    %c0_172 = arith.constant 0 : index
    %c0_173 = arith.constant 0 : index
    %231 = vector.load %arg12[%c6, %c0_172, %c0_173] : memref<14x128x1024xbf16, #tpu.memory_space<vmem>>, vector<1x128x1024xbf16>
    %232 = vector.shape_cast %231 : vector<1x128x1024xbf16> to vector<128x1024xbf16>
    %cst_174 = arith.constant dense<0.000000e+00> : vector<8x1024xf32>
    %233 = tpu.matmul %224, %232, %cst_174 {dimension_numbers = #tpu.dot_dimension_numbers<[1], [0], [0], [1], [0, 0, 1, 1], [], []>} : vector<8x128xbf16>, vector<128x1024xbf16>, vector<8x1024xf32> -> vector<8x1024xf32>
    %234 = arith.addf %215, %233 : vector<8x1024xf32>
    %235 = vector.extract_strided_slice %101 {offsets = [12, 0], sizes = [2, 128], strides = [1, 1]} : vector<24x256xf32> to vector<2x128xf32>
    %236 = vector.extract_strided_slice %101 {offsets = [14, 128], sizes = [2, 128], strides = [1, 1]} : vector<24x256xf32> to vector<2x128xf32>
    %237 = arith.addf %235, %236 : vector<2x128xf32>
    %238 = vector.broadcast %102 : vector<1x128xf32> to vector<2x128xf32>
    %239 = arith.addf %237, %238 : vector<2x128xf32>
    %cst_175 = arith.constant 0.000000e+00 : f32
    %240 = vector.broadcast %cst_175 : f32 to vector<2x128xf32>
    %241 = arith.maximumf %239, %240 : vector<2x128xf32>
    %242 = tpu.concatenate %241, %94 in 0 : vector<2x128xf32>, vector<6x128xf32> -> vector<8x128xf32>
    %243 = arith.truncf %242 : vector<8x128xf32> to vector<8x128xbf16>
    %c7_i32_176 = arith.constant 7 : i32
    %c7_i32_177 = arith.constant 7 : i32
    %c7_i32_178 = arith.constant 7 : i32
    %c0_i32_179 = arith.constant 0 : i32
    %c0_i32_180 = arith.constant 0 : i32
    %244 = tpu.memref_slice %arg9[%c7_i32_176, %c0_i32_179, %c0_i32_180] : memref<14x128x1024xbf16, #tpu.memory_space<any>> -> memref<1x128x1024xbf16, #tpu.memory_space<any>>
    %245 = tpu.memref_squeeze %244 : memref<1x128x1024xbf16, #tpu.memory_space<any>> -> memref<128x1024xbf16, #tpu.memory_space<any>>
    %c0_i32_181 = arith.constant 0 : i32
    %c0_i32_182 = arith.constant 0 : i32
    %246 = tpu.memref_slice %arg12[%c7_i32_177, %c0_i32_181, %c0_i32_182] : memref<14x128x1024xbf16, #tpu.memory_space<vmem>> -> memref<1x128x1024xbf16, #tpu.memory_space<vmem>>
    %247 = tpu.memref_squeeze %246 : memref<1x128x1024xbf16, #tpu.memory_space<vmem>> -> memref<128x1024xbf16, #tpu.memory_space<vmem>>
    %248 = tpu.memref_slice %arg14[%c7_i32_178] : memref<14x!tpu.dma_semaphore, #tpu.memory_space<semaphore_mem>> -> memref<1x!tpu.dma_semaphore, #tpu.memory_space<semaphore_mem>>
    %249 = tpu.memref_squeeze %248 : memref<1x!tpu.dma_semaphore, #tpu.memory_space<semaphore_mem>> -> memref<!tpu.dma_semaphore, #tpu.memory_space<semaphore_mem>>
    tpu.wait_dma2 semaphore(%249 : memref<!tpu.dma_semaphore, #tpu.memory_space<semaphore_mem>>) src(%245 : memref<128x1024xbf16, #tpu.memory_space<any>>) dst(%247 : memref<128x1024xbf16, #tpu.memory_space<vmem>>)
    %c7 = arith.constant 7 : index
    %c0_183 = arith.constant 0 : index
    %c0_184 = arith.constant 0 : index
    %250 = vector.load %arg12[%c7, %c0_183, %c0_184] : memref<14x128x1024xbf16, #tpu.memory_space<vmem>>, vector<1x128x1024xbf16>
    %251 = vector.shape_cast %250 : vector<1x128x1024xbf16> to vector<128x1024xbf16>
    %cst_185 = arith.constant dense<0.000000e+00> : vector<8x1024xf32>
    %252 = tpu.matmul %243, %251, %cst_185 {dimension_numbers = #tpu.dot_dimension_numbers<[1], [0], [0], [1], [0, 0, 1, 1], [], []>} : vector<8x128xbf16>, vector<128x1024xbf16>, vector<8x1024xf32> -> vector<8x1024xf32>
    %253 = arith.addf %234, %252 : vector<8x1024xf32>
    %254 = vector.extract_strided_slice %101 {offsets = [20, 0], sizes = [2, 128], strides = [1, 1]} : vector<24x256xf32> to vector<2x128xf32>
    %255 = vector.extract_strided_slice %101 {offsets = [22, 128], sizes = [2, 128], strides = [1, 1]} : vector<24x256xf32> to vector<2x128xf32>
    %256 = arith.addf %254, %255 : vector<2x128xf32>
    %257 = vector.broadcast %102 : vector<1x128xf32> to vector<2x128xf32>
    %258 = arith.addf %256, %257 : vector<2x128xf32>
    %cst_186 = arith.constant 0.000000e+00 : f32
    %259 = vector.broadcast %cst_186 : f32 to vector<2x128xf32>
    %260 = arith.maximumf %258, %259 : vector<2x128xf32>
    %261 = tpu.concatenate %260, %94 in 0 : vector<2x128xf32>, vector<6x128xf32> -> vector<8x128xf32>
    %262 = arith.truncf %261 : vector<8x128xf32> to vector<8x128xbf16>
    %c8_i32_187 = arith.constant 8 : i32
    %c8_i32_188 = arith.constant 8 : i32
    %c8_i32_189 = arith.constant 8 : i32
    %c0_i32_190 = arith.constant 0 : i32
    %c0_i32_191 = arith.constant 0 : i32
    %263 = tpu.memref_slice %arg9[%c8_i32_187, %c0_i32_190, %c0_i32_191] : memref<14x128x1024xbf16, #tpu.memory_space<any>> -> memref<1x128x1024xbf16, #tpu.memory_space<any>>
    %264 = tpu.memref_squeeze %263 : memref<1x128x1024xbf16, #tpu.memory_space<any>> -> memref<128x1024xbf16, #tpu.memory_space<any>>
    %c0_i32_192 = arith.constant 0 : i32
    %c0_i32_193 = arith.constant 0 : i32
    %265 = tpu.memref_slice %arg12[%c8_i32_188, %c0_i32_192, %c0_i32_193] : memref<14x128x1024xbf16, #tpu.memory_space<vmem>> -> memref<1x128x1024xbf16, #tpu.memory_space<vmem>>
    %266 = tpu.memref_squeeze %265 : memref<1x128x1024xbf16, #tpu.memory_space<vmem>> -> memref<128x1024xbf16, #tpu.memory_space<vmem>>
    %267 = tpu.memref_slice %arg14[%c8_i32_189] : memref<14x!tpu.dma_semaphore, #tpu.memory_space<semaphore_mem>> -> memref<1x!tpu.dma_semaphore, #tpu.memory_space<semaphore_mem>>
    %268 = tpu.memref_squeeze %267 : memref<1x!tpu.dma_semaphore, #tpu.memory_space<semaphore_mem>> -> memref<!tpu.dma_semaphore, #tpu.memory_space<semaphore_mem>>
    tpu.wait_dma2 semaphore(%268 : memref<!tpu.dma_semaphore, #tpu.memory_space<semaphore_mem>>) src(%264 : memref<128x1024xbf16, #tpu.memory_space<any>>) dst(%266 : memref<128x1024xbf16, #tpu.memory_space<vmem>>)
    %c8 = arith.constant 8 : index
    %c0_194 = arith.constant 0 : index
    %c0_195 = arith.constant 0 : index
    %269 = vector.load %arg12[%c8, %c0_194, %c0_195] : memref<14x128x1024xbf16, #tpu.memory_space<vmem>>, vector<1x128x1024xbf16>
    %270 = vector.shape_cast %269 : vector<1x128x1024xbf16> to vector<128x1024xbf16>
    %cst_196 = arith.constant dense<0.000000e+00> : vector<8x1024xf32>
    %271 = tpu.matmul %262, %270, %cst_196 {dimension_numbers = #tpu.dot_dimension_numbers<[1], [0], [0], [1], [0, 0, 1, 1], [], []>} : vector<8x128xbf16>, vector<128x1024xbf16>, vector<8x1024xf32> -> vector<8x1024xf32>
    %272 = arith.addf %253, %271 : vector<8x1024xf32>
    %273 = vector.extract_strided_slice %93 {offsets = [0, 768], sizes = [8, 256], strides = [1, 1]} : vector<8x1536xf32> to vector<8x256xf32>
    %274 = vector.extract_strided_slice %93 {offsets = [0, 1024], sizes = [8, 256], strides = [1, 1]} : vector<8x1536xf32> to vector<8x256xf32>
    %275 = tpu.concatenate %273, %274 in 0 : vector<8x256xf32>, vector<8x256xf32> -> vector<16x256xf32>
    %276 = arith.truncf %275 : vector<16x256xf32> to vector<16x256xbf16>
    %c0_197 = arith.constant 0 : index
    %c256 = arith.constant 256 : index
    %277 = vector.load %arg3[%c0_197, %c256] : memref<256x1152xbf16, #tpu.memory_space<vmem>>, vector<256x384xbf16>
    %cst_198 = arith.constant dense<0.000000e+00> : vector<16x384xf32>
    %278 = tpu.matmul %276, %277, %cst_198 {dimension_numbers = #tpu.dot_dimension_numbers<[1], [0], [0], [1], [0, 0, 1, 1], [], []>} : vector<16x256xbf16>, vector<256x384xbf16>, vector<16x384xf32> -> vector<16x384xf32>
    %c1_199 = arith.constant 1 : index
    %c0_200 = arith.constant 0 : index
    %279 = vector.load %arg4[%c1_199, %c0_200] : memref<3x128xf32, #tpu.memory_space<vmem>>, vector<1x128xf32>
    %280 = vector.extract_strided_slice %278 {offsets = [0, 0], sizes = [2, 128], strides = [1, 1]} : vector<16x384xf32> to vector<2x128xf32>
    %281 = vector.extract_strided_slice %278 {offsets = [2, 128], sizes = [2, 128], strides = [1, 1]} : vector<16x384xf32> to vector<2x128xf32>
    %282 = arith.addf %280, %281 : vector<2x128xf32>
    %283 = vector.extract_strided_slice %278 {offsets = [4, 256], sizes = [2, 128], strides = [1, 1]} : vector<16x384xf32> to vector<2x128xf32>
    %284 = arith.addf %282, %283 : vector<2x128xf32>
    %285 = vector.broadcast %279 : vector<1x128xf32> to vector<2x128xf32>
    %286 = arith.addf %284, %285 : vector<2x128xf32>
    %cst_201 = arith.constant 0.000000e+00 : f32
    %287 = vector.broadcast %cst_201 : f32 to vector<2x128xf32>
    %288 = arith.maximumf %286, %287 : vector<2x128xf32>
    %289 = tpu.concatenate %288, %94 in 0 : vector<2x128xf32>, vector<6x128xf32> -> vector<8x128xf32>
    %290 = arith.truncf %289 : vector<8x128xf32> to vector<8x128xbf16>
    %c9_i32_202 = arith.constant 9 : i32
    %c9_i32_203 = arith.constant 9 : i32
    %c9_i32_204 = arith.constant 9 : i32
    %c0_i32_205 = arith.constant 0 : i32
    %c0_i32_206 = arith.constant 0 : i32
    %291 = tpu.memref_slice %arg9[%c9_i32_202, %c0_i32_205, %c0_i32_206] : memref<14x128x1024xbf16, #tpu.memory_space<any>> -> memref<1x128x1024xbf16, #tpu.memory_space<any>>
    %292 = tpu.memref_squeeze %291 : memref<1x128x1024xbf16, #tpu.memory_space<any>> -> memref<128x1024xbf16, #tpu.memory_space<any>>
    %c0_i32_207 = arith.constant 0 : i32
    %c0_i32_208 = arith.constant 0 : i32
    %293 = tpu.memref_slice %arg12[%c9_i32_203, %c0_i32_207, %c0_i32_208] : memref<14x128x1024xbf16, #tpu.memory_space<vmem>> -> memref<1x128x1024xbf16, #tpu.memory_space<vmem>>
    %294 = tpu.memref_squeeze %293 : memref<1x128x1024xbf16, #tpu.memory_space<vmem>> -> memref<128x1024xbf16, #tpu.memory_space<vmem>>
    %295 = tpu.memref_slice %arg14[%c9_i32_204] : memref<14x!tpu.dma_semaphore, #tpu.memory_space<semaphore_mem>> -> memref<1x!tpu.dma_semaphore, #tpu.memory_space<semaphore_mem>>
    %296 = tpu.memref_squeeze %295 : memref<1x!tpu.dma_semaphore, #tpu.memory_space<semaphore_mem>> -> memref<!tpu.dma_semaphore, #tpu.memory_space<semaphore_mem>>
    tpu.wait_dma2 semaphore(%296 : memref<!tpu.dma_semaphore, #tpu.memory_space<semaphore_mem>>) src(%292 : memref<128x1024xbf16, #tpu.memory_space<any>>) dst(%294 : memref<128x1024xbf16, #tpu.memory_space<vmem>>)
    %c9 = arith.constant 9 : index
    %c0_209 = arith.constant 0 : index
    %c0_210 = arith.constant 0 : index
    %297 = vector.load %arg12[%c9, %c0_209, %c0_210] : memref<14x128x1024xbf16, #tpu.memory_space<vmem>>, vector<1x128x1024xbf16>
    %298 = vector.shape_cast %297 : vector<1x128x1024xbf16> to vector<128x1024xbf16>
    %cst_211 = arith.constant dense<0.000000e+00> : vector<8x1024xf32>
    %299 = tpu.matmul %290, %298, %cst_211 {dimension_numbers = #tpu.dot_dimension_numbers<[1], [0], [0], [1], [0, 0, 1, 1], [], []>} : vector<8x128xbf16>, vector<128x1024xbf16>, vector<8x1024xf32> -> vector<8x1024xf32>
    %300 = arith.addf %272, %299 : vector<8x1024xf32>
    %301 = vector.extract_strided_slice %278 {offsets = [8, 0], sizes = [2, 128], strides = [1, 1]} : vector<16x384xf32> to vector<2x128xf32>
    %302 = vector.extract_strided_slice %278 {offsets = [10, 128], sizes = [2, 128], strides = [1, 1]} : vector<16x384xf32> to vector<2x128xf32>
    %303 = arith.addf %301, %302 : vector<2x128xf32>
    %304 = vector.extract_strided_slice %278 {offsets = [12, 256], sizes = [2, 128], strides = [1, 1]} : vector<16x384xf32> to vector<2x128xf32>
    %305 = arith.addf %303, %304 : vector<2x128xf32>
    %306 = vector.broadcast %279 : vector<1x128xf32> to vector<2x128xf32>
    %307 = arith.addf %305, %306 : vector<2x128xf32>
    %cst_212 = arith.constant 0.000000e+00 : f32
    %308 = vector.broadcast %cst_212 : f32 to vector<2x128xf32>
    %309 = arith.maximumf %307, %308 : vector<2x128xf32>
    %310 = tpu.concatenate %309, %94 in 0 : vector<2x128xf32>, vector<6x128xf32> -> vector<8x128xf32>
    %311 = arith.truncf %310 : vector<8x128xf32> to vector<8x128xbf16>
    %c10_i32_213 = arith.constant 10 : i32
    %c10_i32_214 = arith.constant 10 : i32
    %c10_i32_215 = arith.constant 10 : i32
    %c0_i32_216 = arith.constant 0 : i32
    %c0_i32_217 = arith.constant 0 : i32
    %312 = tpu.memref_slice %arg9[%c10_i32_213, %c0_i32_216, %c0_i32_217] : memref<14x128x1024xbf16, #tpu.memory_space<any>> -> memref<1x128x1024xbf16, #tpu.memory_space<any>>
    %313 = tpu.memref_squeeze %312 : memref<1x128x1024xbf16, #tpu.memory_space<any>> -> memref<128x1024xbf16, #tpu.memory_space<any>>
    %c0_i32_218 = arith.constant 0 : i32
    %c0_i32_219 = arith.constant 0 : i32
    %314 = tpu.memref_slice %arg12[%c10_i32_214, %c0_i32_218, %c0_i32_219] : memref<14x128x1024xbf16, #tpu.memory_space<vmem>> -> memref<1x128x1024xbf16, #tpu.memory_space<vmem>>
    %315 = tpu.memref_squeeze %314 : memref<1x128x1024xbf16, #tpu.memory_space<vmem>> -> memref<128x1024xbf16, #tpu.memory_space<vmem>>
    %316 = tpu.memref_slice %arg14[%c10_i32_215] : memref<14x!tpu.dma_semaphore, #tpu.memory_space<semaphore_mem>> -> memref<1x!tpu.dma_semaphore, #tpu.memory_space<semaphore_mem>>
    %317 = tpu.memref_squeeze %316 : memref<1x!tpu.dma_semaphore, #tpu.memory_space<semaphore_mem>> -> memref<!tpu.dma_semaphore, #tpu.memory_space<semaphore_mem>>
    tpu.wait_dma2 semaphore(%317 : memref<!tpu.dma_semaphore, #tpu.memory_space<semaphore_mem>>) src(%313 : memref<128x1024xbf16, #tpu.memory_space<any>>) dst(%315 : memref<128x1024xbf16, #tpu.memory_space<vmem>>)
    %c10 = arith.constant 10 : index
    %c0_220 = arith.constant 0 : index
    %c0_221 = arith.constant 0 : index
    %318 = vector.load %arg12[%c10, %c0_220, %c0_221] : memref<14x128x1024xbf16, #tpu.memory_space<vmem>>, vector<1x128x1024xbf16>
    %319 = vector.shape_cast %318 : vector<1x128x1024xbf16> to vector<128x1024xbf16>
    %cst_222 = arith.constant dense<0.000000e+00> : vector<8x1024xf32>
    %320 = tpu.matmul %311, %319, %cst_222 {dimension_numbers = #tpu.dot_dimension_numbers<[1], [0], [0], [1], [0, 0, 1, 1], [], []>} : vector<8x128xbf16>, vector<128x1024xbf16>, vector<8x1024xf32> -> vector<8x1024xf32>
    %321 = arith.addf %300, %320 : vector<8x1024xf32>
    %322 = vector.extract_strided_slice %278 {offsets = [2, 0], sizes = [2, 128], strides = [1, 1]} : vector<16x384xf32> to vector<2x128xf32>
    %323 = vector.extract_strided_slice %278 {offsets = [4, 128], sizes = [2, 128], strides = [1, 1]} : vector<16x384xf32> to vector<2x128xf32>
    %324 = arith.addf %322, %323 : vector<2x128xf32>
    %325 = vector.extract_strided_slice %278 {offsets = [6, 256], sizes = [2, 128], strides = [1, 1]} : vector<16x384xf32> to vector<2x128xf32>
    %326 = arith.addf %324, %325 : vector<2x128xf32>
    %327 = vector.broadcast %279 : vector<1x128xf32> to vector<2x128xf32>
    %328 = arith.addf %326, %327 : vector<2x128xf32>
    %cst_223 = arith.constant 0.000000e+00 : f32
    %329 = vector.broadcast %cst_223 : f32 to vector<2x128xf32>
    %330 = arith.maximumf %328, %329 : vector<2x128xf32>
    %331 = tpu.concatenate %330, %94 in 0 : vector<2x128xf32>, vector<6x128xf32> -> vector<8x128xf32>
    %332 = arith.truncf %331 : vector<8x128xf32> to vector<8x128xbf16>
    %c11_i32_224 = arith.constant 11 : i32
    %c11_i32_225 = arith.constant 11 : i32
    %c11_i32_226 = arith.constant 11 : i32
    %c0_i32_227 = arith.constant 0 : i32
    %c0_i32_228 = arith.constant 0 : i32
    %333 = tpu.memref_slice %arg9[%c11_i32_224, %c0_i32_227, %c0_i32_228] : memref<14x128x1024xbf16, #tpu.memory_space<any>> -> memref<1x128x1024xbf16, #tpu.memory_space<any>>
    %334 = tpu.memref_squeeze %333 : memref<1x128x1024xbf16, #tpu.memory_space<any>> -> memref<128x1024xbf16, #tpu.memory_space<any>>
    %c0_i32_229 = arith.constant 0 : i32
    %c0_i32_230 = arith.constant 0 : i32
    %335 = tpu.memref_slice %arg12[%c11_i32_225, %c0_i32_229, %c0_i32_230] : memref<14x128x1024xbf16, #tpu.memory_space<vmem>> -> memref<1x128x1024xbf16, #tpu.memory_space<vmem>>
    %336 = tpu.memref_squeeze %335 : memref<1x128x1024xbf16, #tpu.memory_space<vmem>> -> memref<128x1024xbf16, #tpu.memory_space<vmem>>
    %337 = tpu.memref_slice %arg14[%c11_i32_226] : memref<14x!tpu.dma_semaphore, #tpu.memory_space<semaphore_mem>> -> memref<1x!tpu.dma_semaphore, #tpu.memory_space<semaphore_mem>>
    %338 = tpu.memref_squeeze %337 : memref<1x!tpu.dma_semaphore, #tpu.memory_space<semaphore_mem>> -> memref<!tpu.dma_semaphore, #tpu.memory_space<semaphore_mem>>
    tpu.wait_dma2 semaphore(%338 : memref<!tpu.dma_semaphore, #tpu.memory_space<semaphore_mem>>) src(%334 : memref<128x1024xbf16, #tpu.memory_space<any>>) dst(%336 : memref<128x1024xbf16, #tpu.memory_space<vmem>>)
    %c11 = arith.constant 11 : index
    %c0_231 = arith.constant 0 : index
    %c0_232 = arith.constant 0 : index
    %339 = vector.load %arg12[%c11, %c0_231, %c0_232] : memref<14x128x1024xbf16, #tpu.memory_space<vmem>>, vector<1x128x1024xbf16>
    %340 = vector.shape_cast %339 : vector<1x128x1024xbf16> to vector<128x1024xbf16>
    %cst_233 = arith.constant dense<0.000000e+00> : vector<8x1024xf32>
    %341 = tpu.matmul %332, %340, %cst_233 {dimension_numbers = #tpu.dot_dimension_numbers<[1], [0], [0], [1], [0, 0, 1, 1], [], []>} : vector<8x128xbf16>, vector<128x1024xbf16>, vector<8x1024xf32> -> vector<8x1024xf32>
    %342 = arith.addf %321, %341 : vector<8x1024xf32>
    %343 = vector.extract_strided_slice %278 {offsets = [10, 0], sizes = [2, 128], strides = [1, 1]} : vector<16x384xf32> to vector<2x128xf32>
    %344 = vector.extract_strided_slice %278 {offsets = [12, 128], sizes = [2, 128], strides = [1, 1]} : vector<16x384xf32> to vector<2x128xf32>
    %345 = arith.addf %343, %344 : vector<2x128xf32>
    %346 = vector.extract_strided_slice %278 {offsets = [14, 256], sizes = [2, 128], strides = [1, 1]} : vector<16x384xf32> to vector<2x128xf32>
    %347 = arith.addf %345, %346 : vector<2x128xf32>
    %348 = vector.broadcast %279 : vector<1x128xf32> to vector<2x128xf32>
    %349 = arith.addf %347, %348 : vector<2x128xf32>
    %cst_234 = arith.constant 0.000000e+00 : f32
    %350 = vector.broadcast %cst_234 : f32 to vector<2x128xf32>
    %351 = arith.maximumf %349, %350 : vector<2x128xf32>
    %352 = tpu.concatenate %351, %94 in 0 : vector<2x128xf32>, vector<6x128xf32> -> vector<8x128xf32>
    %353 = arith.truncf %352 : vector<8x128xf32> to vector<8x128xbf16>
    %c12_i32_235 = arith.constant 12 : i32
    %c12_i32_236 = arith.constant 12 : i32
    %c12_i32_237 = arith.constant 12 : i32
    %c0_i32_238 = arith.constant 0 : i32
    %c0_i32_239 = arith.constant 0 : i32
    %354 = tpu.memref_slice %arg9[%c12_i32_235, %c0_i32_238, %c0_i32_239] : memref<14x128x1024xbf16, #tpu.memory_space<any>> -> memref<1x128x1024xbf16, #tpu.memory_space<any>>
    %355 = tpu.memref_squeeze %354 : memref<1x128x1024xbf16, #tpu.memory_space<any>> -> memref<128x1024xbf16, #tpu.memory_space<any>>
    %c0_i32_240 = arith.constant 0 : i32
    %c0_i32_241 = arith.constant 0 : i32
    %356 = tpu.memref_slice %arg12[%c12_i32_236, %c0_i32_240, %c0_i32_241] : memref<14x128x1024xbf16, #tpu.memory_space<vmem>> -> memref<1x128x1024xbf16, #tpu.memory_space<vmem>>
    %357 = tpu.memref_squeeze %356 : memref<1x128x1024xbf16, #tpu.memory_space<vmem>> -> memref<128x1024xbf16, #tpu.memory_space<vmem>>
    %358 = tpu.memref_slice %arg14[%c12_i32_237] : memref<14x!tpu.dma_semaphore, #tpu.memory_space<semaphore_mem>> -> memref<1x!tpu.dma_semaphore, #tpu.memory_space<semaphore_mem>>
    %359 = tpu.memref_squeeze %358 : memref<1x!tpu.dma_semaphore, #tpu.memory_space<semaphore_mem>> -> memref<!tpu.dma_semaphore, #tpu.memory_space<semaphore_mem>>
    tpu.wait_dma2 semaphore(%359 : memref<!tpu.dma_semaphore, #tpu.memory_space<semaphore_mem>>) src(%355 : memref<128x1024xbf16, #tpu.memory_space<any>>) dst(%357 : memref<128x1024xbf16, #tpu.memory_space<vmem>>)
    %c12 = arith.constant 12 : index
    %c0_242 = arith.constant 0 : index
    %c0_243 = arith.constant 0 : index
    %360 = vector.load %arg12[%c12, %c0_242, %c0_243] : memref<14x128x1024xbf16, #tpu.memory_space<vmem>>, vector<1x128x1024xbf16>
    %361 = vector.shape_cast %360 : vector<1x128x1024xbf16> to vector<128x1024xbf16>
    %cst_244 = arith.constant dense<0.000000e+00> : vector<8x1024xf32>
    %362 = tpu.matmul %353, %361, %cst_244 {dimension_numbers = #tpu.dot_dimension_numbers<[1], [0], [0], [1], [0, 0, 1, 1], [], []>} : vector<8x128xbf16>, vector<128x1024xbf16>, vector<8x1024xf32> -> vector<8x1024xf32>
    %363 = arith.addf %342, %362 : vector<8x1024xf32>
    %364 = vector.extract_strided_slice %93 {offsets = [0, 1280], sizes = [8, 256], strides = [1, 1]} : vector<8x1536xf32> to vector<8x256xf32>
    %365 = arith.truncf %364 : vector<8x256xf32> to vector<8x256xbf16>
    %c0_245 = arith.constant 0 : index
    %c640 = arith.constant 640 : index
    %366 = vector.load %arg3[%c0_245, %c640] : memref<256x1152xbf16, #tpu.memory_space<vmem>>, vector<256x512xbf16>
    %cst_246 = arith.constant dense<0.000000e+00> : vector<8x512xf32>
    %367 = tpu.matmul %365, %366, %cst_246 {dimension_numbers = #tpu.dot_dimension_numbers<[1], [0], [0], [1], [0, 0, 1, 1], [], []>} : vector<8x256xbf16>, vector<256x512xbf16>, vector<8x512xf32> -> vector<8x512xf32>
    %c2_247 = arith.constant 2 : index
    %c0_248 = arith.constant 0 : index
    %368 = vector.load %arg4[%c2_247, %c0_248] : memref<3x128xf32, #tpu.memory_space<vmem>>, vector<1x128xf32>
    %369 = vector.extract_strided_slice %367 {offsets = [0, 0], sizes = [2, 128], strides = [1, 1]} : vector<8x512xf32> to vector<2x128xf32>
    %370 = vector.extract_strided_slice %367 {offsets = [2, 128], sizes = [2, 128], strides = [1, 1]} : vector<8x512xf32> to vector<2x128xf32>
    %371 = arith.addf %369, %370 : vector<2x128xf32>
    %372 = vector.extract_strided_slice %367 {offsets = [4, 256], sizes = [2, 128], strides = [1, 1]} : vector<8x512xf32> to vector<2x128xf32>
    %373 = arith.addf %371, %372 : vector<2x128xf32>
    %374 = vector.extract_strided_slice %367 {offsets = [6, 384], sizes = [2, 128], strides = [1, 1]} : vector<8x512xf32> to vector<2x128xf32>
    %375 = arith.addf %373, %374 : vector<2x128xf32>
    %376 = vector.broadcast %368 : vector<1x128xf32> to vector<2x128xf32>
    %377 = arith.addf %375, %376 : vector<2x128xf32>
    %cst_249 = arith.constant 0.000000e+00 : f32
    %378 = vector.broadcast %cst_249 : f32 to vector<2x128xf32>
    %379 = arith.maximumf %377, %378 : vector<2x128xf32>
    %380 = tpu.concatenate %379, %94 in 0 : vector<2x128xf32>, vector<6x128xf32> -> vector<8x128xf32>
    %381 = arith.truncf %380 : vector<8x128xf32> to vector<8x128xbf16>
    %c13_i32_250 = arith.constant 13 : i32
    %c13_i32_251 = arith.constant 13 : i32
    %c13_i32_252 = arith.constant 13 : i32
    %c0_i32_253 = arith.constant 0 : i32
    %c0_i32_254 = arith.constant 0 : i32
    %382 = tpu.memref_slice %arg9[%c13_i32_250, %c0_i32_253, %c0_i32_254] : memref<14x128x1024xbf16, #tpu.memory_space<any>> -> memref<1x128x1024xbf16, #tpu.memory_space<any>>
    %383 = tpu.memref_squeeze %382 : memref<1x128x1024xbf16, #tpu.memory_space<any>> -> memref<128x1024xbf16, #tpu.memory_space<any>>
    %c0_i32_255 = arith.constant 0 : i32
    %c0_i32_256 = arith.constant 0 : i32
    %384 = tpu.memref_slice %arg12[%c13_i32_251, %c0_i32_255, %c0_i32_256] : memref<14x128x1024xbf16, #tpu.memory_space<vmem>> -> memref<1x128x1024xbf16, #tpu.memory_space<vmem>>
    %385 = tpu.memref_squeeze %384 : memref<1x128x1024xbf16, #tpu.memory_space<vmem>> -> memref<128x1024xbf16, #tpu.memory_space<vmem>>
    %386 = tpu.memref_slice %arg14[%c13_i32_252] : memref<14x!tpu.dma_semaphore, #tpu.memory_space<semaphore_mem>> -> memref<1x!tpu.dma_semaphore, #tpu.memory_space<semaphore_mem>>
    %387 = tpu.memref_squeeze %386 : memref<1x!tpu.dma_semaphore, #tpu.memory_space<semaphore_mem>> -> memref<!tpu.dma_semaphore, #tpu.memory_space<semaphore_mem>>
    tpu.wait_dma2 semaphore(%387 : memref<!tpu.dma_semaphore, #tpu.memory_space<semaphore_mem>>) src(%383 : memref<128x1024xbf16, #tpu.memory_space<any>>) dst(%385 : memref<128x1024xbf16, #tpu.memory_space<vmem>>)
    %c13 = arith.constant 13 : index
    %c0_257 = arith.constant 0 : index
    %c0_258 = arith.constant 0 : index
    %388 = vector.load %arg12[%c13, %c0_257, %c0_258] : memref<14x128x1024xbf16, #tpu.memory_space<vmem>>, vector<1x128x1024xbf16>
    %389 = vector.shape_cast %388 : vector<1x128x1024xbf16> to vector<128x1024xbf16>
    %cst_259 = arith.constant dense<0.000000e+00> : vector<8x1024xf32>
    %390 = tpu.matmul %381, %389, %cst_259 {dimension_numbers = #tpu.dot_dimension_numbers<[1], [0], [0], [1], [0, 0, 1, 1], [], []>} : vector<8x128xbf16>, vector<128x1024xbf16>, vector<8x1024xf32> -> vector<8x1024xf32>
    %391 = arith.addf %363, %390 : vector<8x1024xf32>
    %c0_260 = arith.constant 0 : index
    %c0_261 = arith.constant 0 : index
    %392 = vector.load %arg5[%c0_260, %c0_261] : memref<1x1024xf32, #tpu.memory_space<vmem>>, vector<1x1024xf32>
    %393 = vector.broadcast %392 : vector<1x1024xf32> to vector<8x1024xf32>
    %394 = arith.addf %391, %393 : vector<8x1024xf32>
    %cst_262 = arith.constant 0.000000e+00 : f32
    %395 = vector.broadcast %cst_262 : f32 to vector<8x1024xf32>
    %396 = arith.maximumf %394, %395 : vector<8x1024xf32>
    %c0_i32_263 = arith.constant 0 : i32
    %397 = tpu.memref_slice %arg15[%c0_i32_263] : memref<1x!tpu.dma_semaphore, #tpu.memory_space<semaphore_mem>> -> memref<1x!tpu.dma_semaphore, #tpu.memory_space<semaphore_mem>>
    %398 = tpu.memref_squeeze %397 : memref<1x!tpu.dma_semaphore, #tpu.memory_space<semaphore_mem>> -> memref<!tpu.dma_semaphore, #tpu.memory_space<semaphore_mem>>
    tpu.wait_dma2 semaphore(%398 : memref<!tpu.dma_semaphore, #tpu.memory_space<semaphore_mem>>) src(%arg10 : memref<1024x128xbf16, #tpu.memory_space<any>>) dst(%arg13 : memref<1024x128xbf16, #tpu.memory_space<vmem>>)
    %399 = arith.truncf %396 : vector<8x1024xf32> to vector<8x1024xbf16>
    %c0_264 = arith.constant 0 : index
    %c0_265 = arith.constant 0 : index
    %400 = vector.load %arg13[%c0_264, %c0_265] : memref<1024x128xbf16, #tpu.memory_space<vmem>>, vector<1024x128xbf16>
    %cst_266 = arith.constant dense<0.000000e+00> : vector<8x128xf32>
    %401 = tpu.matmul %399, %400, %cst_266 {dimension_numbers = #tpu.dot_dimension_numbers<[1], [0], [0], [1], [0, 0, 1, 1], [], []>} : vector<8x1024xbf16>, vector<1024x128xbf16>, vector<8x128xf32> -> vector<8x128xf32>
    %c0_267 = arith.constant 0 : index
    %c0_268 = arith.constant 0 : index
    %402 = vector.load %arg6[%c0_267, %c0_268] : memref<1x128xf32, #tpu.memory_space<vmem>>, vector<1x128xf32>
    %403 = vector.broadcast %402 : vector<1x128xf32> to vector<8x128xf32>
    %404 = arith.addf %401, %403 : vector<8x128xf32>
    %cst_269 = arith.constant 0.000000e+00 : f32
    %405 = vector.broadcast %cst_269 : f32 to vector<8x128xf32>
    %406 = arith.maximumf %404, %405 : vector<8x128xf32>
    %407 = arith.truncf %406 : vector<8x128xf32> to vector<8x128xbf16>
    %c0_270 = arith.constant 0 : index
    %c0_271 = arith.constant 0 : index
    %408 = vector.load %arg7[%c0_270, %c0_271] : memref<128x128xbf16, #tpu.memory_space<vmem>>, vector<128x128xbf16>
    %cst_272 = arith.constant dense<0.000000e+00> : vector<8x128xf32>
    %409 = tpu.matmul %407, %408, %cst_272 {dimension_numbers = #tpu.dot_dimension_numbers<[1], [0], [0], [1], [0, 0, 1, 1], [], []>} : vector<8x128xbf16>, vector<128x128xbf16>, vector<8x128xf32> -> vector<8x128xf32>
    %c0_273 = arith.constant 0 : index
    %c0_274 = arith.constant 0 : index
    %410 = vector.load %arg8[%c0_273, %c0_274] : memref<1x128xf32, #tpu.memory_space<vmem>>, vector<1x128xf32>
    %411 = vector.broadcast %410 : vector<1x128xf32> to vector<8x128xf32>
    %412 = arith.addf %409, %411 : vector<8x128xf32>
    %c0_275 = arith.constant 0 : index
    %c0_276 = arith.constant 0 : index
    %413 = vector.load %arg11[%c0_275, %c0_276] : memref<8x128xf32, #tpu.memory_space<vmem>>, vector<8x128xf32>
    tpu.vector_store %arg11[%c0_275, %c0_276], %412 {strides = array<i32>} : memref<8x128xf32, #tpu.memory_space<vmem>>, vector<8x128xf32>,
    return
  }
}

</mosaic_0001>

<llo_original>
// kernel: convnet_forward.1
$region0: #{convnet_forward.1}
  #allocation0 [shape = 'u32[]', space=smem, size = 0x4, offset = 0x4, fixed_abs, tag = 'smem constant byte address 0x4 - core index']
  #allocation1 [shape = 'u32[144,128]{1,0:T(1,128)}', space=vmem, size = 0x12000, scoped, tag = 'internal scratch']
  #allocation2 [shape = 'bf16[14,128,1024]{2,1,0:T(16,128)(2,1)}', space=vmem, size = 0x380000, scoped, tag = 'scratch operand']
  #allocation3 [shape = 'bf16[1024,128]{1,0:T(16,128)(2,1)}', space=vmem, size = 0x40000, scoped, tag = 'scratch operand']
  #allocation4 [shape = 's32[14]{0}', space=sflag, size = 0x38, scoped, tag = 'scratch operand']
  #allocation5 [shape = 's32[1]{0}', space=sflag, size = 0x4, scoped, tag = 'scratch operand']
  #allocation19 [shape = 's32[]', space=sflag, size = 0x4, offset = 0, fixed_abs, tag = 'sflag constant byte address 0x0 - dummy sync flag']
  #allocation21 [shape = 's32[]', space=sflag, size = 0x4, offset = 0, fixed_abs, tag = 'sflag constant byte address 0x0 - dummy sync flag']
  #allocation23 [shape = 's32[]', space=sflag, size = 0x4, offset = 0, fixed_abs, tag = 'sflag constant byte address 0x0 - dummy sync flag']
  #allocation25 [shape = 's32[]', space=sflag, size = 0x4, offset = 0, fixed_abs, tag = 'sflag constant byte address 0x0 - dummy sync flag']
  #allocation27 [shape = 's32[]', space=sflag, size = 0x4, offset = 0, fixed_abs, tag = 'sflag constant byte address 0x0 - dummy sync flag']
  #allocation29 [shape = 's32[]', space=sflag, size = 0x4, offset = 0, fixed_abs, tag = 'sflag constant byte address 0x0 - dummy sync flag']
  #allocation31 [shape = 's32[]', space=sflag, size = 0x4, offset = 0, fixed_abs, tag = 'sflag constant byte address 0x0 - dummy sync flag']
  #allocation33 [shape = 's32[]', space=sflag, size = 0x4, offset = 0, fixed_abs, tag = 'sflag constant byte address 0x0 - dummy sync flag']
  #allocation35 [shape = 's32[]', space=sflag, size = 0x4, offset = 0, fixed_abs, tag = 'sflag constant byte address 0x0 - dummy sync flag']
  #allocation37 [shape = 's32[]', space=sflag, size = 0x4, offset = 0, fixed_abs, tag = 'sflag constant byte address 0x0 - dummy sync flag']
  #allocation39 [shape = 's32[]', space=sflag, size = 0x4, offset = 0, fixed_abs, tag = 'sflag constant byte address 0x0 - dummy sync flag']
  #allocation41 [shape = 's32[]', space=sflag, size = 0x4, offset = 0, fixed_abs, tag = 'sflag constant byte address 0x0 - dummy sync flag']
  #allocation43 [shape = 's32[]', space=sflag, size = 0x4, offset = 0, fixed_abs, tag = 'sflag constant byte address 0x0 - dummy sync flag']
  #allocation45 [shape = 's32[]', space=sflag, size = 0x4, offset = 0, fixed_abs, tag = 'sflag constant byte address 0x0 - dummy sync flag']
  #allocation47 [shape = 's32[]', space=sflag, size = 0x4, offset = 0, fixed_abs, tag = 'sflag constant byte address 0x0 - dummy sync flag']
  #allocation48 [shape = 's32[]', space=sflag, size = 0x4, offset = 0, fixed_abs, tag = 'sflag constant byte address 0x0 - dummy sync flag']
  #allocation49 [shape = 'u32[]', space=smem, size = 0x4, offset = 0x44, fixed_abs, tag = 'smem constant byte address 0x44 - assertion arg 0']
  #allocation50 [shape = 'u32[]', space=smem, size = 0x4, offset = 0x48, fixed_abs, tag = 'smem constant byte address 0x48 - assertion arg 1']
  %s0 = inlined_call_operand.vmem [shape: bf16[8,64], index: 0, kind: input, shape index: {}]
  %s1 = inlined_call_operand.hbm [shape: bf16[64,1536], index: 1, kind: input, shape index: {}]
  %s2 = inlined_call_operand.hbm [shape: f32[1,1536], index: 2, kind: input, shape index: {}]
  %s3 = inlined_call_operand.hbm [shape: bf16[256,1152], index: 3, kind: input, shape index: {}]
  %s4 = inlined_call_operand.hbm [shape: f32[3,128], index: 4, kind: input, shape index: {}]
  %s5 = inlined_call_operand.hbm [shape: f32[1,1024], index: 5, kind: input, shape index: {}]
  %s6 = inlined_call_operand.hbm [shape: f32[1,128], index: 6, kind: input, shape index: {}]
  %s7 = inlined_call_operand.hbm [shape: bf16[128,128], index: 7, kind: input, shape index: {}]
  %s8 = inlined_call_operand.hbm [shape: f32[1,128], index: 8, kind: input, shape index: {}]
  %s9 = inlined_call_operand.hbm [shape: bf16[14,128,1024], index: 9, kind: input, shape index: {}]
  %s10 = inlined_call_operand.hbm [shape: bf16[1024,128], index: 10, kind: input, shape index: {}]
  %s11 = inlined_call_operand.vmem [shape: f32[8,128], index: 11, kind: output, shape index: {}]
  %s12 = sld [smem:[#allocation0]]
  $region82: #{convnet_forward.1} parent=0
    _
  %s14 = ssub.s32 1, %s12
  %s15 = scalar_select 0, %s14, %s12
  $region1: #{convnet_forward.1} parent=0
    #allocation6 [shape = 'u8[196608]{0}', space=vmem, size = 0x30000, scoped, tag = 'input window, operand 1, single buffered']
    #allocation7 [shape = 's32[1]{0}', space=sflag, size = 0x4, scoped, tag = 'scoped memory for convnet_forward.1']
    #allocation8 [shape = 'u8[6144]{0}', space=vmem, size = 0x1800, scoped, tag = 'input window, operand 2, single buffered']
    #allocation9 [shape = 's32[1]{0}', space=sflag, size = 0x4, scoped, tag = 'scoped memory for convnet_forward.1']
    #allocation10 [shape = 'u8[589824]{0}', space=vmem, size = 0x90000, scoped, tag = 'input window, operand 3, single buffered']
    #allocation11 [shape = 'u8[2048]{0}', space=vmem, size = 0x800, scoped, tag = 'input window, operand 4, single buffered']
    #allocation12 [shape = 's32[1]{0}', space=sflag, size = 0x4, scoped, tag = 'scoped memory for convnet_forward.1']
    #allocation13 [shape = 'u8[4096]{0}', space=vmem, size = 0x1000, scoped, tag = 'input window, operand 5, single buffered']
    #allocation14 [shape = 'u8[512]{0}', space=vmem, size = 0x400, scoped, tag = 'input window, operand 6, single buffered']
    #allocation15 [shape = 's32[1]{0}', space=sflag, size = 0x4, scoped, tag = 'scoped memory for convnet_forward.1']
    #allocation16 [shape = 'u8[32768]{0}', space=vmem, size = 0x8000, scoped, tag = 'input window, operand 7, single buffered']
    #allocation17 [shape = 'u8[512]{0}', space=vmem, size = 0x400, scoped, tag = 'input window, operand 8, single buffered']
    #allocation18 [shape = 's32[1]{0}', space=sflag, size = 0x4, scoped, tag = 'scoped memory for convnet_forward.1']
    #allocation20 [shape = 'u32[9]{0}', space=smem, size = 0x24, scoped, tag = 'DMA stride descriptor']
    #allocation22 [shape = 'u32[9]{0}', space=smem, size = 0x24, scoped, tag = 'DMA stride descriptor']
    #allocation24 [shape = 'u32[9]{0}', space=smem, size = 0x24, scoped, tag = 'DMA stride descriptor']
    #allocation26 [shape = 'u32[9]{0}', space=smem, size = 0x24, scoped, tag = 'DMA stride descriptor']
    #allocation28 [shape = 'u32[9]{0}', space=smem, size = 0x24, scoped, tag = 'DMA stride descriptor']
    #allocation30 [shape = 'u32[9]{0}', space=smem, size = 0x24, scoped, tag = 'DMA stride descriptor']
    #allocation32 [shape = 'u32[9]{0}', space=smem, size = 0x24, scoped, tag = 'DMA stride descriptor']
    #allocation34 [shape = 'u32[9]{0}', space=smem, size = 0x24, scoped, tag = 'DMA stride descriptor']
    #allocation36 [shape = 'u32[9]{0}', space=smem, size = 0x24, scoped, tag = 'DMA stride descriptor']
    #allocation38 [shape = 'u32[9]{0}', space=smem, size = 0x24, scoped, tag = 'DMA stride descriptor']
    #allocation40 [shape = 'u32[9]{0}', space=smem, size = 0x24, scoped, tag = 'DMA stride descriptor']
    #allocation42 [shape = 'u32[9]{0}', space=smem, size = 0x24, scoped, tag = 'DMA stride descriptor']
    #allocation44 [shape = 'u32[9]{0}', space=smem, size = 0x24, scoped, tag = 'DMA stride descriptor']
    #allocation46 [shape = 'u32[9]{0}', space=smem, size = 0x24, scoped, tag = 'DMA stride descriptor']
    %16 = vsyncpa [#allocation7], 0
    %17 = vsyncpa [#allocation9], 0
    %18 = vsyncpa [#allocation12], 0
    %19 = vsyncpa [#allocation15], 0
    %20 = vsyncpa [#allocation18], 0
    // Predicated region
    $region2: #{convnet_forward.1} parent=1 // pred_check
      _
    $region3: #{convnet_forward.1} parent=1 // pred_check_branch
      %22 = sbr.rel (0) target = $region5
    $region4: #{convnet_forward.1} parent=1 // pred_region
      _
    $region5: #{convnet_forward.1} parent=1 // pred_fallthru
      _
    // Predicated region
    $region6: #{convnet_forward.1} parent=1 // pred_check
      _
    $region7: #{convnet_forward.1} parent=1 // pred_check_branch
      %24 = sbr.rel (0) target = $region9
    $region8: #{convnet_forward.1} parent=1 // pred_region
      %s26 = ssub.s32 6144, 6144
      %27 = vsyncadd [#allocation7], %s26
      %s28 = sshll.u32 [#allocation6], 4
      %s29 = int_to_ptr.vmem [resolvable:$true] %s28
      %34 = dma.hbm_to_vmem [thread:$0]  %s1, 6144, %s29, [#allocation7], 768, 768, 48
    $region9: #{convnet_forward.1} parent=1 // pred_fallthru
      _
    // Predicated region
    $region10: #{convnet_forward.1} parent=1 // pred_check
      _
    $region11: #{convnet_forward.1} parent=1 // pred_check_branch
      %36 = sbr.rel (0) target = $region13
    $region12: #{convnet_forward.1} parent=1 // pred_region
      %s38 = ssub.s32 192, 192
      %39 = vsyncadd [#allocation9], %s38
      %s41 = sshll.u32 [#allocation8], 4
      %s42 = int_to_ptr.vmem [resolvable:$true] %s41
      %44 = dma.hbm_to_vmem [thread:$0]  %s2, 192, %s42, [#allocation9]
    $region13: #{convnet_forward.1} parent=1 // pred_fallthru
      _
    // Predicated region
    $region14: #{convnet_forward.1} parent=1 // pred_check
      _
    $region15: #{convnet_forward.1} parent=1 // pred_check_branch
      %46 = sbr.rel (0) target = $region17
    $region16: #{convnet_forward.1} parent=1 // pred_region
      %s48 = ssub.s32 18432, 18432
      %49 = vsyncadd [#allocation9], %s48
      %s50 = sshll.u32 [#allocation10], 4
      %s51 = int_to_ptr.vmem [resolvable:$true] %s50
      %56 = dma.hbm_to_vmem [thread:$0]  %s3, 18432, %s51, [#allocation9], 576, 576, 36
    $region17: #{convnet_forward.1} parent=1 // pred_fallthru
      _
    // Predicated region
    $region18: #{convnet_forward.1} parent=1 // pred_check
      _
    $region19: #{convnet_forward.1} parent=1 // pred_check_branch
      %58 = sbr.rel (0) target = $region21
    $region20: #{convnet_forward.1} parent=1 // pred_region
      %s60 = ssub.s32 64, 64
      %61 = vsyncadd [#allocation12], %s60
      %s63 = sshll.u32 [#allocation11], 4
      %s64 = int_to_ptr.vmem [resolvable:$true] %s63
      %66 = dma.hbm_to_vmem [thread:$0]  %s4, 64, %s64, [#allocation12]
    $region21: #{convnet_forward.1} parent=1 // pred_fallthru
      _
    // Predicated region
    $region22: #{convnet_forward.1} parent=1 // pred_check
      _
    $region23: #{convnet_forward.1} parent=1 // pred_check_branch
      %68 = sbr.rel (0) target = $region25
    $region24: #{convnet_forward.1} parent=1 // pred_region
      %s70 = ssub.s32 128, 128
      %71 = vsyncadd [#allocation12], %s70
      %s73 = sshll.u32 [#allocation13], 4
      %s74 = int_to_ptr.vmem [resolvable:$true] %s73
      %76 = dma.hbm_to_vmem [thread:$0]  %s5, 128, %s74, [#allocation12]
    $region25: #{convnet_forward.1} parent=1 // pred_fallthru
      _
    // Predicated region
    $region26: #{convnet_forward.1} parent=1 // pred_check
      _
    $region27: #{convnet_forward.1} parent=1 // pred_check_branch
      %78 = sbr.rel (0) target = $region29
    $region28: #{convnet_forward.1} parent=1 // pred_region
      %s80 = ssub.s32 16, 16
      %81 = vsyncadd [#allocation15], %s80
      %s83 = sshll.u32 [#allocation14], 4
      %s84 = int_to_ptr.vmem [resolvable:$true] %s83
      %86 = dma.hbm_to_vmem [thread:$0]  %s6, 16, %s84, [#allocation15]
    $region29: #{convnet_forward.1} parent=1 // pred_fallthru
      _
    // Predicated region
    $region30: #{convnet_forward.1} parent=1 // pred_check
      _
    $region31: #{convnet_forward.1} parent=1 // pred_check_branch
      %88 = sbr.rel (0) target = $region33
    $region32: #{convnet_forward.1} parent=1 // pred_region
      %s90 = ssub.s32 1024, 1024
      %91 = vsyncadd [#allocation15], %s90
      %s92 = sshll.u32 [#allocation16], 4
      %s93 = int_to_ptr.vmem [resolvable:$true] %s92
      %98 = dma.hbm_to_vmem [thread:$0]  %s7, 1024, %s93, [#allocation15], 64, 64, 4
    $region33: #{convnet_forward.1} parent=1 // pred_fallthru
      _
    // Predicated region
    $region34: #{convnet_forward.1} parent=1 // pred_check
      _
    $region35: #{convnet_forward.1} parent=1 // pred_check_branch
      %100 = sbr.rel (0) target = $region37
    $region36: #{convnet_forward.1} parent=1 // pred_region
      %s102 = ssub.s32 16, 16
      %103 = vsyncadd [#allocation18], %s102
      %s105 = sshll.u32 [#allocation17], 4
      %s106 = int_to_ptr.vmem [resolvable:$true] %s105
      %108 = dma.hbm_to_vmem [thread:$0]  %s8, 16, %s106, [#allocation18]
    $region37: #{convnet_forward.1} parent=1 // pred_fallthru
      _
    // Predicated region
    $region38: #{convnet_forward.1} parent=1 // pred_check
      _
    $region39: #{convnet_forward.1} parent=1 // pred_check_branch
      %110 = sbr.rel (0) target = $region41
    $region40: #{convnet_forward.1} parent=1 // pred_region
      %111 = dma.done [#allocation7], 6144
    $region41: #{convnet_forward.1} parent=1 // pred_fallthru
      _
    // Predicated region
    $region42: #{convnet_forward.1} parent=1 // pred_check
      _
    $region43: #{convnet_forward.1} parent=1 // pred_check_branch
      %113 = sbr.rel (0) target = $region45
    $region44: #{convnet_forward.1} parent=1 // pred_region
      %114 = dma.done [#allocation9], 192
    $region45: #{convnet_forward.1} parent=1 // pred_fallthru
      _
    // Predicated region
    $region46: #{convnet_forward.1} parent=1 // pred_check
      _
    $region47: #{convnet_forward.1} parent=1 // pred_check_branch
      %116 = sbr.rel (0) target = $region49
    $region48: #{convnet_forward.1} parent=1 // pred_region
      %117 = dma.done [#allocation9], 18432
    $region49: #{convnet_forward.1} parent=1 // pred_fallthru
      _
    // Predicated region
    $region50: #{convnet_forward.1} parent=1 // pred_check
      _
    $region51: #{convnet_forward.1} parent=1 // pred_check_branch
      %119 = sbr.rel (0) target = $region53
    $region52: #{convnet_forward.1} parent=1 // pred_region
      %120 = dma.done [#allocation12], 64
    $region53: #{convnet_forward.1} parent=1 // pred_fallthru
      _
    // Predicated region
    $region54: #{convnet_forward.1} parent=1 // pred_check
      _
    $region55: #{convnet_forward.1} parent=1 // pred_check_branch
      %122 = sbr.rel (0) target = $region57
    $region56: #{convnet_forward.1} parent=1 // pred_region
      %123 = dma.done [#allocation12], 128
    $region57: #{convnet_forward.1} parent=1 // pred_fallthru
      _
    // Predicated region
    $region58: #{convnet_forward.1} parent=1 // pred_check
      _
    $region59: #{convnet_forward.1} parent=1 // pred_check_branch
      %125 = sbr.rel (0) target = $region61
    $region60: #{convnet_forward.1} parent=1 // pred_region
      %126 = dma.done [#allocation15], 16
    $region61: #{convnet_forward.1} parent=1 // pred_fallthru
      _
    // Predicated region
    $region62: #{convnet_forward.1} parent=1 // pred_check
      _
    $region63: #{convnet_forward.1} parent=1 // pred_check_branch
      %128 = sbr.rel (0) target = $region65
    $region64: #{convnet_forward.1} parent=1 // pred_region
      %129 = dma.done [#allocation15], 1024
    $region65: #{convnet_forward.1} parent=1 // pred_fallthru
      _
    // Predicated region
    $region66: #{convnet_forward.1} parent=1 // pred_check
      _
    $region67: #{convnet_forward.1} parent=1 // pred_check_branch
      %131 = sbr.rel (0) target = $region69
    $region68: #{convnet_forward.1} parent=1 // pred_region
      %132 = dma.done [#allocation18], 16
    $region69: #{convnet_forward.1} parent=1 // pred_fallthru
      _
    %s135 = sshll.u32 1, 14
    %s136 = sxor.u32 4294967295, %s135
    %s138 = sld [smem:[#allocation0]]
    %s139 = sadd.s32 2, %s138
    %s141 = sshll.u32 7, 26
    %s142 = sxor.u32 4294967295, %s141
    %s143 = sand.u32 0, %s142
    %s144 = sshll.u32 %s139, 26
    %s145 = sor.u32 %s143, %s144
    %s146 = sshll.u32 [#allocation2], 4
    %s147 = int_to_ptr.vmem [resolvable:$true] %s146
    %150 = sst [smem:[#allocation20]] 1024
    %s151 = scalar_lea.smem [#allocation20], 1
    %152 = sst [smem:[%s151]] 1024
    %s153 = scalar_lea.smem [#allocation20], 2
    %154 = sst [smem:[%s153]] 8
    %s155 = scalar_lea.smem [#allocation20], 3
    %156 = sst [smem:[%s155]] 64
    %s157 = scalar_lea.smem [#allocation20], 4
    %158 = sst [smem:[%s157]] 128
    %s159 = scalar_lea.smem [#allocation20], 5
    %160 = sst [smem:[%s159]] 2
    %s161 = scalar_lea.smem [#allocation20], 6
    %162 = sst [smem:[%s161]] 512
    %s163 = scalar_lea.smem [#allocation20], 7
    %164 = sst [smem:[%s163]] 64
    %s165 = scalar_lea.smem [#allocation20], 8
    %166 = sst [smem:[%s165]] 4
    %168 = dma.general %s9, 8192, %s147, [#allocation4], [#allocation19], [#allocation20], %s145, 0
    %s169 = scalar_lea.hbm %s9, 8192
    %s170 = scalar_lea.vmem [#allocation2], 512
    %s171 = scalar_lea.sflag [#allocation4], 1
    %s173 = sshll.u32 1, 14
    %s174 = sxor.u32 4294967295, %s173
    %s176 = sadd.s32 2, %s138
    %s178 = sshll.u32 7, 26
    %s179 = sxor.u32 4294967295, %s178
    %s180 = sand.u32 0, %s179
    %s181 = sshll.u32 %s176, 26
    %s182 = sor.u32 %s180, %s181
    %s183 = sshll.u32 %s170, 4
    %s184 = int_to_ptr.vmem [resolvable:$true] %s183
    %187 = sst [smem:[#allocation22]] 1024
    %s188 = scalar_lea.smem [#allocation22], 1
    %189 = sst [smem:[%s188]] 1024
    %s190 = scalar_lea.smem [#allocation22], 2
    %191 = sst [smem:[%s190]] 8
    %s192 = scalar_lea.smem [#allocation22], 3
    %193 = sst [smem:[%s192]] 64
    %s194 = scalar_lea.smem [#allocation22], 4
    %195 = sst [smem:[%s194]] 128
    %s196 = scalar_lea.smem [#allocation22], 5
    %197 = sst [smem:[%s196]] 2
    %s198 = scalar_lea.smem [#allocation22], 6
    %199 = sst [smem:[%s198]] 512
    %s200 = scalar_lea.smem [#allocation22], 7
    %201 = sst [smem:[%s200]] 64
    %s202 = scalar_lea.smem [#allocation22], 8
    %203 = sst [smem:[%s202]] 4
    %205 = dma.general %s169, 8192, %s184, %s171, [#allocation21], [#allocation22], %s182, 0
    %s206 = scalar_lea.hbm %s9, 16384
    %s207 = scalar_lea.vmem [#allocation2], 1024
    %s208 = scalar_lea.sflag [#allocation4], 2
    %s210 = sshll.u32 1, 14
    %s211 = sxor.u32 4294967295, %s210
    %s213 = sadd.s32 2, %s138
    %s215 = sshll.u32 7, 26
    %s216 = sxor.u32 4294967295, %s215
    %s217 = sand.u32 0, %s216
    %s218 = sshll.u32 %s213, 26
    %s219 = sor.u32 %s217, %s218
    %s220 = sshll.u32 %s207, 4
    %s221 = int_to_ptr.vmem [resolvable:$true] %s220
    %224 = sst [smem:[#allocation24]] 1024
    %s225 = scalar_lea.smem [#allocation24], 1
    %226 = sst [smem:[%s225]] 1024
    %s227 = scalar_lea.smem [#allocation24], 2
    %228 = sst [smem:[%s227]] 8
    %s229 = scalar_lea.smem [#allocation24], 3
    %230 = sst [smem:[%s229]] 64
    %s231 = scalar_lea.smem [#allocation24], 4
    %232 = sst [smem:[%s231]] 128
    %s233 = scalar_lea.smem [#allocation24], 5
    %234 = sst [smem:[%s233]] 2
    %s235 = scalar_lea.smem [#allocation24], 6
    %236 = sst [smem:[%s235]] 512
    %s237 = scalar_lea.smem [#allocation24], 7
    %238 = sst [smem:[%s237]] 64
    %s239 = scalar_lea.smem [#allocation24], 8
    %240 = sst [smem:[%s239]] 4
    %242 = dma.general %s206, 8192, %s221, %s208, [#allocation23], [#allocation24], %s219, 0
    %s243 = scalar_lea.hbm %s9, 24576
    %s244 = scalar_lea.vmem [#allocation2], 1536
    %s245 = scalar_lea.sflag [#allocation4], 3
    %s247 = sshll.u32 1, 14
    %s248 = sxor.u32 4294967295, %s247
    %s250 = sadd.s32 2, %s138
    %s252 = sshll.u32 7, 26
    %s253 = sxor.u32 4294967295, %s252
    %s254 = sand.u32 0, %s253
    %s255 = sshll.u32 %s250, 26
    %s256 = sor.u32 %s254, %s255
    %s257 = sshll.u32 %s244, 4
    %s258 = int_to_ptr.vmem [resolvable:$true] %s257
    %261 = sst [smem:[#allocation26]] 1024
    %s262 = scalar_lea.smem [#allocation26], 1
    %263 = sst [smem:[%s262]] 1024
    %s264 = scalar_lea.smem [#allocation26], 2
    %265 = sst [smem:[%s264]] 8
    %s266 = scalar_lea.smem [#allocation26], 3
    %267 = sst [smem:[%s266]] 64
    %s268 = scalar_lea.smem [#allocation26], 4
    %269 = sst [smem:[%s268]] 128
    %s270 = scalar_lea.smem [#allocation26], 5
    %271 = sst [smem:[%s270]] 2
    %s272 = scalar_lea.smem [#allocation26], 6
    %273 = sst [smem:[%s272]] 512
    %s274 = scalar_lea.smem [#allocation26], 7
    %275 = sst [smem:[%s274]] 64
    %s276 = scalar_lea.smem [#allocation26], 8
    %277 = sst [smem:[%s276]] 4
    %279 = dma.general %s243, 8192, %s258, %s245, [#allocation25], [#allocation26], %s256, 0
    %s280 = scalar_lea.hbm %s9, 32768
    %s281 = scalar_lea.vmem [#allocation2], 2048
    %s282 = scalar_lea.sflag [#allocation4], 4
    %s284 = sshll.u32 1, 14
    %s285 = sxor.u32 4294967295, %s284
    %s287 = sadd.s32 2, %s138
    %s289 = sshll.u32 7, 26
    %s290 = sxor.u32 4294967295, %s289
    %s291 = sand.u32 0, %s290
    %s292 = sshll.u32 %s287, 26
    %s293 = sor.u32 %s291, %s292
    %s294 = sshll.u32 %s281, 4
    %s295 = int_to_ptr.vmem [resolvable:$true] %s294
    %298 = sst [smem:[#allocation28]] 1024
    %s299 = scalar_lea.smem [#allocation28], 1
    %300 = sst [smem:[%s299]] 1024
    %s301 = scalar_lea.smem [#allocation28], 2
    %302 = sst [smem:[%s301]] 8
    %s303 = scalar_lea.smem [#allocation28], 3
    %304 = sst [smem:[%s303]] 64
    %s305 = scalar_lea.smem [#allocation28], 4
    %306 = sst [smem:[%s305]] 128
    %s307 = scalar_lea.smem [#allocation28], 5
    %308 = sst [smem:[%s307]] 2
    %s309 = scalar_lea.smem [#allocation28], 6
    %310 = sst [smem:[%s309]] 512
    %s311 = scalar_lea.smem [#allocation28], 7
    %312 = sst [smem:[%s311]] 64
    %s313 = scalar_lea.smem [#allocation28], 8
    %314 = sst [smem:[%s313]] 4
    %316 = dma.general %s280, 8192, %s295, %s282, [#allocation27], [#allocation28], %s293, 0
    %s317 = scalar_lea.hbm %s9, 40960
    %s318 = scalar_lea.vmem [#allocation2], 2560
    %s319 = scalar_lea.sflag [#allocation4], 5
    %s321 = sshll.u32 1, 14
    %s322 = sxor.u32 4294967295, %s321
    %s324 = sadd.s32 2, %s138
    %s326 = sshll.u32 7, 26
    %s327 = sxor.u32 4294967295, %s326
    %s328 = sand.u32 0, %s327
    %s329 = sshll.u32 %s324, 26
    %s330 = sor.u32 %s328, %s329
    %s331 = sshll.u32 %s318, 4
    %s332 = int_to_ptr.vmem [resolvable:$true] %s331
    %335 = sst [smem:[#allocation30]] 1024
    %s336 = scalar_lea.smem [#allocation30], 1
    %337 = sst [smem:[%s336]] 1024
    %s338 = scalar_lea.smem [#allocation30], 2
    %339 = sst [smem:[%s338]] 8
    %s340 = scalar_lea.smem [#allocation30], 3
    %341 = sst [smem:[%s340]] 64
    %s342 = scalar_lea.smem [#allocation30], 4
    %343 = sst [smem:[%s342]] 128
    %s344 = scalar_lea.smem [#allocation30], 5
    %345 = sst [smem:[%s344]] 2
    %s346 = scalar_lea.smem [#allocation30], 6
    %347 = sst [smem:[%s346]] 512
    %s348 = scalar_lea.smem [#allocation30], 7
    %349 = sst [smem:[%s348]] 64
    %s350 = scalar_lea.smem [#allocation30], 8
    %351 = sst [smem:[%s350]] 4
    %353 = dma.general %s317, 8192, %s332, %s319, [#allocation29], [#allocation30], %s330, 0
    %s354 = scalar_lea.hbm %s9, 49152
    %s355 = scalar_lea.vmem [#allocation2], 3072
    %s356 = scalar_lea.sflag [#allocation4], 6
    %s358 = sshll.u32 1, 14
    %s359 = sxor.u32 4294967295, %s358
    %s361 = sadd.s32 2, %s138
    %s363 = sshll.u32 7, 26
    %s364 = sxor.u32 4294967295, %s363
    %s365 = sand.u32 0, %s364
    %s366 = sshll.u32 %s361, 26
    %s367 = sor.u32 %s365, %s366
    %s368 = sshll.u32 %s355, 4
    %s369 = int_to_ptr.vmem [resolvable:$true] %s368
    %372 = sst [smem:[#allocation32]] 1024
    %s373 = scalar_lea.smem [#allocation32], 1
    %374 = sst [smem:[%s373]] 1024
    %s375 = scalar_lea.smem [#allocation32], 2
    %376 = sst [smem:[%s375]] 8
    %s377 = scalar_lea.smem [#allocation32], 3
    %378 = sst [smem:[%s377]] 64
    %s379 = scalar_lea.smem [#allocation32], 4
    %380 = sst [smem:[%s379]] 128
    %s381 = scalar_lea.smem [#allocation32], 5
    %382 = sst [smem:[%s381]] 2
    %s383 = scalar_lea.smem [#allocation32], 6
    %384 = sst [smem:[%s383]] 512
    %s385 = scalar_lea.smem [#allocation32], 7
    %386 = sst [smem:[%s385]] 64
    %s387 = scalar_lea.smem [#allocation32], 8
    %388 = sst [smem:[%s387]] 4
    %390 = dma.general %s354, 8192, %s369, %s356, [#allocation31], [#allocation32], %s367, 0
    %s391 = scalar_lea.hbm %s9, 57344
    %s392 = scalar_lea.vmem [#allocation2], 3584
    %s393 = scalar_lea.sflag [#allocation4], 7
    %s395 = sshll.u32 1, 14
    %s396 = sxor.u32 4294967295, %s395
    %s398 = sadd.s32 2, %s138
    %s400 = sshll.u32 7, 26
    %s401 = sxor.u32 4294967295, %s400
    %s402 = sand.u32 0, %s401
    %s403 = sshll.u32 %s398, 26
    %s404 = sor.u32 %s402, %s403
    %s405 = sshll.u32 %s392, 4
    %s406 = int_to_ptr.vmem [resolvable:$true] %s405
    %409 = sst [smem:[#allocation34]] 1024
    %s410 = scalar_lea.smem [#allocation34], 1
    %411 = sst [smem:[%s410]] 1024
    %s412 = scalar_lea.smem [#allocation34], 2
    %413 = sst [smem:[%s412]] 8
    %s414 = scalar_lea.smem [#allocation34], 3
    %415 = sst [smem:[%s414]] 64
    %s416 = scalar_lea.smem [#allocation34], 4
    %417 = sst [smem:[%s416]] 128
    %s418 = scalar_lea.smem [#allocation34], 5
    %419 = sst [smem:[%s418]] 2
    %s420 = scalar_lea.smem [#allocation34], 6
    %421 = sst [smem:[%s420]] 512
    %s422 = scalar_lea.smem [#allocation34], 7
    %423 = sst [smem:[%s422]] 64
    %s424 = scalar_lea.smem [#allocation34], 8
    %425 = sst [smem:[%s424]] 4
    %427 = dma.general %s391, 8192, %s406, %s393, [#allocation33], [#allocation34], %s404, 0
    %s428 = scalar_lea.hbm %s9, 65536
    %s429 = scalar_lea.vmem [#allocation2], 4096
    %s430 = scalar_lea.sflag [#allocation4], 8
    %s432 = sshll.u32 1, 14
    %s433 = sxor.u32 4294967295, %s432
    %s435 = sadd.s32 2, %s138
    %s437 = sshll.u32 7, 26
    %s438 = sxor.u32 4294967295, %s437
    %s439 = sand.u32 0, %s438
    %s440 = sshll.u32 %s435, 26
    %s441 = sor.u32 %s439, %s440
    %s442 = sshll.u32 %s429, 4
    %s443 = int_to_ptr.vmem [resolvable:$true] %s442
    %446 = sst [smem:[#allocation36]] 1024
    %s447 = scalar_lea.smem [#allocation36], 1
    %448 = sst [smem:[%s447]] 1024
    %s449 = scalar_lea.smem [#allocation36], 2
    %450 = sst [smem:[%s449]] 8
    %s451 = scalar_lea.smem [#allocation36], 3
    %452 = sst [smem:[%s451]] 64
    %s453 = scalar_lea.smem [#allocation36], 4
    %454 = sst [smem:[%s453]] 128
    %s455 = scalar_lea.smem [#allocation36], 5
    %456 = sst [smem:[%s455]] 2
    %s457 = scalar_lea.smem [#allocation36], 6
    %458 = sst [smem:[%s457]] 512
    %s459 = scalar_lea.smem [#allocation36], 7
    %460 = sst [smem:[%s459]] 64
    %s461 = scalar_lea.smem [#allocation36], 8
    %462 = sst [smem:[%s461]] 4
    %464 = dma.general %s428, 8192, %s443, %s430, [#allocation35], [#allocation36], %s441, 0
    %s465 = scalar_lea.hbm %s9, 73728
    %s466 = scalar_lea.vmem [#allocation2], 4608
    %s467 = scalar_lea.sflag [#allocation4], 9
    %s469 = sshll.u32 1, 14
    %s470 = sxor.u32 4294967295, %s469
    %s472 = sadd.s32 2, %s138
    %s474 = sshll.u32 7, 26
    %s475 = sxor.u32 4294967295, %s474
    %s476 = sand.u32 0, %s475
    %s477 = sshll.u32 %s472, 26
    %s478 = sor.u32 %s476, %s477
    %s479 = sshll.u32 %s466, 4
    %s480 = int_to_ptr.vmem [resolvable:$true] %s479
    %483 = sst [smem:[#allocation38]] 1024
    %s484 = scalar_lea.smem [#allocation38], 1
    %485 = sst [smem:[%s484]] 1024
    %s486 = scalar_lea.smem [#allocation38], 2
    %487 = sst [smem:[%s486]] 8
    %s488 = scalar_lea.smem [#allocation38], 3
    %489 = sst [smem:[%s488]] 64
    %s490 = scalar_lea.smem [#allocation38], 4
    %491 = sst [smem:[%s490]] 128
    %s492 = scalar_lea.smem [#allocation38], 5
    %493 = sst [smem:[%s492]] 2
    %s494 = scalar_lea.smem [#allocation38], 6
    %495 = sst [smem:[%s494]] 512
    %s496 = scalar_lea.smem [#allocation38], 7
    %497 = sst [smem:[%s496]] 64
    %s498 = scalar_lea.smem [#allocation38], 8
    %499 = sst [smem:[%s498]] 4
    %501 = dma.general %s465, 8192, %s480, %s467, [#allocation37], [#allocation38], %s478, 0
    %s502 = scalar_lea.hbm %s9, 81920
    %s503 = scalar_lea.vmem [#allocation2], 5120
    %s504 = scalar_lea.sflag [#allocation4], 10
    %s506 = sshll.u32 1, 14
    %s507 = sxor.u32 4294967295, %s506
    %s509 = sadd.s32 2, %s138
    %s511 = sshll.u32 7, 26
    %s512 = sxor.u32 4294967295, %s511
    %s513 = sand.u32 0, %s512
    %s514 = sshll.u32 %s509, 26
    %s515 = sor.u32 %s513, %s514
    %s516 = sshll.u32 %s503, 4
    %s517 = int_to_ptr.vmem [resolvable:$true] %s516
    %520 = sst [smem:[#allocation40]] 1024
    %s521 = scalar_lea.smem [#allocation40], 1
    %522 = sst [smem:[%s521]] 1024
    %s523 = scalar_lea.smem [#allocation40], 2
    %524 = sst [smem:[%s523]] 8
    %s525 = scalar_lea.smem [#allocation40], 3
    %526 = sst [smem:[%s525]] 64
    %s527 = scalar_lea.smem [#allocation40], 4
    %528 = sst [smem:[%s527]] 128
    %s529 = scalar_lea.smem [#allocation40], 5
    %530 = sst [smem:[%s529]] 2
    %s531 = scalar_lea.smem [#allocation40], 6
    %532 = sst [smem:[%s531]] 512
    %s533 = scalar_lea.smem [#allocation40], 7
    %534 = sst [smem:[%s533]] 64
    %s535 = scalar_lea.smem [#allocation40], 8
    %536 = sst [smem:[%s535]] 4
    %538 = dma.general %s502, 8192, %s517, %s504, [#allocation39], [#allocation40], %s515, 0
    %s539 = scalar_lea.hbm %s9, 90112
    %s540 = scalar_lea.vmem [#allocation2], 5632
    %s541 = scalar_lea.sflag [#allocation4], 11
    %s543 = sshll.u32 1, 14
    %s544 = sxor.u32 4294967295, %s543
    %s546 = sadd.s32 2, %s138
    %s548 = sshll.u32 7, 26
    %s549 = sxor.u32 4294967295, %s548
    %s550 = sand.u32 0, %s549
    %s551 = sshll.u32 %s546, 26
    %s552 = sor.u32 %s550, %s551
    %s553 = sshll.u32 %s540, 4
    %s554 = int_to_ptr.vmem [resolvable:$true] %s553
    %557 = sst [smem:[#allocation42]] 1024
    %s558 = scalar_lea.smem [#allocation42], 1
    %559 = sst [smem:[%s558]] 1024
    %s560 = scalar_lea.smem [#allocation42], 2
    %561 = sst [smem:[%s560]] 8
    %s562 = scalar_lea.smem [#allocation42], 3
    %563 = sst [smem:[%s562]] 64
    %s564 = scalar_lea.smem [#allocation42], 4
    %565 = sst [smem:[%s564]] 128
    %s566 = scalar_lea.smem [#allocation42], 5
    %567 = sst [smem:[%s566]] 2
    %s568 = scalar_lea.smem [#allocation42], 6
    %569 = sst [smem:[%s568]] 512
    %s570 = scalar_lea.smem [#allocation42], 7
    %571 = sst [smem:[%s570]] 64
    %s572 = scalar_lea.smem [#allocation42], 8
    %573 = sst [smem:[%s572]] 4
    %575 = dma.general %s539, 8192, %s554, %s541, [#allocation41], [#allocation42], %s552, 0
    %s576 = scalar_lea.hbm %s9, 98304
    %s577 = scalar_lea.vmem [#allocation2], 6144
    %s578 = scalar_lea.sflag [#allocation4], 12
    %s580 = sshll.u32 1, 14
    %s581 = sxor.u32 4294967295, %s580
    %s583 = sadd.s32 2, %s138
    %s585 = sshll.u32 7, 26
    %s586 = sxor.u32 4294967295, %s585
    %s587 = sand.u32 0, %s586
    %s588 = sshll.u32 %s583, 26
    %s589 = sor.u32 %s587, %s588
    %s590 = sshll.u32 %s577, 4
    %s591 = int_to_ptr.vmem [resolvable:$true] %s590
    %594 = sst [smem:[#allocation44]] 1024
    %s595 = scalar_lea.smem [#allocation44], 1
    %596 = sst [smem:[%s595]] 1024
    %s597 = scalar_lea.smem [#allocation44], 2
    %598 = sst [smem:[%s597]] 8
    %s599 = scalar_lea.smem [#allocation44], 3
    %600 = sst [smem:[%s599]] 64
    %s601 = scalar_lea.smem [#allocation44], 4
    %602 = sst [smem:[%s601]] 128
    %s603 = scalar_lea.smem [#allocation44], 5
    %604 = sst [smem:[%s603]] 2
    %s605 = scalar_lea.smem [#allocation44], 6
    %606 = sst [smem:[%s605]] 512
    %s607 = scalar_lea.smem [#allocation44], 7
    %608 = sst [smem:[%s607]] 64
    %s609 = scalar_lea.smem [#allocation44], 8
    %610 = sst [smem:[%s609]] 4
    %612 = dma.general %s576, 8192, %s591, %s578, [#allocation43], [#allocation44], %s589, 0
    %s613 = scalar_lea.hbm %s9, 106496
    %s614 = scalar_lea.vmem [#allocation2], 6656
    %s615 = scalar_lea.sflag [#allocation4], 13
    %s617 = sshll.u32 1, 14
    %s618 = sxor.u32 4294967295, %s617
    %s620 = sadd.s32 2, %s138
    %s622 = sshll.u32 7, 26
    %s623 = sxor.u32 4294967295, %s622
    %s624 = sand.u32 0, %s623
    %s625 = sshll.u32 %s620, 26
    %s626 = sor.u32 %s624, %s625
    %s627 = sshll.u32 %s614, 4
    %s628 = int_to_ptr.vmem [resolvable:$true] %s627
    %631 = sst [smem:[#allocation46]] 1024
    %s632 = scalar_lea.smem [#allocation46], 1
    %633 = sst [smem:[%s632]] 1024
    %s634 = scalar_lea.smem [#allocation46], 2
    %635 = sst [smem:[%s634]] 8
    %s636 = scalar_lea.smem [#allocation46], 3
    %637 = sst [smem:[%s636]] 64
    %s638 = scalar_lea.smem [#allocation46], 4
    %639 = sst [smem:[%s638]] 128
    %s640 = scalar_lea.smem [#allocation46], 5
    %641 = sst [smem:[%s640]] 2
    %s642 = scalar_lea.smem [#allocation46], 6
    %643 = sst [smem:[%s642]] 512
    %s644 = scalar_lea.smem [#allocation46], 7
    %645 = sst [smem:[%s644]] 64
    %s646 = scalar_lea.smem [#allocation46], 8
    %647 = sst [smem:[%s646]] 4
    %649 = dma.general %s613, 8192, %s628, %s615, [#allocation45], [#allocation46], %s626, 0
    // Predicated region
    $region70: #{convnet_forward.1} parent=1 // pred_check
      _
    $region71: #{convnet_forward.1} parent=1 // pred_check_branch
      %651 = sbr.rel target = $region73
    $region72: #{convnet_forward.1} parent=1 // pred_region
      %652 = sst [smem:[#allocation49]] [#allocation48]
      %653 = sst [smem:[#allocation50]] [#allocation47]
    $region73: #{convnet_forward.1} parent=1 // pred_fallthru
      _
    %655 = shalt.err (0)
    %s657 = sshll.u32 [#allocation3], 4
    %s658 = int_to_ptr.vmem [resolvable:$true] %s657
    %660 = dma.hbm_to_vmem [thread:$0]  %s10, 8192, %s658, [#allocation5]
    %v661 = vld [vmem:[%s0] sm:$0xf]
    %v662 = vld [vmem:[#allocation6] sm:$0xff]
    %v663 = vld [vmem:[#allocation6 + $0x8] sm:$0xff]
    %v664 = vld [vmem:[#allocation6 + $0x10] sm:$0xff]
    %v665 = vld [vmem:[#allocation6 + $0x18] sm:$0xff]
    %v666 = vld [vmem:[#allocation6 + $0x20] sm:$0xff]
    %v667 = vld [vmem:[#allocation6 + $0x28] sm:$0xff]
    %v668 = vld [vmem:[#allocation6 + $0x30] sm:$0xff]
    %v669 = vld [vmem:[#allocation6 + $0x38] sm:$0xff]
    %v670 = vld [vmem:[#allocation6 + $0x40] sm:$0xff]
    %v671 = vld [vmem:[#allocation6 + $0x48] sm:$0xff]
    %v672 = vld [vmem:[#allocation6 + $0x50] sm:$0xff]
    %v673 = vld [vmem:[#allocation6 + $0x58] sm:$0xff]
    %v674 = vld [vmem:[#allocation6 + $0x60] sm:$0xff]
    %v675 = vld [vmem:[#allocation6 + $0x68] sm:$0xff]
    %v676 = vld [vmem:[#allocation6 + $0x70] sm:$0xff]
    %v677 = vld [vmem:[#allocation6 + $0x78] sm:$0xff]
    %v678 = vld [vmem:[#allocation6 + $0x80] sm:$0xff]
    %v679 = vld [vmem:[#allocation6 + $0x88] sm:$0xff]
    %v680 = vld [vmem:[#allocation6 + $0x90] sm:$0xff]
    %v681 = vld [vmem:[#allocation6 + $0x98] sm:$0xff]
    %v682 = vld [vmem:[#allocation6 + $0xa0] sm:$0xff]
    %v683 = vld [vmem:[#allocation6 + $0xa8] sm:$0xff]
    %v684 = vld [vmem:[#allocation6 + $0xb0] sm:$0xff]
    %v685 = vld [vmem:[#allocation6 + $0xb8] sm:$0xff]
    %v686 = vld [vmem:[#allocation6 + $0xc0] sm:$0xff]
    %v687 = vld [vmem:[#allocation6 + $0xc8] sm:$0xff]
    %v688 = vld [vmem:[#allocation6 + $0xd0] sm:$0xff]
    %v689 = vld [vmem:[#allocation6 + $0xd8] sm:$0xff]
    %v690 = vld [vmem:[#allocation6 + $0xe0] sm:$0xff]
    %v691 = vld [vmem:[#allocation6 + $0xe8] sm:$0xff]
    %v692 = vld [vmem:[#allocation6 + $0xf0] sm:$0xff]
    %v693 = vld [vmem:[#allocation6 + $0xf8] sm:$0xff]
    %v694 = vld [vmem:[#allocation6 + $0x100] sm:$0xff]
    %v695 = vld [vmem:[#allocation6 + $0x108] sm:$0xff]
    %v696 = vld [vmem:[#allocation6 + $0x110] sm:$0xff]
    %v697 = vld [vmem:[#allocation6 + $0x118] sm:$0xff]
    %v698 = vld [vmem:[#allocation6 + $0x120] sm:$0xff]
    %v699 = vld [vmem:[#allocation6 + $0x128] sm:$0xff]
    %v700 = vld [vmem:[#allocation6 + $0x130] sm:$0xff]
    %v701 = vld [vmem:[#allocation6 + $0x138] sm:$0xff]
    %v702 = vld [vmem:[#allocation6 + $0x140] sm:$0xff]
    %v703 = vld [vmem:[#allocation6 + $0x148] sm:$0xff]
    %v704 = vld [vmem:[#allocation6 + $0x150] sm:$0xff]
    %v705 = vld [vmem:[#allocation6 + $0x158] sm:$0xff]
    %v706 = vld [vmem:[#allocation6 + $0x160] sm:$0xff]
    %v707 = vld [vmem:[#allocation6 + $0x168] sm:$0xff]
    %v708 = vld [vmem:[#allocation6 + $0x170] sm:$0xff]
    %v709 = vld [vmem:[#allocation6 + $0x178] sm:$0xff]
    %v710 = vld [vmem:[#allocation8] sm:$0xff]
    %v711 = vld [vmem:[#allocation8 + $0x8] sm:$0xf]
    %v714 = vlaneseq
    %v715 = vshrl.u32 %v714, 7
    %v716 = vsub.s32 0, %v715
    %v717 = vrot.slane %v710, %v716
    %v718 = vlaneseq
    %v719 = vshrl.u32 %v718, 7
    %v720 = vsub.s32 1, %v719
    %v721 = vrot.slane %v710, %v720
    %v722 = vlaneseq
    %v723 = vshrl.u32 %v722, 7
    %v724 = vsub.s32 2, %v723
    %v725 = vrot.slane %v710, %v724
    %v726 = vlaneseq
    %v727 = vshrl.u32 %v726, 7
    %v728 = vsub.s32 3, %v727
    %v729 = vrot.slane %v710, %v728
    %v730 = vlaneseq
    %v731 = vshrl.u32 %v730, 7
    %v732 = vsub.s32 4, %v731
    %v733 = vrot.slane %v710, %v732
    %v734 = vlaneseq
    %v735 = vshrl.u32 %v734, 7
    %v736 = vsub.s32 5, %v735
    %v737 = vrot.slane %v710, %v736
    %v738 = vlaneseq
    %v739 = vshrl.u32 %v738, 7
    %v740 = vsub.s32 6, %v739
    %v741 = vrot.slane %v710, %v740
    %v742 = vlaneseq
    %v743 = vshrl.u32 %v742, 7
    %v744 = vsub.s32 7, %v743
    %v745 = vrot.slane %v710, %v744
    %v746 = vlaneseq
    %v747 = vshrl.u32 %v746, 7
    %v748 = vsub.s32 0, %v747
    %v749 = vrot.slane %v711, %v748
    %v750 = vlaneseq
    %v751 = vshrl.u32 %v750, 7
    %v752 = vsub.s32 1, %v751
    %v753 = vrot.slane %v711, %v752
    %v754 = vlaneseq
    %v755 = vshrl.u32 %v754, 7
    %v756 = vsub.s32 2, %v755
    %v757 = vrot.slane %v711, %v756
    %v758 = vlaneseq
    %v759 = vshrl.u32 %v758, 7
    %v760 = vsub.s32 3, %v759
    %v761 = vrot.slane %v711, %v760
    %v822 = vunpack.c.l.b16 %v662
    %v823 = vunpack.c.h.b16 %v662
    %v824 = vunpack.c.l.b16 %v663
    %v825 = vunpack.c.h.b16 %v663
    %v826 = vunpack.c.l.b16 %v664
    %v827 = vunpack.c.h.b16 %v664
    %v828 = vunpack.c.l.b16 %v665
    %v829 = vunpack.c.h.b16 %v665
    %v830 = vunpack.c.l.b16 %v666
    %v831 = vunpack.c.h.b16 %v666
    %v832 = vunpack.c.l.b16 %v667
    %v833 = vunpack.c.h.b16 %v667
    %v834 = vunpack.c.l.b16 %v668
    %v835 = vunpack.c.h.b16 %v668
    %v836 = vunpack.c.l.b16 %v669
    %v837 = vunpack.c.h.b16 %v669
    %v838 = vunpack.c.l.b16 %v670
    %v839 = vunpack.c.h.b16 %v670
    %v840 = vunpack.c.l.b16 %v671
    %v841 = vunpack.c.h.b16 %v671
    %v842 = vunpack.c.l.b16 %v672
    %v843 = vunpack.c.h.b16 %v672
    %v844 = vunpack.c.l.b16 %v673
    %v845 = vunpack.c.h.b16 %v673
    %v846 = vunpack.c.l.b16 %v674
    %v847 = vunpack.c.h.b16 %v674
    %v848 = vunpack.c.l.b16 %v675
    %v849 = vunpack.c.h.b16 %v675
    %v850 = vunpack.c.l.b16 %v676
    %v851 = vunpack.c.h.b16 %v676
    %v852 = vunpack.c.l.b16 %v677
    %v853 = vunpack.c.h.b16 %v677
    %v854 = vunpack.c.l.b16 %v678
    %v855 = vunpack.c.h.b16 %v678
    %v856 = vunpack.c.l.b16 %v679
    %v857 = vunpack.c.h.b16 %v679
    %v858 = vunpack.c.l.b16 %v680
    %v859 = vunpack.c.h.b16 %v680
    %v860 = vunpack.c.l.b16 %v681
    %v861 = vunpack.c.h.b16 %v681
    %v862 = vunpack.c.l.b16 %v682
    %v863 = vunpack.c.h.b16 %v682
    %v864 = vunpack.c.l.b16 %v683
    %v865 = vunpack.c.h.b16 %v683
    %v866 = vunpack.c.l.b16 %v684
    %v867 = vunpack.c.h.b16 %v684
    %v868 = vunpack.c.l.b16 %v685
    %v869 = vunpack.c.h.b16 %v685
    %v870 = vunpack.c.l.b16 %v686
    %v871 = vunpack.c.h.b16 %v686
    %v872 = vunpack.c.l.b16 %v687
    %v873 = vunpack.c.h.b16 %v687
    %v874 = vunpack.c.l.b16 %v688
    %v875 = vunpack.c.h.b16 %v688
    %v876 = vunpack.c.l.b16 %v689
    %v877 = vunpack.c.h.b16 %v689
    %v878 = vunpack.c.l.b16 %v690
    %v879 = vunpack.c.h.b16 %v690
    %v880 = vunpack.c.l.b16 %v691
    %v881 = vunpack.c.h.b16 %v691
    %v882 = vunpack.c.l.b16 %v692
    %v883 = vunpack.c.h.b16 %v692
    %v884 = vunpack.c.l.b16 %v693
    %v885 = vunpack.c.h.b16 %v693
    %v886 = vunpack.c.l.b16 %v694
    %v887 = vunpack.c.h.b16 %v694
    %v888 = vunpack.c.l.b16 %v695
    %v889 = vunpack.c.h.b16 %v695
    %v890 = vunpack.c.l.b16 %v696
    %v891 = vunpack.c.h.b16 %v696
    %v892 = vunpack.c.l.b16 %v697
    %v893 = vunpack.c.h.b16 %v697
    %v894 = vunpack.c.l.b16 %v698
    %v895 = vunpack.c.h.b16 %v698
    %v896 = vunpack.c.l.b16 %v699
    %v897 = vunpack.c.h.b16 %v699
    %v898 = vunpack.c.l.b16 %v700
    %v899 = vunpack.c.h.b16 %v700
    %v900 = vunpack.c.l.b16 %v701
    %v901 = vunpack.c.h.b16 %v701
    %v902 = vunpack.c.l.b16 %v702
    %v903 = vunpack.c.h.b16 %v702
    %v904 = vunpack.c.l.b16 %v703
    %v905 = vunpack.c.h.b16 %v703
    %v906 = vunpack.c.l.b16 %v704
    %v907 = vunpack.c.h.b16 %v704
    %v908 = vunpack.c.l.b16 %v705
    %v909 = vunpack.c.h.b16 %v705
    %v910 = vunpack.c.l.b16 %v706
    %v911 = vunpack.c.h.b16 %v706
    %v912 = vunpack.c.l.b16 %v707
    %v913 = vunpack.c.h.b16 %v707
    %v914 = vunpack.c.l.b16 %v708
    %v915 = vunpack.c.h.b16 %v708
    %v916 = vunpack.c.l.b16 %v709
    %v917 = vunpack.c.h.b16 %v709
    %v918 = vpack.c.b16 %v834, %v822
    %v919 = vpack.c.b16 %v835, %v823
    %v920 = vpack.c.b16 %v836, %v824
    %v921 = vpack.c.b16 %v837, %v825
    %v922 = vpack.c.b16 %v838, %v826
    %v923 = vpack.c.b16 %v839, %v827
    %v924 = vpack.c.b16 %v840, %v828
    %v925 = vpack.c.b16 %v841, %v829
    %v926 = vpack.c.b16 %v842, %v830
    %v927 = vpack.c.b16 %v843, %v831
    %v928 = vpack.c.b16 %v844, %v832
    %v929 = vpack.c.b16 %v845, %v833
    %v930 = vpack.c.b16 %v858, %v846
    %v931 = vpack.c.b16 %v859, %v847
    %v932 = vpack.c.b16 %v860, %v848
    %v933 = vpack.c.b16 %v861, %v849
    %v934 = vpack.c.b16 %v862, %v850
    %v935 = vpack.c.b16 %v863, %v851
    %v936 = vpack.c.b16 %v864, %v852
    %v937 = vpack.c.b16 %v865, %v853
    %v938 = vpack.c.b16 %v866, %v854
    %v939 = vpack.c.b16 %v867, %v855
    %v940 = vpack.c.b16 %v868, %v856
    %v941 = vpack.c.b16 %v869, %v857
    %v942 = vpack.c.b16 %v882, %v870
    %v943 = vpack.c.b16 %v883, %v871
    %v944 = vpack.c.b16 %v884, %v872
    %v945 = vpack.c.b16 %v885, %v873
    %v946 = vpack.c.b16 %v886, %v874
    %v947 = vpack.c.b16 %v887, %v875
    %v948 = vpack.c.b16 %v888, %v876
    %v949 = vpack.c.b16 %v889, %v877
    %v950 = vpack.c.b16 %v890, %v878
    %v951 = vpack.c.b16 %v891, %v879
    %v952 = vpack.c.b16 %v892, %v880
    %v953 = vpack.c.b16 %v893, %v881
    %v954 = vpack.c.b16 %v906, %v894
    %v955 = vpack.c.b16 %v907, %v895
    %v956 = vpack.c.b16 %v908, %v896
    %v957 = vpack.c.b16 %v909, %v897
    %v958 = vpack.c.b16 %v910, %v898
    %v959 = vpack.c.b16 %v911, %v899
    %v960 = vpack.c.b16 %v912, %v900
    %v961 = vpack.c.b16 %v913, %v901
    %v962 = vpack.c.b16 %v914, %v902
    %v963 = vpack.c.b16 %v915, %v903
    %v964 = vpack.c.b16 %v916, %v904
    %v965 = vpack.c.b16 %v917, %v905
    %vm1014 = vcmask 523264
    %v1016 = vsel %vm1014, %v661, 0
    %1018 = vmatprep.subr.bf16.mxu0 %v919
    %1019 = vmatpush1.bf16.msra.mxu0 %v918
    %1020 = vmatprep.subr.bf16.mxu0 %v931
    %1021 = vmatpush1.bf16.msra.mxu0 %v930
    %1022 = vmatprep.subr.bf16.mxu0 %v943
    %1023 = vmatpush1.bf16.msra.mxu0 %v942
    %1024 = vmatprep.subr.bf16.mxu0 %v955
    %1025 = vmatpush1.bf16.msra.mxu0 %v954
    %1026 = vmatprep.subr.bf16.mxu0 0
    %1027 = vmatpush1.bf16.msra.mxu0 0
    %1028 = vmatprep.subr.bf16.mxu0 0
    %1029 = vmatpush1.bf16.msra.mxu0 0
    %1030 = vmatprep.subr.bf16.mxu0 0
    %1031 = vmatpush1.bf16.msra.mxu0 0
    %1032 = vmatprep.subr.bf16.mxu0 0
    %1033 = vmatpush1.bf16.msra.mxu0 0
    %1034 = vmatprep.subr.bf16.mxu0 0
    %1035 = vmatpush1.bf16.msra.mxu0 0
    %1036 = vmatprep.subr.bf16.mxu0 0
    %1037 = vmatpush1.bf16.msra.mxu0 0
    %1038 = vmatprep.subr.bf16.mxu0 0
    %1039 = vmatpush1.bf16.msra.mxu0 0
    %1040 = vmatprep.subr.bf16.mxu0 0
    %1041 = vmatpush1.bf16.msra.mxu0 0
    %1042 = vmatprep.subr.bf16.mxu0 0
    %1043 = vmatpush1.bf16.msra.mxu0 0
    %1044 = vmatprep.subr.bf16.mxu0 0
    %1045 = vmatpush1.bf16.msra.mxu0 0
    %1046 = vmatprep.subr.bf16.mxu0 0
    %1047 = vmatpush1.bf16.msra.mxu0 0
    %1048 = vmatprep.subr.bf16.mxu0 0
    %1049 = vmatpush1.bf16.msra.mxu0 0
    %1050 = vmatprep.mubr.bf16.mxu0 0
    %1051 = vmatmul.mubr.bf16.gmra.mrb[0].mxu0 %v1016
    %v1052 = vpop.f32.mrb[0].mxu0
    %v1053 = vadd.f32 %v717, %v1052
    %v1054 = vpop.f32.mrb[0].mxu0
    %v1055 = vadd.f32 %v721, %v1054
    %v1056 = vpop.f32.mrb[0].mxu0
    %v1057 = vpop.f32.mrb[0].mxu0
    %1058 = vdwg.mxu0
    %1059 = vmatprep.subr.bf16.mxu0 %v921
    %1060 = vmatpush1.bf16.msra.mxu0 %v920
    %1061 = vmatprep.subr.bf16.mxu0 %v933
    %1062 = vmatpush1.bf16.msra.mxu0 %v932
    %1063 = vmatprep.subr.bf16.mxu0 %v945
    %1064 = vmatpush1.bf16.msra.mxu0 %v944
    %1065 = vmatprep.subr.bf16.mxu0 %v957
    %1066 = vmatpush1.bf16.msra.mxu0 %v956
    %1067 = vmatprep.subr.bf16.mxu0 0
    %1068 = vmatpush1.bf16.msra.mxu0 0
    %1069 = vmatprep.subr.bf16.mxu0 0
    %1070 = vmatpush1.bf16.msra.mxu0 0
    %1071 = vmatprep.subr.bf16.mxu0 0
    %1072 = vmatpush1.bf16.msra.mxu0 0
    %1073 = vmatprep.subr.bf16.mxu0 0
    %1074 = vmatpush1.bf16.msra.mxu0 0
    %1075 = vmatprep.subr.bf16.mxu0 0
    %1076 = vmatpush1.bf16.msra.mxu0 0
    %1077 = vmatprep.subr.bf16.mxu0 0
    %1078 = vmatpush1.bf16.msra.mxu0 0
    %1079 = vmatprep.subr.bf16.mxu0 0
    %1080 = vmatpush1.bf16.msra.mxu0 0
    %1081 = vmatprep.subr.bf16.mxu0 0
    %1082 = vmatpush1.bf16.msra.mxu0 0
    %1083 = vmatprep.subr.bf16.mxu0 0
    %1084 = vmatpush1.bf16.msra.mxu0 0
    %1085 = vmatprep.subr.bf16.mxu0 0
    %1086 = vmatpush1.bf16.msra.mxu0 0
    %1087 = vmatprep.subr.bf16.mxu0 0
    %1088 = vmatpush1.bf16.msra.mxu0 0
    %1089 = vmatprep.subr.bf16.mxu0 0
    %1090 = vmatpush1.bf16.msra.mxu0 0
    %1091 = vmatprep.mubr.bf16.mxu0 0
    %1092 = vmatmul.mubr.bf16.gmra.mrb[0].mxu0 %v1016
    %v1093 = vpop.f32.mrb[0].mxu0
    %v1094 = vadd.f32 %v725, %v1093
    %v1095 = vpop.f32.mrb[0].mxu0
    %v1096 = vadd.f32 %v729, %v1095
    %v1097 = vpop.f32.mrb[0].mxu0
    %v1098 = vpop.f32.mrb[0].mxu0
    %1099 = vdwg.mxu0
    %1100 = vmatprep.subr.bf16.mxu0 %v923
    %1101 = vmatpush1.bf16.msra.mxu0 %v922
    %1102 = vmatprep.subr.bf16.mxu0 %v935
    %1103 = vmatpush1.bf16.msra.mxu0 %v934
    %1104 = vmatprep.subr.bf16.mxu0 %v947
    %1105 = vmatpush1.bf16.msra.mxu0 %v946
    %1106 = vmatprep.subr.bf16.mxu0 %v959
    %1107 = vmatpush1.bf16.msra.mxu0 %v958
    %1108 = vmatprep.subr.bf16.mxu0 0
    %1109 = vmatpush1.bf16.msra.mxu0 0
    %1110 = vmatprep.subr.bf16.mxu0 0
    %1111 = vmatpush1.bf16.msra.mxu0 0
    %1112 = vmatprep.subr.bf16.mxu0 0
    %1113 = vmatpush1.bf16.msra.mxu0 0
    %1114 = vmatprep.subr.bf16.mxu0 0
    %1115 = vmatpush1.bf16.msra.mxu0 0
    %1116 = vmatprep.subr.bf16.mxu0 0
    %1117 = vmatpush1.bf16.msra.mxu0 0
    %1118 = vmatprep.subr.bf16.mxu0 0
    %1119 = vmatpush1.bf16.msra.mxu0 0
    %1120 = vmatprep.subr.bf16.mxu0 0
    %1121 = vmatpush1.bf16.msra.mxu0 0
    %1122 = vmatprep.subr.bf16.mxu0 0
    %1123 = vmatpush1.bf16.msra.mxu0 0
    %1124 = vmatprep.subr.bf16.mxu0 0
    %1125 = vmatpush1.bf16.msra.mxu0 0
    %1126 = vmatprep.subr.bf16.mxu0 0
    %1127 = vmatpush1.bf16.msra.mxu0 0
    %1128 = vmatprep.subr.bf16.mxu0 0
    %1129 = vmatpush1.bf16.msra.mxu0 0
    %1130 = vmatprep.subr.bf16.mxu0 0
    %1131 = vmatpush1.bf16.msra.mxu0 0
    %1132 = vmatprep.mubr.bf16.mxu0 0
    %1133 = vmatmul.mubr.bf16.gmra.mrb[0].mxu0 %v1016
    %v1134 = vpop.f32.mrb[0].mxu0
    %v1135 = vadd.f32 %v733, %v1134
    %v1136 = vpop.f32.mrb[0].mxu0
    %v1137 = vadd.f32 %v737, %v1136
    %v1138 = vpop.f32.mrb[0].mxu0
    %v1139 = vpop.f32.mrb[0].mxu0
    %1140 = vdwg.mxu0
    %1141 = vmatprep.subr.bf16.mxu0 %v925
    %1142 = vmatpush1.bf16.msra.mxu0 %v924
    %1143 = vmatprep.subr.bf16.mxu0 %v937
    %1144 = vmatpush1.bf16.msra.mxu0 %v936
    %1145 = vmatprep.subr.bf16.mxu0 %v949
    %1146 = vmatpush1.bf16.msra.mxu0 %v948
    %1147 = vmatprep.subr.bf16.mxu0 %v961
    %1148 = vmatpush1.bf16.msra.mxu0 %v960
    %1149 = vmatprep.subr.bf16.mxu0 0
    %1150 = vmatpush1.bf16.msra.mxu0 0
    %1151 = vmatprep.subr.bf16.mxu0 0
    %1152 = vmatpush1.bf16.msra.mxu0 0
    %1153 = vmatprep.subr.bf16.mxu0 0
    %1154 = vmatpush1.bf16.msra.mxu0 0
    %1155 = vmatprep.subr.bf16.mxu0 0
    %1156 = vmatpush1.bf16.msra.mxu0 0
    %1157 = vmatprep.subr.bf16.mxu0 0
    %1158 = vmatpush1.bf16.msra.mxu0 0
    %1159 = vmatprep.subr.bf16.mxu0 0
    %1160 = vmatpush1.bf16.msra.mxu0 0
    %1161 = vmatprep.subr.bf16.mxu0 0
    %1162 = vmatpush1.bf16.msra.mxu0 0
    %1163 = vmatprep.subr.bf16.mxu0 0
    %1164 = vmatpush1.bf16.msra.mxu0 0
    %1165 = vmatprep.subr.bf16.mxu0 0
    %1166 = vmatpush1.bf16.msra.mxu0 0
    %1167 = vmatprep.subr.bf16.mxu0 0
    %1168 = vmatpush1.bf16.msra.mxu0 0
    %1169 = vmatprep.subr.bf16.mxu0 0
    %1170 = vmatpush1.bf16.msra.mxu0 0
    %1171 = vmatprep.subr.bf16.mxu0 0
    %1172 = vmatpush1.bf16.msra.mxu0 0
    %1173 = vmatprep.mubr.bf16.mxu0 0
    %1174 = vmatmul.mubr.bf16.gmra.mrb[0].mxu0 %v1016
    %v1175 = vpop.f32.mrb[0].mxu0
    %v1176 = vadd.f32 %v741, %v1175
    %v1177 = vpop.f32.mrb[0].mxu0
    %v1178 = vadd.f32 %v745, %v1177
    %v1179 = vpop.f32.mrb[0].mxu0
    %v1180 = vpop.f32.mrb[0].mxu0
    %1181 = vdwg.mxu0
    %1182 = vmatprep.subr.bf16.mxu0 %v927
    %1183 = vmatpush1.bf16.msra.mxu0 %v926
    %1184 = vmatprep.subr.bf16.mxu0 %v939
    %1185 = vmatpush1.bf16.msra.mxu0 %v938
    %1186 = vmatprep.subr.bf16.mxu0 %v951
    %1187 = vmatpush1.bf16.msra.mxu0 %v950
    %1188 = vmatprep.subr.bf16.mxu0 %v963
    %1189 = vmatpush1.bf16.msra.mxu0 %v962
    %1190 = vmatprep.subr.bf16.mxu0 0
    %1191 = vmatpush1.bf16.msra.mxu0 0
    %1192 = vmatprep.subr.bf16.mxu0 0
    %1193 = vmatpush1.bf16.msra.mxu0 0
    %1194 = vmatprep.subr.bf16.mxu0 0
    %1195 = vmatpush1.bf16.msra.mxu0 0
    %1196 = vmatprep.subr.bf16.mxu0 0
    %1197 = vmatpush1.bf16.msra.mxu0 0
    %1198 = vmatprep.subr.bf16.mxu0 0
    %1199 = vmatpush1.bf16.msra.mxu0 0
    %1200 = vmatprep.subr.bf16.mxu0 0
    %1201 = vmatpush1.bf16.msra.mxu0 0
    %1202 = vmatprep.subr.bf16.mxu0 0
    %1203 = vmatpush1.bf16.msra.mxu0 0
    %1204 = vmatprep.subr.bf16.mxu0 0
    %1205 = vmatpush1.bf16.msra.mxu0 0
    %1206 = vmatprep.subr.bf16.mxu0 0
    %1207 = vmatpush1.bf16.msra.mxu0 0
    %1208 = vmatprep.subr.bf16.mxu0 0
    %1209 = vmatpush1.bf16.msra.mxu0 0
    %1210 = vmatprep.subr.bf16.mxu0 0
    %1211 = vmatpush1.bf16.msra.mxu0 0
    %1212 = vmatprep.subr.bf16.mxu0 0
    %1213 = vmatpush1.bf16.msra.mxu0 0
    %1214 = vmatprep.mubr.bf16.mxu0 0
    %1215 = vmatmul.mubr.bf16.gmra.mrb[0].mxu0 %v1016
    %v1216 = vpop.f32.mrb[0].mxu0
    %v1217 = vadd.f32 %v749, %v1216
    %v1218 = vpop.f32.mrb[0].mxu0
    %v1219 = vadd.f32 %v753, %v1218
    %v1220 = vpop.f32.mrb[0].mxu0
    %v1221 = vpop.f32.mrb[0].mxu0
    %1222 = vdwg.mxu0
    %1223 = vmatprep.subr.bf16.mxu0 %v929
    %1224 = vmatpush1.bf16.msra.mxu0 %v928
    %1225 = vmatprep.subr.bf16.mxu0 %v941
    %1226 = vmatpush1.bf16.msra.mxu0 %v940
    %1227 = vmatprep.subr.bf16.mxu0 %v953
    %1228 = vmatpush1.bf16.msra.mxu0 %v952
    %1229 = vmatprep.subr.bf16.mxu0 %v965
    %1230 = vmatpush1.bf16.msra.mxu0 %v964
    %1231 = vmatprep.subr.bf16.mxu0 0
    %1232 = vmatpush1.bf16.msra.mxu0 0
    %1233 = vmatprep.subr.bf16.mxu0 0
    %1234 = vmatpush1.bf16.msra.mxu0 0
    %1235 = vmatprep.subr.bf16.mxu0 0
    %1236 = vmatpush1.bf16.msra.mxu0 0
    %1237 = vmatprep.subr.bf16.mxu0 0
    %1238 = vmatpush1.bf16.msra.mxu0 0
    %1239 = vmatprep.subr.bf16.mxu0 0
    %1240 = vmatpush1.bf16.msra.mxu0 0
    %1241 = vmatprep.subr.bf16.mxu0 0
    %1242 = vmatpush1.bf16.msra.mxu0 0
    %1243 = vmatprep.subr.bf16.mxu0 0
    %1244 = vmatpush1.bf16.msra.mxu0 0
    %1245 = vmatprep.subr.bf16.mxu0 0
    %1246 = vmatpush1.bf16.msra.mxu0 0
    %1247 = vmatprep.subr.bf16.mxu0 0
    %1248 = vmatpush1.bf16.msra.mxu0 0
    %1249 = vmatprep.subr.bf16.mxu0 0
    %1250 = vmatpush1.bf16.msra.mxu0 0
    %1251 = vmatprep.subr.bf16.mxu0 0
    %1252 = vmatpush1.bf16.msra.mxu0 0
    %1253 = vmatprep.subr.bf16.mxu0 0
    %1254 = vmatpush1.bf16.msra.mxu0 0
    %1255 = vmatprep.mubr.bf16.mxu0 0
    %1256 = vmatmul.mubr.bf16.gmra.mrb[0].mxu0 %v1016
    %v1257 = vpop.f32.mrb[0].mxu0
    %v1258 = vadd.f32 %v757, %v1257
    %v1259 = vpop.f32.mrb[0].mxu0
    %v1260 = vadd.f32 %v761, %v1259
    %v1261 = vpop.f32.mrb[0].mxu0
    %v1262 = vpop.f32.mrb[0].mxu0
    %1263 = vdwg.mxu0
    %v1264 = vmax.f32 %v1053, 0.0
    %v1265 = vmax.f32 %v1055, 0.0
    %v1266 = vmax.f32 %v1094, 0.0
    %v1267 = vmax.f32 %v1096, 0.0
    %v1268 = vmax.f32 %v1135, 0.0
    %v1269 = vmax.f32 %v1137, 0.0
    %v1270 = vmax.f32 %v1176, 0.0
    %v1271 = vmax.f32 %v1178, 0.0
    %v1272 = vmax.f32 %v1217, 0.0
    %v1273 = vmax.f32 %v1219, 0.0
    %v1274 = vmax.f32 %v1258, 0.0
    %v1275 = vmax.f32 %v1260, 0.0
    %v1276 = vpack.c.bf16 %v1266, %v1264
    %v1277 = vpack.c.bf16 %v1267, %v1265
    %v1278 = vpack.c.bf16 %v1268, %v1268
    %v1279 = vpack.c.bf16 %v1269, %v1269
    %v1280 = vld [vmem:[#allocation10] sm:$0xff]
    %v1281 = vld [vmem:[#allocation10 + $0x24] sm:$0xff]
    %v1282 = vld [vmem:[#allocation10 + $0x48] sm:$0xff]
    %v1283 = vld [vmem:[#allocation10 + $0x6c] sm:$0xff]
    %v1284 = vld [vmem:[#allocation10 + $0x90] sm:$0xff]
    %v1285 = vld [vmem:[#allocation10 + $0xb4] sm:$0xff]
    %v1286 = vld [vmem:[#allocation10 + $0xd8] sm:$0xff]
    %v1287 = vld [vmem:[#allocation10 + $0xfc] sm:$0xff]
    %v1288 = vld [vmem:[#allocation10 + $0x120] sm:$0xff]
    %v1289 = vld [vmem:[#allocation10 + $0x144] sm:$0xff]
    %v1290 = vld [vmem:[#allocation10 + $0x168] sm:$0xff]
    %v1291 = vld [vmem:[#allocation10 + $0x18c] sm:$0xff]
    %v1292 = vld [vmem:[#allocation10 + $0x1b0] sm:$0xff]
    %v1293 = vld [vmem:[#allocation10 + $0x1d4] sm:$0xff]
    %v1294 = vld [vmem:[#allocation10 + $0x1f8] sm:$0xff]
    %v1295 = vld [vmem:[#allocation10 + $0x21c] sm:$0xff]
    %v1296 = vld [vmem:[#allocation10 + $0x240] sm:$0xff]
    %v1297 = vld [vmem:[#allocation10 + $0x264] sm:$0xff]
    %v1298 = vld [vmem:[#allocation10 + $0x288] sm:$0xff]
    %v1299 = vld [vmem:[#allocation10 + $0x2ac] sm:$0xff]
    %v1300 = vld [vmem:[#allocation10 + $0x2d0] sm:$0xff]
    %v1301 = vld [vmem:[#allocation10 + $0x2f4] sm:$0xff]
    %v1302 = vld [vmem:[#allocation10 + $0x318] sm:$0xff]
    %v1303 = vld [vmem:[#allocation10 + $0x33c] sm:$0xff]
    %v1304 = vld [vmem:[#allocation10 + $0x360] sm:$0xff]
    %v1305 = vld [vmem:[#allocation10 + $0x384] sm:$0xff]
    %v1306 = vld [vmem:[#allocation10 + $0x3a8] sm:$0xff]
    %v1307 = vld [vmem:[#allocation10 + $0x3cc] sm:$0xff]
    %v1308 = vld [vmem:[#allocation10 + $0x3f0] sm:$0xff]
    %v1309 = vld [vmem:[#allocation10 + $0x414] sm:$0xff]
    %v1310 = vld [vmem:[#allocation10 + $0x438] sm:$0xff]
    %v1311 = vld [vmem:[#allocation10 + $0x45c] sm:$0xff]
    %v1344 = vunpack.c.l.b16 %v1280
    %v1345 = vunpack.c.h.b16 %v1280
    %v1346 = vunpack.c.l.b16 %v1281
    %v1347 = vunpack.c.h.b16 %v1281
    %v1348 = vunpack.c.l.b16 %v1282
    %v1349 = vunpack.c.h.b16 %v1282
    %v1350 = vunpack.c.l.b16 %v1283
    %v1351 = vunpack.c.h.b16 %v1283
    %v1352 = vunpack.c.l.b16 %v1284
    %v1353 = vunpack.c.h.b16 %v1284
    %v1354 = vunpack.c.l.b16 %v1285
    %v1355 = vunpack.c.h.b16 %v1285
    %v1356 = vunpack.c.l.b16 %v1286
    %v1357 = vunpack.c.h.b16 %v1286
    %v1358 = vunpack.c.l.b16 %v1287
    %v1359 = vunpack.c.h.b16 %v1287
    %v1360 = vunpack.c.l.b16 %v1288
    %v1361 = vunpack.c.h.b16 %v1288
    %v1362 = vunpack.c.l.b16 %v1289
    %v1363 = vunpack.c.h.b16 %v1289
    %v1364 = vunpack.c.l.b16 %v1290
    %v1365 = vunpack.c.h.b16 %v1290
    %v1366 = vunpack.c.l.b16 %v1291
    %v1367 = vunpack.c.h.b16 %v1291
    %v1368 = vunpack.c.l.b16 %v1292
    %v1369 = vunpack.c.h.b16 %v1292
    %v1370 = vunpack.c.l.b16 %v1293
    %v1371 = vunpack.c.h.b16 %v1293
    %v1372 = vunpack.c.l.b16 %v1294
    %v1373 = vunpack.c.h.b16 %v1294
    %v1374 = vunpack.c.l.b16 %v1295
    %v1375 = vunpack.c.h.b16 %v1295
    %v1376 = vunpack.c.l.b16 %v1296
    %v1377 = vunpack.c.h.b16 %v1296
    %v1378 = vunpack.c.l.b16 %v1297
    %v1379 = vunpack.c.h.b16 %v1297
    %v1380 = vunpack.c.l.b16 %v1298
    %v1381 = vunpack.c.h.b16 %v1298
    %v1382 = vunpack.c.l.b16 %v1299
    %v1383 = vunpack.c.h.b16 %v1299
    %v1384 = vunpack.c.l.b16 %v1300
    %v1385 = vunpack.c.h.b16 %v1300
    %v1386 = vunpack.c.l.b16 %v1301
    %v1387 = vunpack.c.h.b16 %v1301
    %v1388 = vunpack.c.l.b16 %v1302
    %v1389 = vunpack.c.h.b16 %v1302
    %v1390 = vunpack.c.l.b16 %v1303
    %v1391 = vunpack.c.h.b16 %v1303
    %v1392 = vunpack.c.l.b16 %v1304
    %v1393 = vunpack.c.h.b16 %v1304
    %v1394 = vunpack.c.l.b16 %v1305
    %v1395 = vunpack.c.h.b16 %v1305
    %v1396 = vunpack.c.l.b16 %v1306
    %v1397 = vunpack.c.h.b16 %v1306
    %v1398 = vunpack.c.l.b16 %v1307
    %v1399 = vunpack.c.h.b16 %v1307
    %v1400 = vunpack.c.l.b16 %v1308
    %v1401 = vunpack.c.h.b16 %v1308
    %v1402 = vunpack.c.l.b16 %v1309
    %v1403 = vunpack.c.h.b16 %v1309
    %v1404 = vunpack.c.l.b16 %v1310
    %v1405 = vunpack.c.h.b16 %v1310
    %v1406 = vunpack.c.l.b16 %v1311
    %v1407 = vunpack.c.h.b16 %v1311
    %v1408 = vpack.c.b16 %v1346, %v1344
    %v1409 = vpack.c.b16 %v1347, %v1345
    %v1410 = vpack.c.b16 %v1350, %v1348
    %v1411 = vpack.c.b16 %v1351, %v1349
    %v1412 = vpack.c.b16 %v1354, %v1352
    %v1413 = vpack.c.b16 %v1355, %v1353
    %v1414 = vpack.c.b16 %v1358, %v1356
    %v1415 = vpack.c.b16 %v1359, %v1357
    %v1416 = vpack.c.b16 %v1362, %v1360
    %v1417 = vpack.c.b16 %v1363, %v1361
    %v1418 = vpack.c.b16 %v1366, %v1364
    %v1419 = vpack.c.b16 %v1367, %v1365
    %v1420 = vpack.c.b16 %v1370, %v1368
    %v1421 = vpack.c.b16 %v1371, %v1369
    %v1422 = vpack.c.b16 %v1374, %v1372
    %v1423 = vpack.c.b16 %v1375, %v1373
    %v1424 = vpack.c.b16 %v1378, %v1376
    %v1425 = vpack.c.b16 %v1379, %v1377
    %v1426 = vpack.c.b16 %v1382, %v1380
    %v1427 = vpack.c.b16 %v1383, %v1381
    %v1428 = vpack.c.b16 %v1386, %v1384
    %v1429 = vpack.c.b16 %v1387, %v1385
    %v1430 = vpack.c.b16 %v1390, %v1388
    %v1431 = vpack.c.b16 %v1391, %v1389
    %v1432 = vpack.c.b16 %v1394, %v1392
    %v1433 = vpack.c.b16 %v1395, %v1393
    %v1434 = vpack.c.b16 %v1398, %v1396
    %v1435 = vpack.c.b16 %v1399, %v1397
    %v1436 = vpack.c.b16 %v1402, %v1400
    %v1437 = vpack.c.b16 %v1403, %v1401
    %v1438 = vpack.c.b16 %v1406, %v1404
    %v1439 = vpack.c.b16 %v1407, %v1405
    %1472 = vmatprep.subr.bf16.mxu0 %v1409
    %1473 = vmatpush1.bf16.msra.mxu0 %v1408
    %1474 = vmatprep.subr.bf16.mxu0 %v1411
    %1475 = vmatpush1.bf16.msra.mxu0 %v1410
    %1476 = vmatprep.subr.bf16.mxu0 %v1413
    %1477 = vmatpush1.bf16.msra.mxu0 %v1412
    %1478 = vmatprep.subr.bf16.mxu0 %v1415
    %1479 = vmatpush1.bf16.msra.mxu0 %v1414
    %1480 = vmatprep.subr.bf16.mxu0 %v1417
    %1481 = vmatpush1.bf16.msra.mxu0 %v1416
    %1482 = vmatprep.subr.bf16.mxu0 %v1419
    %1483 = vmatpush1.bf16.msra.mxu0 %v1418
    %1484 = vmatprep.subr.bf16.mxu0 %v1421
    %1485 = vmatpush1.bf16.msra.mxu0 %v1420
    %1486 = vmatprep.subr.bf16.mxu0 %v1423
    %1487 = vmatpush1.bf16.msra.mxu0 %v1422
    %1488 = vmatprep.subr.bf16.mxu0 %v1425
    %1489 = vmatpush1.bf16.msra.mxu0 %v1424
    %1490 = vmatprep.subr.bf16.mxu0 %v1427
    %1491 = vmatpush1.bf16.msra.mxu0 %v1426
    %1492 = vmatprep.subr.bf16.mxu0 %v1429
    %1493 = vmatpush1.bf16.msra.mxu0 %v1428
    %1494 = vmatprep.subr.bf16.mxu0 %v1431
    %1495 = vmatpush1.bf16.msra.mxu0 %v1430
    %1496 = vmatprep.subr.bf16.mxu0 %v1433
    %1497 = vmatpush1.bf16.msra.mxu0 %v1432
    %1498 = vmatprep.subr.bf16.mxu0 %v1435
    %1499 = vmatpush1.bf16.msra.mxu0 %v1434
    %1500 = vmatprep.subr.bf16.mxu0 %v1437
    %1501 = vmatpush1.bf16.msra.mxu0 %v1436
    %1502 = vmatprep.subr.bf16.mxu0 %v1439
    %1503 = vmatpush1.bf16.msra.mxu0 %v1438
    %1504 = vmatprep.mubr.bf16.mxu0 %v1277
    %1505 = vmatmul.mubr.bf16.gmra.mrb[0].mxu0 %v1276
    %v1506 = vpop.f32.mrb[0].mxu0
    %v1507 = vadd.f32 0.0, %v1506
    %v1508 = vpop.f32.mrb[0].mxu0
    %v1509 = vadd.f32 0.0, %v1508
    %v1510 = vpop.f32.mrb[0].mxu0
    %v1511 = vadd.f32 0.0, %v1510
    %v1512 = vpop.f32.mrb[0].mxu0
    %v1513 = vadd.f32 0.0, %v1512
    %1514 = vmatprep.mubr.bf16.mxu0 %v1279
    %1515 = vmatmul.mubr.bf16.gmra.mrb[0].mxu0 %v1278
    %v1516 = vpop.f32.mrb[0].mxu0
    %v1517 = vadd.f32 0.0, %v1516
    %v1518 = vpop.f32.mrb[0].mxu0
    %v1519 = vadd.f32 0.0, %v1518
    %v1520 = vpop.f32.mrb[0].mxu0
    %v1521 = vpop.f32.mrb[0].mxu0
    %1522 = vdwg.mxu0
    %v1523 = vld [vmem:[#allocation11] sm:$0x1]
    %v1525 = vrot.slane %v1509, 2
    %v1527 = vadd.f32 %v1507, %v1525
    %v1528 = vlaneseq
    %v1529 = vshrl.u32 %v1528, 7
    %v1530 = vsub.s32 0, %v1529
    %v1531 = vrot.slane %v1523, %v1530
    %v1532 = vadd.f32 %v1527, %v1531
    %v1533 = vmax.f32 %v1532, 0.0
    %vm1534 = vcmask 1041408
    %v1535 = vsel %vm1534, %v1533, 0.0
    %v1536 = vpack.c.bf16 %v1535, %v1535
    %s1537 = smul.u32 4, 16
    %s1538 = smul.u32 %s1537, 8
    %s1539 = sshll.u32 %s1538, 4
    %1540 = dma.done [#allocation4], %s1539
    %v1541 = vld [vmem:[#allocation2] sm:$0xff]
    %v1542 = vld [vmem:[#allocation2 + $0x8] sm:$0xff]
    %v1543 = vld [vmem:[#allocation2 + $0x10] sm:$0xff]
    %v1544 = vld [vmem:[#allocation2 + $0x18] sm:$0xff]
    %v1545 = vld [vmem:[#allocation2 + $0x20] sm:$0xff]
    %v1546 = vld [vmem:[#allocation2 + $0x28] sm:$0xff]
    %v1547 = vld [vmem:[#allocation2 + $0x30] sm:$0xff]
    %v1548 = vld [vmem:[#allocation2 + $0x38] sm:$0xff]
    %v1549 = vld [vmem:[#allocation2 + $0x40] sm:$0xff]
    %v1550 = vld [vmem:[#allocation2 + $0x48] sm:$0xff]
    %v1551 = vld [vmem:[#allocation2 + $0x50] sm:$0xff]
    %v1552 = vld [vmem:[#allocation2 + $0x58] sm:$0xff]
    %v1553 = vld [vmem:[#allocation2 + $0x60] sm:$0xff]
    %v1554 = vld [vmem:[#allocation2 + $0x68] sm:$0xff]
    %v1555 = vld [vmem:[#allocation2 + $0x70] sm:$0xff]
    %v1556 = vld [vmem:[#allocation2 + $0x78] sm:$0xff]
    %v1557 = vld [vmem:[#allocation2 + $0x80] sm:$0xff]
    %v1558 = vld [vmem:[#allocation2 + $0x88] sm:$0xff]
    %v1559 = vld [vmem:[#allocation2 + $0x90] sm:$0xff]
    %v1560 = vld [vmem:[#allocation2 + $0x98] sm:$0xff]
    %v1561 = vld [vmem:[#allocation2 + $0xa0] sm:$0xff]
    %v1562 = vld [vmem:[#allocation2 + $0xa8] sm:$0xff]
    %v1563 = vld [vmem:[#allocation2 + $0xb0] sm:$0xff]
    %v1564 = vld [vmem:[#allocation2 + $0xb8] sm:$0xff]
    %v1565 = vld [vmem:[#allocation2 + $0xc0] sm:$0xff]
    %v1566 = vld [vmem:[#allocation2 + $0xc8] sm:$0xff]
    %v1567 = vld [vmem:[#allocation2 + $0xd0] sm:$0xff]
    %v1568 = vld [vmem:[#allocation2 + $0xd8] sm:$0xff]
    %v1569 = vld [vmem:[#allocation2 + $0xe0] sm:$0xff]
    %v1570 = vld [vmem:[#allocation2 + $0xe8] sm:$0xff]
    %v1571 = vld [vmem:[#allocation2 + $0xf0] sm:$0xff]
    %v1572 = vld [vmem:[#allocation2 + $0xf8] sm:$0xff]
    %v1573 = vld [vmem:[#allocation2 + $0x100] sm:$0xff]
    %v1574 = vld [vmem:[#allocation2 + $0x108] sm:$0xff]
    %v1575 = vld [vmem:[#allocation2 + $0x110] sm:$0xff]
    %v1576 = vld [vmem:[#allocation2 + $0x118] sm:$0xff]
    %v1577 = vld [vmem:[#allocation2 + $0x120] sm:$0xff]
    %v1578 = vld [vmem:[#allocation2 + $0x128] sm:$0xff]
    %v1579 = vld [vmem:[#allocation2 + $0x130] sm:$0xff]
    %v1580 = vld [vmem:[#allocation2 + $0x138] sm:$0xff]
    %v1581 = vld [vmem:[#allocation2 + $0x140] sm:$0xff]
    %v1582 = vld [vmem:[#allocation2 + $0x148] sm:$0xff]
    %v1583 = vld [vmem:[#allocation2 + $0x150] sm:$0xff]
    %v1584 = vld [vmem:[#allocation2 + $0x158] sm:$0xff]
    %v1585 = vld [vmem:[#allocation2 + $0x160] sm:$0xff]
    %v1586 = vld [vmem:[#allocation2 + $0x168] sm:$0xff]
    %v1587 = vld [vmem:[#allocation2 + $0x170] sm:$0xff]
    %v1588 = vld [vmem:[#allocation2 + $0x178] sm:$0xff]
    %v1589 = vld [vmem:[#allocation2 + $0x180] sm:$0xff]
    %v1590 = vld [vmem:[#allocation2 + $0x188] sm:$0xff]
    %v1591 = vld [vmem:[#allocation2 + $0x190] sm:$0xff]
    %v1592 = vld [vmem:[#allocation2 + $0x198] sm:$0xff]
    %v1593 = vld [vmem:[#allocation2 + $0x1a0] sm:$0xff]
    %v1594 = vld [vmem:[#allocation2 + $0x1a8] sm:$0xff]
    %v1595 = vld [vmem:[#allocation2 + $0x1b0] sm:$0xff]
    %v1596 = vld [vmem:[#allocation2 + $0x1b8] sm:$0xff]
    %v1597 = vld [vmem:[#allocation2 + $0x1c0] sm:$0xff]
    %v1598 = vld [vmem:[#allocation2 + $0x1c8] sm:$0xff]
    %v1599 = vld [vmem:[#allocation2 + $0x1d0] sm:$0xff]
    %v1600 = vld [vmem:[#allocation2 + $0x1d8] sm:$0xff]
    %v1601 = vld [vmem:[#allocation2 + $0x1e0] sm:$0xff]
    %v1602 = vld [vmem:[#allocation2 + $0x1e8] sm:$0xff]
    %v1603 = vld [vmem:[#allocation2 + $0x1f0] sm:$0xff]
    %v1604 = vld [vmem:[#allocation2 + $0x1f8] sm:$0xff]
    %v1606 = vrot.slane %v1513, 2
    %v1608 = vadd.f32 %v1511, %v1606
    %v1609 = vadd.f32 %v1608, %v1531
    %v1610 = vmax.f32 %v1609, 0.0
    %v1611 = vsel %vm1534, %v1610, 0.0
    %v1612 = vpack.c.bf16 %v1611, %v1611
    %s1613 = sshll.u32 %s1538, 4
    %1614 = dma.done %s171, %s1613
    %v1615 = vld [vmem:[%s170] sm:$0xff]
    %v1616 = vld [vmem:[%s170 + $0x8] sm:$0xff]
    %v1617 = vld [vmem:[%s170 + $0x10] sm:$0xff]
    %v1618 = vld [vmem:[%s170 + $0x18] sm:$0xff]
    %v1619 = vld [vmem:[%s170 + $0x20] sm:$0xff]
    %v1620 = vld [vmem:[%s170 + $0x28] sm:$0xff]
    %v1621 = vld [vmem:[%s170 + $0x30] sm:$0xff]
    %v1622 = vld [vmem:[%s170 + $0x38] sm:$0xff]
    %v1623 = vld [vmem:[%s170 + $0x40] sm:$0xff]
    %v1624 = vld [vmem:[%s170 + $0x48] sm:$0xff]
    %v1625 = vld [vmem:[%s170 + $0x50] sm:$0xff]
    %v1626 = vld [vmem:[%s170 + $0x58] sm:$0xff]
    %v1627 = vld [vmem:[%s170 + $0x60] sm:$0xff]
    %v1628 = vld [vmem:[%s170 + $0x68] sm:$0xff]
    %v1629 = vld [vmem:[%s170 + $0x70] sm:$0xff]
    %v1630 = vld [vmem:[%s170 + $0x78] sm:$0xff]
    %v1631 = vld [vmem:[%s170 + $0x80] sm:$0xff]
    %v1632 = vld [vmem:[%s170 + $0x88] sm:$0xff]
    %v1633 = vld [vmem:[%s170 + $0x90] sm:$0xff]
    %v1634 = vld [vmem:[%s170 + $0x98] sm:$0xff]
    %v1635 = vld [vmem:[%s170 + $0xa0] sm:$0xff]
    %v1636 = vld [vmem:[%s170 + $0xa8] sm:$0xff]
    %v1637 = vld [vmem:[%s170 + $0xb0] sm:$0xff]
    %v1638 = vld [vmem:[%s170 + $0xb8] sm:$0xff]
    %v1639 = vld [vmem:[%s170 + $0xc0] sm:$0xff]
    %v1640 = vld [vmem:[%s170 + $0xc8] sm:$0xff]
    %v1641 = vld [vmem:[%s170 + $0xd0] sm:$0xff]
    %v1642 = vld [vmem:[%s170 + $0xd8] sm:$0xff]
    %v1643 = vld [vmem:[%s170 + $0xe0] sm:$0xff]
    %v1644 = vld [vmem:[%s170 + $0xe8] sm:$0xff]
    %v1645 = vld [vmem:[%s170 + $0xf0] sm:$0xff]
    %v1646 = vld [vmem:[%s170 + $0xf8] sm:$0xff]
    %v1647 = vld [vmem:[%s170 + $0x100] sm:$0xff]
    %v1648 = vld [vmem:[%s170 + $0x108] sm:$0xff]
    %v1649 = vld [vmem:[%s170 + $0x110] sm:$0xff]
    %v1650 = vld [vmem:[%s170 + $0x118] sm:$0xff]
    %v1651 = vld [vmem:[%s170 + $0x120] sm:$0xff]
    %v1652 = vld [vmem:[%s170 + $0x128] sm:$0xff]
    %v1653 = vld [vmem:[%s170 + $0x130] sm:$0xff]
    %v1654 = vld [vmem:[%s170 + $0x138] sm:$0xff]
    %v1655 = vld [vmem:[%s170 + $0x140] sm:$0xff]
    %v1656 = vld [vmem:[%s170 + $0x148] sm:$0xff]
    %v1657 = vld [vmem:[%s170 + $0x150] sm:$0xff]
    %v1658 = vld [vmem:[%s170 + $0x158] sm:$0xff]
    %v1659 = vld [vmem:[%s170 + $0x160] sm:$0xff]
    %v1660 = vld [vmem:[%s170 + $0x168] sm:$0xff]
    %v1661 = vld [vmem:[%s170 + $0x170] sm:$0xff]
    %v1662 = vld [vmem:[%s170 + $0x178] sm:$0xff]
    %v1663 = vld [vmem:[%s170 + $0x180] sm:$0xff]
    %v1664 = vld [vmem:[%s170 + $0x188] sm:$0xff]
    %v1665 = vld [vmem:[%s170 + $0x190] sm:$0xff]
    %v1666 = vld [vmem:[%s170 + $0x198] sm:$0xff]
    %v1667 = vld [vmem:[%s170 + $0x1a0] sm:$0xff]
    %v1668 = vld [vmem:[%s170 + $0x1a8] sm:$0xff]
    %v1669 = vld [vmem:[%s170 + $0x1b0] sm:$0xff]
    %v1670 = vld [vmem:[%s170 + $0x1b8] sm:$0xff]
    %v1671 = vld [vmem:[%s170 + $0x1c0] sm:$0xff]
    %v1672 = vld [vmem:[%s170 + $0x1c8] sm:$0xff]
    %v1673 = vld [vmem:[%s170 + $0x1d0] sm:$0xff]
    %v1674 = vld [vmem:[%s170 + $0x1d8] sm:$0xff]
    %v1675 = vld [vmem:[%s170 + $0x1e0] sm:$0xff]
    %v1676 = vld [vmem:[%s170 + $0x1e8] sm:$0xff]
    %v1677 = vld [vmem:[%s170 + $0x1f0] sm:$0xff]
    %v1678 = vld [vmem:[%s170 + $0x1f8] sm:$0xff]
    %1679 = vmatprep.subr.bf16.mxu0 %v1616
    %1680 = vmatpush1.bf16.msra.mxu0 %v1615
    %1681 = vmatprep.subr.bf16.mxu0 %v1624
    %1682 = vmatpush1.bf16.msra.mxu0 %v1623
    %1683 = vmatprep.subr.bf16.mxu0 %v1632
    %1684 = vmatpush1.bf16.msra.mxu0 %v1631
    %1685 = vmatprep.subr.bf16.mxu0 %v1640
    %1686 = vmatpush1.bf16.msra.mxu0 %v1639
    %1687 = vmatprep.subr.bf16.mxu0 %v1648
    %1688 = vmatpush1.bf16.msra.mxu0 %v1647
    %1689 = vmatprep.subr.bf16.mxu0 %v1656
    %1690 = vmatpush1.bf16.msra.mxu0 %v1655
    %1691 = vmatprep.subr.bf16.mxu0 %v1664
    %1692 = vmatpush1.bf16.msra.mxu0 %v1663
    %1693 = vmatprep.subr.bf16.mxu0 %v1672
    %1694 = vmatpush1.bf16.msra.mxu0 %v1671
    %1695 = vmatprep.subr.bf16.mxu0 0
    %1696 = vmatpush1.bf16.msra.mxu0 0
    %1697 = vmatprep.subr.bf16.mxu0 0
    %1698 = vmatpush1.bf16.msra.mxu0 0
    %1699 = vmatprep.subr.bf16.mxu0 0
    %1700 = vmatpush1.bf16.msra.mxu0 0
    %1701 = vmatprep.subr.bf16.mxu0 0
    %1702 = vmatpush1.bf16.msra.mxu0 0
    %1703 = vmatprep.subr.bf16.mxu0 0
    %1704 = vmatpush1.bf16.msra.mxu0 0
    %1705 = vmatprep.subr.bf16.mxu0 0
    %1706 = vmatpush1.bf16.msra.mxu0 0
    %1707 = vmatprep.subr.bf16.mxu0 0
    %1708 = vmatpush1.bf16.msra.mxu0 0
    %1709 = vmatprep.subr.bf16.mxu0 0
    %1710 = vmatpush1.bf16.msra.mxu0 0
    %1711 = vmatprep.mubr.bf16.mxu0 0
    %1712 = vmatmul.mubr.bf16.gmra.mrb[0].mxu0 %v1612
    %v1713 = vpop.f32.mrb[0].mxu0
    %v1714 = vadd.f32 0.0, %v1713
    %v1715 = vpop.f32.mrb[0].mxu0
    %v1716 = vadd.f32 0.0, %v1715
    %v1717 = vpop.f32.mrb[0].mxu0
    %v1718 = vpop.f32.mrb[0].mxu0
    %1719 = vdwg.mxu0
    %1720 = vmatprep.subr.bf16.mxu0 %v1618
    %1721 = vmatpush1.bf16.msra.mxu0 %v1617
    %1722 = vmatprep.subr.bf16.mxu0 %v1626
    %1723 = vmatpush1.bf16.msra.mxu0 %v1625
    %1724 = vmatprep.subr.bf16.mxu0 %v1634
    %1725 = vmatpush1.bf16.msra.mxu0 %v1633
    %1726 = vmatprep.subr.bf16.mxu0 %v1642
    %1727 = vmatpush1.bf16.msra.mxu0 %v1641
    %1728 = vmatprep.subr.bf16.mxu0 %v1650
    %1729 = vmatpush1.bf16.msra.mxu0 %v1649
    %1730 = vmatprep.subr.bf16.mxu0 %v1658
    %1731 = vmatpush1.bf16.msra.mxu0 %v1657
    %1732 = vmatprep.subr.bf16.mxu0 %v1666
    %1733 = vmatpush1.bf16.msra.mxu0 %v1665
    %1734 = vmatprep.subr.bf16.mxu0 %v1674
    %1735 = vmatpush1.bf16.msra.mxu0 %v1673
    %1736 = vmatprep.subr.bf16.mxu0 0
    %1737 = vmatpush1.bf16.msra.mxu0 0
    %1738 = vmatprep.subr.bf16.mxu0 0
    %1739 = vmatpush1.bf16.msra.mxu0 0
    %1740 = vmatprep.subr.bf16.mxu0 0
    %1741 = vmatpush1.bf16.msra.mxu0 0
    %1742 = vmatprep.subr.bf16.mxu0 0
    %1743 = vmatpush1.bf16.msra.mxu0 0
    %1744 = vmatprep.subr.bf16.mxu0 0
    %1745 = vmatpush1.bf16.msra.mxu0 0
    %1746 = vmatprep.subr.bf16.mxu0 0
    %1747 = vmatpush1.bf16.msra.mxu0 0
    %1748 = vmatprep.subr.bf16.mxu0 0
    %1749 = vmatpush1.bf16.msra.mxu0 0
    %1750 = vmatprep.subr.bf16.mxu0 0
    %1751 = vmatpush1.bf16.msra.mxu0 0
    %1752 = vmatprep.mubr.bf16.mxu0 0
    %1753 = vmatmul.mubr.bf16.gmra.mrb[0].mxu0 %v1612
    %v1754 = vpop.f32.mrb[0].mxu0
    %v1755 = vadd.f32 0.0, %v1754
    %v1756 = vpop.f32.mrb[0].mxu0
    %v1757 = vadd.f32 0.0, %v1756
    %v1758 = vpop.f32.mrb[0].mxu0
    %v1759 = vpop.f32.mrb[0].mxu0
    %1760 = vdwg.mxu0
    %1761 = vmatprep.subr.bf16.mxu0 %v1620
    %1762 = vmatpush1.bf16.msra.mxu0 %v1619
    %1763 = vmatprep.subr.bf16.mxu0 %v1628
    %1764 = vmatpush1.bf16.msra.mxu0 %v1627
    %1765 = vmatprep.subr.bf16.mxu0 %v1636
    %1766 = vmatpush1.bf16.msra.mxu0 %v1635
    %1767 = vmatprep.subr.bf16.mxu0 %v1644
    %1768 = vmatpush1.bf16.msra.mxu0 %v1643
    %1769 = vmatprep.subr.bf16.mxu0 %v1652
    %1770 = vmatpush1.bf16.msra.mxu0 %v1651
    %1771 = vmatprep.subr.bf16.mxu0 %v1660
    %1772 = vmatpush1.bf16.msra.mxu0 %v1659
    %1773 = vmatprep.subr.bf16.mxu0 %v1668
    %1774 = vmatpush1.bf16.msra.mxu0 %v1667
    %1775 = vmatprep.subr.bf16.mxu0 %v1676
    %1776 = vmatpush1.bf16.msra.mxu0 %v1675
    %1777 = vmatprep.subr.bf16.mxu0 0
    %1778 = vmatpush1.bf16.msra.mxu0 0
    %1779 = vmatprep.subr.bf16.mxu0 0
    %1780 = vmatpush1.bf16.msra.mxu0 0
    %1781 = vmatprep.subr.bf16.mxu0 0
    %1782 = vmatpush1.bf16.msra.mxu0 0
    %1783 = vmatprep.subr.bf16.mxu0 0
    %1784 = vmatpush1.bf16.msra.mxu0 0
    %1785 = vmatprep.subr.bf16.mxu0 0
    %1786 = vmatpush1.bf16.msra.mxu0 0
    %1787 = vmatprep.subr.bf16.mxu0 0
    %1788 = vmatpush1.bf16.msra.mxu0 0
    %1789 = vmatprep.subr.bf16.mxu0 0
    %1790 = vmatpush1.bf16.msra.mxu0 0
    %1791 = vmatprep.subr.bf16.mxu0 0
    %1792 = vmatpush1.bf16.msra.mxu0 0
    %1793 = vmatprep.mubr.bf16.mxu0 0
    %1794 = vmatmul.mubr.bf16.gmra.mrb[0].mxu0 %v1612
    %v1795 = vpop.f32.mrb[0].mxu0
    %v1796 = vadd.f32 0.0, %v1795
    %v1797 = vpop.f32.mrb[0].mxu0
    %v1798 = vadd.f32 0.0, %v1797
    %v1799 = vpop.f32.mrb[0].mxu0
    %v1800 = vpop.f32.mrb[0].mxu0
    %1801 = vdwg.mxu0
    %1802 = vmatprep.subr.bf16.mxu0 %v1622
    %1803 = vmatpush1.bf16.msra.mxu0 %v1621
    %1804 = vmatprep.subr.bf16.mxu0 %v1630
    %1805 = vmatpush1.bf16.msra.mxu0 %v1629
    %1806 = vmatprep.subr.bf16.mxu0 %v1638
    %1807 = vmatpush1.bf16.msra.mxu0 %v1637
    %1808 = vmatprep.subr.bf16.mxu0 %v1646
    %1809 = vmatpush1.bf16.msra.mxu0 %v1645
    %1810 = vmatprep.subr.bf16.mxu0 %v1654
    %1811 = vmatpush1.bf16.msra.mxu0 %v1653
    %1812 = vmatprep.subr.bf16.mxu0 %v1662
    %1813 = vmatpush1.bf16.msra.mxu0 %v1661
    %1814 = vmatprep.subr.bf16.mxu0 %v1670
    %1815 = vmatpush1.bf16.msra.mxu0 %v1669
    %1816 = vmatprep.subr.bf16.mxu0 %v1678
    %1817 = vmatpush1.bf16.msra.mxu0 %v1677
    %1818 = vmatprep.subr.bf16.mxu0 0
    %1819 = vmatpush1.bf16.msra.mxu0 0
    %1820 = vmatprep.subr.bf16.mxu0 0
    %1821 = vmatpush1.bf16.msra.mxu0 0
    %1822 = vmatprep.subr.bf16.mxu0 0
    %1823 = vmatpush1.bf16.msra.mxu0 0
    %1824 = vmatprep.subr.bf16.mxu0 0
    %1825 = vmatpush1.bf16.msra.mxu0 0
    %1826 = vmatprep.subr.bf16.mxu0 0
    %1827 = vmatpush1.bf16.msra.mxu0 0
    %1828 = vmatprep.subr.bf16.mxu0 0
    %1829 = vmatpush1.bf16.msra.mxu0 0
    %1830 = vmatprep.subr.bf16.mxu0 0
    %1831 = vmatpush1.bf16.msra.mxu0 0
    %1832 = vmatprep.subr.bf16.mxu0 0
    %1833 = vmatpush1.bf16.msra.mxu0 0
    %1834 = vmatprep.mubr.bf16.mxu0 0
    %1835 = vmatmul.mubr.bf16.gmra.mrb[0].mxu0 %v1612
    %v1836 = vpop.f32.mrb[0].mxu0
    %v1837 = vadd.f32 0.0, %v1836
    %v1838 = vpop.f32.mrb[0].mxu0
    %v1839 = vadd.f32 0.0, %v1838
    %v1840 = vpop.f32.mrb[0].mxu0
    %v1841 = vpop.f32.mrb[0].mxu0
    %1842 = vdwg.mxu0
    %1843 = vmatprep.subr.bf16.mxu0 %v1542
    %1844 = vmatpush1.bf16.msra.mxu0 %v1541
    %1845 = vmatprep.subr.bf16.mxu0 %v1550
    %1846 = vmatpush1.bf16.msra.mxu0 %v1549
    %1847 = vmatprep.subr.bf16.mxu0 %v1558
    %1848 = vmatpush1.bf16.msra.mxu0 %v1557
    %1849 = vmatprep.subr.bf16.mxu0 %v1566
    %1850 = vmatpush1.bf16.msra.mxu0 %v1565
    %1851 = vmatprep.subr.bf16.mxu0 %v1574
    %1852 = vmatpush1.bf16.msra.mxu0 %v1573
    %1853 = vmatprep.subr.bf16.mxu0 %v1582
    %1854 = vmatpush1.bf16.msra.mxu0 %v1581
    %1855 = vmatprep.subr.bf16.mxu0 %v1590
    %1856 = vmatpush1.bf16.msra.mxu0 %v1589
    %1857 = vmatprep.subr.bf16.mxu0 %v1598
    %1858 = vmatpush1.bf16.msra.mxu0 %v1597
    %1859 = vmatprep.subr.bf16.mxu0 0
    %1860 = vmatpush1.bf16.msra.mxu0 0
    %1861 = vmatprep.subr.bf16.mxu0 0
    %1862 = vmatpush1.bf16.msra.mxu0 0
    %1863 = vmatprep.subr.bf16.mxu0 0
    %1864 = vmatpush1.bf16.msra.mxu0 0
    %1865 = vmatprep.subr.bf16.mxu0 0
    %1866 = vmatpush1.bf16.msra.mxu0 0
    %1867 = vmatprep.subr.bf16.mxu0 0
    %1868 = vmatpush1.bf16.msra.mxu0 0
    %1869 = vmatprep.subr.bf16.mxu0 0
    %1870 = vmatpush1.bf16.msra.mxu0 0
    %1871 = vmatprep.subr.bf16.mxu0 0
    %1872 = vmatpush1.bf16.msra.mxu0 0
    %1873 = vmatprep.subr.bf16.mxu0 0
    %1874 = vmatpush1.bf16.msra.mxu0 0
    %1875 = vmatprep.mubr.bf16.mxu0 0
    %1876 = vmatmul.mubr.bf16.gmra.mrb[0].mxu0 %v1536
    %v1877 = vpop.f32.mrb[0].mxu0
    %v1878 = vadd.f32 %v1714, %v1877
    %v1879 = vpop.f32.mrb[0].mxu0
    %v1880 = vadd.f32 %v1716, %v1879
    %v1881 = vpop.f32.mrb[0].mxu0
    %v1882 = vpop.f32.mrb[0].mxu0
    %1883 = vdwg.mxu0
    %1884 = vmatprep.subr.bf16.mxu0 %v1544
    %1885 = vmatpush1.bf16.msra.mxu0 %v1543
    %1886 = vmatprep.subr.bf16.mxu0 %v1552
    %1887 = vmatpush1.bf16.msra.mxu0 %v1551
    %1888 = vmatprep.subr.bf16.mxu0 %v1560
    %1889 = vmatpush1.bf16.msra.mxu0 %v1559
    %1890 = vmatprep.subr.bf16.mxu0 %v1568
    %1891 = vmatpush1.bf16.msra.mxu0 %v1567
    %1892 = vmatprep.subr.bf16.mxu0 %v1576
    %1893 = vmatpush1.bf16.msra.mxu0 %v1575
    %1894 = vmatprep.subr.bf16.mxu0 %v1584
    %1895 = vmatpush1.bf16.msra.mxu0 %v1583
    %1896 = vmatprep.subr.bf16.mxu0 %v1592
    %1897 = vmatpush1.bf16.msra.mxu0 %v1591
    %1898 = vmatprep.subr.bf16.mxu0 %v1600
    %1899 = vmatpush1.bf16.msra.mxu0 %v1599
    %1900 = vmatprep.subr.bf16.mxu0 0
    %1901 = vmatpush1.bf16.msra.mxu0 0
    %1902 = vmatprep.subr.bf16.mxu0 0
    %1903 = vmatpush1.bf16.msra.mxu0 0
    %1904 = vmatprep.subr.bf16.mxu0 0
    %1905 = vmatpush1.bf16.msra.mxu0 0
    %1906 = vmatprep.subr.bf16.mxu0 0
    %1907 = vmatpush1.bf16.msra.mxu0 0
    %1908 = vmatprep.subr.bf16.mxu0 0
    %1909 = vmatpush1.bf16.msra.mxu0 0
    %1910 = vmatprep.subr.bf16.mxu0 0
    %1911 = vmatpush1.bf16.msra.mxu0 0
    %1912 = vmatprep.subr.bf16.mxu0 0
    %1913 = vmatpush1.bf16.msra.mxu0 0
    %1914 = vmatprep.subr.bf16.mxu0 0
    %1915 = vmatpush1.bf16.msra.mxu0 0
    %1916 = vmatprep.mubr.bf16.mxu0 0
    %1917 = vmatmul.mubr.bf16.gmra.mrb[0].mxu0 %v1536
    %v1918 = vpop.f32.mrb[0].mxu0
    %v1919 = vadd.f32 %v1755, %v1918
    %v1920 = vpop.f32.mrb[0].mxu0
    %v1921 = vadd.f32 %v1757, %v1920
    %v1922 = vpop.f32.mrb[0].mxu0
    %v1923 = vpop.f32.mrb[0].mxu0
    %1924 = vdwg.mxu0
    %1925 = vmatprep.subr.bf16.mxu0 %v1546
    %1926 = vmatpush1.bf16.msra.mxu0 %v1545
    %1927 = vmatprep.subr.bf16.mxu0 %v1554
    %1928 = vmatpush1.bf16.msra.mxu0 %v1553
    %1929 = vmatprep.subr.bf16.mxu0 %v1562
    %1930 = vmatpush1.bf16.msra.mxu0 %v1561
    %1931 = vmatprep.subr.bf16.mxu0 %v1570
    %1932 = vmatpush1.bf16.msra.mxu0 %v1569
    %1933 = vmatprep.subr.bf16.mxu0 %v1578
    %1934 = vmatpush1.bf16.msra.mxu0 %v1577
    %1935 = vmatprep.subr.bf16.mxu0 %v1586
    %1936 = vmatpush1.bf16.msra.mxu0 %v1585
    %1937 = vmatprep.subr.bf16.mxu0 %v1594
    %1938 = vmatpush1.bf16.msra.mxu0 %v1593
    %1939 = vmatprep.subr.bf16.mxu0 %v1602
    %1940 = vmatpush1.bf16.msra.mxu0 %v1601
    %1941 = vmatprep.subr.bf16.mxu0 0
    %1942 = vmatpush1.bf16.msra.mxu0 0
    %1943 = vmatprep.subr.bf16.mxu0 0
    %1944 = vmatpush1.bf16.msra.mxu0 0
    %1945 = vmatprep.subr.bf16.mxu0 0
    %1946 = vmatpush1.bf16.msra.mxu0 0
    %1947 = vmatprep.subr.bf16.mxu0 0
    %1948 = vmatpush1.bf16.msra.mxu0 0
    %1949 = vmatprep.subr.bf16.mxu0 0
    %1950 = vmatpush1.bf16.msra.mxu0 0
    %1951 = vmatprep.subr.bf16.mxu0 0
    %1952 = vmatpush1.bf16.msra.mxu0 0
    %1953 = vmatprep.subr.bf16.mxu0 0
    %1954 = vmatpush1.bf16.msra.mxu0 0
    %1955 = vmatprep.subr.bf16.mxu0 0
    %1956 = vmatpush1.bf16.msra.mxu0 0
    %1957 = vmatprep.mubr.bf16.mxu0 0
    %1958 = vmatmul.mubr.bf16.gmra.mrb[0].mxu0 %v1536
    %v1959 = vpop.f32.mrb[0].mxu0
    %v1960 = vadd.f32 %v1796, %v1959
    %v1961 = vpop.f32.mrb[0].mxu0
    %v1962 = vadd.f32 %v1798, %v1961
    %v1963 = vpop.f32.mrb[0].mxu0
    %v1964 = vpop.f32.mrb[0].mxu0
    %1965 = vdwg.mxu0
    %1966 = vmatprep.subr.bf16.mxu0 %v1548
    %1967 = vmatpush1.bf16.msra.mxu0 %v1547
    %1968 = vmatprep.subr.bf16.mxu0 %v1556
    %1969 = vmatpush1.bf16.msra.mxu0 %v1555
    %1970 = vmatprep.subr.bf16.mxu0 %v1564
    %1971 = vmatpush1.bf16.msra.mxu0 %v1563
    %1972 = vmatprep.subr.bf16.mxu0 %v1572
    %1973 = vmatpush1.bf16.msra.mxu0 %v1571
    %1974 = vmatprep.subr.bf16.mxu0 %v1580
    %1975 = vmatpush1.bf16.msra.mxu0 %v1579
    %1976 = vmatprep.subr.bf16.mxu0 %v1588
    %1977 = vmatpush1.bf16.msra.mxu0 %v1587
    %1978 = vmatprep.subr.bf16.mxu0 %v1596
    %1979 = vmatpush1.bf16.msra.mxu0 %v1595
    %1980 = vmatprep.subr.bf16.mxu0 %v1604
    %1981 = vmatpush1.bf16.msra.mxu0 %v1603
    %1982 = vmatprep.subr.bf16.mxu0 0
    %1983 = vmatpush1.bf16.msra.mxu0 0
    %1984 = vmatprep.subr.bf16.mxu0 0
    %1985 = vmatpush1.bf16.msra.mxu0 0
    %1986 = vmatprep.subr.bf16.mxu0 0
    %1987 = vmatpush1.bf16.msra.mxu0 0
    %1988 = vmatprep.subr.bf16.mxu0 0
    %1989 = vmatpush1.bf16.msra.mxu0 0
    %1990 = vmatprep.subr.bf16.mxu0 0
    %1991 = vmatpush1.bf16.msra.mxu0 0
    %1992 = vmatprep.subr.bf16.mxu0 0
    %1993 = vmatpush1.bf16.msra.mxu0 0
    %1994 = vmatprep.subr.bf16.mxu0 0
    %1995 = vmatpush1.bf16.msra.mxu0 0
    %1996 = vmatprep.subr.bf16.mxu0 0
    %1997 = vmatpush1.bf16.msra.mxu0 0
    %1998 = vmatprep.mubr.bf16.mxu0 0
    %1999 = vmatmul.mubr.bf16.gmra.mrb[0].mxu0 %v1536
    %v2000 = vpop.f32.mrb[0].mxu0
    %v2001 = vadd.f32 %v1837, %v2000
    %v2002 = vpop.f32.mrb[0].mxu0
    %v2003 = vadd.f32 %v1839, %v2002
    %v2004 = vpop.f32.mrb[0].mxu0
    %v2005 = vpop.f32.mrb[0].mxu0
    %2006 = vdwg.mxu0
    %v2008 = vrot.slane %v1519, 2
    %v2010 = vadd.f32 %v1517, %v2008
    %v2011 = vadd.f32 %v2010, %v1531
    %v2012 = vmax.f32 %v2011, 0.0
    %v2013 = vsel %vm1534, %v2012, 0.0
    %v2014 = vpack.c.bf16 %v2013, %v2013
    %s2015 = sshll.u32 %s1538, 4
    %2016 = dma.done %s208, %s2015
    %v2017 = vld [vmem:[%s207] sm:$0xff]
    %v2018 = vld [vmem:[%s207 + $0x8] sm:$0xff]
    %v2019 = vld [vmem:[%s207 + $0x10] sm:$0xff]
    %v2020 = vld [vmem:[%s207 + $0x18] sm:$0xff]
    %v2021 = vld [vmem:[%s207 + $0x20] sm:$0xff]
    %v2022 = vld [vmem:[%s207 + $0x28] sm:$0xff]
    %v2023 = vld [vmem:[%s207 + $0x30] sm:$0xff]
    %v2024 = vld [vmem:[%s207 + $0x38] sm:$0xff]
    %v2025 = vld [vmem:[%s207 + $0x40] sm:$0xff]
    %v2026 = vld [vmem:[%s207 + $0x48] sm:$0xff]
    %v2027 = vld [vmem:[%s207 + $0x50] sm:$0xff]
    %v2028 = vld [vmem:[%s207 + $0x58] sm:$0xff]
    %v2029 = vld [vmem:[%s207 + $0x60] sm:$0xff]
    %v2030 = vld [vmem:[%s207 + $0x68] sm:$0xff]
    %v2031 = vld [vmem:[%s207 + $0x70] sm:$0xff]
    %v2032 = vld [vmem:[%s207 + $0x78] sm:$0xff]
    %v2033 = vld [vmem:[%s207 + $0x80] sm:$0xff]
    %v2034 = vld [vmem:[%s207 + $0x88] sm:$0xff]
    %v2035 = vld [vmem:[%s207 + $0x90] sm:$0xff]
    %v2036 = vld [vmem:[%s207 + $0x98] sm:$0xff]
    %v2037 = vld [vmem:[%s207 + $0xa0] sm:$0xff]
    %v2038 = vld [vmem:[%s207 + $0xa8] sm:$0xff]
    %v2039 = vld [vmem:[%s207 + $0xb0] sm:$0xff]
    %v2040 = vld [vmem:[%s207 + $0xb8] sm:$0xff]
    %v2041 = vld [vmem:[%s207 + $0xc0] sm:$0xff]
    %v2042 = vld [vmem:[%s207 + $0xc8] sm:$0xff]
    %v2043 = vld [vmem:[%s207 + $0xd0] sm:$0xff]
    %v2044 = vld [vmem:[%s207 + $0xd8] sm:$0xff]
    %v2045 = vld [vmem:[%s207 + $0xe0] sm:$0xff]
    %v2046 = vld [vmem:[%s207 + $0xe8] sm:$0xff]
    %v2047 = vld [vmem:[%s207 + $0xf0] sm:$0xff]
    %v2048 = vld [vmem:[%s207 + $0xf8] sm:$0xff]
    %v2049 = vld [vmem:[%s207 + $0x100] sm:$0xff]
    %v2050 = vld [vmem:[%s207 + $0x108] sm:$0xff]
    %v2051 = vld [vmem:[%s207 + $0x110] sm:$0xff]
    %v2052 = vld [vmem:[%s207 + $0x118] sm:$0xff]
    %v2053 = vld [vmem:[%s207 + $0x120] sm:$0xff]
    %v2054 = vld [vmem:[%s207 + $0x128] sm:$0xff]
    %v2055 = vld [vmem:[%s207 + $0x130] sm:$0xff]
    %v2056 = vld [vmem:[%s207 + $0x138] sm:$0xff]
    %v2057 = vld [vmem:[%s207 + $0x140] sm:$0xff]
    %v2058 = vld [vmem:[%s207 + $0x148] sm:$0xff]
    %v2059 = vld [vmem:[%s207 + $0x150] sm:$0xff]
    %v2060 = vld [vmem:[%s207 + $0x158] sm:$0xff]
    %v2061 = vld [vmem:[%s207 + $0x160] sm:$0xff]
    %v2062 = vld [vmem:[%s207 + $0x168] sm:$0xff]
    %v2063 = vld [vmem:[%s207 + $0x170] sm:$0xff]
    %v2064 = vld [vmem:[%s207 + $0x178] sm:$0xff]
    %v2065 = vld [vmem:[%s207 + $0x180] sm:$0xff]
    %v2066 = vld [vmem:[%s207 + $0x188] sm:$0xff]
    %v2067 = vld [vmem:[%s207 + $0x190] sm:$0xff]
    %v2068 = vld [vmem:[%s207 + $0x198] sm:$0xff]
    %v2069 = vld [vmem:[%s207 + $0x1a0] sm:$0xff]
    %v2070 = vld [vmem:[%s207 + $0x1a8] sm:$0xff]
    %v2071 = vld [vmem:[%s207 + $0x1b0] sm:$0xff]
    %v2072 = vld [vmem:[%s207 + $0x1b8] sm:$0xff]
    %v2073 = vld [vmem:[%s207 + $0x1c0] sm:$0xff]
    %v2074 = vld [vmem:[%s207 + $0x1c8] sm:$0xff]
    %v2075 = vld [vmem:[%s207 + $0x1d0] sm:$0xff]
    %v2076 = vld [vmem:[%s207 + $0x1d8] sm:$0xff]
    %v2077 = vld [vmem:[%s207 + $0x1e0] sm:$0xff]
    %v2078 = vld [vmem:[%s207 + $0x1e8] sm:$0xff]
    %v2079 = vld [vmem:[%s207 + $0x1f0] sm:$0xff]
    %v2080 = vld [vmem:[%s207 + $0x1f8] sm:$0xff]
    %2081 = vmatprep.subr.bf16.mxu0 %v2018
    %2082 = vmatpush1.bf16.msra.mxu0 %v2017
    %2083 = vmatprep.subr.bf16.mxu0 %v2026
    %2084 = vmatpush1.bf16.msra.mxu0 %v2025
    %2085 = vmatprep.subr.bf16.mxu0 %v2034
    %2086 = vmatpush1.bf16.msra.mxu0 %v2033
    %2087 = vmatprep.subr.bf16.mxu0 %v2042
    %2088 = vmatpush1.bf16.msra.mxu0 %v2041
    %2089 = vmatprep.subr.bf16.mxu0 %v2050
    %2090 = vmatpush1.bf16.msra.mxu0 %v2049
    %2091 = vmatprep.subr.bf16.mxu0 %v2058
    %2092 = vmatpush1.bf16.msra.mxu0 %v2057
    %2093 = vmatprep.subr.bf16.mxu0 %v2066
    %2094 = vmatpush1.bf16.msra.mxu0 %v2065
    %2095 = vmatprep.subr.bf16.mxu0 %v2074
    %2096 = vmatpush1.bf16.msra.mxu0 %v2073
    %2097 = vmatprep.subr.bf16.mxu0 0
    %2098 = vmatpush1.bf16.msra.mxu0 0
    %2099 = vmatprep.subr.bf16.mxu0 0
    %2100 = vmatpush1.bf16.msra.mxu0 0
    %2101 = vmatprep.subr.bf16.mxu0 0
    %2102 = vmatpush1.bf16.msra.mxu0 0
    %2103 = vmatprep.subr.bf16.mxu0 0
    %2104 = vmatpush1.bf16.msra.mxu0 0
    %2105 = vmatprep.subr.bf16.mxu0 0
    %2106 = vmatpush1.bf16.msra.mxu0 0
    %2107 = vmatprep.subr.bf16.mxu0 0
    %2108 = vmatpush1.bf16.msra.mxu0 0
    %2109 = vmatprep.subr.bf16.mxu0 0
    %2110 = vmatpush1.bf16.msra.mxu0 0
    %2111 = vmatprep.subr.bf16.mxu0 0
    %2112 = vmatpush1.bf16.msra.mxu0 0
    %2113 = vmatprep.mubr.bf16.mxu0 0
    %2114 = vmatmul.mubr.bf16.gmra.mrb[0].mxu0 %v2014
    %v2115 = vpop.f32.mrb[0].mxu0
    %v2116 = vadd.f32 0.0, %v2115
    %v2117 = vpop.f32.mrb[0].mxu0
    %v2118 = vadd.f32 0.0, %v2117
    %v2119 = vpop.f32.mrb[0].mxu0
    %v2120 = vpop.f32.mrb[0].mxu0
    %2121 = vdwg.mxu0
    %2122 = vmatprep.subr.bf16.mxu0 %v2020
    %2123 = vmatpush1.bf16.msra.mxu0 %v2019
    %2124 = vmatprep.subr.bf16.mxu0 %v2028
    %2125 = vmatpush1.bf16.msra.mxu0 %v2027
    %2126 = vmatprep.subr.bf16.mxu0 %v2036
    %2127 = vmatpush1.bf16.msra.mxu0 %v2035
    %2128 = vmatprep.subr.bf16.mxu0 %v2044
    %2129 = vmatpush1.bf16.msra.mxu0 %v2043
    %2130 = vmatprep.subr.bf16.mxu0 %v2052
    %2131 = vmatpush1.bf16.msra.mxu0 %v2051
    %2132 = vmatprep.subr.bf16.mxu0 %v2060
    %2133 = vmatpush1.bf16.msra.mxu0 %v2059
    %2134 = vmatprep.subr.bf16.mxu0 %v2068
    %2135 = vmatpush1.bf16.msra.mxu0 %v2067
    %2136 = vmatprep.subr.bf16.mxu0 %v2076
    %2137 = vmatpush1.bf16.msra.mxu0 %v2075
    %2138 = vmatprep.subr.bf16.mxu0 0
    %2139 = vmatpush1.bf16.msra.mxu0 0
    %2140 = vmatprep.subr.bf16.mxu0 0
    %2141 = vmatpush1.bf16.msra.mxu0 0
    %2142 = vmatprep.subr.bf16.mxu0 0
    %2143 = vmatpush1.bf16.msra.mxu0 0
    %2144 = vmatprep.subr.bf16.mxu0 0
    %2145 = vmatpush1.bf16.msra.mxu0 0
    %2146 = vmatprep.subr.bf16.mxu0 0
    %2147 = vmatpush1.bf16.msra.mxu0 0
    %2148 = vmatprep.subr.bf16.mxu0 0
    %2149 = vmatpush1.bf16.msra.mxu0 0
    %2150 = vmatprep.subr.bf16.mxu0 0
    %2151 = vmatpush1.bf16.msra.mxu0 0
    %2152 = vmatprep.subr.bf16.mxu0 0
    %2153 = vmatpush1.bf16.msra.mxu0 0
    %2154 = vmatprep.mubr.bf16.mxu0 0
    %2155 = vmatmul.mubr.bf16.gmra.mrb[0].mxu0 %v2014
    %v2156 = vpop.f32.mrb[0].mxu0
    %v2157 = vadd.f32 0.0, %v2156
    %v2158 = vpop.f32.mrb[0].mxu0
    %v2159 = vadd.f32 0.0, %v2158
    %v2160 = vpop.f32.mrb[0].mxu0
    %v2161 = vpop.f32.mrb[0].mxu0
    %2162 = vdwg.mxu0
    %2163 = vmatprep.subr.bf16.mxu0 %v2022
    %2164 = vmatpush1.bf16.msra.mxu0 %v2021
    %2165 = vmatprep.subr.bf16.mxu0 %v2030
    %2166 = vmatpush1.bf16.msra.mxu0 %v2029
    %2167 = vmatprep.subr.bf16.mxu0 %v2038
    %2168 = vmatpush1.bf16.msra.mxu0 %v2037
    %2169 = vmatprep.subr.bf16.mxu0 %v2046
    %2170 = vmatpush1.bf16.msra.mxu0 %v2045
    %2171 = vmatprep.subr.bf16.mxu0 %v2054
    %2172 = vmatpush1.bf16.msra.mxu0 %v2053
    %2173 = vmatprep.subr.bf16.mxu0 %v2062
    %2174 = vmatpush1.bf16.msra.mxu0 %v2061
    %2175 = vmatprep.subr.bf16.mxu0 %v2070
    %2176 = vmatpush1.bf16.msra.mxu0 %v2069
    %2177 = vmatprep.subr.bf16.mxu0 %v2078
    %2178 = vmatpush1.bf16.msra.mxu0 %v2077
    %2179 = vmatprep.subr.bf16.mxu0 0
    %2180 = vmatpush1.bf16.msra.mxu0 0
    %2181 = vmatprep.subr.bf16.mxu0 0
    %2182 = vmatpush1.bf16.msra.mxu0 0
    %2183 = vmatprep.subr.bf16.mxu0 0
    %2184 = vmatpush1.bf16.msra.mxu0 0
    %2185 = vmatprep.subr.bf16.mxu0 0
    %2186 = vmatpush1.bf16.msra.mxu0 0
    %2187 = vmatprep.subr.bf16.mxu0 0
    %2188 = vmatpush1.bf16.msra.mxu0 0
    %2189 = vmatprep.subr.bf16.mxu0 0
    %2190 = vmatpush1.bf16.msra.mxu0 0
    %2191 = vmatprep.subr.bf16.mxu0 0
    %2192 = vmatpush1.bf16.msra.mxu0 0
    %2193 = vmatprep.subr.bf16.mxu0 0
    %2194 = vmatpush1.bf16.msra.mxu0 0
    %2195 = vmatprep.mubr.bf16.mxu0 0
    %2196 = vmatmul.mubr.bf16.gmra.mrb[0].mxu0 %v2014
    %v2197 = vpop.f32.mrb[0].mxu0
    %v2198 = vadd.f32 0.0, %v2197
    %v2199 = vpop.f32.mrb[0].mxu0
    %v2200 = vadd.f32 0.0, %v2199
    %v2201 = vpop.f32.mrb[0].mxu0
    %v2202 = vpop.f32.mrb[0].mxu0
    %2203 = vdwg.mxu0
    %2204 = vmatprep.subr.bf16.mxu0 %v2024
    %2205 = vmatpush1.bf16.msra.mxu0 %v2023
    %2206 = vmatprep.subr.bf16.mxu0 %v2032
    %2207 = vmatpush1.bf16.msra.mxu0 %v2031
    %2208 = vmatprep.subr.bf16.mxu0 %v2040
    %2209 = vmatpush1.bf16.msra.mxu0 %v2039
    %2210 = vmatprep.subr.bf16.mxu0 %v2048
    %2211 = vmatpush1.bf16.msra.mxu0 %v2047
    %2212 = vmatprep.subr.bf16.mxu0 %v2056
    %2213 = vmatpush1.bf16.msra.mxu0 %v2055
    %2214 = vmatprep.subr.bf16.mxu0 %v2064
    %2215 = vmatpush1.bf16.msra.mxu0 %v2063
    %2216 = vmatprep.subr.bf16.mxu0 %v2072
    %2217 = vmatpush1.bf16.msra.mxu0 %v2071
    %2218 = vmatprep.subr.bf16.mxu0 %v2080
    %2219 = vmatpush1.bf16.msra.mxu0 %v2079
    %2220 = vmatprep.subr.bf16.mxu0 0
    %2221 = vmatpush1.bf16.msra.mxu0 0
    %2222 = vmatprep.subr.bf16.mxu0 0
    %2223 = vmatpush1.bf16.msra.mxu0 0
    %2224 = vmatprep.subr.bf16.mxu0 0
    %2225 = vmatpush1.bf16.msra.mxu0 0
    %2226 = vmatprep.subr.bf16.mxu0 0
    %2227 = vmatpush1.bf16.msra.mxu0 0
    %2228 = vmatprep.subr.bf16.mxu0 0
    %2229 = vmatpush1.bf16.msra.mxu0 0
    %2230 = vmatprep.subr.bf16.mxu0 0
    %2231 = vmatpush1.bf16.msra.mxu0 0
    %2232 = vmatprep.subr.bf16.mxu0 0
    %2233 = vmatpush1.bf16.msra.mxu0 0
    %2234 = vmatprep.subr.bf16.mxu0 0
    %2235 = vmatpush1.bf16.msra.mxu0 0
    %2236 = vmatprep.mubr.bf16.mxu0 0
    %2237 = vmatmul.mubr.bf16.gmra.mrb[0].mxu0 %v2014
    %v2238 = vpop.f32.mrb[0].mxu0
    %v2239 = vadd.f32 0.0, %v2238
    %v2240 = vpop.f32.mrb[0].mxu0
    %v2241 = vadd.f32 0.0, %v2240
    %v2242 = vpop.f32.mrb[0].mxu0
    %v2243 = vpop.f32.mrb[0].mxu0
    %2244 = vdwg.mxu0
    %v2245 = vadd.f32 %v1878, %v2116
    %v2246 = vadd.f32 %v1880, %v2118
    %v2247 = vadd.f32 %v1919, %v2157
    %v2248 = vadd.f32 %v1921, %v2159
    %v2249 = vadd.f32 %v1960, %v2198
    %v2250 = vadd.f32 %v1962, %v2200
    %v2251 = vadd.f32 %v2001, %v2239
    %v2252 = vadd.f32 %v2003, %v2241
    %v2254 = vrot.slane %v1533, 2
    %v2256 = vsel %vm1534, %v2254, 0.0
    %v2257 = vpack.c.bf16 %v2256, %v2256
    %s2258 = sshll.u32 %s1538, 4
    %2259 = dma.done %s245, %s2258
    %v2260 = vld [vmem:[%s244] sm:$0xff]
    %v2261 = vld [vmem:[%s244 + $0x8] sm:$0xff]
    %v2262 = vld [vmem:[%s244 + $0x10] sm:$0xff]
    %v2263 = vld [vmem:[%s244 + $0x18] sm:$0xff]
    %v2264 = vld [vmem:[%s244 + $0x20] sm:$0xff]
    %v2265 = vld [vmem:[%s244 + $0x28] sm:$0xff]
    %v2266 = vld [vmem:[%s244 + $0x30] sm:$0xff]
    %v2267 = vld [vmem:[%s244 + $0x38] sm:$0xff]
    %v2268 = vld [vmem:[%s244 + $0x40] sm:$0xff]
    %v2269 = vld [vmem:[%s244 + $0x48] sm:$0xff]
    %v2270 = vld [vmem:[%s244 + $0x50] sm:$0xff]
    %v2271 = vld [vmem:[%s244 + $0x58] sm:$0xff]
    %v2272 = vld [vmem:[%s244 + $0x60] sm:$0xff]
    %v2273 = vld [vmem:[%s244 + $0x68] sm:$0xff]
    %v2274 = vld [vmem:[%s244 + $0x70] sm:$0xff]
    %v2275 = vld [vmem:[%s244 + $0x78] sm:$0xff]
    %v2276 = vld [vmem:[%s244 + $0x80] sm:$0xff]
    %v2277 = vld [vmem:[%s244 + $0x88] sm:$0xff]
    %v2278 = vld [vmem:[%s244 + $0x90] sm:$0xff]
    %v2279 = vld [vmem:[%s244 + $0x98] sm:$0xff]
    %v2280 = vld [vmem:[%s244 + $0xa0] sm:$0xff]
    %v2281 = vld [vmem:[%s244 + $0xa8] sm:$0xff]
    %v2282 = vld [vmem:[%s244 + $0xb0] sm:$0xff]
    %v2283 = vld [vmem:[%s244 + $0xb8] sm:$0xff]
    %v2284 = vld [vmem:[%s244 + $0xc0] sm:$0xff]
    %v2285 = vld [vmem:[%s244 + $0xc8] sm:$0xff]
    %v2286 = vld [vmem:[%s244 + $0xd0] sm:$0xff]
    %v2287 = vld [vmem:[%s244 + $0xd8] sm:$0xff]
    %v2288 = vld [vmem:[%s244 + $0xe0] sm:$0xff]
    %v2289 = vld [vmem:[%s244 + $0xe8] sm:$0xff]
    %v2290 = vld [vmem:[%s244 + $0xf0] sm:$0xff]
    %v2291 = vld [vmem:[%s244 + $0xf8] sm:$0xff]
    %v2292 = vld [vmem:[%s244 + $0x100] sm:$0xff]
    %v2293 = vld [vmem:[%s244 + $0x108] sm:$0xff]
    %v2294 = vld [vmem:[%s244 + $0x110] sm:$0xff]
    %v2295 = vld [vmem:[%s244 + $0x118] sm:$0xff]
    %v2296 = vld [vmem:[%s244 + $0x120] sm:$0xff]
    %v2297 = vld [vmem:[%s244 + $0x128] sm:$0xff]
    %v2298 = vld [vmem:[%s244 + $0x130] sm:$0xff]
    %v2299 = vld [vmem:[%s244 + $0x138] sm:$0xff]
    %v2300 = vld [vmem:[%s244 + $0x140] sm:$0xff]
    %v2301 = vld [vmem:[%s244 + $0x148] sm:$0xff]
    %v2302 = vld [vmem:[%s244 + $0x150] sm:$0xff]
    %v2303 = vld [vmem:[%s244 + $0x158] sm:$0xff]
    %v2304 = vld [vmem:[%s244 + $0x160] sm:$0xff]
    %v2305 = vld [vmem:[%s244 + $0x168] sm:$0xff]
    %v2306 = vld [vmem:[%s244 + $0x170] sm:$0xff]
    %v2307 = vld [vmem:[%s244 + $0x178] sm:$0xff]
    %v2308 = vld [vmem:[%s244 + $0x180] sm:$0xff]
    %v2309 = vld [vmem:[%s244 + $0x188] sm:$0xff]
    %v2310 = vld [vmem:[%s244 + $0x190] sm:$0xff]
    %v2311 = vld [vmem:[%s244 + $0x198] sm:$0xff]
    %v2312 = vld [vmem:[%s244 + $0x1a0] sm:$0xff]
    %v2313 = vld [vmem:[%s244 + $0x1a8] sm:$0xff]
    %v2314 = vld [vmem:[%s244 + $0x1b0] sm:$0xff]
    %v2315 = vld [vmem:[%s244 + $0x1b8] sm:$0xff]
    %v2316 = vld [vmem:[%s244 + $0x1c0] sm:$0xff]
    %v2317 = vld [vmem:[%s244 + $0x1c8] sm:$0xff]
    %v2318 = vld [vmem:[%s244 + $0x1d0] sm:$0xff]
    %v2319 = vld [vmem:[%s244 + $0x1d8] sm:$0xff]
    %v2320 = vld [vmem:[%s244 + $0x1e0] sm:$0xff]
    %v2321 = vld [vmem:[%s244 + $0x1e8] sm:$0xff]
    %v2322 = vld [vmem:[%s244 + $0x1f0] sm:$0xff]
    %v2323 = vld [vmem:[%s244 + $0x1f8] sm:$0xff]
    %2324 = vmatprep.subr.bf16.mxu0 %v2261
    %2325 = vmatpush1.bf16.msra.mxu0 %v2260
    %2326 = vmatprep.subr.bf16.mxu0 %v2269
    %2327 = vmatpush1.bf16.msra.mxu0 %v2268
    %2328 = vmatprep.subr.bf16.mxu0 %v2277
    %2329 = vmatpush1.bf16.msra.mxu0 %v2276
    %2330 = vmatprep.subr.bf16.mxu0 %v2285
    %2331 = vmatpush1.bf16.msra.mxu0 %v2284
    %2332 = vmatprep.subr.bf16.mxu0 %v2293
    %2333 = vmatpush1.bf16.msra.mxu0 %v2292
    %2334 = vmatprep.subr.bf16.mxu0 %v2301
    %2335 = vmatpush1.bf16.msra.mxu0 %v2300
    %2336 = vmatprep.subr.bf16.mxu0 %v2309
    %2337 = vmatpush1.bf16.msra.mxu0 %v2308
    %2338 = vmatprep.subr.bf16.mxu0 %v2317
    %2339 = vmatpush1.bf16.msra.mxu0 %v2316
    %2340 = vmatprep.subr.bf16.mxu0 0
    %2341 = vmatpush1.bf16.msra.mxu0 0
    %2342 = vmatprep.subr.bf16.mxu0 0
    %2343 = vmatpush1.bf16.msra.mxu0 0
    %2344 = vmatprep.subr.bf16.mxu0 0
    %2345 = vmatpush1.bf16.msra.mxu0 0
    %2346 = vmatprep.subr.bf16.mxu0 0
    %2347 = vmatpush1.bf16.msra.mxu0 0
    %2348 = vmatprep.subr.bf16.mxu0 0
    %2349 = vmatpush1.bf16.msra.mxu0 0
    %2350 = vmatprep.subr.bf16.mxu0 0
    %2351 = vmatpush1.bf16.msra.mxu0 0
    %2352 = vmatprep.subr.bf16.mxu0 0
    %2353 = vmatpush1.bf16.msra.mxu0 0
    %2354 = vmatprep.subr.bf16.mxu0 0
    %2355 = vmatpush1.bf16.msra.mxu0 0
    %2356 = vmatprep.mubr.bf16.mxu0 0
    %2357 = vmatmul.mubr.bf16.gmra.mrb[0].mxu0 %v2257
    %v2358 = vpop.f32.mrb[0].mxu0
    %v2359 = vadd.f32 0.0, %v2358
    %v2360 = vpop.f32.mrb[0].mxu0
    %v2361 = vadd.f32 0.0, %v2360
    %v2362 = vpop.f32.mrb[0].mxu0
    %v2363 = vpop.f32.mrb[0].mxu0
    %2364 = vdwg.mxu0
    %2365 = vmatprep.subr.bf16.mxu0 %v2263
    %2366 = vmatpush1.bf16.msra.mxu0 %v2262
    %2367 = vmatprep.subr.bf16.mxu0 %v2271
    %2368 = vmatpush1.bf16.msra.mxu0 %v2270
    %2369 = vmatprep.subr.bf16.mxu0 %v2279
    %2370 = vmatpush1.bf16.msra.mxu0 %v2278
    %2371 = vmatprep.subr.bf16.mxu0 %v2287
    %2372 = vmatpush1.bf16.msra.mxu0 %v2286
    %2373 = vmatprep.subr.bf16.mxu0 %v2295
    %2374 = vmatpush1.bf16.msra.mxu0 %v2294
    %2375 = vmatprep.subr.bf16.mxu0 %v2303
    %2376 = vmatpush1.bf16.msra.mxu0 %v2302
    %2377 = vmatprep.subr.bf16.mxu0 %v2311
    %2378 = vmatpush1.bf16.msra.mxu0 %v2310
    %2379 = vmatprep.subr.bf16.mxu0 %v2319
    %2380 = vmatpush1.bf16.msra.mxu0 %v2318
    %2381 = vmatprep.subr.bf16.mxu0 0
    %2382 = vmatpush1.bf16.msra.mxu0 0
    %2383 = vmatprep.subr.bf16.mxu0 0
    %2384 = vmatpush1.bf16.msra.mxu0 0
    %2385 = vmatprep.subr.bf16.mxu0 0
    %2386 = vmatpush1.bf16.msra.mxu0 0
    %2387 = vmatprep.subr.bf16.mxu0 0
    %2388 = vmatpush1.bf16.msra.mxu0 0
    %2389 = vmatprep.subr.bf16.mxu0 0
    %2390 = vmatpush1.bf16.msra.mxu0 0
    %2391 = vmatprep.subr.bf16.mxu0 0
    %2392 = vmatpush1.bf16.msra.mxu0 0
    %2393 = vmatprep.subr.bf16.mxu0 0
    %2394 = vmatpush1.bf16.msra.mxu0 0
    %2395 = vmatprep.subr.bf16.mxu0 0
    %2396 = vmatpush1.bf16.msra.mxu0 0
    %2397 = vmatprep.mubr.bf16.mxu0 0
    %2398 = vmatmul.mubr.bf16.gmra.mrb[0].mxu0 %v2257
    %v2399 = vpop.f32.mrb[0].mxu0
    %v2400 = vadd.f32 0.0, %v2399
    %v2401 = vpop.f32.mrb[0].mxu0
    %v2402 = vadd.f32 0.0, %v2401
    %v2403 = vpop.f32.mrb[0].mxu0
    %v2404 = vpop.f32.mrb[0].mxu0
    %2405 = vdwg.mxu0
    %2406 = vmatprep.subr.bf16.mxu0 %v2265
    %2407 = vmatpush1.bf16.msra.mxu0 %v2264
    %2408 = vmatprep.subr.bf16.mxu0 %v2273
    %2409 = vmatpush1.bf16.msra.mxu0 %v2272
    %2410 = vmatprep.subr.bf16.mxu0 %v2281
    %2411 = vmatpush1.bf16.msra.mxu0 %v2280
    %2412 = vmatprep.subr.bf16.mxu0 %v2289
    %2413 = vmatpush1.bf16.msra.mxu0 %v2288
    %2414 = vmatprep.subr.bf16.mxu0 %v2297
    %2415 = vmatpush1.bf16.msra.mxu0 %v2296
    %2416 = vmatprep.subr.bf16.mxu0 %v2305
    %2417 = vmatpush1.bf16.msra.mxu0 %v2304
    %2418 = vmatprep.subr.bf16.mxu0 %v2313
    %2419 = vmatpush1.bf16.msra.mxu0 %v2312
    %2420 = vmatprep.subr.bf16.mxu0 %v2321
    %2421 = vmatpush1.bf16.msra.mxu0 %v2320
    %2422 = vmatprep.subr.bf16.mxu0 0
    %2423 = vmatpush1.bf16.msra.mxu0 0
    %2424 = vmatprep.subr.bf16.mxu0 0
    %2425 = vmatpush1.bf16.msra.mxu0 0
    %2426 = vmatprep.subr.bf16.mxu0 0
    %2427 = vmatpush1.bf16.msra.mxu0 0
    %2428 = vmatprep.subr.bf16.mxu0 0
    %2429 = vmatpush1.bf16.msra.mxu0 0
    %2430 = vmatprep.subr.bf16.mxu0 0
    %2431 = vmatpush1.bf16.msra.mxu0 0
    %2432 = vmatprep.subr.bf16.mxu0 0
    %2433 = vmatpush1.bf16.msra.mxu0 0
    %2434 = vmatprep.subr.bf16.mxu0 0
    %2435 = vmatpush1.bf16.msra.mxu0 0
    %2436 = vmatprep.subr.bf16.mxu0 0
    %2437 = vmatpush1.bf16.msra.mxu0 0
    %2438 = vmatprep.mubr.bf16.mxu0 0
    %2439 = vmatmul.mubr.bf16.gmra.mrb[0].mxu0 %v2257
    %v2440 = vpop.f32.mrb[0].mxu0
    %v2441 = vadd.f32 0.0, %v2440
    %v2442 = vpop.f32.mrb[0].mxu0
    %v2443 = vadd.f32 0.0, %v2442
    %v2444 = vpop.f32.mrb[0].mxu0
    %v2445 = vpop.f32.mrb[0].mxu0
    %2446 = vdwg.mxu0
    %2447 = vmatprep.subr.bf16.mxu0 %v2267
    %2448 = vmatpush1.bf16.msra.mxu0 %v2266
    %2449 = vmatprep.subr.bf16.mxu0 %v2275
    %2450 = vmatpush1.bf16.msra.mxu0 %v2274
    %2451 = vmatprep.subr.bf16.mxu0 %v2283
    %2452 = vmatpush1.bf16.msra.mxu0 %v2282
    %2453 = vmatprep.subr.bf16.mxu0 %v2291
    %2454 = vmatpush1.bf16.msra.mxu0 %v2290
    %2455 = vmatprep.subr.bf16.mxu0 %v2299
    %2456 = vmatpush1.bf16.msra.mxu0 %v2298
    %2457 = vmatprep.subr.bf16.mxu0 %v2307
    %2458 = vmatpush1.bf16.msra.mxu0 %v2306
    %2459 = vmatprep.subr.bf16.mxu0 %v2315
    %2460 = vmatpush1.bf16.msra.mxu0 %v2314
    %2461 = vmatprep.subr.bf16.mxu0 %v2323
    %2462 = vmatpush1.bf16.msra.mxu0 %v2322
    %2463 = vmatprep.subr.bf16.mxu0 0
    %2464 = vmatpush1.bf16.msra.mxu0 0
    %2465 = vmatprep.subr.bf16.mxu0 0
    %2466 = vmatpush1.bf16.msra.mxu0 0
    %2467 = vmatprep.subr.bf16.mxu0 0
    %2468 = vmatpush1.bf16.msra.mxu0 0
    %2469 = vmatprep.subr.bf16.mxu0 0
    %2470 = vmatpush1.bf16.msra.mxu0 0
    %2471 = vmatprep.subr.bf16.mxu0 0
    %2472 = vmatpush1.bf16.msra.mxu0 0
    %2473 = vmatprep.subr.bf16.mxu0 0
    %2474 = vmatpush1.bf16.msra.mxu0 0
    %2475 = vmatprep.subr.bf16.mxu0 0
    %2476 = vmatpush1.bf16.msra.mxu0 0
    %2477 = vmatprep.subr.bf16.mxu0 0
    %2478 = vmatpush1.bf16.msra.mxu0 0
    %2479 = vmatprep.mubr.bf16.mxu0 0
    %2480 = vmatmul.mubr.bf16.gmra.mrb[0].mxu0 %v2257
    %v2481 = vpop.f32.mrb[0].mxu0
    %v2482 = vadd.f32 0.0, %v2481
    %v2483 = vpop.f32.mrb[0].mxu0
    %v2484 = vadd.f32 0.0, %v2483
    %v2485 = vpop.f32.mrb[0].mxu0
    %v2486 = vpop.f32.mrb[0].mxu0
    %2487 = vdwg.mxu0
    %v2488 = vadd.f32 %v2245, %v2359
    %v2489 = vadd.f32 %v2246, %v2361
    %v2490 = vadd.f32 %v2247, %v2400
    %v2491 = vadd.f32 %v2248, %v2402
    %v2492 = vadd.f32 %v2249, %v2441
    %v2493 = vadd.f32 %v2250, %v2443
    %v2494 = vadd.f32 %v2251, %v2482
    %v2495 = vadd.f32 %v2252, %v2484
    %v2497 = vrot.slane %v1610, 2
    %v2499 = vsel %vm1534, %v2497, 0.0
    %v2500 = vpack.c.bf16 %v2499, %v2499
    %s2501 = sshll.u32 %s1538, 4
    %2502 = dma.done %s282, %s2501
    %v2503 = vld [vmem:[%s281] sm:$0xff]
    %v2504 = vld [vmem:[%s281 + $0x8] sm:$0xff]
    %v2505 = vld [vmem:[%s281 + $0x10] sm:$0xff]
    %v2506 = vld [vmem:[%s281 + $0x18] sm:$0xff]
    %v2507 = vld [vmem:[%s281 + $0x20] sm:$0xff]
    %v2508 = vld [vmem:[%s281 + $0x28] sm:$0xff]
    %v2509 = vld [vmem:[%s281 + $0x30] sm:$0xff]
    %v2510 = vld [vmem:[%s281 + $0x38] sm:$0xff]
    %v2511 = vld [vmem:[%s281 + $0x40] sm:$0xff]
    %v2512 = vld [vmem:[%s281 + $0x48] sm:$0xff]
    %v2513 = vld [vmem:[%s281 + $0x50] sm:$0xff]
    %v2514 = vld [vmem:[%s281 + $0x58] sm:$0xff]
    %v2515 = vld [vmem:[%s281 + $0x60] sm:$0xff]
    %v2516 = vld [vmem:[%s281 + $0x68] sm:$0xff]
    %v2517 = vld [vmem:[%s281 + $0x70] sm:$0xff]
    %v2518 = vld [vmem:[%s281 + $0x78] sm:$0xff]
    %v2519 = vld [vmem:[%s281 + $0x80] sm:$0xff]
    %v2520 = vld [vmem:[%s281 + $0x88] sm:$0xff]
    %v2521 = vld [vmem:[%s281 + $0x90] sm:$0xff]
    %v2522 = vld [vmem:[%s281 + $0x98] sm:$0xff]
    %v2523 = vld [vmem:[%s281 + $0xa0] sm:$0xff]
    %v2524 = vld [vmem:[%s281 + $0xa8] sm:$0xff]
    %v2525 = vld [vmem:[%s281 + $0xb0] sm:$0xff]
    %v2526 = vld [vmem:[%s281 + $0xb8] sm:$0xff]
    %v2527 = vld [vmem:[%s281 + $0xc0] sm:$0xff]
    %v2528 = vld [vmem:[%s281 + $0xc8] sm:$0xff]
    %v2529 = vld [vmem:[%s281 + $0xd0] sm:$0xff]
    %v2530 = vld [vmem:[%s281 + $0xd8] sm:$0xff]
    %v2531 = vld [vmem:[%s281 + $0xe0] sm:$0xff]
    %v2532 = vld [vmem:[%s281 + $0xe8] sm:$0xff]
    %v2533 = vld [vmem:[%s281 + $0xf0] sm:$0xff]
    %v2534 = vld [vmem:[%s281 + $0xf8] sm:$0xff]
    %v2535 = vld [vmem:[%s281 + $0x100] sm:$0xff]
    %v2536 = vld [vmem:[%s281 + $0x108] sm:$0xff]
    %v2537 = vld [vmem:[%s281 + $0x110] sm:$0xff]
    %v2538 = vld [vmem:[%s281 + $0x118] sm:$0xff]
    %v2539 = vld [vmem:[%s281 + $0x120] sm:$0xff]
    %v2540 = vld [vmem:[%s281 + $0x128] sm:$0xff]
    %v2541 = vld [vmem:[%s281 + $0x130] sm:$0xff]
    %v2542 = vld [vmem:[%s281 + $0x138] sm:$0xff]
    %v2543 = vld [vmem:[%s281 + $0x140] sm:$0xff]
    %v2544 = vld [vmem:[%s281 + $0x148] sm:$0xff]
    %v2545 = vld [vmem:[%s281 + $0x150] sm:$0xff]
    %v2546 = vld [vmem:[%s281 + $0x158] sm:$0xff]
    %v2547 = vld [vmem:[%s281 + $0x160] sm:$0xff]
    %v2548 = vld [vmem:[%s281 + $0x168] sm:$0xff]
    %v2549 = vld [vmem:[%s281 + $0x170] sm:$0xff]
    %v2550 = vld [vmem:[%s281 + $0x178] sm:$0xff]
    %v2551 = vld [vmem:[%s281 + $0x180] sm:$0xff]
    %v2552 = vld [vmem:[%s281 + $0x188] sm:$0xff]
    %v2553 = vld [vmem:[%s281 + $0x190] sm:$0xff]
    %v2554 = vld [vmem:[%s281 + $0x198] sm:$0xff]
    %v2555 = vld [vmem:[%s281 + $0x1a0] sm:$0xff]
    %v2556 = vld [vmem:[%s281 + $0x1a8] sm:$0xff]
    %v2557 = vld [vmem:[%s281 + $0x1b0] sm:$0xff]
    %v2558 = vld [vmem:[%s281 + $0x1b8] sm:$0xff]
    %v2559 = vld [vmem:[%s281 + $0x1c0] sm:$0xff]
    %v2560 = vld [vmem:[%s281 + $0x1c8] sm:$0xff]
    %v2561 = vld [vmem:[%s281 + $0x1d0] sm:$0xff]
    %v2562 = vld [vmem:[%s281 + $0x1d8] sm:$0xff]
    %v2563 = vld [vmem:[%s281 + $0x1e0] sm:$0xff]
    %v2564 = vld [vmem:[%s281 + $0x1e8] sm:$0xff]
    %v2565 = vld [vmem:[%s281 + $0x1f0] sm:$0xff]
    %v2566 = vld [vmem:[%s281 + $0x1f8] sm:$0xff]
    %2567 = vmatprep.subr.bf16.mxu0 %v2504
    %2568 = vmatpush1.bf16.msra.mxu0 %v2503
    %2569 = vmatprep.subr.bf16.mxu0 %v2512
    %2570 = vmatpush1.bf16.msra.mxu0 %v2511
    %2571 = vmatprep.subr.bf16.mxu0 %v2520
    %2572 = vmatpush1.bf16.msra.mxu0 %v2519
    %2573 = vmatprep.subr.bf16.mxu0 %v2528
    %2574 = vmatpush1.bf16.msra.mxu0 %v2527
    %2575 = vmatprep.subr.bf16.mxu0 %v2536
    %2576 = vmatpush1.bf16.msra.mxu0 %v2535
    %2577 = vmatprep.subr.bf16.mxu0 %v2544
    %2578 = vmatpush1.bf16.msra.mxu0 %v2543
    %2579 = vmatprep.subr.bf16.mxu0 %v2552
    %2580 = vmatpush1.bf16.msra.mxu0 %v2551
    %2581 = vmatprep.subr.bf16.mxu0 %v2560
    %2582 = vmatpush1.bf16.msra.mxu0 %v2559
    %2583 = vmatprep.subr.bf16.mxu0 0
    %2584 = vmatpush1.bf16.msra.mxu0 0
    %2585 = vmatprep.subr.bf16.mxu0 0
    %2586 = vmatpush1.bf16.msra.mxu0 0
    %2587 = vmatprep.subr.bf16.mxu0 0
    %2588 = vmatpush1.bf16.msra.mxu0 0
    %2589 = vmatprep.subr.bf16.mxu0 0
    %2590 = vmatpush1.bf16.msra.mxu0 0
    %2591 = vmatprep.subr.bf16.mxu0 0
    %2592 = vmatpush1.bf16.msra.mxu0 0
    %2593 = vmatprep.subr.bf16.mxu0 0
    %2594 = vmatpush1.bf16.msra.mxu0 0
    %2595 = vmatprep.subr.bf16.mxu0 0
    %2596 = vmatpush1.bf16.msra.mxu0 0
    %2597 = vmatprep.subr.bf16.mxu0 0
    %2598 = vmatpush1.bf16.msra.mxu0 0
    %2599 = vmatprep.mubr.bf16.mxu0 0
    %2600 = vmatmul.mubr.bf16.gmra.mrb[0].mxu0 %v2500
    %v2601 = vpop.f32.mrb[0].mxu0
    %v2602 = vadd.f32 0.0, %v2601
    %v2603 = vpop.f32.mrb[0].mxu0
    %v2604 = vadd.f32 0.0, %v2603
    %v2605 = vpop.f32.mrb[0].mxu0
    %v2606 = vpop.f32.mrb[0].mxu0
    %2607 = vdwg.mxu0
    %2608 = vmatprep.subr.bf16.mxu0 %v2506
    %2609 = vmatpush1.bf16.msra.mxu0 %v2505
    %2610 = vmatprep.subr.bf16.mxu0 %v2514
    %2611 = vmatpush1.bf16.msra.mxu0 %v2513
    %2612 = vmatprep.subr.bf16.mxu0 %v2522
    %2613 = vmatpush1.bf16.msra.mxu0 %v2521
    %2614 = vmatprep.subr.bf16.mxu0 %v2530
    %2615 = vmatpush1.bf16.msra.mxu0 %v2529
    %2616 = vmatprep.subr.bf16.mxu0 %v2538
    %2617 = vmatpush1.bf16.msra.mxu0 %v2537
    %2618 = vmatprep.subr.bf16.mxu0 %v2546
    %2619 = vmatpush1.bf16.msra.mxu0 %v2545
    %2620 = vmatprep.subr.bf16.mxu0 %v2554
    %2621 = vmatpush1.bf16.msra.mxu0 %v2553
    %2622 = vmatprep.subr.bf16.mxu0 %v2562
    %2623 = vmatpush1.bf16.msra.mxu0 %v2561
    %2624 = vmatprep.subr.bf16.mxu0 0
    %2625 = vmatpush1.bf16.msra.mxu0 0
    %2626 = vmatprep.subr.bf16.mxu0 0
    %2627 = vmatpush1.bf16.msra.mxu0 0
    %2628 = vmatprep.subr.bf16.mxu0 0
    %2629 = vmatpush1.bf16.msra.mxu0 0
    %2630 = vmatprep.subr.bf16.mxu0 0
    %2631 = vmatpush1.bf16.msra.mxu0 0
    %2632 = vmatprep.subr.bf16.mxu0 0
    %2633 = vmatpush1.bf16.msra.mxu0 0
    %2634 = vmatprep.subr.bf16.mxu0 0
    %2635 = vmatpush1.bf16.msra.mxu0 0
    %2636 = vmatprep.subr.bf16.mxu0 0
    %2637 = vmatpush1.bf16.msra.mxu0 0
    %2638 = vmatprep.subr.bf16.mxu0 0
    %2639 = vmatpush1.bf16.msra.mxu0 0
    %2640 = vmatprep.mubr.bf16.mxu0 0
    %2641 = vmatmul.mubr.bf16.gmra.mrb[0].mxu0 %v2500
    %v2642 = vpop.f32.mrb[0].mxu0
    %v2643 = vadd.f32 0.0, %v2642
    %v2644 = vpop.f32.mrb[0].mxu0
    %v2645 = vadd.f32 0.0, %v2644
    %v2646 = vpop.f32.mrb[0].mxu0
    %v2647 = vpop.f32.mrb[0].mxu0
    %2648 = vdwg.mxu0
    %2649 = vmatprep.subr.bf16.mxu0 %v2508
    %2650 = vmatpush1.bf16.msra.mxu0 %v2507
    %2651 = vmatprep.subr.bf16.mxu0 %v2516
    %2652 = vmatpush1.bf16.msra.mxu0 %v2515
    %2653 = vmatprep.subr.bf16.mxu0 %v2524
    %2654 = vmatpush1.bf16.msra.mxu0 %v2523
    %2655 = vmatprep.subr.bf16.mxu0 %v2532
    %2656 = vmatpush1.bf16.msra.mxu0 %v2531
    %2657 = vmatprep.subr.bf16.mxu0 %v2540
    %2658 = vmatpush1.bf16.msra.mxu0 %v2539
    %2659 = vmatprep.subr.bf16.mxu0 %v2548
    %2660 = vmatpush1.bf16.msra.mxu0 %v2547
    %2661 = vmatprep.subr.bf16.mxu0 %v2556
    %2662 = vmatpush1.bf16.msra.mxu0 %v2555
    %2663 = vmatprep.subr.bf16.mxu0 %v2564
    %2664 = vmatpush1.bf16.msra.mxu0 %v2563
    %2665 = vmatprep.subr.bf16.mxu0 0
    %2666 = vmatpush1.bf16.msra.mxu0 0
    %2667 = vmatprep.subr.bf16.mxu0 0
    %2668 = vmatpush1.bf16.msra.mxu0 0
    %2669 = vmatprep.subr.bf16.mxu0 0
    %2670 = vmatpush1.bf16.msra.mxu0 0
    %2671 = vmatprep.subr.bf16.mxu0 0
    %2672 = vmatpush1.bf16.msra.mxu0 0
    %2673 = vmatprep.subr.bf16.mxu0 0
    %2674 = vmatpush1.bf16.msra.mxu0 0
    %2675 = vmatprep.subr.bf16.mxu0 0
    %2676 = vmatpush1.bf16.msra.mxu0 0
    %2677 = vmatprep.subr.bf16.mxu0 0
    %2678 = vmatpush1.bf16.msra.mxu0 0
    %2679 = vmatprep.subr.bf16.mxu0 0
    %2680 = vmatpush1.bf16.msra.mxu0 0
    %2681 = vmatprep.mubr.bf16.mxu0 0
    %2682 = vmatmul.mubr.bf16.gmra.mrb[0].mxu0 %v2500
    %v2683 = vpop.f32.mrb[0].mxu0
    %v2684 = vadd.f32 0.0, %v2683
    %v2685 = vpop.f32.mrb[0].mxu0
    %v2686 = vadd.f32 0.0, %v2685
    %v2687 = vpop.f32.mrb[0].mxu0
    %v2688 = vpop.f32.mrb[0].mxu0
    %2689 = vdwg.mxu0
    %2690 = vmatprep.subr.bf16.mxu0 %v2510
    %2691 = vmatpush1.bf16.msra.mxu0 %v2509
    %2692 = vmatprep.subr.bf16.mxu0 %v2518
    %2693 = vmatpush1.bf16.msra.mxu0 %v2517
    %2694 = vmatprep.subr.bf16.mxu0 %v2526
    %2695 = vmatpush1.bf16.msra.mxu0 %v2525
    %2696 = vmatprep.subr.bf16.mxu0 %v2534
    %2697 = vmatpush1.bf16.msra.mxu0 %v2533
    %2698 = vmatprep.subr.bf16.mxu0 %v2542
    %2699 = vmatpush1.bf16.msra.mxu0 %v2541
    %2700 = vmatprep.subr.bf16.mxu0 %v2550
    %2701 = vmatpush1.bf16.msra.mxu0 %v2549
    %2702 = vmatprep.subr.bf16.mxu0 %v2558
    %2703 = vmatpush1.bf16.msra.mxu0 %v2557
    %2704 = vmatprep.subr.bf16.mxu0 %v2566
    %2705 = vmatpush1.bf16.msra.mxu0 %v2565
    %2706 = vmatprep.subr.bf16.mxu0 0
    %2707 = vmatpush1.bf16.msra.mxu0 0
    %2708 = vmatprep.subr.bf16.mxu0 0
    %2709 = vmatpush1.bf16.msra.mxu0 0
    %2710 = vmatprep.subr.bf16.mxu0 0
    %2711 = vmatpush1.bf16.msra.mxu0 0
    %2712 = vmatprep.subr.bf16.mxu0 0
    %2713 = vmatpush1.bf16.msra.mxu0 0
    %2714 = vmatprep.subr.bf16.mxu0 0
    %2715 = vmatpush1.bf16.msra.mxu0 0
    %2716 = vmatprep.subr.bf16.mxu0 0
    %2717 = vmatpush1.bf16.msra.mxu0 0
    %2718 = vmatprep.subr.bf16.mxu0 0
    %2719 = vmatpush1.bf16.msra.mxu0 0
    %2720 = vmatprep.subr.bf16.mxu0 0
    %2721 = vmatpush1.bf16.msra.mxu0 0
    %2722 = vmatprep.mubr.bf16.mxu0 0
    %2723 = vmatmul.mubr.bf16.gmra.mrb[0].mxu0 %v2500
    %v2724 = vpop.f32.mrb[0].mxu0
    %v2725 = vadd.f32 0.0, %v2724
    %v2726 = vpop.f32.mrb[0].mxu0
    %v2727 = vadd.f32 0.0, %v2726
    %v2728 = vpop.f32.mrb[0].mxu0
    %v2729 = vpop.f32.mrb[0].mxu0
    %2730 = vdwg.mxu0
    %v2731 = vadd.f32 %v2488, %v2602
    %v2732 = vadd.f32 %v2489, %v2604
    %v2733 = vadd.f32 %v2490, %v2643
    %v2734 = vadd.f32 %v2491, %v2645
    %v2735 = vadd.f32 %v2492, %v2684
    %v2736 = vadd.f32 %v2493, %v2686
    %v2737 = vadd.f32 %v2494, %v2725
    %v2738 = vadd.f32 %v2495, %v2727
    %v2740 = vrot.slane %v2012, 2
    %v2742 = vsel %vm1534, %v2740, 0.0
    %v2743 = vpack.c.bf16 %v2742, %v2742
    %s2744 = sshll.u32 %s1538, 4
    %2745 = dma.done %s319, %s2744
    %v2746 = vld [vmem:[%s318] sm:$0xff]
    %v2747 = vld [vmem:[%s318 + $0x8] sm:$0xff]
    %v2748 = vld [vmem:[%s318 + $0x10] sm:$0xff]
    %v2749 = vld [vmem:[%s318 + $0x18] sm:$0xff]
    %v2750 = vld [vmem:[%s318 + $0x20] sm:$0xff]
    %v2751 = vld [vmem:[%s318 + $0x28] sm:$0xff]
    %v2752 = vld [vmem:[%s318 + $0x30] sm:$0xff]
    %v2753 = vld [vmem:[%s318 + $0x38] sm:$0xff]
    %v2754 = vld [vmem:[%s318 + $0x40] sm:$0xff]
    %v2755 = vld [vmem:[%s318 + $0x48] sm:$0xff]
    %v2756 = vld [vmem:[%s318 + $0x50] sm:$0xff]
    %v2757 = vld [vmem:[%s318 + $0x58] sm:$0xff]
    %v2758 = vld [vmem:[%s318 + $0x60] sm:$0xff]
    %v2759 = vld [vmem:[%s318 + $0x68] sm:$0xff]
    %v2760 = vld [vmem:[%s318 + $0x70] sm:$0xff]
    %v2761 = vld [vmem:[%s318 + $0x78] sm:$0xff]
    %v2762 = vld [vmem:[%s318 + $0x80] sm:$0xff]
    %v2763 = vld [vmem:[%s318 + $0x88] sm:$0xff]
    %v2764 = vld [vmem:[%s318 + $0x90] sm:$0xff]
    %v2765 = vld [vmem:[%s318 + $0x98] sm:$0xff]
    %v2766 = vld [vmem:[%s318 + $0xa0] sm:$0xff]
    %v2767 = vld [vmem:[%s318 + $0xa8] sm:$0xff]
    %v2768 = vld [vmem:[%s318 + $0xb0] sm:$0xff]
    %v2769 = vld [vmem:[%s318 + $0xb8] sm:$0xff]
    %v2770 = vld [vmem:[%s318 + $0xc0] sm:$0xff]
    %v2771 = vld [vmem:[%s318 + $0xc8] sm:$0xff]
    %v2772 = vld [vmem:[%s318 + $0xd0] sm:$0xff]
    %v2773 = vld [vmem:[%s318 + $0xd8] sm:$0xff]
    %v2774 = vld [vmem:[%s318 + $0xe0] sm:$0xff]
    %v2775 = vld [vmem:[%s318 + $0xe8] sm:$0xff]
    %v2776 = vld [vmem:[%s318 + $0xf0] sm:$0xff]
    %v2777 = vld [vmem:[%s318 + $0xf8] sm:$0xff]
    %v2778 = vld [vmem:[%s318 + $0x100] sm:$0xff]
    %v2779 = vld [vmem:[%s318 + $0x108] sm:$0xff]
    %v2780 = vld [vmem:[%s318 + $0x110] sm:$0xff]
    %v2781 = vld [vmem:[%s318 + $0x118] sm:$0xff]
    %v2782 = vld [vmem:[%s318 + $0x120] sm:$0xff]
    %v2783 = vld [vmem:[%s318 + $0x128] sm:$0xff]
    %v2784 = vld [vmem:[%s318 + $0x130] sm:$0xff]
    %v2785 = vld [vmem:[%s318 + $0x138] sm:$0xff]
    %v2786 = vld [vmem:[%s318 + $0x140] sm:$0xff]
    %v2787 = vld [vmem:[%s318 + $0x148] sm:$0xff]
    %v2788 = vld [vmem:[%s318 + $0x150] sm:$0xff]
    %v2789 = vld [vmem:[%s318 + $0x158] sm:$0xff]
    %v2790 = vld [vmem:[%s318 + $0x160] sm:$0xff]
    %v2791 = vld [vmem:[%s318 + $0x168] sm:$0xff]
    %v2792 = vld [vmem:[%s318 + $0x170] sm:$0xff]
    %v2793 = vld [vmem:[%s318 + $0x178] sm:$0xff]
    %v2794 = vld [vmem:[%s318 + $0x180] sm:$0xff]
    %v2795 = vld [vmem:[%s318 + $0x188] sm:$0xff]
    %v2796 = vld [vmem:[%s318 + $0x190] sm:$0xff]
    %v2797 = vld [vmem:[%s318 + $0x198] sm:$0xff]
    %v2798 = vld [vmem:[%s318 + $0x1a0] sm:$0xff]
    %v2799 = vld [vmem:[%s318 + $0x1a8] sm:$0xff]
    %v2800 = vld [vmem:[%s318 + $0x1b0] sm:$0xff]
    %v2801 = vld [vmem:[%s318 + $0x1b8] sm:$0xff]
    %v2802 = vld [vmem:[%s318 + $0x1c0] sm:$0xff]
    %v2803 = vld [vmem:[%s318 + $0x1c8] sm:$0xff]
    %v2804 = vld [vmem:[%s318 + $0x1d0] sm:$0xff]
    %v2805 = vld [vmem:[%s318 + $0x1d8] sm:$0xff]
    %v2806 = vld [vmem:[%s318 + $0x1e0] sm:$0xff]
    %v2807 = vld [vmem:[%s318 + $0x1e8] sm:$0xff]
    %v2808 = vld [vmem:[%s318 + $0x1f0] sm:$0xff]
    %v2809 = vld [vmem:[%s318 + $0x1f8] sm:$0xff]
    %2810 = vmatprep.subr.bf16.mxu0 %v2747
    %2811 = vmatpush1.bf16.msra.mxu0 %v2746
    %2812 = vmatprep.subr.bf16.mxu0 %v2755
    %2813 = vmatpush1.bf16.msra.mxu0 %v2754
    %2814 = vmatprep.subr.bf16.mxu0 %v2763
    %2815 = vmatpush1.bf16.msra.mxu0 %v2762
    %2816 = vmatprep.subr.bf16.mxu0 %v2771
    %2817 = vmatpush1.bf16.msra.mxu0 %v2770
    %2818 = vmatprep.subr.bf16.mxu0 %v2779
    %2819 = vmatpush1.bf16.msra.mxu0 %v2778
    %2820 = vmatprep.subr.bf16.mxu0 %v2787
    %2821 = vmatpush1.bf16.msra.mxu0 %v2786
    %2822 = vmatprep.subr.bf16.mxu0 %v2795
    %2823 = vmatpush1.bf16.msra.mxu0 %v2794
    %2824 = vmatprep.subr.bf16.mxu0 %v2803
    %2825 = vmatpush1.bf16.msra.mxu0 %v2802
    %2826 = vmatprep.subr.bf16.mxu0 0
    %2827 = vmatpush1.bf16.msra.mxu0 0
    %2828 = vmatprep.subr.bf16.mxu0 0
    %2829 = vmatpush1.bf16.msra.mxu0 0
    %2830 = vmatprep.subr.bf16.mxu0 0
    %2831 = vmatpush1.bf16.msra.mxu0 0
    %2832 = vmatprep.subr.bf16.mxu0 0
    %2833 = vmatpush1.bf16.msra.mxu0 0
    %2834 = vmatprep.subr.bf16.mxu0 0
    %2835 = vmatpush1.bf16.msra.mxu0 0
    %2836 = vmatprep.subr.bf16.mxu0 0
    %2837 = vmatpush1.bf16.msra.mxu0 0
    %2838 = vmatprep.subr.bf16.mxu0 0
    %2839 = vmatpush1.bf16.msra.mxu0 0
    %2840 = vmatprep.subr.bf16.mxu0 0
    %2841 = vmatpush1.bf16.msra.mxu0 0
    %2842 = vmatprep.mubr.bf16.mxu0 0
    %2843 = vmatmul.mubr.bf16.gmra.mrb[0].mxu0 %v2743
    %v2844 = vpop.f32.mrb[0].mxu0
    %v2845 = vadd.f32 0.0, %v2844
    %v2846 = vpop.f32.mrb[0].mxu0
    %v2847 = vadd.f32 0.0, %v2846
    %v2848 = vpop.f32.mrb[0].mxu0
    %v2849 = vpop.f32.mrb[0].mxu0
    %2850 = vdwg.mxu0
    %2851 = vmatprep.subr.bf16.mxu0 %v2749
    %2852 = vmatpush1.bf16.msra.mxu0 %v2748
    %2853 = vmatprep.subr.bf16.mxu0 %v2757
    %2854 = vmatpush1.bf16.msra.mxu0 %v2756
    %2855 = vmatprep.subr.bf16.mxu0 %v2765
    %2856 = vmatpush1.bf16.msra.mxu0 %v2764
    %2857 = vmatprep.subr.bf16.mxu0 %v2773
    %2858 = vmatpush1.bf16.msra.mxu0 %v2772
    %2859 = vmatprep.subr.bf16.mxu0 %v2781
    %2860 = vmatpush1.bf16.msra.mxu0 %v2780
    %2861 = vmatprep.subr.bf16.mxu0 %v2789
    %2862 = vmatpush1.bf16.msra.mxu0 %v2788
    %2863 = vmatprep.subr.bf16.mxu0 %v2797
    %2864 = vmatpush1.bf16.msra.mxu0 %v2796
    %2865 = vmatprep.subr.bf16.mxu0 %v2805
    %2866 = vmatpush1.bf16.msra.mxu0 %v2804
    %2867 = vmatprep.subr.bf16.mxu0 0
    %2868 = vmatpush1.bf16.msra.mxu0 0
    %2869 = vmatprep.subr.bf16.mxu0 0
    %2870 = vmatpush1.bf16.msra.mxu0 0
    %2871 = vmatprep.subr.bf16.mxu0 0
    %2872 = vmatpush1.bf16.msra.mxu0 0
    %2873 = vmatprep.subr.bf16.mxu0 0
    %2874 = vmatpush1.bf16.msra.mxu0 0
    %2875 = vmatprep.subr.bf16.mxu0 0
    %2876 = vmatpush1.bf16.msra.mxu0 0
    %2877 = vmatprep.subr.bf16.mxu0 0
    %2878 = vmatpush1.bf16.msra.mxu0 0
    %2879 = vmatprep.subr.bf16.mxu0 0
    %2880 = vmatpush1.bf16.msra.mxu0 0
    %2881 = vmatprep.subr.bf16.mxu0 0
    %2882 = vmatpush1.bf16.msra.mxu0 0
    %2883 = vmatprep.mubr.bf16.mxu0 0
    %2884 = vmatmul.mubr.bf16.gmra.mrb[0].mxu0 %v2743
    %v2885 = vpop.f32.mrb[0].mxu0
    %v2886 = vadd.f32 0.0, %v2885
    %v2887 = vpop.f32.mrb[0].mxu0
    %v2888 = vadd.f32 0.0, %v2887
    %v2889 = vpop.f32.mrb[0].mxu0
    %v2890 = vpop.f32.mrb[0].mxu0
    %2891 = vdwg.mxu0
    %2892 = vmatprep.subr.bf16.mxu0 %v2751
    %2893 = vmatpush1.bf16.msra.mxu0 %v2750
    %2894 = vmatprep.subr.bf16.mxu0 %v2759
    %2895 = vmatpush1.bf16.msra.mxu0 %v2758
    %2896 = vmatprep.subr.bf16.mxu0 %v2767
    %2897 = vmatpush1.bf16.msra.mxu0 %v2766
    %2898 = vmatprep.subr.bf16.mxu0 %v2775
    %2899 = vmatpush1.bf16.msra.mxu0 %v2774
    %2900 = vmatprep.subr.bf16.mxu0 %v2783
    %2901 = vmatpush1.bf16.msra.mxu0 %v2782
    %2902 = vmatprep.subr.bf16.mxu0 %v2791
    %2903 = vmatpush1.bf16.msra.mxu0 %v2790
    %2904 = vmatprep.subr.bf16.mxu0 %v2799
    %2905 = vmatpush1.bf16.msra.mxu0 %v2798
    %2906 = vmatprep.subr.bf16.mxu0 %v2807
    %2907 = vmatpush1.bf16.msra.mxu0 %v2806
    %2908 = vmatprep.subr.bf16.mxu0 0
    %2909 = vmatpush1.bf16.msra.mxu0 0
    %2910 = vmatprep.subr.bf16.mxu0 0
    %2911 = vmatpush1.bf16.msra.mxu0 0
    %2912 = vmatprep.subr.bf16.mxu0 0
    %2913 = vmatpush1.bf16.msra.mxu0 0
    %2914 = vmatprep.subr.bf16.mxu0 0
    %2915 = vmatpush1.bf16.msra.mxu0 0
    %2916 = vmatprep.subr.bf16.mxu0 0
    %2917 = vmatpush1.bf16.msra.mxu0 0
    %2918 = vmatprep.subr.bf16.mxu0 0
    %2919 = vmatpush1.bf16.msra.mxu0 0
    %2920 = vmatprep.subr.bf16.mxu0 0
    %2921 = vmatpush1.bf16.msra.mxu0 0
    %2922 = vmatprep.subr.bf16.mxu0 0
    %2923 = vmatpush1.bf16.msra.mxu0 0
    %2924 = vmatprep.mubr.bf16.mxu0 0
    %2925 = vmatmul.mubr.bf16.gmra.mrb[0].mxu0 %v2743
    %v2926 = vpop.f32.mrb[0].mxu0
    %v2927 = vadd.f32 0.0, %v2926
    %v2928 = vpop.f32.mrb[0].mxu0
    %v2929 = vadd.f32 0.0, %v2928
    %v2930 = vpop.f32.mrb[0].mxu0
    %v2931 = vpop.f32.mrb[0].mxu0
    %2932 = vdwg.mxu0
    %2933 = vmatprep.subr.bf16.mxu0 %v2753
    %2934 = vmatpush1.bf16.msra.mxu0 %v2752
    %2935 = vmatprep.subr.bf16.mxu0 %v2761
    %2936 = vmatpush1.bf16.msra.mxu0 %v2760
    %2937 = vmatprep.subr.bf16.mxu0 %v2769
    %2938 = vmatpush1.bf16.msra.mxu0 %v2768
    %2939 = vmatprep.subr.bf16.mxu0 %v2777
    %2940 = vmatpush1.bf16.msra.mxu0 %v2776
    %2941 = vmatprep.subr.bf16.mxu0 %v2785
    %2942 = vmatpush1.bf16.msra.mxu0 %v2784
    %2943 = vmatprep.subr.bf16.mxu0 %v2793
    %2944 = vmatpush1.bf16.msra.mxu0 %v2792
    %2945 = vmatprep.subr.bf16.mxu0 %v2801
    %2946 = vmatpush1.bf16.msra.mxu0 %v2800
    %2947 = vmatprep.subr.bf16.mxu0 %v2809
    %2948 = vmatpush1.bf16.msra.mxu0 %v2808
    %2949 = vmatprep.subr.bf16.mxu0 0
    %2950 = vmatpush1.bf16.msra.mxu0 0
    %2951 = vmatprep.subr.bf16.mxu0 0
    %2952 = vmatpush1.bf16.msra.mxu0 0
    %2953 = vmatprep.subr.bf16.mxu0 0
    %2954 = vmatpush1.bf16.msra.mxu0 0
    %2955 = vmatprep.subr.bf16.mxu0 0
    %2956 = vmatpush1.bf16.msra.mxu0 0
    %2957 = vmatprep.subr.bf16.mxu0 0
    %2958 = vmatpush1.bf16.msra.mxu0 0
    %2959 = vmatprep.subr.bf16.mxu0 0
    %2960 = vmatpush1.bf16.msra.mxu0 0
    %2961 = vmatprep.subr.bf16.mxu0 0
    %2962 = vmatpush1.bf16.msra.mxu0 0
    %2963 = vmatprep.subr.bf16.mxu0 0
    %2964 = vmatpush1.bf16.msra.mxu0 0
    %2965 = vmatprep.mubr.bf16.mxu0 0
    %2966 = vmatmul.mubr.bf16.gmra.mrb[0].mxu0 %v2743
    %v2967 = vpop.f32.mrb[0].mxu0
    %v2968 = vadd.f32 0.0, %v2967
    %v2969 = vpop.f32.mrb[0].mxu0
    %v2970 = vadd.f32 0.0, %v2969
    %v2971 = vpop.f32.mrb[0].mxu0
    %v2972 = vpop.f32.mrb[0].mxu0
    %2973 = vdwg.mxu0
    %v2974 = vadd.f32 %v2731, %v2845
    %v2975 = vadd.f32 %v2732, %v2847
    %v2976 = vadd.f32 %v2733, %v2886
    %v2977 = vadd.f32 %v2734, %v2888
    %v2978 = vadd.f32 %v2735, %v2927
    %v2979 = vadd.f32 %v2736, %v2929
    %v2980 = vadd.f32 %v2737, %v2968
    %v2981 = vadd.f32 %v2738, %v2970
    %v2982 = vrot.slane %v1533, 4
    %v2984 = vsel %vm1534, %v2982, 0.0
    %v2985 = vpack.c.bf16 %v2984, %v2984
    %s2986 = sshll.u32 %s1538, 4
    %2987 = dma.done %s356, %s2986
    %v2988 = vld [vmem:[%s355] sm:$0xff]
    %v2989 = vld [vmem:[%s355 + $0x8] sm:$0xff]
    %v2990 = vld [vmem:[%s355 + $0x10] sm:$0xff]
    %v2991 = vld [vmem:[%s355 + $0x18] sm:$0xff]
    %v2992 = vld [vmem:[%s355 + $0x20] sm:$0xff]
    %v2993 = vld [vmem:[%s355 + $0x28] sm:$0xff]
    %v2994 = vld [vmem:[%s355 + $0x30] sm:$0xff]
    %v2995 = vld [vmem:[%s355 + $0x38] sm:$0xff]
    %v2996 = vld [vmem:[%s355 + $0x40] sm:$0xff]
    %v2997 = vld [vmem:[%s355 + $0x48] sm:$0xff]
    %v2998 = vld [vmem:[%s355 + $0x50] sm:$0xff]
    %v2999 = vld [vmem:[%s355 + $0x58] sm:$0xff]
    %v3000 = vld [vmem:[%s355 + $0x60] sm:$0xff]
    %v3001 = vld [vmem:[%s355 + $0x68] sm:$0xff]
    %v3002 = vld [vmem:[%s355 + $0x70] sm:$0xff]
    %v3003 = vld [vmem:[%s355 + $0x78] sm:$0xff]
    %v3004 = vld [vmem:[%s355 + $0x80] sm:$0xff]
    %v3005 = vld [vmem:[%s355 + $0x88] sm:$0xff]
    %v3006 = vld [vmem:[%s355 + $0x90] sm:$0xff]
    %v3007 = vld [vmem:[%s355 + $0x98] sm:$0xff]
    %v3008 = vld [vmem:[%s355 + $0xa0] sm:$0xff]
    %v3009 = vld [vmem:[%s355 + $0xa8] sm:$0xff]
    %v3010 = vld [vmem:[%s355 + $0xb0] sm:$0xff]
    %v3011 = vld [vmem:[%s355 + $0xb8] sm:$0xff]
    %v3012 = vld [vmem:[%s355 + $0xc0] sm:$0xff]
    %v3013 = vld [vmem:[%s355 + $0xc8] sm:$0xff]
    %v3014 = vld [vmem:[%s355 + $0xd0] sm:$0xff]
    %v3015 = vld [vmem:[%s355 + $0xd8] sm:$0xff]
    %v3016 = vld [vmem:[%s355 + $0xe0] sm:$0xff]
    %v3017 = vld [vmem:[%s355 + $0xe8] sm:$0xff]
    %v3018 = vld [vmem:[%s355 + $0xf0] sm:$0xff]
    %v3019 = vld [vmem:[%s355 + $0xf8] sm:$0xff]
    %v3020 = vld [vmem:[%s355 + $0x100] sm:$0xff]
    %v3021 = vld [vmem:[%s355 + $0x108] sm:$0xff]
    %v3022 = vld [vmem:[%s355 + $0x110] sm:$0xff]
    %v3023 = vld [vmem:[%s355 + $0x118] sm:$0xff]
    %v3024 = vld [vmem:[%s355 + $0x120] sm:$0xff]
    %v3025 = vld [vmem:[%s355 + $0x128] sm:$0xff]
    %v3026 = vld [vmem:[%s355 + $0x130] sm:$0xff]
    %v3027 = vld [vmem:[%s355 + $0x138] sm:$0xff]
    %v3028 = vld [vmem:[%s355 + $0x140] sm:$0xff]
    %v3029 = vld [vmem:[%s355 + $0x148] sm:$0xff]
    %v3030 = vld [vmem:[%s355 + $0x150] sm:$0xff]
    %v3031 = vld [vmem:[%s355 + $0x158] sm:$0xff]
    %v3032 = vld [vmem:[%s355 + $0x160] sm:$0xff]
    %v3033 = vld [vmem:[%s355 + $0x168] sm:$0xff]
    %v3034 = vld [vmem:[%s355 + $0x170] sm:$0xff]
    %v3035 = vld [vmem:[%s355 + $0x178] sm:$0xff]
    %v3036 = vld [vmem:[%s355 + $0x180] sm:$0xff]
    %v3037 = vld [vmem:[%s355 + $0x188] sm:$0xff]
    %v3038 = vld [vmem:[%s355 + $0x190] sm:$0xff]
    %v3039 = vld [vmem:[%s355 + $0x198] sm:$0xff]
    %v3040 = vld [vmem:[%s355 + $0x1a0] sm:$0xff]
    %v3041 = vld [vmem:[%s355 + $0x1a8] sm:$0xff]
    %v3042 = vld [vmem:[%s355 + $0x1b0] sm:$0xff]
    %v3043 = vld [vmem:[%s355 + $0x1b8] sm:$0xff]
    %v3044 = vld [vmem:[%s355 + $0x1c0] sm:$0xff]
    %v3045 = vld [vmem:[%s355 + $0x1c8] sm:$0xff]
    %v3046 = vld [vmem:[%s355 + $0x1d0] sm:$0xff]
    %v3047 = vld [vmem:[%s355 + $0x1d8] sm:$0xff]
    %v3048 = vld [vmem:[%s355 + $0x1e0] sm:$0xff]
    %v3049 = vld [vmem:[%s355 + $0x1e8] sm:$0xff]
    %v3050 = vld [vmem:[%s355 + $0x1f0] sm:$0xff]
    %v3051 = vld [vmem:[%s355 + $0x1f8] sm:$0xff]
    %3052 = vmatprep.subr.bf16.mxu0 %v2989
    %3053 = vmatpush1.bf16.msra.mxu0 %v2988
    %3054 = vmatprep.subr.bf16.mxu0 %v2997
    %3055 = vmatpush1.bf16.msra.mxu0 %v2996
    %3056 = vmatprep.subr.bf16.mxu0 %v3005
    %3057 = vmatpush1.bf16.msra.mxu0 %v3004
    %3058 = vmatprep.subr.bf16.mxu0 %v3013
    %3059 = vmatpush1.bf16.msra.mxu0 %v3012
    %3060 = vmatprep.subr.bf16.mxu0 %v3021
    %3061 = vmatpush1.bf16.msra.mxu0 %v3020
    %3062 = vmatprep.subr.bf16.mxu0 %v3029
    %3063 = vmatpush1.bf16.msra.mxu0 %v3028
    %3064 = vmatprep.subr.bf16.mxu0 %v3037
    %3065 = vmatpush1.bf16.msra.mxu0 %v3036
    %3066 = vmatprep.subr.bf16.mxu0 %v3045
    %3067 = vmatpush1.bf16.msra.mxu0 %v3044
    %3068 = vmatprep.subr.bf16.mxu0 0
    %3069 = vmatpush1.bf16.msra.mxu0 0
    %3070 = vmatprep.subr.bf16.mxu0 0
    %3071 = vmatpush1.bf16.msra.mxu0 0
    %3072 = vmatprep.subr.bf16.mxu0 0
    %3073 = vmatpush1.bf16.msra.mxu0 0
    %3074 = vmatprep.subr.bf16.mxu0 0
    %3075 = vmatpush1.bf16.msra.mxu0 0
    %3076 = vmatprep.subr.bf16.mxu0 0
    %3077 = vmatpush1.bf16.msra.mxu0 0
    %3078 = vmatprep.subr.bf16.mxu0 0
    %3079 = vmatpush1.bf16.msra.mxu0 0
    %3080 = vmatprep.subr.bf16.mxu0 0
    %3081 = vmatpush1.bf16.msra.mxu0 0
    %3082 = vmatprep.subr.bf16.mxu0 0
    %3083 = vmatpush1.bf16.msra.mxu0 0
    %3084 = vmatprep.mubr.bf16.mxu0 0
    %3085 = vmatmul.mubr.bf16.gmra.mrb[0].mxu0 %v2985
    %v3086 = vpop.f32.mrb[0].mxu0
    %v3087 = vadd.f32 0.0, %v3086
    %v3088 = vpop.f32.mrb[0].mxu0
    %v3089 = vadd.f32 0.0, %v3088
    %v3090 = vpop.f32.mrb[0].mxu0
    %v3091 = vpop.f32.mrb[0].mxu0
    %3092 = vdwg.mxu0
    %3093 = vmatprep.subr.bf16.mxu0 %v2991
    %3094 = vmatpush1.bf16.msra.mxu0 %v2990
    %3095 = vmatprep.subr.bf16.mxu0 %v2999
    %3096 = vmatpush1.bf16.msra.mxu0 %v2998
    %3097 = vmatprep.subr.bf16.mxu0 %v3007
    %3098 = vmatpush1.bf16.msra.mxu0 %v3006
    %3099 = vmatprep.subr.bf16.mxu0 %v3015
    %3100 = vmatpush1.bf16.msra.mxu0 %v3014
    %3101 = vmatprep.subr.bf16.mxu0 %v3023
    %3102 = vmatpush1.bf16.msra.mxu0 %v3022
    %3103 = vmatprep.subr.bf16.mxu0 %v3031
    %3104 = vmatpush1.bf16.msra.mxu0 %v3030
    %3105 = vmatprep.subr.bf16.mxu0 %v3039
    %3106 = vmatpush1.bf16.msra.mxu0 %v3038
    %3107 = vmatprep.subr.bf16.mxu0 %v3047
    %3108 = vmatpush1.bf16.msra.mxu0 %v3046
    %3109 = vmatprep.subr.bf16.mxu0 0
    %3110 = vmatpush1.bf16.msra.mxu0 0
    %3111 = vmatprep.subr.bf16.mxu0 0
    %3112 = vmatpush1.bf16.msra.mxu0 0
    %3113 = vmatprep.subr.bf16.mxu0 0
    %3114 = vmatpush1.bf16.msra.mxu0 0
    %3115 = vmatprep.subr.bf16.mxu0 0
    %3116 = vmatpush1.bf16.msra.mxu0 0
    %3117 = vmatprep.subr.bf16.mxu0 0
    %3118 = vmatpush1.bf16.msra.mxu0 0
    %3119 = vmatprep.subr.bf16.mxu0 0
    %3120 = vmatpush1.bf16.msra.mxu0 0
    %3121 = vmatprep.subr.bf16.mxu0 0
    %3122 = vmatpush1.bf16.msra.mxu0 0
    %3123 = vmatprep.subr.bf16.mxu0 0
    %3124 = vmatpush1.bf16.msra.mxu0 0
    %3125 = vmatprep.mubr.bf16.mxu0 0
    %3126 = vmatmul.mubr.bf16.gmra.mrb[0].mxu0 %v2985
    %v3127 = vpop.f32.mrb[0].mxu0
    %v3128 = vadd.f32 0.0, %v3127
    %v3129 = vpop.f32.mrb[0].mxu0
    %v3130 = vadd.f32 0.0, %v3129
    %v3131 = vpop.f32.mrb[0].mxu0
    %v3132 = vpop.f32.mrb[0].mxu0
    %3133 = vdwg.mxu0
    %3134 = vmatprep.subr.bf16.mxu0 %v2993
    %3135 = vmatpush1.bf16.msra.mxu0 %v2992
    %3136 = vmatprep.subr.bf16.mxu0 %v3001
    %3137 = vmatpush1.bf16.msra.mxu0 %v3000
    %3138 = vmatprep.subr.bf16.mxu0 %v3009
    %3139 = vmatpush1.bf16.msra.mxu0 %v3008
    %3140 = vmatprep.subr.bf16.mxu0 %v3017
    %3141 = vmatpush1.bf16.msra.mxu0 %v3016
    %3142 = vmatprep.subr.bf16.mxu0 %v3025
    %3143 = vmatpush1.bf16.msra.mxu0 %v3024
    %3144 = vmatprep.subr.bf16.mxu0 %v3033
    %3145 = vmatpush1.bf16.msra.mxu0 %v3032
    %3146 = vmatprep.subr.bf16.mxu0 %v3041
    %3147 = vmatpush1.bf16.msra.mxu0 %v3040
    %3148 = vmatprep.subr.bf16.mxu0 %v3049
    %3149 = vmatpush1.bf16.msra.mxu0 %v3048
    %3150 = vmatprep.subr.bf16.mxu0 0
    %3151 = vmatpush1.bf16.msra.mxu0 0
    %3152 = vmatprep.subr.bf16.mxu0 0
    %3153 = vmatpush1.bf16.msra.mxu0 0
    %3154 = vmatprep.subr.bf16.mxu0 0
    %3155 = vmatpush1.bf16.msra.mxu0 0
    %3156 = vmatprep.subr.bf16.mxu0 0
    %3157 = vmatpush1.bf16.msra.mxu0 0
    %3158 = vmatprep.subr.bf16.mxu0 0
    %3159 = vmatpush1.bf16.msra.mxu0 0
    %3160 = vmatprep.subr.bf16.mxu0 0
    %3161 = vmatpush1.bf16.msra.mxu0 0
    %3162 = vmatprep.subr.bf16.mxu0 0
    %3163 = vmatpush1.bf16.msra.mxu0 0
    %3164 = vmatprep.subr.bf16.mxu0 0
    %3165 = vmatpush1.bf16.msra.mxu0 0
    %3166 = vmatprep.mubr.bf16.mxu0 0
    %3167 = vmatmul.mubr.bf16.gmra.mrb[0].mxu0 %v2985
    %v3168 = vpop.f32.mrb[0].mxu0
    %v3169 = vadd.f32 0.0, %v3168
    %v3170 = vpop.f32.mrb[0].mxu0
    %v3171 = vadd.f32 0.0, %v3170
    %v3172 = vpop.f32.mrb[0].mxu0
    %v3173 = vpop.f32.mrb[0].mxu0
    %3174 = vdwg.mxu0
    %3175 = vmatprep.subr.bf16.mxu0 %v2995
    %3176 = vmatpush1.bf16.msra.mxu0 %v2994
    %3177 = vmatprep.subr.bf16.mxu0 %v3003
    %3178 = vmatpush1.bf16.msra.mxu0 %v3002
    %3179 = vmatprep.subr.bf16.mxu0 %v3011
    %3180 = vmatpush1.bf16.msra.mxu0 %v3010
    %3181 = vmatprep.subr.bf16.mxu0 %v3019
    %3182 = vmatpush1.bf16.msra.mxu0 %v3018
    %3183 = vmatprep.subr.bf16.mxu0 %v3027
    %3184 = vmatpush1.bf16.msra.mxu0 %v3026
    %3185 = vmatprep.subr.bf16.mxu0 %v3035
    %3186 = vmatpush1.bf16.msra.mxu0 %v3034
    %3187 = vmatprep.subr.bf16.mxu0 %v3043
    %3188 = vmatpush1.bf16.msra.mxu0 %v3042
    %3189 = vmatprep.subr.bf16.mxu0 %v3051
    %3190 = vmatpush1.bf16.msra.mxu0 %v3050
    %3191 = vmatprep.subr.bf16.mxu0 0
    %3192 = vmatpush1.bf16.msra.mxu0 0
    %3193 = vmatprep.subr.bf16.mxu0 0
    %3194 = vmatpush1.bf16.msra.mxu0 0
    %3195 = vmatprep.subr.bf16.mxu0 0
    %3196 = vmatpush1.bf16.msra.mxu0 0
    %3197 = vmatprep.subr.bf16.mxu0 0
    %3198 = vmatpush1.bf16.msra.mxu0 0
    %3199 = vmatprep.subr.bf16.mxu0 0
    %3200 = vmatpush1.bf16.msra.mxu0 0
    %3201 = vmatprep.subr.bf16.mxu0 0
    %3202 = vmatpush1.bf16.msra.mxu0 0
    %3203 = vmatprep.subr.bf16.mxu0 0
    %3204 = vmatpush1.bf16.msra.mxu0 0
    %3205 = vmatprep.subr.bf16.mxu0 0
    %3206 = vmatpush1.bf16.msra.mxu0 0
    %3207 = vmatprep.mubr.bf16.mxu0 0
    %3208 = vmatmul.mubr.bf16.gmra.mrb[0].mxu0 %v2985
    %v3209 = vpop.f32.mrb[0].mxu0
    %v3210 = vadd.f32 0.0, %v3209
    %v3211 = vpop.f32.mrb[0].mxu0
    %v3212 = vadd.f32 0.0, %v3211
    %v3213 = vpop.f32.mrb[0].mxu0
    %v3214 = vpop.f32.mrb[0].mxu0
    %3215 = vdwg.mxu0
    %v3216 = vadd.f32 %v2974, %v3087
    %v3217 = vadd.f32 %v2975, %v3089
    %v3218 = vadd.f32 %v2976, %v3128
    %v3219 = vadd.f32 %v2977, %v3130
    %v3220 = vadd.f32 %v2978, %v3169
    %v3221 = vadd.f32 %v2979, %v3171
    %v3222 = vadd.f32 %v2980, %v3210
    %v3223 = vadd.f32 %v2981, %v3212
    %v3224 = vrot.slane %v1610, 4
    %v3226 = vsel %vm1534, %v3224, 0.0
    %v3227 = vpack.c.bf16 %v3226, %v3226
    %s3228 = sshll.u32 %s1538, 4
    %3229 = dma.done %s393, %s3228
    %v3230 = vld [vmem:[%s392] sm:$0xff]
    %v3231 = vld [vmem:[%s392 + $0x8] sm:$0xff]
    %v3232 = vld [vmem:[%s392 + $0x10] sm:$0xff]
    %v3233 = vld [vmem:[%s392 + $0x18] sm:$0xff]
    %v3234 = vld [vmem:[%s392 + $0x20] sm:$0xff]
    %v3235 = vld [vmem:[%s392 + $0x28] sm:$0xff]
    %v3236 = vld [vmem:[%s392 + $0x30] sm:$0xff]
    %v3237 = vld [vmem:[%s392 + $0x38] sm:$0xff]
    %v3238 = vld [vmem:[%s392 + $0x40] sm:$0xff]
    %v3239 = vld [vmem:[%s392 + $0x48] sm:$0xff]
    %v3240 = vld [vmem:[%s392 + $0x50] sm:$0xff]
    %v3241 = vld [vmem:[%s392 + $0x58] sm:$0xff]
    %v3242 = vld [vmem:[%s392 + $0x60] sm:$0xff]
    %v3243 = vld [vmem:[%s392 + $0x68] sm:$0xff]
    %v3244 = vld [vmem:[%s392 + $0x70] sm:$0xff]
    %v3245 = vld [vmem:[%s392 + $0x78] sm:$0xff]
    %v3246 = vld [vmem:[%s392 + $0x80] sm:$0xff]
    %v3247 = vld [vmem:[%s392 + $0x88] sm:$0xff]
    %v3248 = vld [vmem:[%s392 + $0x90] sm:$0xff]
    %v3249 = vld [vmem:[%s392 + $0x98] sm:$0xff]
    %v3250 = vld [vmem:[%s392 + $0xa0] sm:$0xff]
    %v3251 = vld [vmem:[%s392 + $0xa8] sm:$0xff]
    %v3252 = vld [vmem:[%s392 + $0xb0] sm:$0xff]
    %v3253 = vld [vmem:[%s392 + $0xb8] sm:$0xff]
    %v3254 = vld [vmem:[%s392 + $0xc0] sm:$0xff]
    %v3255 = vld [vmem:[%s392 + $0xc8] sm:$0xff]
    %v3256 = vld [vmem:[%s392 + $0xd0] sm:$0xff]
    %v3257 = vld [vmem:[%s392 + $0xd8] sm:$0xff]
    %v3258 = vld [vmem:[%s392 + $0xe0] sm:$0xff]
    %v3259 = vld [vmem:[%s392 + $0xe8] sm:$0xff]
    %v3260 = vld [vmem:[%s392 + $0xf0] sm:$0xff]
    %v3261 = vld [vmem:[%s392 + $0xf8] sm:$0xff]
    %v3262 = vld [vmem:[%s392 + $0x100] sm:$0xff]
    %v3263 = vld [vmem:[%s392 + $0x108] sm:$0xff]
    %v3264 = vld [vmem:[%s392 + $0x110] sm:$0xff]
    %v3265 = vld [vmem:[%s392 + $0x118] sm:$0xff]
    %v3266 = vld [vmem:[%s392 + $0x120] sm:$0xff]
    %v3267 = vld [vmem:[%s392 + $0x128] sm:$0xff]
    %v3268 = vld [vmem:[%s392 + $0x130] sm:$0xff]
    %v3269 = vld [vmem:[%s392 + $0x138] sm:$0xff]
    %v3270 = vld [vmem:[%s392 + $0x140] sm:$0xff]
    %v3271 = vld [vmem:[%s392 + $0x148] sm:$0xff]
    %v3272 = vld [vmem:[%s392 + $0x150] sm:$0xff]
    %v3273 = vld [vmem:[%s392 + $0x158] sm:$0xff]
    %v3274 = vld [vmem:[%s392 + $0x160] sm:$0xff]
    %v3275 = vld [vmem:[%s392 + $0x168] sm:$0xff]
    %v3276 = vld [vmem:[%s392 + $0x170] sm:$0xff]
    %v3277 = vld [vmem:[%s392 + $0x178] sm:$0xff]
    %v3278 = vld [vmem:[%s392 + $0x180] sm:$0xff]
    %v3279 = vld [vmem:[%s392 + $0x188] sm:$0xff]
    %v3280 = vld [vmem:[%s392 + $0x190] sm:$0xff]
    %v3281 = vld [vmem:[%s392 + $0x198] sm:$0xff]
    %v3282 = vld [vmem:[%s392 + $0x1a0] sm:$0xff]
    %v3283 = vld [vmem:[%s392 + $0x1a8] sm:$0xff]
    %v3284 = vld [vmem:[%s392 + $0x1b0] sm:$0xff]
    %v3285 = vld [vmem:[%s392 + $0x1b8] sm:$0xff]
    %v3286 = vld [vmem:[%s392 + $0x1c0] sm:$0xff]
    %v3287 = vld [vmem:[%s392 + $0x1c8] sm:$0xff]
    %v3288 = vld [vmem:[%s392 + $0x1d0] sm:$0xff]
    %v3289 = vld [vmem:[%s392 + $0x1d8] sm:$0xff]
    %v3290 = vld [vmem:[%s392 + $0x1e0] sm:$0xff]
    %v3291 = vld [vmem:[%s392 + $0x1e8] sm:$0xff]
    %v3292 = vld [vmem:[%s392 + $0x1f0] sm:$0xff]
    %v3293 = vld [vmem:[%s392 + $0x1f8] sm:$0xff]
    %3294 = vmatprep.subr.bf16.mxu0 %v3231
    %3295 = vmatpush1.bf16.msra.mxu0 %v3230
    %3296 = vmatprep.subr.bf16.mxu0 %v3239
    %3297 = vmatpush1.bf16.msra.mxu0 %v3238
    %3298 = vmatprep.subr.bf16.mxu0 %v3247
    %3299 = vmatpush1.bf16.msra.mxu0 %v3246
    %3300 = vmatprep.subr.bf16.mxu0 %v3255
    %3301 = vmatpush1.bf16.msra.mxu0 %v3254
    %3302 = vmatprep.subr.bf16.mxu0 %v3263
    %3303 = vmatpush1.bf16.msra.mxu0 %v3262
    %3304 = vmatprep.subr.bf16.mxu0 %v3271
    %3305 = vmatpush1.bf16.msra.mxu0 %v3270
    %3306 = vmatprep.subr.bf16.mxu0 %v3279
    %3307 = vmatpush1.bf16.msra.mxu0 %v3278
    %3308 = vmatprep.subr.bf16.mxu0 %v3287
    %3309 = vmatpush1.bf16.msra.mxu0 %v3286
    %3310 = vmatprep.subr.bf16.mxu0 0
    %3311 = vmatpush1.bf16.msra.mxu0 0
    %3312 = vmatprep.subr.bf16.mxu0 0
    %3313 = vmatpush1.bf16.msra.mxu0 0
    %3314 = vmatprep.subr.bf16.mxu0 0
    %3315 = vmatpush1.bf16.msra.mxu0 0
    %3316 = vmatprep.subr.bf16.mxu0 0
    %3317 = vmatpush1.bf16.msra.mxu0 0
    %3318 = vmatprep.subr.bf16.mxu0 0
    %3319 = vmatpush1.bf16.msra.mxu0 0
    %3320 = vmatprep.subr.bf16.mxu0 0
    %3321 = vmatpush1.bf16.msra.mxu0 0
    %3322 = vmatprep.subr.bf16.mxu0 0
    %3323 = vmatpush1.bf16.msra.mxu0 0
    %3324 = vmatprep.subr.bf16.mxu0 0
    %3325 = vmatpush1.bf16.msra.mxu0 0
    %3326 = vmatprep.mubr.bf16.mxu0 0
    %3327 = vmatmul.mubr.bf16.gmra.mrb[0].mxu0 %v3227
    %v3328 = vpop.f32.mrb[0].mxu0
    %v3329 = vadd.f32 0.0, %v3328
    %v3330 = vpop.f32.mrb[0].mxu0
    %v3331 = vadd.f32 0.0, %v3330
    %v3332 = vpop.f32.mrb[0].mxu0
    %v3333 = vpop.f32.mrb[0].mxu0
    %3334 = vdwg.mxu0
    %3335 = vmatprep.subr.bf16.mxu0 %v3233
    %3336 = vmatpush1.bf16.msra.mxu0 %v3232
    %3337 = vmatprep.subr.bf16.mxu0 %v3241
    %3338 = vmatpush1.bf16.msra.mxu0 %v3240
    %3339 = vmatprep.subr.bf16.mxu0 %v3249
    %3340 = vmatpush1.bf16.msra.mxu0 %v3248
    %3341 = vmatprep.subr.bf16.mxu0 %v3257
    %3342 = vmatpush1.bf16.msra.mxu0 %v3256
    %3343 = vmatprep.subr.bf16.mxu0 %v3265
    %3344 = vmatpush1.bf16.msra.mxu0 %v3264
    %3345 = vmatprep.subr.bf16.mxu0 %v3273
    %3346 = vmatpush1.bf16.msra.mxu0 %v3272
    %3347 = vmatprep.subr.bf16.mxu0 %v3281
    %3348 = vmatpush1.bf16.msra.mxu0 %v3280
    %3349 = vmatprep.subr.bf16.mxu0 %v3289
    %3350 = vmatpush1.bf16.msra.mxu0 %v3288
    %3351 = vmatprep.subr.bf16.mxu0 0
    %3352 = vmatpush1.bf16.msra.mxu0 0
    %3353 = vmatprep.subr.bf16.mxu0 0
    %3354 = vmatpush1.bf16.msra.mxu0 0
    %3355 = vmatprep.subr.bf16.mxu0 0
    %3356 = vmatpush1.bf16.msra.mxu0 0
    %3357 = vmatprep.subr.bf16.mxu0 0
    %3358 = vmatpush1.bf16.msra.mxu0 0
    %3359 = vmatprep.subr.bf16.mxu0 0
    %3360 = vmatpush1.bf16.msra.mxu0 0
    %3361 = vmatprep.subr.bf16.mxu0 0
    %3362 = vmatpush1.bf16.msra.mxu0 0
    %3363 = vmatprep.subr.bf16.mxu0 0
    %3364 = vmatpush1.bf16.msra.mxu0 0
    %3365 = vmatprep.subr.bf16.mxu0 0
    %3366 = vmatpush1.bf16.msra.mxu0 0
    %3367 = vmatprep.mubr.bf16.mxu0 0
    %3368 = vmatmul.mubr.bf16.gmra.mrb[0].mxu0 %v3227
    %v3369 = vpop.f32.mrb[0].mxu0
    %v3370 = vadd.f32 0.0, %v3369
    %v3371 = vpop.f32.mrb[0].mxu0
    %v3372 = vadd.f32 0.0, %v3371
    %v3373 = vpop.f32.mrb[0].mxu0
    %v3374 = vpop.f32.mrb[0].mxu0
    %3375 = vdwg.mxu0
    %3376 = vmatprep.subr.bf16.mxu0 %v3235
    %3377 = vmatpush1.bf16.msra.mxu0 %v3234
    %3378 = vmatprep.subr.bf16.mxu0 %v3243
    %3379 = vmatpush1.bf16.msra.mxu0 %v3242
    %3380 = vmatprep.subr.bf16.mxu0 %v3251
    %3381 = vmatpush1.bf16.msra.mxu0 %v3250
    %3382 = vmatprep.subr.bf16.mxu0 %v3259
    %3383 = vmatpush1.bf16.msra.mxu0 %v3258
    %3384 = vmatprep.subr.bf16.mxu0 %v3267
    %3385 = vmatpush1.bf16.msra.mxu0 %v3266
    %3386 = vmatprep.subr.bf16.mxu0 %v3275
    %3387 = vmatpush1.bf16.msra.mxu0 %v3274
    %3388 = vmatprep.subr.bf16.mxu0 %v3283
    %3389 = vmatpush1.bf16.msra.mxu0 %v3282
    %3390 = vmatprep.subr.bf16.mxu0 %v3291
    %3391 = vmatpush1.bf16.msra.mxu0 %v3290
    %3392 = vmatprep.subr.bf16.mxu0 0
    %3393 = vmatpush1.bf16.msra.mxu0 0
    %3394 = vmatprep.subr.bf16.mxu0 0
    %3395 = vmatpush1.bf16.msra.mxu0 0
    %3396 = vmatprep.subr.bf16.mxu0 0
    %3397 = vmatpush1.bf16.msra.mxu0 0
    %3398 = vmatprep.subr.bf16.mxu0 0
    %3399 = vmatpush1.bf16.msra.mxu0 0
    %3400 = vmatprep.subr.bf16.mxu0 0
    %3401 = vmatpush1.bf16.msra.mxu0 0
    %3402 = vmatprep.subr.bf16.mxu0 0
    %3403 = vmatpush1.bf16.msra.mxu0 0
    %3404 = vmatprep.subr.bf16.mxu0 0
    %3405 = vmatpush1.bf16.msra.mxu0 0
    %3406 = vmatprep.subr.bf16.mxu0 0
    %3407 = vmatpush1.bf16.msra.mxu0 0
    %3408 = vmatprep.mubr.bf16.mxu0 0
    %3409 = vmatmul.mubr.bf16.gmra.mrb[0].mxu0 %v3227
    %v3410 = vpop.f32.mrb[0].mxu0
    %v3411 = vadd.f32 0.0, %v3410
    %v3412 = vpop.f32.mrb[0].mxu0
    %v3413 = vadd.f32 0.0, %v3412
    %v3414 = vpop.f32.mrb[0].mxu0
    %v3415 = vpop.f32.mrb[0].mxu0
    %3416 = vdwg.mxu0
    %3417 = vmatprep.subr.bf16.mxu0 %v3237
    %3418 = vmatpush1.bf16.msra.mxu0 %v3236
    %3419 = vmatprep.subr.bf16.mxu0 %v3245
    %3420 = vmatpush1.bf16.msra.mxu0 %v3244
    %3421 = vmatprep.subr.bf16.mxu0 %v3253
    %3422 = vmatpush1.bf16.msra.mxu0 %v3252
    %3423 = vmatprep.subr.bf16.mxu0 %v3261
    %3424 = vmatpush1.bf16.msra.mxu0 %v3260
    %3425 = vmatprep.subr.bf16.mxu0 %v3269
    %3426 = vmatpush1.bf16.msra.mxu0 %v3268
    %3427 = vmatprep.subr.bf16.mxu0 %v3277
    %3428 = vmatpush1.bf16.msra.mxu0 %v3276
    %3429 = vmatprep.subr.bf16.mxu0 %v3285
    %3430 = vmatpush1.bf16.msra.mxu0 %v3284
    %3431 = vmatprep.subr.bf16.mxu0 %v3293
    %3432 = vmatpush1.bf16.msra.mxu0 %v3292
    %3433 = vmatprep.subr.bf16.mxu0 0
    %3434 = vmatpush1.bf16.msra.mxu0 0
    %3435 = vmatprep.subr.bf16.mxu0 0
    %3436 = vmatpush1.bf16.msra.mxu0 0
    %3437 = vmatprep.subr.bf16.mxu0 0
    %3438 = vmatpush1.bf16.msra.mxu0 0
    %3439 = vmatprep.subr.bf16.mxu0 0
    %3440 = vmatpush1.bf16.msra.mxu0 0
    %3441 = vmatprep.subr.bf16.mxu0 0
    %3442 = vmatpush1.bf16.msra.mxu0 0
    %3443 = vmatprep.subr.bf16.mxu0 0
    %3444 = vmatpush1.bf16.msra.mxu0 0
    %3445 = vmatprep.subr.bf16.mxu0 0
    %3446 = vmatpush1.bf16.msra.mxu0 0
    %3447 = vmatprep.subr.bf16.mxu0 0
    %3448 = vmatpush1.bf16.msra.mxu0 0
    %3449 = vmatprep.mubr.bf16.mxu0 0
    %3450 = vmatmul.mubr.bf16.gmra.mrb[0].mxu0 %v3227
    %v3451 = vpop.f32.mrb[0].mxu0
    %v3452 = vadd.f32 0.0, %v3451
    %v3453 = vpop.f32.mrb[0].mxu0
    %v3454 = vadd.f32 0.0, %v3453
    %v3455 = vpop.f32.mrb[0].mxu0
    %v3456 = vpop.f32.mrb[0].mxu0
    %3457 = vdwg.mxu0
    %v3458 = vadd.f32 %v3216, %v3329
    %v3459 = vadd.f32 %v3217, %v3331
    %v3460 = vadd.f32 %v3218, %v3370
    %v3461 = vadd.f32 %v3219, %v3372
    %v3462 = vadd.f32 %v3220, %v3411
    %v3463 = vadd.f32 %v3221, %v3413
    %v3464 = vadd.f32 %v3222, %v3452
    %v3465 = vadd.f32 %v3223, %v3454
    %v3466 = vrot.slane %v2012, 4
    %v3468 = vsel %vm1534, %v3466, 0.0
    %v3469 = vpack.c.bf16 %v3468, %v3468
    %s3470 = sshll.u32 %s1538, 4
    %3471 = dma.done %s430, %s3470
    %v3472 = vld [vmem:[%s429] sm:$0xff]
    %v3473 = vld [vmem:[%s429 + $0x8] sm:$0xff]
    %v3474 = vld [vmem:[%s429 + $0x10] sm:$0xff]
    %v3475 = vld [vmem:[%s429 + $0x18] sm:$0xff]
    %v3476 = vld [vmem:[%s429 + $0x20] sm:$0xff]
    %v3477 = vld [vmem:[%s429 + $0x28] sm:$0xff]
    %v3478 = vld [vmem:[%s429 + $0x30] sm:$0xff]
    %v3479 = vld [vmem:[%s429 + $0x38] sm:$0xff]
    %v3480 = vld [vmem:[%s429 + $0x40] sm:$0xff]
    %v3481 = vld [vmem:[%s429 + $0x48] sm:$0xff]
    %v3482 = vld [vmem:[%s429 + $0x50] sm:$0xff]
    %v3483 = vld [vmem:[%s429 + $0x58] sm:$0xff]
    %v3484 = vld [vmem:[%s429 + $0x60] sm:$0xff]
    %v3485 = vld [vmem:[%s429 + $0x68] sm:$0xff]
    %v3486 = vld [vmem:[%s429 + $0x70] sm:$0xff]
    %v3487 = vld [vmem:[%s429 + $0x78] sm:$0xff]
    %v3488 = vld [vmem:[%s429 + $0x80] sm:$0xff]
    %v3489 = vld [vmem:[%s429 + $0x88] sm:$0xff]
    %v3490 = vld [vmem:[%s429 + $0x90] sm:$0xff]
    %v3491 = vld [vmem:[%s429 + $0x98] sm:$0xff]
    %v3492 = vld [vmem:[%s429 + $0xa0] sm:$0xff]
    %v3493 = vld [vmem:[%s429 + $0xa8] sm:$0xff]
    %v3494 = vld [vmem:[%s429 + $0xb0] sm:$0xff]
    %v3495 = vld [vmem:[%s429 + $0xb8] sm:$0xff]
    %v3496 = vld [vmem:[%s429 + $0xc0] sm:$0xff]
    %v3497 = vld [vmem:[%s429 + $0xc8] sm:$0xff]
    %v3498 = vld [vmem:[%s429 + $0xd0] sm:$0xff]
    %v3499 = vld [vmem:[%s429 + $0xd8] sm:$0xff]
    %v3500 = vld [vmem:[%s429 + $0xe0] sm:$0xff]
    %v3501 = vld [vmem:[%s429 + $0xe8] sm:$0xff]
    %v3502 = vld [vmem:[%s429 + $0xf0] sm:$0xff]
    %v3503 = vld [vmem:[%s429 + $0xf8] sm:$0xff]
    %v3504 = vld [vmem:[%s429 + $0x100] sm:$0xff]
    %v3505 = vld [vmem:[%s429 + $0x108] sm:$0xff]
    %v3506 = vld [vmem:[%s429 + $0x110] sm:$0xff]
    %v3507 = vld [vmem:[%s429 + $0x118] sm:$0xff]
    %v3508 = vld [vmem:[%s429 + $0x120] sm:$0xff]
    %v3509 = vld [vmem:[%s429 + $0x128] sm:$0xff]
    %v3510 = vld [vmem:[%s429 + $0x130] sm:$0xff]
    %v3511 = vld [vmem:[%s429 + $0x138] sm:$0xff]
    %v3512 = vld [vmem:[%s429 + $0x140] sm:$0xff]
    %v3513 = vld [vmem:[%s429 + $0x148] sm:$0xff]
    %v3514 = vld [vmem:[%s429 + $0x150] sm:$0xff]
    %v3515 = vld [vmem:[%s429 + $0x158] sm:$0xff]
    %v3516 = vld [vmem:[%s429 + $0x160] sm:$0xff]
    %v3517 = vld [vmem:[%s429 + $0x168] sm:$0xff]
    %v3518 = vld [vmem:[%s429 + $0x170] sm:$0xff]
    %v3519 = vld [vmem:[%s429 + $0x178] sm:$0xff]
    %v3520 = vld [vmem:[%s429 + $0x180] sm:$0xff]
    %v3521 = vld [vmem:[%s429 + $0x188] sm:$0xff]
    %v3522 = vld [vmem:[%s429 + $0x190] sm:$0xff]
    %v3523 = vld [vmem:[%s429 + $0x198] sm:$0xff]
    %v3524 = vld [vmem:[%s429 + $0x1a0] sm:$0xff]
    %v3525 = vld [vmem:[%s429 + $0x1a8] sm:$0xff]
    %v3526 = vld [vmem:[%s429 + $0x1b0] sm:$0xff]
    %v3527 = vld [vmem:[%s429 + $0x1b8] sm:$0xff]
    %v3528 = vld [vmem:[%s429 + $0x1c0] sm:$0xff]
    %v3529 = vld [vmem:[%s429 + $0x1c8] sm:$0xff]
    %v3530 = vld [vmem:[%s429 + $0x1d0] sm:$0xff]
    %v3531 = vld [vmem:[%s429 + $0x1d8] sm:$0xff]
    %v3532 = vld [vmem:[%s429 + $0x1e0] sm:$0xff]
    %v3533 = vld [vmem:[%s429 + $0x1e8] sm:$0xff]
    %v3534 = vld [vmem:[%s429 + $0x1f0] sm:$0xff]
    %v3535 = vld [vmem:[%s429 + $0x1f8] sm:$0xff]
    %3536 = vmatprep.subr.bf16.mxu0 %v3473
    %3537 = vmatpush1.bf16.msra.mxu0 %v3472
    %3538 = vmatprep.subr.bf16.mxu0 %v3481
    %3539 = vmatpush1.bf16.msra.mxu0 %v3480
    %3540 = vmatprep.subr.bf16.mxu0 %v3489
    %3541 = vmatpush1.bf16.msra.mxu0 %v3488
    %3542 = vmatprep.subr.bf16.mxu0 %v3497
    %3543 = vmatpush1.bf16.msra.mxu0 %v3496
    %3544 = vmatprep.subr.bf16.mxu0 %v3505
    %3545 = vmatpush1.bf16.msra.mxu0 %v3504
    %3546 = vmatprep.subr.bf16.mxu0 %v3513
    %3547 = vmatpush1.bf16.msra.mxu0 %v3512
    %3548 = vmatprep.subr.bf16.mxu0 %v3521
    %3549 = vmatpush1.bf16.msra.mxu0 %v3520
    %3550 = vmatprep.subr.bf16.mxu0 %v3529
    %3551 = vmatpush1.bf16.msra.mxu0 %v3528
    %3552 = vmatprep.subr.bf16.mxu0 0
    %3553 = vmatpush1.bf16.msra.mxu0 0
    %3554 = vmatprep.subr.bf16.mxu0 0
    %3555 = vmatpush1.bf16.msra.mxu0 0
    %3556 = vmatprep.subr.bf16.mxu0 0
    %3557 = vmatpush1.bf16.msra.mxu0 0
    %3558 = vmatprep.subr.bf16.mxu0 0
    %3559 = vmatpush1.bf16.msra.mxu0 0
    %3560 = vmatprep.subr.bf16.mxu0 0
    %3561 = vmatpush1.bf16.msra.mxu0 0
    %3562 = vmatprep.subr.bf16.mxu0 0
    %3563 = vmatpush1.bf16.msra.mxu0 0
    %3564 = vmatprep.subr.bf16.mxu0 0
    %3565 = vmatpush1.bf16.msra.mxu0 0
    %3566 = vmatprep.subr.bf16.mxu0 0
    %3567 = vmatpush1.bf16.msra.mxu0 0
    %3568 = vmatprep.mubr.bf16.mxu0 0
    %3569 = vmatmul.mubr.bf16.gmra.mrb[0].mxu0 %v3469
    %v3570 = vpop.f32.mrb[0].mxu0
    %v3571 = vadd.f32 0.0, %v3570
    %v3572 = vpop.f32.mrb[0].mxu0
    %v3573 = vadd.f32 0.0, %v3572
    %v3574 = vpop.f32.mrb[0].mxu0
    %v3575 = vpop.f32.mrb[0].mxu0
    %3576 = vdwg.mxu0
    %3577 = vmatprep.subr.bf16.mxu0 %v3475
    %3578 = vmatpush1.bf16.msra.mxu0 %v3474
    %3579 = vmatprep.subr.bf16.mxu0 %v3483
    %3580 = vmatpush1.bf16.msra.mxu0 %v3482
    %3581 = vmatprep.subr.bf16.mxu0 %v3491
    %3582 = vmatpush1.bf16.msra.mxu0 %v3490
    %3583 = vmatprep.subr.bf16.mxu0 %v3499
    %3584 = vmatpush1.bf16.msra.mxu0 %v3498
    %3585 = vmatprep.subr.bf16.mxu0 %v3507
    %3586 = vmatpush1.bf16.msra.mxu0 %v3506
    %3587 = vmatprep.subr.bf16.mxu0 %v3515
    %3588 = vmatpush1.bf16.msra.mxu0 %v3514
    %3589 = vmatprep.subr.bf16.mxu0 %v3523
    %3590 = vmatpush1.bf16.msra.mxu0 %v3522
    %3591 = vmatprep.subr.bf16.mxu0 %v3531
    %3592 = vmatpush1.bf16.msra.mxu0 %v3530
    %3593 = vmatprep.subr.bf16.mxu0 0
    %3594 = vmatpush1.bf16.msra.mxu0 0
    %3595 = vmatprep.subr.bf16.mxu0 0
    %3596 = vmatpush1.bf16.msra.mxu0 0
    %3597 = vmatprep.subr.bf16.mxu0 0
    %3598 = vmatpush1.bf16.msra.mxu0 0
    %3599 = vmatprep.subr.bf16.mxu0 0
    %3600 = vmatpush1.bf16.msra.mxu0 0
    %3601 = vmatprep.subr.bf16.mxu0 0
    %3602 = vmatpush1.bf16.msra.mxu0 0
    %3603 = vmatprep.subr.bf16.mxu0 0
    %3604 = vmatpush1.bf16.msra.mxu0 0
    %3605 = vmatprep.subr.bf16.mxu0 0
    %3606 = vmatpush1.bf16.msra.mxu0 0
    %3607 = vmatprep.subr.bf16.mxu0 0
    %3608 = vmatpush1.bf16.msra.mxu0 0
    %3609 = vmatprep.mubr.bf16.mxu0 0
    %3610 = vmatmul.mubr.bf16.gmra.mrb[0].mxu0 %v3469
    %v3611 = vpop.f32.mrb[0].mxu0
    %v3612 = vadd.f32 0.0, %v3611
    %v3613 = vpop.f32.mrb[0].mxu0
    %v3614 = vadd.f32 0.0, %v3613
    %v3615 = vpop.f32.mrb[0].mxu0
    %v3616 = vpop.f32.mrb[0].mxu0
    %3617 = vdwg.mxu0
    %3618 = vmatprep.subr.bf16.mxu0 %v3477
    %3619 = vmatpush1.bf16.msra.mxu0 %v3476
    %3620 = vmatprep.subr.bf16.mxu0 %v3485
    %3621 = vmatpush1.bf16.msra.mxu0 %v3484
    %3622 = vmatprep.subr.bf16.mxu0 %v3493
    %3623 = vmatpush1.bf16.msra.mxu0 %v3492
    %3624 = vmatprep.subr.bf16.mxu0 %v3501
    %3625 = vmatpush1.bf16.msra.mxu0 %v3500
    %3626 = vmatprep.subr.bf16.mxu0 %v3509
    %3627 = vmatpush1.bf16.msra.mxu0 %v3508
    %3628 = vmatprep.subr.bf16.mxu0 %v3517
    %3629 = vmatpush1.bf16.msra.mxu0 %v3516
    %3630 = vmatprep.subr.bf16.mxu0 %v3525
    %3631 = vmatpush1.bf16.msra.mxu0 %v3524
    %3632 = vmatprep.subr.bf16.mxu0 %v3533
    %3633 = vmatpush1.bf16.msra.mxu0 %v3532
    %3634 = vmatprep.subr.bf16.mxu0 0
    %3635 = vmatpush1.bf16.msra.mxu0 0
    %3636 = vmatprep.subr.bf16.mxu0 0
    %3637 = vmatpush1.bf16.msra.mxu0 0
    %3638 = vmatprep.subr.bf16.mxu0 0
    %3639 = vmatpush1.bf16.msra.mxu0 0
    %3640 = vmatprep.subr.bf16.mxu0 0
    %3641 = vmatpush1.bf16.msra.mxu0 0
    %3642 = vmatprep.subr.bf16.mxu0 0
    %3643 = vmatpush1.bf16.msra.mxu0 0
    %3644 = vmatprep.subr.bf16.mxu0 0
    %3645 = vmatpush1.bf16.msra.mxu0 0
    %3646 = vmatprep.subr.bf16.mxu0 0
    %3647 = vmatpush1.bf16.msra.mxu0 0
    %3648 = vmatprep.subr.bf16.mxu0 0
    %3649 = vmatpush1.bf16.msra.mxu0 0
    %3650 = vmatprep.mubr.bf16.mxu0 0
    %3651 = vmatmul.mubr.bf16.gmra.mrb[0].mxu0 %v3469
    %v3652 = vpop.f32.mrb[0].mxu0
    %v3653 = vadd.f32 0.0, %v3652
    %v3654 = vpop.f32.mrb[0].mxu0
    %v3655 = vadd.f32 0.0, %v3654
    %v3656 = vpop.f32.mrb[0].mxu0
    %v3657 = vpop.f32.mrb[0].mxu0
    %3658 = vdwg.mxu0
    %3659 = vmatprep.subr.bf16.mxu0 %v3479
    %3660 = vmatpush1.bf16.msra.mxu0 %v3478
    %3661 = vmatprep.subr.bf16.mxu0 %v3487
    %3662 = vmatpush1.bf16.msra.mxu0 %v3486
    %3663 = vmatprep.subr.bf16.mxu0 %v3495
    %3664 = vmatpush1.bf16.msra.mxu0 %v3494
    %3665 = vmatprep.subr.bf16.mxu0 %v3503
    %3666 = vmatpush1.bf16.msra.mxu0 %v3502
    %3667 = vmatprep.subr.bf16.mxu0 %v3511
    %3668 = vmatpush1.bf16.msra.mxu0 %v3510
    %3669 = vmatprep.subr.bf16.mxu0 %v3519
    %3670 = vmatpush1.bf16.msra.mxu0 %v3518
    %3671 = vmatprep.subr.bf16.mxu0 %v3527
    %3672 = vmatpush1.bf16.msra.mxu0 %v3526
    %3673 = vmatprep.subr.bf16.mxu0 %v3535
    %3674 = vmatpush1.bf16.msra.mxu0 %v3534
    %3675 = vmatprep.subr.bf16.mxu0 0
    %3676 = vmatpush1.bf16.msra.mxu0 0
    %3677 = vmatprep.subr.bf16.mxu0 0
    %3678 = vmatpush1.bf16.msra.mxu0 0
    %3679 = vmatprep.subr.bf16.mxu0 0
    %3680 = vmatpush1.bf16.msra.mxu0 0
    %3681 = vmatprep.subr.bf16.mxu0 0
    %3682 = vmatpush1.bf16.msra.mxu0 0
    %3683 = vmatprep.subr.bf16.mxu0 0
    %3684 = vmatpush1.bf16.msra.mxu0 0
    %3685 = vmatprep.subr.bf16.mxu0 0
    %3686 = vmatpush1.bf16.msra.mxu0 0
    %3687 = vmatprep.subr.bf16.mxu0 0
    %3688 = vmatpush1.bf16.msra.mxu0 0
    %3689 = vmatprep.subr.bf16.mxu0 0
    %3690 = vmatpush1.bf16.msra.mxu0 0
    %3691 = vmatprep.mubr.bf16.mxu0 0
    %3692 = vmatmul.mubr.bf16.gmra.mrb[0].mxu0 %v3469
    %v3693 = vpop.f32.mrb[0].mxu0
    %v3694 = vadd.f32 0.0, %v3693
    %v3695 = vpop.f32.mrb[0].mxu0
    %v3696 = vadd.f32 0.0, %v3695
    %v3697 = vpop.f32.mrb[0].mxu0
    %v3698 = vpop.f32.mrb[0].mxu0
    %3699 = vdwg.mxu0
    %v3700 = vadd.f32 %v3458, %v3571
    %v3701 = vadd.f32 %v3459, %v3573
    %v3702 = vadd.f32 %v3460, %v3612
    %v3703 = vadd.f32 %v3461, %v3614
    %v3704 = vadd.f32 %v3462, %v3653
    %v3705 = vadd.f32 %v3463, %v3655
    %v3706 = vadd.f32 %v3464, %v3694
    %v3707 = vadd.f32 %v3465, %v3696
    %v3708 = vpack.c.bf16 %v1272, %v1270
    %v3709 = vpack.c.bf16 %v1273, %v1271
    %v3710 = vld [vmem:[#allocation10 + $0x8] sm:$0xff]
    %v3711 = vld [vmem:[#allocation10 + $0x10] sm:$0xf]
    %v3712 = vld [vmem:[#allocation10 + $0x2c] sm:$0xff]
    %v3713 = vld [vmem:[#allocation10 + $0x34] sm:$0xf]
    %v3714 = vld [vmem:[#allocation10 + $0x50] sm:$0xff]
    %v3715 = vld [vmem:[#allocation10 + $0x58] sm:$0xf]
    %v3716 = vld [vmem:[#allocation10 + $0x74] sm:$0xff]
    %v3717 = vld [vmem:[#allocation10 + $0x7c] sm:$0xf]
    %v3718 = vld [vmem:[#allocation10 + $0x98] sm:$0xff]
    %v3719 = vld [vmem:[#allocation10 + $0xa0] sm:$0xf]
    %v3720 = vld [vmem:[#allocation10 + $0xbc] sm:$0xff]
    %v3721 = vld [vmem:[#allocation10 + $0xc4] sm:$0xf]
    %v3722 = vld [vmem:[#allocation10 + $0xe0] sm:$0xff]
    %v3723 = vld [vmem:[#allocation10 + $0xe8] sm:$0xf]
    %v3724 = vld [vmem:[#allocation10 + $0x104] sm:$0xff]
    %v3725 = vld [vmem:[#allocation10 + $0x10c] sm:$0xf]
    %v3726 = vld [vmem:[#allocation10 + $0x128] sm:$0xff]
    %v3727 = vld [vmem:[#allocation10 + $0x130] sm:$0xf]
    %v3728 = vld [vmem:[#allocation10 + $0x14c] sm:$0xff]
    %v3729 = vld [vmem:[#allocation10 + $0x154] sm:$0xf]
    %v3730 = vld [vmem:[#allocation10 + $0x170] sm:$0xff]
    %v3731 = vld [vmem:[#allocation10 + $0x178] sm:$0xf]
    %v3732 = vld [vmem:[#allocation10 + $0x194] sm:$0xff]
    %v3733 = vld [vmem:[#allocation10 + $0x19c] sm:$0xf]
    %v3734 = vld [vmem:[#allocation10 + $0x1b8] sm:$0xff]
    %v3735 = vld [vmem:[#allocation10 + $0x1c0] sm:$0xf]
    %v3736 = vld [vmem:[#allocation10 + $0x1dc] sm:$0xff]
    %v3737 = vld [vmem:[#allocation10 + $0x1e4] sm:$0xf]
    %v3738 = vld [vmem:[#allocation10 + $0x200] sm:$0xff]
    %v3739 = vld [vmem:[#allocation10 + $0x208] sm:$0xf]
    %v3740 = vld [vmem:[#allocation10 + $0x224] sm:$0xff]
    %v3741 = vld [vmem:[#allocation10 + $0x22c] sm:$0xf]
    %v3742 = vld [vmem:[#allocation10 + $0x248] sm:$0xff]
    %v3743 = vld [vmem:[#allocation10 + $0x250] sm:$0xf]
    %v3744 = vld [vmem:[#allocation10 + $0x26c] sm:$0xff]
    %v3745 = vld [vmem:[#allocation10 + $0x274] sm:$0xf]
    %v3746 = vld [vmem:[#allocation10 + $0x290] sm:$0xff]
    %v3747 = vld [vmem:[#allocation10 + $0x298] sm:$0xf]
    %v3748 = vld [vmem:[#allocation10 + $0x2b4] sm:$0xff]
    %v3749 = vld [vmem:[#allocation10 + $0x2bc] sm:$0xf]
    %v3750 = vld [vmem:[#allocation10 + $0x2d8] sm:$0xff]
    %v3751 = vld [vmem:[#allocation10 + $0x2e0] sm:$0xf]
    %v3752 = vld [vmem:[#allocation10 + $0x2fc] sm:$0xff]
    %v3753 = vld [vmem:[#allocation10 + $0x304] sm:$0xf]
    %v3754 = vld [vmem:[#allocation10 + $0x320] sm:$0xff]
    %v3755 = vld [vmem:[#allocation10 + $0x328] sm:$0xf]
    %v3756 = vld [vmem:[#allocation10 + $0x344] sm:$0xff]
    %v3757 = vld [vmem:[#allocation10 + $0x34c] sm:$0xf]
    %v3758 = vld [vmem:[#allocation10 + $0x368] sm:$0xff]
    %v3759 = vld [vmem:[#allocation10 + $0x370] sm:$0xf]
    %v3760 = vld [vmem:[#allocation10 + $0x38c] sm:$0xff]
    %v3761 = vld [vmem:[#allocation10 + $0x394] sm:$0xf]
    %v3762 = vld [vmem:[#allocation10 + $0x3b0] sm:$0xff]
    %v3763 = vld [vmem:[#allocation10 + $0x3b8] sm:$0xf]
    %v3764 = vld [vmem:[#allocation10 + $0x3d4] sm:$0xff]
    %v3765 = vld [vmem:[#allocation10 + $0x3dc] sm:$0xf]
    %v3766 = vld [vmem:[#allocation10 + $0x3f8] sm:$0xff]
    %v3767 = vld [vmem:[#allocation10 + $0x400] sm:$0xf]
    %v3768 = vld [vmem:[#allocation10 + $0x41c] sm:$0xff]
    %v3769 = vld [vmem:[#allocation10 + $0x424] sm:$0xf]
    %v3770 = vld [vmem:[#allocation10 + $0x440] sm:$0xff]
    %v3771 = vld [vmem:[#allocation10 + $0x448] sm:$0xf]
    %v3772 = vld [vmem:[#allocation10 + $0x464] sm:$0xff]
    %v3773 = vld [vmem:[#allocation10 + $0x46c] sm:$0xf]
    %v3838 = vunpack.c.l.b16 %v3710
    %v3839 = vunpack.c.h.b16 %v3710
    %v3840 = vunpack.c.l.b16 %v3711
    %v3841 = vunpack.c.l.b16 %v3712
    %v3842 = vunpack.c.h.b16 %v3712
    %v3843 = vunpack.c.l.b16 %v3713
    %v3844 = vunpack.c.l.b16 %v3714
    %v3845 = vunpack.c.h.b16 %v3714
    %v3846 = vunpack.c.l.b16 %v3715
    %v3847 = vunpack.c.l.b16 %v3716
    %v3848 = vunpack.c.h.b16 %v3716
    %v3849 = vunpack.c.l.b16 %v3717
    %v3850 = vunpack.c.l.b16 %v3718
    %v3851 = vunpack.c.h.b16 %v3718
    %v3852 = vunpack.c.l.b16 %v3719
    %v3853 = vunpack.c.l.b16 %v3720
    %v3854 = vunpack.c.h.b16 %v3720
    %v3855 = vunpack.c.l.b16 %v3721
    %v3856 = vunpack.c.l.b16 %v3722
    %v3857 = vunpack.c.h.b16 %v3722
    %v3858 = vunpack.c.l.b16 %v3723
    %v3859 = vunpack.c.l.b16 %v3724
    %v3860 = vunpack.c.h.b16 %v3724
    %v3861 = vunpack.c.l.b16 %v3725
    %v3862 = vunpack.c.l.b16 %v3726
    %v3863 = vunpack.c.h.b16 %v3726
    %v3864 = vunpack.c.l.b16 %v3727
    %v3865 = vunpack.c.l.b16 %v3728
    %v3866 = vunpack.c.h.b16 %v3728
    %v3867 = vunpack.c.l.b16 %v3729
    %v3868 = vunpack.c.l.b16 %v3730
    %v3869 = vunpack.c.h.b16 %v3730
    %v3870 = vunpack.c.l.b16 %v3731
    %v3871 = vunpack.c.l.b16 %v3732
    %v3872 = vunpack.c.h.b16 %v3732
    %v3873 = vunpack.c.l.b16 %v3733
    %v3874 = vunpack.c.l.b16 %v3734
    %v3875 = vunpack.c.h.b16 %v3734
    %v3876 = vunpack.c.l.b16 %v3735
    %v3877 = vunpack.c.l.b16 %v3736
    %v3878 = vunpack.c.h.b16 %v3736
    %v3879 = vunpack.c.l.b16 %v3737
    %v3880 = vunpack.c.l.b16 %v3738
    %v3881 = vunpack.c.h.b16 %v3738
    %v3882 = vunpack.c.l.b16 %v3739
    %v3883 = vunpack.c.l.b16 %v3740
    %v3884 = vunpack.c.h.b16 %v3740
    %v3885 = vunpack.c.l.b16 %v3741
    %v3886 = vunpack.c.l.b16 %v3742
    %v3887 = vunpack.c.h.b16 %v3742
    %v3888 = vunpack.c.l.b16 %v3743
    %v3889 = vunpack.c.l.b16 %v3744
    %v3890 = vunpack.c.h.b16 %v3744
    %v3891 = vunpack.c.l.b16 %v3745
    %v3892 = vunpack.c.l.b16 %v3746
    %v3893 = vunpack.c.h.b16 %v3746
    %v3894 = vunpack.c.l.b16 %v3747
    %v3895 = vunpack.c.l.b16 %v3748
    %v3896 = vunpack.c.h.b16 %v3748
    %v3897 = vunpack.c.l.b16 %v3749
    %v3898 = vunpack.c.l.b16 %v3750
    %v3899 = vunpack.c.h.b16 %v3750
    %v3900 = vunpack.c.l.b16 %v3751
    %v3901 = vunpack.c.l.b16 %v3752
    %v3902 = vunpack.c.h.b16 %v3752
    %v3903 = vunpack.c.l.b16 %v3753
    %v3904 = vunpack.c.l.b16 %v3754
    %v3905 = vunpack.c.h.b16 %v3754
    %v3906 = vunpack.c.l.b16 %v3755
    %v3907 = vunpack.c.l.b16 %v3756
    %v3908 = vunpack.c.h.b16 %v3756
    %v3909 = vunpack.c.l.b16 %v3757
    %v3910 = vunpack.c.l.b16 %v3758
    %v3911 = vunpack.c.h.b16 %v3758
    %v3912 = vunpack.c.l.b16 %v3759
    %v3913 = vunpack.c.l.b16 %v3760
    %v3914 = vunpack.c.h.b16 %v3760
    %v3915 = vunpack.c.l.b16 %v3761
    %v3916 = vunpack.c.l.b16 %v3762
    %v3917 = vunpack.c.h.b16 %v3762
    %v3918 = vunpack.c.l.b16 %v3763
    %v3919 = vunpack.c.l.b16 %v3764
    %v3920 = vunpack.c.h.b16 %v3764
    %v3921 = vunpack.c.l.b16 %v3765
    %v3922 = vunpack.c.l.b16 %v3766
    %v3923 = vunpack.c.h.b16 %v3766
    %v3924 = vunpack.c.l.b16 %v3767
    %v3925 = vunpack.c.l.b16 %v3768
    %v3926 = vunpack.c.h.b16 %v3768
    %v3927 = vunpack.c.l.b16 %v3769
    %v3928 = vunpack.c.l.b16 %v3770
    %v3929 = vunpack.c.h.b16 %v3770
    %v3930 = vunpack.c.l.b16 %v3771
    %v3931 = vunpack.c.l.b16 %v3772
    %v3932 = vunpack.c.h.b16 %v3772
    %v3933 = vunpack.c.l.b16 %v3773
    %v3934 = vpack.c.b16 %v3841, %v3838
    %v3935 = vpack.c.b16 %v3842, %v3839
    %v3936 = vpack.c.b16 %v3843, %v3840
    %v3937 = vpack.c.b16 %v3847, %v3844
    %v3938 = vpack.c.b16 %v3848, %v3845
    %v3939 = vpack.c.b16 %v3849, %v3846
    %v3940 = vpack.c.b16 %v3853, %v3850
    %v3941 = vpack.c.b16 %v3854, %v3851
    %v3942 = vpack.c.b16 %v3855, %v3852
    %v3943 = vpack.c.b16 %v3859, %v3856
    %v3944 = vpack.c.b16 %v3860, %v3857
    %v3945 = vpack.c.b16 %v3861, %v3858
    %v3946 = vpack.c.b16 %v3865, %v3862
    %v3947 = vpack.c.b16 %v3866, %v3863
    %v3948 = vpack.c.b16 %v3867, %v3864
    %v3949 = vpack.c.b16 %v3871, %v3868
    %v3950 = vpack.c.b16 %v3872, %v3869
    %v3951 = vpack.c.b16 %v3873, %v3870
    %v3952 = vpack.c.b16 %v3877, %v3874
    %v3953 = vpack.c.b16 %v3878, %v3875
    %v3954 = vpack.c.b16 %v3879, %v3876
    %v3955 = vpack.c.b16 %v3883, %v3880
    %v3956 = vpack.c.b16 %v3884, %v3881
    %v3957 = vpack.c.b16 %v3885, %v3882
    %v3958 = vpack.c.b16 %v3889, %v3886
    %v3959 = vpack.c.b16 %v3890, %v3887
    %v3960 = vpack.c.b16 %v3891, %v3888
    %v3961 = vpack.c.b16 %v3895, %v3892
    %v3962 = vpack.c.b16 %v3896, %v3893
    %v3963 = vpack.c.b16 %v3897, %v3894
    %v3964 = vpack.c.b16 %v3901, %v3898
    %v3965 = vpack.c.b16 %v3902, %v3899
    %v3966 = vpack.c.b16 %v3903, %v3900
    %v3967 = vpack.c.b16 %v3907, %v3904
    %v3968 = vpack.c.b16 %v3908, %v3905
    %v3969 = vpack.c.b16 %v3909, %v3906
    %v3970 = vpack.c.b16 %v3913, %v3910
    %v3971 = vpack.c.b16 %v3914, %v3911
    %v3972 = vpack.c.b16 %v3915, %v3912
    %v3973 = vpack.c.b16 %v3919, %v3916
    %v3974 = vpack.c.b16 %v3920, %v3917
    %v3975 = vpack.c.b16 %v3921, %v3918
    %v3976 = vpack.c.b16 %v3925, %v3922
    %v3977 = vpack.c.b16 %v3926, %v3923
    %v3978 = vpack.c.b16 %v3927, %v3924
    %v3979 = vpack.c.b16 %v3931, %v3928
    %v3980 = vpack.c.b16 %v3932, %v3929
    %v3981 = vpack.c.b16 %v3933, %v3930
    %4030 = vmatprep.subr.bf16.mxu0 %v3935
    %4031 = vmatpush1.bf16.msra.mxu0 %v3934
    %4032 = vmatprep.subr.bf16.mxu0 %v3938
    %4033 = vmatpush1.bf16.msra.mxu0 %v3937
    %4034 = vmatprep.subr.bf16.mxu0 %v3941
    %4035 = vmatpush1.bf16.msra.mxu0 %v3940
    %4036 = vmatprep.subr.bf16.mxu0 %v3944
    %4037 = vmatpush1.bf16.msra.mxu0 %v3943
    %4038 = vmatprep.subr.bf16.mxu0 %v3947
    %4039 = vmatpush1.bf16.msra.mxu0 %v3946
    %4040 = vmatprep.subr.bf16.mxu0 %v3950
    %4041 = vmatpush1.bf16.msra.mxu0 %v3949
    %4042 = vmatprep.subr.bf16.mxu0 %v3953
    %4043 = vmatpush1.bf16.msra.mxu0 %v3952
    %4044 = vmatprep.subr.bf16.mxu0 %v3956
    %4045 = vmatpush1.bf16.msra.mxu0 %v3955
    %4046 = vmatprep.subr.bf16.mxu0 %v3959
    %4047 = vmatpush1.bf16.msra.mxu0 %v3958
    %4048 = vmatprep.subr.bf16.mxu0 %v3962
    %4049 = vmatpush1.bf16.msra.mxu0 %v3961
    %4050 = vmatprep.subr.bf16.mxu0 %v3965
    %4051 = vmatpush1.bf16.msra.mxu0 %v3964
    %4052 = vmatprep.subr.bf16.mxu0 %v3968
    %4053 = vmatpush1.bf16.msra.mxu0 %v3967
    %4054 = vmatprep.subr.bf16.mxu0 %v3971
    %4055 = vmatpush1.bf16.msra.mxu0 %v3970
    %4056 = vmatprep.subr.bf16.mxu0 %v3974
    %4057 = vmatpush1.bf16.msra.mxu0 %v3973
    %4058 = vmatprep.subr.bf16.mxu0 %v3977
    %4059 = vmatpush1.bf16.msra.mxu0 %v3976
    %4060 = vmatprep.subr.bf16.mxu0 %v3980
    %4061 = vmatpush1.bf16.msra.mxu0 %v3979
    %4062 = vmatprep.mubr.bf16.mxu0 %v3709
    %4063 = vmatmul.mubr.bf16.gmra.mrb[0].mxu0 %v3708
    %v4064 = vpop.f32.mrb[0].mxu0
    %v4065 = vadd.f32 0.0, %v4064
    %v4066 = vpop.f32.mrb[0].mxu0
    %v4067 = vadd.f32 0.0, %v4066
    %v4068 = vpop.f32.mrb[0].mxu0
    %v4069 = vadd.f32 0.0, %v4068
    %v4070 = vpop.f32.mrb[0].mxu0
    %v4071 = vadd.f32 0.0, %v4070
    %4072 = vdwg.mxu0
    %4073 = vmatprep.subr.bf16.mxu0 0
    %4074 = vmatpush1.bf16.msra.mxu0 %v3936
    %4075 = vmatprep.subr.bf16.mxu0 0
    %4076 = vmatpush1.bf16.msra.mxu0 %v3939
    %4077 = vmatprep.subr.bf16.mxu0 0
    %4078 = vmatpush1.bf16.msra.mxu0 %v3942
    %4079 = vmatprep.subr.bf16.mxu0 0
    %4080 = vmatpush1.bf16.msra.mxu0 %v3945
    %4081 = vmatprep.subr.bf16.mxu0 0
    %4082 = vmatpush1.bf16.msra.mxu0 %v3948
    %4083 = vmatprep.subr.bf16.mxu0 0
    %4084 = vmatpush1.bf16.msra.mxu0 %v3951
    %4085 = vmatprep.subr.bf16.mxu0 0
    %4086 = vmatpush1.bf16.msra.mxu0 %v3954
    %4087 = vmatprep.subr.bf16.mxu0 0
    %4088 = vmatpush1.bf16.msra.mxu0 %v3957
    %4089 = vmatprep.subr.bf16.mxu0 0
    %4090 = vmatpush1.bf16.msra.mxu0 %v3960
    %4091 = vmatprep.subr.bf16.mxu0 0
    %4092 = vmatpush1.bf16.msra.mxu0 %v3963
    %4093 = vmatprep.subr.bf16.mxu0 0
    %4094 = vmatpush1.bf16.msra.mxu0 %v3966
    %4095 = vmatprep.subr.bf16.mxu0 0
    %4096 = vmatpush1.bf16.msra.mxu0 %v3969
    %4097 = vmatprep.subr.bf16.mxu0 0
    %4098 = vmatpush1.bf16.msra.mxu0 %v3972
    %4099 = vmatprep.subr.bf16.mxu0 0
    %4100 = vmatpush1.bf16.msra.mxu0 %v3975
    %4101 = vmatprep.subr.bf16.mxu0 0
    %4102 = vmatpush1.bf16.msra.mxu0 %v3978
    %4103 = vmatprep.subr.bf16.mxu0 0
    %4104 = vmatpush1.bf16.msra.mxu0 %v3981
    %4105 = vmatprep.mubr.bf16.mxu0 %v3709
    %4106 = vmatmul.mubr.bf16.gmra.mrb[0].mxu0 %v3708
    %v4107 = vpop.f32.mrb[0].mxu0
    %v4108 = vadd.f32 0.0, %v4107
    %v4109 = vpop.f32.mrb[0].mxu0
    %v4110 = vpop.f32.mrb[0].mxu0
    %v4111 = vadd.f32 0.0, %v4110
    %v4112 = vpop.f32.mrb[0].mxu0
    %4113 = vdwg.mxu0
    %v4114 = vld [vmem:[#allocation11 + $0x1] sm:$0x1]
    %v4116 = vrot.slane %v4067, 2
    %v4118 = vadd.f32 %v4065, %v4116
    %v4120 = vrot.slane %v4108, 4
    %v4122 = vadd.f32 %v4118, %v4120
    %v4123 = vlaneseq
    %v4124 = vshrl.u32 %v4123, 7
    %v4125 = vsub.s32 0, %v4124
    %v4126 = vrot.slane %v4114, %v4125
    %v4127 = vadd.f32 %v4122, %v4126
    %v4128 = vmax.f32 %v4127, 0.0
    %v4129 = vsel %vm1534, %v4128, 0.0
    %v4130 = vpack.c.bf16 %v4129, %v4129
    %s4131 = sshll.u32 %s1538, 4
    %4132 = dma.done %s467, %s4131
    %v4133 = vld [vmem:[%s466] sm:$0xff]
    %v4134 = vld [vmem:[%s466 + $0x8] sm:$0xff]
    %v4135 = vld [vmem:[%s466 + $0x10] sm:$0xff]
    %v4136 = vld [vmem:[%s466 + $0x18] sm:$0xff]
    %v4137 = vld [vmem:[%s466 + $0x20] sm:$0xff]
    %v4138 = vld [vmem:[%s466 + $0x28] sm:$0xff]
    %v4139 = vld [vmem:[%s466 + $0x30] sm:$0xff]
    %v4140 = vld [vmem:[%s466 + $0x38] sm:$0xff]
    %v4141 = vld [vmem:[%s466 + $0x40] sm:$0xff]
    %v4142 = vld [vmem:[%s466 + $0x48] sm:$0xff]
    %v4143 = vld [vmem:[%s466 + $0x50] sm:$0xff]
    %v4144 = vld [vmem:[%s466 + $0x58] sm:$0xff]
    %v4145 = vld [vmem:[%s466 + $0x60] sm:$0xff]
    %v4146 = vld [vmem:[%s466 + $0x68] sm:$0xff]
    %v4147 = vld [vmem:[%s466 + $0x70] sm:$0xff]
    %v4148 = vld [vmem:[%s466 + $0x78] sm:$0xff]
    %v4149 = vld [vmem:[%s466 + $0x80] sm:$0xff]
    %v4150 = vld [vmem:[%s466 + $0x88] sm:$0xff]
    %v4151 = vld [vmem:[%s466 + $0x90] sm:$0xff]
    %v4152 = vld [vmem:[%s466 + $0x98] sm:$0xff]
    %v4153 = vld [vmem:[%s466 + $0xa0] sm:$0xff]
    %v4154 = vld [vmem:[%s466 + $0xa8] sm:$0xff]
    %v4155 = vld [vmem:[%s466 + $0xb0] sm:$0xff]
    %v4156 = vld [vmem:[%s466 + $0xb8] sm:$0xff]
    %v4157 = vld [vmem:[%s466 + $0xc0] sm:$0xff]
    %v4158 = vld [vmem:[%s466 + $0xc8] sm:$0xff]
    %v4159 = vld [vmem:[%s466 + $0xd0] sm:$0xff]
    %v4160 = vld [vmem:[%s466 + $0xd8] sm:$0xff]
    %v4161 = vld [vmem:[%s466 + $0xe0] sm:$0xff]
    %v4162 = vld [vmem:[%s466 + $0xe8] sm:$0xff]
    %v4163 = vld [vmem:[%s466 + $0xf0] sm:$0xff]
    %v4164 = vld [vmem:[%s466 + $0xf8] sm:$0xff]
    %v4165 = vld [vmem:[%s466 + $0x100] sm:$0xff]
    %v4166 = vld [vmem:[%s466 + $0x108] sm:$0xff]
    %v4167 = vld [vmem:[%s466 + $0x110] sm:$0xff]
    %v4168 = vld [vmem:[%s466 + $0x118] sm:$0xff]
    %v4169 = vld [vmem:[%s466 + $0x120] sm:$0xff]
    %v4170 = vld [vmem:[%s466 + $0x128] sm:$0xff]
    %v4171 = vld [vmem:[%s466 + $0x130] sm:$0xff]
    %v4172 = vld [vmem:[%s466 + $0x138] sm:$0xff]
    %v4173 = vld [vmem:[%s466 + $0x140] sm:$0xff]
    %v4174 = vld [vmem:[%s466 + $0x148] sm:$0xff]
    %v4175 = vld [vmem:[%s466 + $0x150] sm:$0xff]
    %v4176 = vld [vmem:[%s466 + $0x158] sm:$0xff]
    %v4177 = vld [vmem:[%s466 + $0x160] sm:$0xff]
    %v4178 = vld [vmem:[%s466 + $0x168] sm:$0xff]
    %v4179 = vld [vmem:[%s466 + $0x170] sm:$0xff]
    %v4180 = vld [vmem:[%s466 + $0x178] sm:$0xff]
    %v4181 = vld [vmem:[%s466 + $0x180] sm:$0xff]
    %v4182 = vld [vmem:[%s466 + $0x188] sm:$0xff]
    %v4183 = vld [vmem:[%s466 + $0x190] sm:$0xff]
    %v4184 = vld [vmem:[%s466 + $0x198] sm:$0xff]
    %v4185 = vld [vmem:[%s466 + $0x1a0] sm:$0xff]
    %v4186 = vld [vmem:[%s466 + $0x1a8] sm:$0xff]
    %v4187 = vld [vmem:[%s466 + $0x1b0] sm:$0xff]
    %v4188 = vld [vmem:[%s466 + $0x1b8] sm:$0xff]
    %v4189 = vld [vmem:[%s466 + $0x1c0] sm:$0xff]
    %v4190 = vld [vmem:[%s466 + $0x1c8] sm:$0xff]
    %v4191 = vld [vmem:[%s466 + $0x1d0] sm:$0xff]
    %v4192 = vld [vmem:[%s466 + $0x1d8] sm:$0xff]
    %v4193 = vld [vmem:[%s466 + $0x1e0] sm:$0xff]
    %v4194 = vld [vmem:[%s466 + $0x1e8] sm:$0xff]
    %v4195 = vld [vmem:[%s466 + $0x1f0] sm:$0xff]
    %v4196 = vld [vmem:[%s466 + $0x1f8] sm:$0xff]
    %4197 = vmatprep.subr.bf16.mxu0 %v4134
    %4198 = vmatpush1.bf16.msra.mxu0 %v4133
    %4199 = vmatprep.subr.bf16.mxu0 %v4142
    %4200 = vmatpush1.bf16.msra.mxu0 %v4141
    %4201 = vmatprep.subr.bf16.mxu0 %v4150
    %4202 = vmatpush1.bf16.msra.mxu0 %v4149
    %4203 = vmatprep.subr.bf16.mxu0 %v4158
    %4204 = vmatpush1.bf16.msra.mxu0 %v4157
    %4205 = vmatprep.subr.bf16.mxu0 %v4166
    %4206 = vmatpush1.bf16.msra.mxu0 %v4165
    %4207 = vmatprep.subr.bf16.mxu0 %v4174
    %4208 = vmatpush1.bf16.msra.mxu0 %v4173
    %4209 = vmatprep.subr.bf16.mxu0 %v4182
    %4210 = vmatpush1.bf16.msra.mxu0 %v4181
    %4211 = vmatprep.subr.bf16.mxu0 %v4190
    %4212 = vmatpush1.bf16.msra.mxu0 %v4189
    %4213 = vmatprep.subr.bf16.mxu0 0
    %4214 = vmatpush1.bf16.msra.mxu0 0
    %4215 = vmatprep.subr.bf16.mxu0 0
    %4216 = vmatpush1.bf16.msra.mxu0 0
    %4217 = vmatprep.subr.bf16.mxu0 0
    %4218 = vmatpush1.bf16.msra.mxu0 0
    %4219 = vmatprep.subr.bf16.mxu0 0
    %4220 = vmatpush1.bf16.msra.mxu0 0
    %4221 = vmatprep.subr.bf16.mxu0 0
    %4222 = vmatpush1.bf16.msra.mxu0 0
    %4223 = vmatprep.subr.bf16.mxu0 0
    %4224 = vmatpush1.bf16.msra.mxu0 0
    %4225 = vmatprep.subr.bf16.mxu0 0
    %4226 = vmatpush1.bf16.msra.mxu0 0
    %4227 = vmatprep.subr.bf16.mxu0 0
    %4228 = vmatpush1.bf16.msra.mxu0 0
    %4229 = vmatprep.mubr.bf16.mxu0 0
    %4230 = vmatmul.mubr.bf16.gmra.mrb[0].mxu0 %v4130
    %v4231 = vpop.f32.mrb[0].mxu0
    %v4232 = vadd.f32 0.0, %v4231
    %v4233 = vpop.f32.mrb[0].mxu0
    %v4234 = vadd.f32 0.0, %v4233
    %v4235 = vpop.f32.mrb[0].mxu0
    %v4236 = vpop.f32.mrb[0].mxu0
    %4237 = vdwg.mxu0
    %4238 = vmatprep.subr.bf16.mxu0 %v4136
    %4239 = vmatpush1.bf16.msra.mxu0 %v4135
    %4240 = vmatprep.subr.bf16.mxu0 %v4144
    %4241 = vmatpush1.bf16.msra.mxu0 %v4143
    %4242 = vmatprep.subr.bf16.mxu0 %v4152
    %4243 = vmatpush1.bf16.msra.mxu0 %v4151
    %4244 = vmatprep.subr.bf16.mxu0 %v4160
    %4245 = vmatpush1.bf16.msra.mxu0 %v4159
    %4246 = vmatprep.subr.bf16.mxu0 %v4168
    %4247 = vmatpush1.bf16.msra.mxu0 %v4167
    %4248 = vmatprep.subr.bf16.mxu0 %v4176
    %4249 = vmatpush1.bf16.msra.mxu0 %v4175
    %4250 = vmatprep.subr.bf16.mxu0 %v4184
    %4251 = vmatpush1.bf16.msra.mxu0 %v4183
    %4252 = vmatprep.subr.bf16.mxu0 %v4192
    %4253 = vmatpush1.bf16.msra.mxu0 %v4191
    %4254 = vmatprep.subr.bf16.mxu0 0
    %4255 = vmatpush1.bf16.msra.mxu0 0
    %4256 = vmatprep.subr.bf16.mxu0 0
    %4257 = vmatpush1.bf16.msra.mxu0 0
    %4258 = vmatprep.subr.bf16.mxu0 0
    %4259 = vmatpush1.bf16.msra.mxu0 0
    %4260 = vmatprep.subr.bf16.mxu0 0
    %4261 = vmatpush1.bf16.msra.mxu0 0
    %4262 = vmatprep.subr.bf16.mxu0 0
    %4263 = vmatpush1.bf16.msra.mxu0 0
    %4264 = vmatprep.subr.bf16.mxu0 0
    %4265 = vmatpush1.bf16.msra.mxu0 0
    %4266 = vmatprep.subr.bf16.mxu0 0
    %4267 = vmatpush1.bf16.msra.mxu0 0
    %4268 = vmatprep.subr.bf16.mxu0 0
    %4269 = vmatpush1.bf16.msra.mxu0 0
    %4270 = vmatprep.mubr.bf16.mxu0 0
    %4271 = vmatmul.mubr.bf16.gmra.mrb[0].mxu0 %v4130
    %v4272 = vpop.f32.mrb[0].mxu0
    %v4273 = vadd.f32 0.0, %v4272
    %v4274 = vpop.f32.mrb[0].mxu0
    %v4275 = vadd.f32 0.0, %v4274
    %v4276 = vpop.f32.mrb[0].mxu0
    %v4277 = vpop.f32.mrb[0].mxu0
    %4278 = vdwg.mxu0
    %4279 = vmatprep.subr.bf16.mxu0 %v4138
    %4280 = vmatpush1.bf16.msra.mxu0 %v4137
    %4281 = vmatprep.subr.bf16.mxu0 %v4146
    %4282 = vmatpush1.bf16.msra.mxu0 %v4145
    %4283 = vmatprep.subr.bf16.mxu0 %v4154
    %4284 = vmatpush1.bf16.msra.mxu0 %v4153
    %4285 = vmatprep.subr.bf16.mxu0 %v4162
    %4286 = vmatpush1.bf16.msra.mxu0 %v4161
    %4287 = vmatprep.subr.bf16.mxu0 %v4170
    %4288 = vmatpush1.bf16.msra.mxu0 %v4169
    %4289 = vmatprep.subr.bf16.mxu0 %v4178
    %4290 = vmatpush1.bf16.msra.mxu0 %v4177
    %4291 = vmatprep.subr.bf16.mxu0 %v4186
    %4292 = vmatpush1.bf16.msra.mxu0 %v4185
    %4293 = vmatprep.subr.bf16.mxu0 %v4194
    %4294 = vmatpush1.bf16.msra.mxu0 %v4193
    %4295 = vmatprep.subr.bf16.mxu0 0
    %4296 = vmatpush1.bf16.msra.mxu0 0
    %4297 = vmatprep.subr.bf16.mxu0 0
    %4298 = vmatpush1.bf16.msra.mxu0 0
    %4299 = vmatprep.subr.bf16.mxu0 0
    %4300 = vmatpush1.bf16.msra.mxu0 0
    %4301 = vmatprep.subr.bf16.mxu0 0
    %4302 = vmatpush1.bf16.msra.mxu0 0
    %4303 = vmatprep.subr.bf16.mxu0 0
    %4304 = vmatpush1.bf16.msra.mxu0 0
    %4305 = vmatprep.subr.bf16.mxu0 0
    %4306 = vmatpush1.bf16.msra.mxu0 0
    %4307 = vmatprep.subr.bf16.mxu0 0
    %4308 = vmatpush1.bf16.msra.mxu0 0
    %4309 = vmatprep.subr.bf16.mxu0 0
    %4310 = vmatpush1.bf16.msra.mxu0 0
    %4311 = vmatprep.mubr.bf16.mxu0 0
    %4312 = vmatmul.mubr.bf16.gmra.mrb[0].mxu0 %v4130
    %v4313 = vpop.f32.mrb[0].mxu0
    %v4314 = vadd.f32 0.0, %v4313
    %v4315 = vpop.f32.mrb[0].mxu0
    %v4316 = vadd.f32 0.0, %v4315
    %v4317 = vpop.f32.mrb[0].mxu0
    %v4318 = vpop.f32.mrb[0].mxu0
    %4319 = vdwg.mxu0
    %4320 = vmatprep.subr.bf16.mxu0 %v4140
    %4321 = vmatpush1.bf16.msra.mxu0 %v4139
    %4322 = vmatprep.subr.bf16.mxu0 %v4148
    %4323 = vmatpush1.bf16.msra.mxu0 %v4147
    %4324 = vmatprep.subr.bf16.mxu0 %v4156
    %4325 = vmatpush1.bf16.msra.mxu0 %v4155
    %4326 = vmatprep.subr.bf16.mxu0 %v4164
    %4327 = vmatpush1.bf16.msra.mxu0 %v4163
    %4328 = vmatprep.subr.bf16.mxu0 %v4172
    %4329 = vmatpush1.bf16.msra.mxu0 %v4171
    %4330 = vmatprep.subr.bf16.mxu0 %v4180
    %4331 = vmatpush1.bf16.msra.mxu0 %v4179
    %4332 = vmatprep.subr.bf16.mxu0 %v4188
    %4333 = vmatpush1.bf16.msra.mxu0 %v4187
    %4334 = vmatprep.subr.bf16.mxu0 %v4196
    %4335 = vmatpush1.bf16.msra.mxu0 %v4195
    %4336 = vmatprep.subr.bf16.mxu0 0
    %4337 = vmatpush1.bf16.msra.mxu0 0
    %4338 = vmatprep.subr.bf16.mxu0 0
    %4339 = vmatpush1.bf16.msra.mxu0 0
    %4340 = vmatprep.subr.bf16.mxu0 0
    %4341 = vmatpush1.bf16.msra.mxu0 0
    %4342 = vmatprep.subr.bf16.mxu0 0
    %4343 = vmatpush1.bf16.msra.mxu0 0
    %4344 = vmatprep.subr.bf16.mxu0 0
    %4345 = vmatpush1.bf16.msra.mxu0 0
    %4346 = vmatprep.subr.bf16.mxu0 0
    %4347 = vmatpush1.bf16.msra.mxu0 0
    %4348 = vmatprep.subr.bf16.mxu0 0
    %4349 = vmatpush1.bf16.msra.mxu0 0
    %4350 = vmatprep.subr.bf16.mxu0 0
    %4351 = vmatpush1.bf16.msra.mxu0 0
    %4352 = vmatprep.mubr.bf16.mxu0 0
    %4353 = vmatmul.mubr.bf16.gmra.mrb[0].mxu0 %v4130
    %v4354 = vpop.f32.mrb[0].mxu0
    %v4355 = vadd.f32 0.0, %v4354
    %v4356 = vpop.f32.mrb[0].mxu0
    %v4357 = vadd.f32 0.0, %v4356
    %v4358 = vpop.f32.mrb[0].mxu0
    %v4359 = vpop.f32.mrb[0].mxu0
    %4360 = vdwg.mxu0
    %v4361 = vadd.f32 %v3700, %v4232
    %v4362 = vadd.f32 %v3701, %v4234
    %v4363 = vadd.f32 %v3702, %v4273
    %v4364 = vadd.f32 %v3703, %v4275
    %v4365 = vadd.f32 %v3704, %v4314
    %v4366 = vadd.f32 %v3705, %v4316
    %v4367 = vadd.f32 %v3706, %v4355
    %v4368 = vadd.f32 %v3707, %v4357
    %v4370 = vrot.slane %v4071, 2
    %v4372 = vadd.f32 %v4069, %v4370
    %v4374 = vrot.slane %v4111, 4
    %v4376 = vadd.f32 %v4372, %v4374
    %v4377 = vadd.f32 %v4376, %v4126
    %v4378 = vmax.f32 %v4377, 0.0
    %v4379 = vsel %vm1534, %v4378, 0.0
    %v4380 = vpack.c.bf16 %v4379, %v4379
    %s4381 = sshll.u32 %s1538, 4
    %4382 = dma.done %s504, %s4381
    %v4383 = vld [vmem:[%s503] sm:$0xff]
    %v4384 = vld [vmem:[%s503 + $0x8] sm:$0xff]
    %v4385 = vld [vmem:[%s503 + $0x10] sm:$0xff]
    %v4386 = vld [vmem:[%s503 + $0x18] sm:$0xff]
    %v4387 = vld [vmem:[%s503 + $0x20] sm:$0xff]
    %v4388 = vld [vmem:[%s503 + $0x28] sm:$0xff]
    %v4389 = vld [vmem:[%s503 + $0x30] sm:$0xff]
    %v4390 = vld [vmem:[%s503 + $0x38] sm:$0xff]
    %v4391 = vld [vmem:[%s503 + $0x40] sm:$0xff]
    %v4392 = vld [vmem:[%s503 + $0x48] sm:$0xff]
    %v4393 = vld [vmem:[%s503 + $0x50] sm:$0xff]
    %v4394 = vld [vmem:[%s503 + $0x58] sm:$0xff]
    %v4395 = vld [vmem:[%s503 + $0x60] sm:$0xff]
    %v4396 = vld [vmem:[%s503 + $0x68] sm:$0xff]
    %v4397 = vld [vmem:[%s503 + $0x70] sm:$0xff]
    %v4398 = vld [vmem:[%s503 + $0x78] sm:$0xff]
    %v4399 = vld [vmem:[%s503 + $0x80] sm:$0xff]
    %v4400 = vld [vmem:[%s503 + $0x88] sm:$0xff]
    %v4401 = vld [vmem:[%s503 + $0x90] sm:$0xff]
    %v4402 = vld [vmem:[%s503 + $0x98] sm:$0xff]
    %v4403 = vld [vmem:[%s503 + $0xa0] sm:$0xff]
    %v4404 = vld [vmem:[%s503 + $0xa8] sm:$0xff]
    %v4405 = vld [vmem:[%s503 + $0xb0] sm:$0xff]
    %v4406 = vld [vmem:[%s503 + $0xb8] sm:$0xff]
    %v4407 = vld [vmem:[%s503 + $0xc0] sm:$0xff]
    %v4408 = vld [vmem:[%s503 + $0xc8] sm:$0xff]
    %v4409 = vld [vmem:[%s503 + $0xd0] sm:$0xff]
    %v4410 = vld [vmem:[%s503 + $0xd8] sm:$0xff]
    %v4411 = vld [vmem:[%s503 + $0xe0] sm:$0xff]
    %v4412 = vld [vmem:[%s503 + $0xe8] sm:$0xff]
    %v4413 = vld [vmem:[%s503 + $0xf0] sm:$0xff]
    %v4414 = vld [vmem:[%s503 + $0xf8] sm:$0xff]
    %v4415 = vld [vmem:[%s503 + $0x100] sm:$0xff]
    %v4416 = vld [vmem:[%s503 + $0x108] sm:$0xff]
    %v4417 = vld [vmem:[%s503 + $0x110] sm:$0xff]
    %v4418 = vld [vmem:[%s503 + $0x118] sm:$0xff]
    %v4419 = vld [vmem:[%s503 + $0x120] sm:$0xff]
    %v4420 = vld [vmem:[%s503 + $0x128] sm:$0xff]
    %v4421 = vld [vmem:[%s503 + $0x130] sm:$0xff]
    %v4422 = vld [vmem:[%s503 + $0x138] sm:$0xff]
    %v4423 = vld [vmem:[%s503 + $0x140] sm:$0xff]
    %v4424 = vld [vmem:[%s503 + $0x148] sm:$0xff]
    %v4425 = vld [vmem:[%s503 + $0x150] sm:$0xff]
    %v4426 = vld [vmem:[%s503 + $0x158] sm:$0xff]
    %v4427 = vld [vmem:[%s503 + $0x160] sm:$0xff]
    %v4428 = vld [vmem:[%s503 + $0x168] sm:$0xff]
    %v4429 = vld [vmem:[%s503 + $0x170] sm:$0xff]
    %v4430 = vld [vmem:[%s503 + $0x178] sm:$0xff]
    %v4431 = vld [vmem:[%s503 + $0x180] sm:$0xff]
    %v4432 = vld [vmem:[%s503 + $0x188] sm:$0xff]
    %v4433 = vld [vmem:[%s503 + $0x190] sm:$0xff]
    %v4434 = vld [vmem:[%s503 + $0x198] sm:$0xff]
    %v4435 = vld [vmem:[%s503 + $0x1a0] sm:$0xff]
    %v4436 = vld [vmem:[%s503 + $0x1a8] sm:$0xff]
    %v4437 = vld [vmem:[%s503 + $0x1b0] sm:$0xff]
    %v4438 = vld [vmem:[%s503 + $0x1b8] sm:$0xff]
    %v4439 = vld [vmem:[%s503 + $0x1c0] sm:$0xff]
    %v4440 = vld [vmem:[%s503 + $0x1c8] sm:$0xff]
    %v4441 = vld [vmem:[%s503 + $0x1d0] sm:$0xff]
    %v4442 = vld [vmem:[%s503 + $0x1d8] sm:$0xff]
    %v4443 = vld [vmem:[%s503 + $0x1e0] sm:$0xff]
    %v4444 = vld [vmem:[%s503 + $0x1e8] sm:$0xff]
    %v4445 = vld [vmem:[%s503 + $0x1f0] sm:$0xff]
    %v4446 = vld [vmem:[%s503 + $0x1f8] sm:$0xff]
    %4447 = vmatprep.subr.bf16.mxu0 %v4384
    %4448 = vmatpush1.bf16.msra.mxu0 %v4383
    %4449 = vmatprep.subr.bf16.mxu0 %v4392
    %4450 = vmatpush1.bf16.msra.mxu0 %v4391
    %4451 = vmatprep.subr.bf16.mxu0 %v4400
    %4452 = vmatpush1.bf16.msra.mxu0 %v4399
    %4453 = vmatprep.subr.bf16.mxu0 %v4408
    %4454 = vmatpush1.bf16.msra.mxu0 %v4407
    %4455 = vmatprep.subr.bf16.mxu0 %v4416
    %4456 = vmatpush1.bf16.msra.mxu0 %v4415
    %4457 = vmatprep.subr.bf16.mxu0 %v4424
    %4458 = vmatpush1.bf16.msra.mxu0 %v4423
    %4459 = vmatprep.subr.bf16.mxu0 %v4432
    %4460 = vmatpush1.bf16.msra.mxu0 %v4431
    %4461 = vmatprep.subr.bf16.mxu0 %v4440
    %4462 = vmatpush1.bf16.msra.mxu0 %v4439
    %4463 = vmatprep.subr.bf16.mxu0 0
    %4464 = vmatpush1.bf16.msra.mxu0 0
    %4465 = vmatprep.subr.bf16.mxu0 0
    %4466 = vmatpush1.bf16.msra.mxu0 0
    %4467 = vmatprep.subr.bf16.mxu0 0
    %4468 = vmatpush1.bf16.msra.mxu0 0
    %4469 = vmatprep.subr.bf16.mxu0 0
    %4470 = vmatpush1.bf16.msra.mxu0 0
    %4471 = vmatprep.subr.bf16.mxu0 0
    %4472 = vmatpush1.bf16.msra.mxu0 0
    %4473 = vmatprep.subr.bf16.mxu0 0
    %4474 = vmatpush1.bf16.msra.mxu0 0
    %4475 = vmatprep.subr.bf16.mxu0 0
    %4476 = vmatpush1.bf16.msra.mxu0 0
    %4477 = vmatprep.subr.bf16.mxu0 0
    %4478 = vmatpush1.bf16.msra.mxu0 0
    %4479 = vmatprep.mubr.bf16.mxu0 0
    %4480 = vmatmul.mubr.bf16.gmra.mrb[0].mxu0 %v4380
    %v4481 = vpop.f32.mrb[0].mxu0
    %v4482 = vadd.f32 0.0, %v4481
    %v4483 = vpop.f32.mrb[0].mxu0
    %v4484 = vadd.f32 0.0, %v4483
    %v4485 = vpop.f32.mrb[0].mxu0
    %v4486 = vpop.f32.mrb[0].mxu0
    %4487 = vdwg.mxu0
    %4488 = vmatprep.subr.bf16.mxu0 %v4386
    %4489 = vmatpush1.bf16.msra.mxu0 %v4385
    %4490 = vmatprep.subr.bf16.mxu0 %v4394
    %4491 = vmatpush1.bf16.msra.mxu0 %v4393
    %4492 = vmatprep.subr.bf16.mxu0 %v4402
    %4493 = vmatpush1.bf16.msra.mxu0 %v4401
    %4494 = vmatprep.subr.bf16.mxu0 %v4410
    %4495 = vmatpush1.bf16.msra.mxu0 %v4409
    %4496 = vmatprep.subr.bf16.mxu0 %v4418
    %4497 = vmatpush1.bf16.msra.mxu0 %v4417
    %4498 = vmatprep.subr.bf16.mxu0 %v4426
    %4499 = vmatpush1.bf16.msra.mxu0 %v4425
    %4500 = vmatprep.subr.bf16.mxu0 %v4434
    %4501 = vmatpush1.bf16.msra.mxu0 %v4433
    %4502 = vmatprep.subr.bf16.mxu0 %v4442
    %4503 = vmatpush1.bf16.msra.mxu0 %v4441
    %4504 = vmatprep.subr.bf16.mxu0 0
    %4505 = vmatpush1.bf16.msra.mxu0 0
    %4506 = vmatprep.subr.bf16.mxu0 0
    %4507 = vmatpush1.bf16.msra.mxu0 0
    %4508 = vmatprep.subr.bf16.mxu0 0
    %4509 = vmatpush1.bf16.msra.mxu0 0
    %4510 = vmatprep.subr.bf16.mxu0 0
    %4511 = vmatpush1.bf16.msra.mxu0 0
    %4512 = vmatprep.subr.bf16.mxu0 0
    %4513 = vmatpush1.bf16.msra.mxu0 0
    %4514 = vmatprep.subr.bf16.mxu0 0
    %4515 = vmatpush1.bf16.msra.mxu0 0
    %4516 = vmatprep.subr.bf16.mxu0 0
    %4517 = vmatpush1.bf16.msra.mxu0 0
    %4518 = vmatprep.subr.bf16.mxu0 0
    %4519 = vmatpush1.bf16.msra.mxu0 0
    %4520 = vmatprep.mubr.bf16.mxu0 0
    %4521 = vmatmul.mubr.bf16.gmra.mrb[0].mxu0 %v4380
    %v4522 = vpop.f32.mrb[0].mxu0
    %v4523 = vadd.f32 0.0, %v4522
    %v4524 = vpop.f32.mrb[0].mxu0
    %v4525 = vadd.f32 0.0, %v4524
    %v4526 = vpop.f32.mrb[0].mxu0
    %v4527 = vpop.f32.mrb[0].mxu0
    %4528 = vdwg.mxu0
    %4529 = vmatprep.subr.bf16.mxu0 %v4388
    %4530 = vmatpush1.bf16.msra.mxu0 %v4387
    %4531 = vmatprep.subr.bf16.mxu0 %v4396
    %4532 = vmatpush1.bf16.msra.mxu0 %v4395
    %4533 = vmatprep.subr.bf16.mxu0 %v4404
    %4534 = vmatpush1.bf16.msra.mxu0 %v4403
    %4535 = vmatprep.subr.bf16.mxu0 %v4412
    %4536 = vmatpush1.bf16.msra.mxu0 %v4411
    %4537 = vmatprep.subr.bf16.mxu0 %v4420
    %4538 = vmatpush1.bf16.msra.mxu0 %v4419
    %4539 = vmatprep.subr.bf16.mxu0 %v4428
    %4540 = vmatpush1.bf16.msra.mxu0 %v4427
    %4541 = vmatprep.subr.bf16.mxu0 %v4436
    %4542 = vmatpush1.bf16.msra.mxu0 %v4435
    %4543 = vmatprep.subr.bf16.mxu0 %v4444
    %4544 = vmatpush1.bf16.msra.mxu0 %v4443
    %4545 = vmatprep.subr.bf16.mxu0 0
    %4546 = vmatpush1.bf16.msra.mxu0 0
    %4547 = vmatprep.subr.bf16.mxu0 0
    %4548 = vmatpush1.bf16.msra.mxu0 0
    %4549 = vmatprep.subr.bf16.mxu0 0
    %4550 = vmatpush1.bf16.msra.mxu0 0
    %4551 = vmatprep.subr.bf16.mxu0 0
    %4552 = vmatpush1.bf16.msra.mxu0 0
    %4553 = vmatprep.subr.bf16.mxu0 0
    %4554 = vmatpush1.bf16.msra.mxu0 0
    %4555 = vmatprep.subr.bf16.mxu0 0
    %4556 = vmatpush1.bf16.msra.mxu0 0
    %4557 = vmatprep.subr.bf16.mxu0 0
    %4558 = vmatpush1.bf16.msra.mxu0 0
    %4559 = vmatprep.subr.bf16.mxu0 0
    %4560 = vmatpush1.bf16.msra.mxu0 0
    %4561 = vmatprep.mubr.bf16.mxu0 0
    %4562 = vmatmul.mubr.bf16.gmra.mrb[0].mxu0 %v4380
    %v4563 = vpop.f32.mrb[0].mxu0
    %v4564 = vadd.f32 0.0, %v4563
    %v4565 = vpop.f32.mrb[0].mxu0
    %v4566 = vadd.f32 0.0, %v4565
    %v4567 = vpop.f32.mrb[0].mxu0
    %v4568 = vpop.f32.mrb[0].mxu0
    %4569 = vdwg.mxu0
    %4570 = vmatprep.subr.bf16.mxu0 %v4390
    %4571 = vmatpush1.bf16.msra.mxu0 %v4389
    %4572 = vmatprep.subr.bf16.mxu0 %v4398
    %4573 = vmatpush1.bf16.msra.mxu0 %v4397
    %4574 = vmatprep.subr.bf16.mxu0 %v4406
    %4575 = vmatpush1.bf16.msra.mxu0 %v4405
    %4576 = vmatprep.subr.bf16.mxu0 %v4414
    %4577 = vmatpush1.bf16.msra.mxu0 %v4413
    %4578 = vmatprep.subr.bf16.mxu0 %v4422
    %4579 = vmatpush1.bf16.msra.mxu0 %v4421
    %4580 = vmatprep.subr.bf16.mxu0 %v4430
    %4581 = vmatpush1.bf16.msra.mxu0 %v4429
    %4582 = vmatprep.subr.bf16.mxu0 %v4438
    %4583 = vmatpush1.bf16.msra.mxu0 %v4437
    %4584 = vmatprep.subr.bf16.mxu0 %v4446
    %4585 = vmatpush1.bf16.msra.mxu0 %v4445
    %4586 = vmatprep.subr.bf16.mxu0 0
    %4587 = vmatpush1.bf16.msra.mxu0 0
    %4588 = vmatprep.subr.bf16.mxu0 0
    %4589 = vmatpush1.bf16.msra.mxu0 0
    %4590 = vmatprep.subr.bf16.mxu0 0
    %4591 = vmatpush1.bf16.msra.mxu0 0
    %4592 = vmatprep.subr.bf16.mxu0 0
    %4593 = vmatpush1.bf16.msra.mxu0 0
    %4594 = vmatprep.subr.bf16.mxu0 0
    %4595 = vmatpush1.bf16.msra.mxu0 0
    %4596 = vmatprep.subr.bf16.mxu0 0
    %4597 = vmatpush1.bf16.msra.mxu0 0
    %4598 = vmatprep.subr.bf16.mxu0 0
    %4599 = vmatpush1.bf16.msra.mxu0 0
    %4600 = vmatprep.subr.bf16.mxu0 0
    %4601 = vmatpush1.bf16.msra.mxu0 0
    %4602 = vmatprep.mubr.bf16.mxu0 0
    %4603 = vmatmul.mubr.bf16.gmra.mrb[0].mxu0 %v4380
    %v4604 = vpop.f32.mrb[0].mxu0
    %v4605 = vadd.f32 0.0, %v4604
    %v4606 = vpop.f32.mrb[0].mxu0
    %v4607 = vadd.f32 0.0, %v4606
    %v4608 = vpop.f32.mrb[0].mxu0
    %v4609 = vpop.f32.mrb[0].mxu0
    %4610 = vdwg.mxu0
    %v4611 = vadd.f32 %v4361, %v4482
    %v4612 = vadd.f32 %v4362, %v4484
    %v4613 = vadd.f32 %v4363, %v4523
    %v4614 = vadd.f32 %v4364, %v4525
    %v4615 = vadd.f32 %v4365, %v4564
    %v4616 = vadd.f32 %v4366, %v4566
    %v4617 = vadd.f32 %v4367, %v4605
    %v4618 = vadd.f32 %v4368, %v4607
    %v4620 = vrot.slane %v4128, 2
    %v4622 = vsel %vm1534, %v4620, 0.0
    %v4623 = vpack.c.bf16 %v4622, %v4622
    %s4624 = sshll.u32 %s1538, 4
    %4625 = dma.done %s541, %s4624
    %v4626 = vld [vmem:[%s540] sm:$0xff]
    %v4627 = vld [vmem:[%s540 + $0x8] sm:$0xff]
    %v4628 = vld [vmem:[%s540 + $0x10] sm:$0xff]
    %v4629 = vld [vmem:[%s540 + $0x18] sm:$0xff]
    %v4630 = vld [vmem:[%s540 + $0x20] sm:$0xff]
    %v4631 = vld [vmem:[%s540 + $0x28] sm:$0xff]
    %v4632 = vld [vmem:[%s540 + $0x30] sm:$0xff]
    %v4633 = vld [vmem:[%s540 + $0x38] sm:$0xff]
    %v4634 = vld [vmem:[%s540 + $0x40] sm:$0xff]
    %v4635 = vld [vmem:[%s540 + $0x48] sm:$0xff]
    %v4636 = vld [vmem:[%s540 + $0x50] sm:$0xff]
    %v4637 = vld [vmem:[%s540 + $0x58] sm:$0xff]
    %v4638 = vld [vmem:[%s540 + $0x60] sm:$0xff]
    %v4639 = vld [vmem:[%s540 + $0x68] sm:$0xff]
    %v4640 = vld [vmem:[%s540 + $0x70] sm:$0xff]
    %v4641 = vld [vmem:[%s540 + $0x78] sm:$0xff]
    %v4642 = vld [vmem:[%s540 + $0x80] sm:$0xff]
    %v4643 = vld [vmem:[%s540 + $0x88] sm:$0xff]
    %v4644 = vld [vmem:[%s540 + $0x90] sm:$0xff]
    %v4645 = vld [vmem:[%s540 + $0x98] sm:$0xff]
    %v4646 = vld [vmem:[%s540 + $0xa0] sm:$0xff]
    %v4647 = vld [vmem:[%s540 + $0xa8] sm:$0xff]
    %v4648 = vld [vmem:[%s540 + $0xb0] sm:$0xff]
    %v4649 = vld [vmem:[%s540 + $0xb8] sm:$0xff]
    %v4650 = vld [vmem:[%s540 + $0xc0] sm:$0xff]
    %v4651 = vld [vmem:[%s540 + $0xc8] sm:$0xff]
    %v4652 = vld [vmem:[%s540 + $0xd0] sm:$0xff]
    %v4653 = vld [vmem:[%s540 + $0xd8] sm:$0xff]
    %v4654 = vld [vmem:[%s540 + $0xe0] sm:$0xff]
    %v4655 = vld [vmem:[%s540 + $0xe8] sm:$0xff]
    %v4656 = vld [vmem:[%s540 + $0xf0] sm:$0xff]
    %v4657 = vld [vmem:[%s540 + $0xf8] sm:$0xff]
    %v4658 = vld [vmem:[%s540 + $0x100] sm:$0xff]
    %v4659 = vld [vmem:[%s540 + $0x108] sm:$0xff]
    %v4660 = vld [vmem:[%s540 + $0x110] sm:$0xff]
    %v4661 = vld [vmem:[%s540 + $0x118] sm:$0xff]
    %v4662 = vld [vmem:[%s540 + $0x120] sm:$0xff]
    %v4663 = vld [vmem:[%s540 + $0x128] sm:$0xff]
    %v4664 = vld [vmem:[%s540 + $0x130] sm:$0xff]
    %v4665 = vld [vmem:[%s540 + $0x138] sm:$0xff]
    %v4666 = vld [vmem:[%s540 + $0x140] sm:$0xff]
    %v4667 = vld [vmem:[%s540 + $0x148] sm:$0xff]
    %v4668 = vld [vmem:[%s540 + $0x150] sm:$0xff]
    %v4669 = vld [vmem:[%s540 + $0x158] sm:$0xff]
    %v4670 = vld [vmem:[%s540 + $0x160] sm:$0xff]
    %v4671 = vld [vmem:[%s540 + $0x168] sm:$0xff]
    %v4672 = vld [vmem:[%s540 + $0x170] sm:$0xff]
    %v4673 = vld [vmem:[%s540 + $0x178] sm:$0xff]
    %v4674 = vld [vmem:[%s540 + $0x180] sm:$0xff]
    %v4675 = vld [vmem:[%s540 + $0x188] sm:$0xff]
    %v4676 = vld [vmem:[%s540 + $0x190] sm:$0xff]
    %v4677 = vld [vmem:[%s540 + $0x198] sm:$0xff]
    %v4678 = vld [vmem:[%s540 + $0x1a0] sm:$0xff]
    %v4679 = vld [vmem:[%s540 + $0x1a8] sm:$0xff]
    %v4680 = vld [vmem:[%s540 + $0x1b0] sm:$0xff]
    %v4681 = vld [vmem:[%s540 + $0x1b8] sm:$0xff]
    %v4682 = vld [vmem:[%s540 + $0x1c0] sm:$0xff]
    %v4683 = vld [vmem:[%s540 + $0x1c8] sm:$0xff]
    %v4684 = vld [vmem:[%s540 + $0x1d0] sm:$0xff]
    %v4685 = vld [vmem:[%s540 + $0x1d8] sm:$0xff]
    %v4686 = vld [vmem:[%s540 + $0x1e0] sm:$0xff]
    %v4687 = vld [vmem:[%s540 + $0x1e8] sm:$0xff]
    %v4688 = vld [vmem:[%s540 + $0x1f0] sm:$0xff]
    %v4689 = vld [vmem:[%s540 + $0x1f8] sm:$0xff]
    %4690 = vmatprep.subr.bf16.mxu0 %v4627
    %4691 = vmatpush1.bf16.msra.mxu0 %v4626
    %4692 = vmatprep.subr.bf16.mxu0 %v4635
    %4693 = vmatpush1.bf16.msra.mxu0 %v4634
    %4694 = vmatprep.subr.bf16.mxu0 %v4643
    %4695 = vmatpush1.bf16.msra.mxu0 %v4642
    %4696 = vmatprep.subr.bf16.mxu0 %v4651
    %4697 = vmatpush1.bf16.msra.mxu0 %v4650
    %4698 = vmatprep.subr.bf16.mxu0 %v4659
    %4699 = vmatpush1.bf16.msra.mxu0 %v4658
    %4700 = vmatprep.subr.bf16.mxu0 %v4667
    %4701 = vmatpush1.bf16.msra.mxu0 %v4666
    %4702 = vmatprep.subr.bf16.mxu0 %v4675
    %4703 = vmatpush1.bf16.msra.mxu0 %v4674
    %4704 = vmatprep.subr.bf16.mxu0 %v4683
    %4705 = vmatpush1.bf16.msra.mxu0 %v4682
    %4706 = vmatprep.subr.bf16.mxu0 0
    %4707 = vmatpush1.bf16.msra.mxu0 0
    %4708 = vmatprep.subr.bf16.mxu0 0
    %4709 = vmatpush1.bf16.msra.mxu0 0
    %4710 = vmatprep.subr.bf16.mxu0 0
    %4711 = vmatpush1.bf16.msra.mxu0 0
    %4712 = vmatprep.subr.bf16.mxu0 0
    %4713 = vmatpush1.bf16.msra.mxu0 0
    %4714 = vmatprep.subr.bf16.mxu0 0
    %4715 = vmatpush1.bf16.msra.mxu0 0
    %4716 = vmatprep.subr.bf16.mxu0 0
    %4717 = vmatpush1.bf16.msra.mxu0 0
    %4718 = vmatprep.subr.bf16.mxu0 0
    %4719 = vmatpush1.bf16.msra.mxu0 0
    %4720 = vmatprep.subr.bf16.mxu0 0
    %4721 = vmatpush1.bf16.msra.mxu0 0
    %4722 = vmatprep.mubr.bf16.mxu0 0
    %4723 = vmatmul.mubr.bf16.gmra.mrb[0].mxu0 %v4623
    %v4724 = vpop.f32.mrb[0].mxu0
    %v4725 = vadd.f32 0.0, %v4724
    %v4726 = vpop.f32.mrb[0].mxu0
    %v4727 = vadd.f32 0.0, %v4726
    %v4728 = vpop.f32.mrb[0].mxu0
    %v4729 = vpop.f32.mrb[0].mxu0
    %4730 = vdwg.mxu0
    %4731 = vmatprep.subr.bf16.mxu0 %v4629
    %4732 = vmatpush1.bf16.msra.mxu0 %v4628
    %4733 = vmatprep.subr.bf16.mxu0 %v4637
    %4734 = vmatpush1.bf16.msra.mxu0 %v4636
    %4735 = vmatprep.subr.bf16.mxu0 %v4645
    %4736 = vmatpush1.bf16.msra.mxu0 %v4644
    %4737 = vmatprep.subr.bf16.mxu0 %v4653
    %4738 = vmatpush1.bf16.msra.mxu0 %v4652
    %4739 = vmatprep.subr.bf16.mxu0 %v4661
    %4740 = vmatpush1.bf16.msra.mxu0 %v4660
    %4741 = vmatprep.subr.bf16.mxu0 %v4669
    %4742 = vmatpush1.bf16.msra.mxu0 %v4668
    %4743 = vmatprep.subr.bf16.mxu0 %v4677
    %4744 = vmatpush1.bf16.msra.mxu0 %v4676
    %4745 = vmatprep.subr.bf16.mxu0 %v4685
    %4746 = vmatpush1.bf16.msra.mxu0 %v4684
    %4747 = vmatprep.subr.bf16.mxu0 0
    %4748 = vmatpush1.bf16.msra.mxu0 0
    %4749 = vmatprep.subr.bf16.mxu0 0
    %4750 = vmatpush1.bf16.msra.mxu0 0
    %4751 = vmatprep.subr.bf16.mxu0 0
    %4752 = vmatpush1.bf16.msra.mxu0 0
    %4753 = vmatprep.subr.bf16.mxu0 0
    %4754 = vmatpush1.bf16.msra.mxu0 0
    %4755 = vmatprep.subr.bf16.mxu0 0
    %4756 = vmatpush1.bf16.msra.mxu0 0
    %4757 = vmatprep.subr.bf16.mxu0 0
    %4758 = vmatpush1.bf16.msra.mxu0 0
    %4759 = vmatprep.subr.bf16.mxu0 0
    %4760 = vmatpush1.bf16.msra.mxu0 0
    %4761 = vmatprep.subr.bf16.mxu0 0
    %4762 = vmatpush1.bf16.msra.mxu0 0
    %4763 = vmatprep.mubr.bf16.mxu0 0
    %4764 = vmatmul.mubr.bf16.gmra.mrb[0].mxu0 %v4623
    %v4765 = vpop.f32.mrb[0].mxu0
    %v4766 = vadd.f32 0.0, %v4765
    %v4767 = vpop.f32.mrb[0].mxu0
    %v4768 = vadd.f32 0.0, %v4767
    %v4769 = vpop.f32.mrb[0].mxu0
    %v4770 = vpop.f32.mrb[0].mxu0
    %4771 = vdwg.mxu0
    %4772 = vmatprep.subr.bf16.mxu0 %v4631
    %4773 = vmatpush1.bf16.msra.mxu0 %v4630
    %4774 = vmatprep.subr.bf16.mxu0 %v4639
    %4775 = vmatpush1.bf16.msra.mxu0 %v4638
    %4776 = vmatprep.subr.bf16.mxu0 %v4647
    %4777 = vmatpush1.bf16.msra.mxu0 %v4646
    %4778 = vmatprep.subr.bf16.mxu0 %v4655
    %4779 = vmatpush1.bf16.msra.mxu0 %v4654
    %4780 = vmatprep.subr.bf16.mxu0 %v4663
    %4781 = vmatpush1.bf16.msra.mxu0 %v4662
    %4782 = vmatprep.subr.bf16.mxu0 %v4671
    %4783 = vmatpush1.bf16.msra.mxu0 %v4670
    %4784 = vmatprep.subr.bf16.mxu0 %v4679
    %4785 = vmatpush1.bf16.msra.mxu0 %v4678
    %4786 = vmatprep.subr.bf16.mxu0 %v4687
    %4787 = vmatpush1.bf16.msra.mxu0 %v4686
    %4788 = vmatprep.subr.bf16.mxu0 0
    %4789 = vmatpush1.bf16.msra.mxu0 0
    %4790 = vmatprep.subr.bf16.mxu0 0
    %4791 = vmatpush1.bf16.msra.mxu0 0
    %4792 = vmatprep.subr.bf16.mxu0 0
    %4793 = vmatpush1.bf16.msra.mxu0 0
    %4794 = vmatprep.subr.bf16.mxu0 0
    %4795 = vmatpush1.bf16.msra.mxu0 0
    %4796 = vmatprep.subr.bf16.mxu0 0
    %4797 = vmatpush1.bf16.msra.mxu0 0
    %4798 = vmatprep.subr.bf16.mxu0 0
    %4799 = vmatpush1.bf16.msra.mxu0 0
    %4800 = vmatprep.subr.bf16.mxu0 0
    %4801 = vmatpush1.bf16.msra.mxu0 0
    %4802 = vmatprep.subr.bf16.mxu0 0
    %4803 = vmatpush1.bf16.msra.mxu0 0
    %4804 = vmatprep.mubr.bf16.mxu0 0
    %4805 = vmatmul.mubr.bf16.gmra.mrb[0].mxu0 %v4623
    %v4806 = vpop.f32.mrb[0].mxu0
    %v4807 = vadd.f32 0.0, %v4806
    %v4808 = vpop.f32.mrb[0].mxu0
    %v4809 = vadd.f32 0.0, %v4808
    %v4810 = vpop.f32.mrb[0].mxu0
    %v4811 = vpop.f32.mrb[0].mxu0
    %4812 = vdwg.mxu0
    %4813 = vmatprep.subr.bf16.mxu0 %v4633
    %4814 = vmatpush1.bf16.msra.mxu0 %v4632
    %4815 = vmatprep.subr.bf16.mxu0 %v4641
    %4816 = vmatpush1.bf16.msra.mxu0 %v4640
    %4817 = vmatprep.subr.bf16.mxu0 %v4649
    %4818 = vmatpush1.bf16.msra.mxu0 %v4648
    %4819 = vmatprep.subr.bf16.mxu0 %v4657
    %4820 = vmatpush1.bf16.msra.mxu0 %v4656
    %4821 = vmatprep.subr.bf16.mxu0 %v4665
    %4822 = vmatpush1.bf16.msra.mxu0 %v4664
    %4823 = vmatprep.subr.bf16.mxu0 %v4673
    %4824 = vmatpush1.bf16.msra.mxu0 %v4672
    %4825 = vmatprep.subr.bf16.mxu0 %v4681
    %4826 = vmatpush1.bf16.msra.mxu0 %v4680
    %4827 = vmatprep.subr.bf16.mxu0 %v4689
    %4828 = vmatpush1.bf16.msra.mxu0 %v4688
    %4829 = vmatprep.subr.bf16.mxu0 0
    %4830 = vmatpush1.bf16.msra.mxu0 0
    %4831 = vmatprep.subr.bf16.mxu0 0
    %4832 = vmatpush1.bf16.msra.mxu0 0
    %4833 = vmatprep.subr.bf16.mxu0 0
    %4834 = vmatpush1.bf16.msra.mxu0 0
    %4835 = vmatprep.subr.bf16.mxu0 0
    %4836 = vmatpush1.bf16.msra.mxu0 0
    %4837 = vmatprep.subr.bf16.mxu0 0
    %4838 = vmatpush1.bf16.msra.mxu0 0
    %4839 = vmatprep.subr.bf16.mxu0 0
    %4840 = vmatpush1.bf16.msra.mxu0 0
    %4841 = vmatprep.subr.bf16.mxu0 0
    %4842 = vmatpush1.bf16.msra.mxu0 0
    %4843 = vmatprep.subr.bf16.mxu0 0
    %4844 = vmatpush1.bf16.msra.mxu0 0
    %4845 = vmatprep.mubr.bf16.mxu0 0
    %4846 = vmatmul.mubr.bf16.gmra.mrb[0].mxu0 %v4623
    %v4847 = vpop.f32.mrb[0].mxu0
    %v4848 = vadd.f32 0.0, %v4847
    %v4849 = vpop.f32.mrb[0].mxu0
    %v4850 = vadd.f32 0.0, %v4849
    %v4851 = vpop.f32.mrb[0].mxu0
    %v4852 = vpop.f32.mrb[0].mxu0
    %4853 = vdwg.mxu0
    %v4854 = vadd.f32 %v4611, %v4725
    %v4855 = vadd.f32 %v4612, %v4727
    %v4856 = vadd.f32 %v4613, %v4766
    %v4857 = vadd.f32 %v4614, %v4768
    %v4858 = vadd.f32 %v4615, %v4807
    %v4859 = vadd.f32 %v4616, %v4809
    %v4860 = vadd.f32 %v4617, %v4848
    %v4861 = vadd.f32 %v4618, %v4850
    %v4863 = vrot.slane %v4378, 2
    %v4865 = vsel %vm1534, %v4863, 0.0
    %v4866 = vpack.c.bf16 %v4865, %v4865
    %s4867 = sshll.u32 %s1538, 4
    %4868 = dma.done %s578, %s4867
    %v4869 = vld [vmem:[%s577] sm:$0xff]
    %v4870 = vld [vmem:[%s577 + $0x8] sm:$0xff]
    %v4871 = vld [vmem:[%s577 + $0x10] sm:$0xff]
    %v4872 = vld [vmem:[%s577 + $0x18] sm:$0xff]
    %v4873 = vld [vmem:[%s577 + $0x20] sm:$0xff]
    %v4874 = vld [vmem:[%s577 + $0x28] sm:$0xff]
    %v4875 = vld [vmem:[%s577 + $0x30] sm:$0xff]
    %v4876 = vld [vmem:[%s577 + $0x38] sm:$0xff]
    %v4877 = vld [vmem:[%s577 + $0x40] sm:$0xff]
    %v4878 = vld [vmem:[%s577 + $0x48] sm:$0xff]
    %v4879 = vld [vmem:[%s577 + $0x50] sm:$0xff]
    %v4880 = vld [vmem:[%s577 + $0x58] sm:$0xff]
    %v4881 = vld [vmem:[%s577 + $0x60] sm:$0xff]
    %v4882 = vld [vmem:[%s577 + $0x68] sm:$0xff]
    %v4883 = vld [vmem:[%s577 + $0x70] sm:$0xff]
    %v4884 = vld [vmem:[%s577 + $0x78] sm:$0xff]
    %v4885 = vld [vmem:[%s577 + $0x80] sm:$0xff]
    %v4886 = vld [vmem:[%s577 + $0x88] sm:$0xff]
    %v4887 = vld [vmem:[%s577 + $0x90] sm:$0xff]
    %v4888 = vld [vmem:[%s577 + $0x98] sm:$0xff]
    %v4889 = vld [vmem:[%s577 + $0xa0] sm:$0xff]
    %v4890 = vld [vmem:[%s577 + $0xa8] sm:$0xff]
    %v4891 = vld [vmem:[%s577 + $0xb0] sm:$0xff]
    %v4892 = vld [vmem:[%s577 + $0xb8] sm:$0xff]
    %v4893 = vld [vmem:[%s577 + $0xc0] sm:$0xff]
    %v4894 = vld [vmem:[%s577 + $0xc8] sm:$0xff]
    %v4895 = vld [vmem:[%s577 + $0xd0] sm:$0xff]
    %v4896 = vld [vmem:[%s577 + $0xd8] sm:$0xff]
    %v4897 = vld [vmem:[%s577 + $0xe0] sm:$0xff]
    %v4898 = vld [vmem:[%s577 + $0xe8] sm:$0xff]
    %v4899 = vld [vmem:[%s577 + $0xf0] sm:$0xff]
    %v4900 = vld [vmem:[%s577 + $0xf8] sm:$0xff]
    %v4901 = vld [vmem:[%s577 + $0x100] sm:$0xff]
    %v4902 = vld [vmem:[%s577 + $0x108] sm:$0xff]
    %v4903 = vld [vmem:[%s577 + $0x110] sm:$0xff]
    %v4904 = vld [vmem:[%s577 + $0x118] sm:$0xff]
    %v4905 = vld [vmem:[%s577 + $0x120] sm:$0xff]
    %v4906 = vld [vmem:[%s577 + $0x128] sm:$0xff]
    %v4907 = vld [vmem:[%s577 + $0x130] sm:$0xff]
    %v4908 = vld [vmem:[%s577 + $0x138] sm:$0xff]
    %v4909 = vld [vmem:[%s577 + $0x140] sm:$0xff]
    %v4910 = vld [vmem:[%s577 + $0x148] sm:$0xff]
    %v4911 = vld [vmem:[%s577 + $0x150] sm:$0xff]
    %v4912 = vld [vmem:[%s577 + $0x158] sm:$0xff]
    %v4913 = vld [vmem:[%s577 + $0x160] sm:$0xff]
    %v4914 = vld [vmem:[%s577 + $0x168] sm:$0xff]
    %v4915 = vld [vmem:[%s577 + $0x170] sm:$0xff]
    %v4916 = vld [vmem:[%s577 + $0x178] sm:$0xff]
    %v4917 = vld [vmem:[%s577 + $0x180] sm:$0xff]
    %v4918 = vld [vmem:[%s577 + $0x188] sm:$0xff]
    %v4919 = vld [vmem:[%s577 + $0x190] sm:$0xff]
    %v4920 = vld [vmem:[%s577 + $0x198] sm:$0xff]
    %v4921 = vld [vmem:[%s577 + $0x1a0] sm:$0xff]
    %v4922 = vld [vmem:[%s577 + $0x1a8] sm:$0xff]
    %v4923 = vld [vmem:[%s577 + $0x1b0] sm:$0xff]
    %v4924 = vld [vmem:[%s577 + $0x1b8] sm:$0xff]
    %v4925 = vld [vmem:[%s577 + $0x1c0] sm:$0xff]
    %v4926 = vld [vmem:[%s577 + $0x1c8] sm:$0xff]
    %v4927 = vld [vmem:[%s577 + $0x1d0] sm:$0xff]
    %v4928 = vld [vmem:[%s577 + $0x1d8] sm:$0xff]
    %v4929 = vld [vmem:[%s577 + $0x1e0] sm:$0xff]
    %v4930 = vld [vmem:[%s577 + $0x1e8] sm:$0xff]
    %v4931 = vld [vmem:[%s577 + $0x1f0] sm:$0xff]
    %v4932 = vld [vmem:[%s577 + $0x1f8] sm:$0xff]
    %4933 = vmatprep.subr.bf16.mxu0 %v4870
    %4934 = vmatpush1.bf16.msra.mxu0 %v4869
    %4935 = vmatprep.subr.bf16.mxu0 %v4878
    %4936 = vmatpush1.bf16.msra.mxu0 %v4877
    %4937 = vmatprep.subr.bf16.mxu0 %v4886
    %4938 = vmatpush1.bf16.msra.mxu0 %v4885
    %4939 = vmatprep.subr.bf16.mxu0 %v4894
    %4940 = vmatpush1.bf16.msra.mxu0 %v4893
    %4941 = vmatprep.subr.bf16.mxu0 %v4902
    %4942 = vmatpush1.bf16.msra.mxu0 %v4901
    %4943 = vmatprep.subr.bf16.mxu0 %v4910
    %4944 = vmatpush1.bf16.msra.mxu0 %v4909
    %4945 = vmatprep.subr.bf16.mxu0 %v4918
    %4946 = vmatpush1.bf16.msra.mxu0 %v4917
    %4947 = vmatprep.subr.bf16.mxu0 %v4926
    %4948 = vmatpush1.bf16.msra.mxu0 %v4925
    %4949 = vmatprep.subr.bf16.mxu0 0
    %4950 = vmatpush1.bf16.msra.mxu0 0
    %4951 = vmatprep.subr.bf16.mxu0 0
    %4952 = vmatpush1.bf16.msra.mxu0 0
    %4953 = vmatprep.subr.bf16.mxu0 0
    %4954 = vmatpush1.bf16.msra.mxu0 0
    %4955 = vmatprep.subr.bf16.mxu0 0
    %4956 = vmatpush1.bf16.msra.mxu0 0
    %4957 = vmatprep.subr.bf16.mxu0 0
    %4958 = vmatpush1.bf16.msra.mxu0 0
    %4959 = vmatprep.subr.bf16.mxu0 0
    %4960 = vmatpush1.bf16.msra.mxu0 0
    %4961 = vmatprep.subr.bf16.mxu0 0
    %4962 = vmatpush1.bf16.msra.mxu0 0
    %4963 = vmatprep.subr.bf16.mxu0 0
    %4964 = vmatpush1.bf16.msra.mxu0 0
    %4965 = vmatprep.mubr.bf16.mxu0 0
    %4966 = vmatmul.mubr.bf16.gmra.mrb[0].mxu0 %v4866
    %v4967 = vpop.f32.mrb[0].mxu0
    %v4968 = vadd.f32 0.0, %v4967
    %v4969 = vpop.f32.mrb[0].mxu0
    %v4970 = vadd.f32 0.0, %v4969
    %v4971 = vpop.f32.mrb[0].mxu0
    %v4972 = vpop.f32.mrb[0].mxu0
    %4973 = vdwg.mxu0
    %4974 = vmatprep.subr.bf16.mxu0 %v4872
    %4975 = vmatpush1.bf16.msra.mxu0 %v4871
    %4976 = vmatprep.subr.bf16.mxu0 %v4880
    %4977 = vmatpush1.bf16.msra.mxu0 %v4879
    %4978 = vmatprep.subr.bf16.mxu0 %v4888
    %4979 = vmatpush1.bf16.msra.mxu0 %v4887
    %4980 = vmatprep.subr.bf16.mxu0 %v4896
    %4981 = vmatpush1.bf16.msra.mxu0 %v4895
    %4982 = vmatprep.subr.bf16.mxu0 %v4904
    %4983 = vmatpush1.bf16.msra.mxu0 %v4903
    %4984 = vmatprep.subr.bf16.mxu0 %v4912
    %4985 = vmatpush1.bf16.msra.mxu0 %v4911
    %4986 = vmatprep.subr.bf16.mxu0 %v4920
    %4987 = vmatpush1.bf16.msra.mxu0 %v4919
    %4988 = vmatprep.subr.bf16.mxu0 %v4928
    %4989 = vmatpush1.bf16.msra.mxu0 %v4927
    %4990 = vmatprep.subr.bf16.mxu0 0
    %4991 = vmatpush1.bf16.msra.mxu0 0
    %4992 = vmatprep.subr.bf16.mxu0 0
    %4993 = vmatpush1.bf16.msra.mxu0 0
    %4994 = vmatprep.subr.bf16.mxu0 0
    %4995 = vmatpush1.bf16.msra.mxu0 0
    %4996 = vmatprep.subr.bf16.mxu0 0
    %4997 = vmatpush1.bf16.msra.mxu0 0
    %4998 = vmatprep.subr.bf16.mxu0 0
    %4999 = vmatpush1.bf16.msra.mxu0 0
    %5000 = vmatprep.subr.bf16.mxu0 0
    %5001 = vmatpush1.bf16.msra.mxu0 0
    %5002 = vmatprep.subr.bf16.mxu0 0
    %5003 = vmatpush1.bf16.msra.mxu0 0
    %5004 = vmatprep.subr.bf16.mxu0 0
    %5005 = vmatpush1.bf16.msra.mxu0 0
    %5006 = vmatprep.mubr.bf16.mxu0 0
    %5007 = vmatmul.mubr.bf16.gmra.mrb[0].mxu0 %v4866
    %v5008 = vpop.f32.mrb[0].mxu0
    %v5009 = vadd.f32 0.0, %v5008
    %v5010 = vpop.f32.mrb[0].mxu0
    %v5011 = vadd.f32 0.0, %v5010
    %v5012 = vpop.f32.mrb[0].mxu0
    %v5013 = vpop.f32.mrb[0].mxu0
    %5014 = vdwg.mxu0
    %5015 = vmatprep.subr.bf16.mxu0 %v4874
    %5016 = vmatpush1.bf16.msra.mxu0 %v4873
    %5017 = vmatprep.subr.bf16.mxu0 %v4882
    %5018 = vmatpush1.bf16.msra.mxu0 %v4881
    %5019 = vmatprep.subr.bf16.mxu0 %v4890
    %5020 = vmatpush1.bf16.msra.mxu0 %v4889
    %5021 = vmatprep.subr.bf16.mxu0 %v4898
    %5022 = vmatpush1.bf16.msra.mxu0 %v4897
    %5023 = vmatprep.subr.bf16.mxu0 %v4906
    %5024 = vmatpush1.bf16.msra.mxu0 %v4905
    %5025 = vmatprep.subr.bf16.mxu0 %v4914
    %5026 = vmatpush1.bf16.msra.mxu0 %v4913
    %5027 = vmatprep.subr.bf16.mxu0 %v4922
    %5028 = vmatpush1.bf16.msra.mxu0 %v4921
    %5029 = vmatprep.subr.bf16.mxu0 %v4930
    %5030 = vmatpush1.bf16.msra.mxu0 %v4929
    %5031 = vmatprep.subr.bf16.mxu0 0
    %5032 = vmatpush1.bf16.msra.mxu0 0
    %5033 = vmatprep.subr.bf16.mxu0 0
    %5034 = vmatpush1.bf16.msra.mxu0 0
    %5035 = vmatprep.subr.bf16.mxu0 0
    %5036 = vmatpush1.bf16.msra.mxu0 0
    %5037 = vmatprep.subr.bf16.mxu0 0
    %5038 = vmatpush1.bf16.msra.mxu0 0
    %5039 = vmatprep.subr.bf16.mxu0 0
    %5040 = vmatpush1.bf16.msra.mxu0 0
    %5041 = vmatprep.subr.bf16.mxu0 0
    %5042 = vmatpush1.bf16.msra.mxu0 0
    %5043 = vmatprep.subr.bf16.mxu0 0
    %5044 = vmatpush1.bf16.msra.mxu0 0
    %5045 = vmatprep.subr.bf16.mxu0 0
    %5046 = vmatpush1.bf16.msra.mxu0 0
    %5047 = vmatprep.mubr.bf16.mxu0 0
    %5048 = vmatmul.mubr.bf16.gmra.mrb[0].mxu0 %v4866
    %v5049 = vpop.f32.mrb[0].mxu0
    %v5050 = vadd.f32 0.0, %v5049
    %v5051 = vpop.f32.mrb[0].mxu0
    %v5052 = vadd.f32 0.0, %v5051
    %v5053 = vpop.f32.mrb[0].mxu0
    %v5054 = vpop.f32.mrb[0].mxu0
    %5055 = vdwg.mxu0
    %5056 = vmatprep.subr.bf16.mxu0 %v4876
    %5057 = vmatpush1.bf16.msra.mxu0 %v4875
    %5058 = vmatprep.subr.bf16.mxu0 %v4884
    %5059 = vmatpush1.bf16.msra.mxu0 %v4883
    %5060 = vmatprep.subr.bf16.mxu0 %v4892
    %5061 = vmatpush1.bf16.msra.mxu0 %v4891
    %5062 = vmatprep.subr.bf16.mxu0 %v4900
    %5063 = vmatpush1.bf16.msra.mxu0 %v4899
    %5064 = vmatprep.subr.bf16.mxu0 %v4908
    %5065 = vmatpush1.bf16.msra.mxu0 %v4907
    %5066 = vmatprep.subr.bf16.mxu0 %v4916
    %5067 = vmatpush1.bf16.msra.mxu0 %v4915
    %5068 = vmatprep.subr.bf16.mxu0 %v4924
    %5069 = vmatpush1.bf16.msra.mxu0 %v4923
    %5070 = vmatprep.subr.bf16.mxu0 %v4932
    %5071 = vmatpush1.bf16.msra.mxu0 %v4931
    %5072 = vmatprep.subr.bf16.mxu0 0
    %5073 = vmatpush1.bf16.msra.mxu0 0
    %5074 = vmatprep.subr.bf16.mxu0 0
    %5075 = vmatpush1.bf16.msra.mxu0 0
    %5076 = vmatprep.subr.bf16.mxu0 0
    %5077 = vmatpush1.bf16.msra.mxu0 0
    %5078 = vmatprep.subr.bf16.mxu0 0
    %5079 = vmatpush1.bf16.msra.mxu0 0
    %5080 = vmatprep.subr.bf16.mxu0 0
    %5081 = vmatpush1.bf16.msra.mxu0 0
    %5082 = vmatprep.subr.bf16.mxu0 0
    %5083 = vmatpush1.bf16.msra.mxu0 0
    %5084 = vmatprep.subr.bf16.mxu0 0
    %5085 = vmatpush1.bf16.msra.mxu0 0
    %5086 = vmatprep.subr.bf16.mxu0 0
    %5087 = vmatpush1.bf16.msra.mxu0 0
    %5088 = vmatprep.mubr.bf16.mxu0 0
    %5089 = vmatmul.mubr.bf16.gmra.mrb[0].mxu0 %v4866
    %v5090 = vpop.f32.mrb[0].mxu0
    %v5091 = vadd.f32 0.0, %v5090
    %v5092 = vpop.f32.mrb[0].mxu0
    %v5093 = vadd.f32 0.0, %v5092
    %v5094 = vpop.f32.mrb[0].mxu0
    %v5095 = vpop.f32.mrb[0].mxu0
    %5096 = vdwg.mxu0
    %v5097 = vadd.f32 %v4854, %v4968
    %v5098 = vadd.f32 %v4855, %v4970
    %v5099 = vadd.f32 %v4856, %v5009
    %v5100 = vadd.f32 %v4857, %v5011
    %v5101 = vadd.f32 %v4858, %v5050
    %v5102 = vadd.f32 %v4859, %v5052
    %v5103 = vadd.f32 %v4860, %v5091
    %v5104 = vadd.f32 %v4861, %v5093
    %v5105 = vpack.c.bf16 %v1274, %v1274
    %v5106 = vpack.c.bf16 %v1275, %v1275
    %v5107 = vld [vmem:[#allocation10 + $0x14] sm:$0xff]
    %v5108 = vld [vmem:[#allocation10 + $0x1c] sm:$0xff]
    %v5109 = vld [vmem:[#allocation10 + $0x38] sm:$0xff]
    %v5110 = vld [vmem:[#allocation10 + $0x40] sm:$0xff]
    %v5111 = vld [vmem:[#allocation10 + $0x5c] sm:$0xff]
    %v5112 = vld [vmem:[#allocation10 + $0x64] sm:$0xff]
    %v5113 = vld [vmem:[#allocation10 + $0x80] sm:$0xff]
    %v5114 = vld [vmem:[#allocation10 + $0x88] sm:$0xff]
    %v5115 = vld [vmem:[#allocation10 + $0xa4] sm:$0xff]
    %v5116 = vld [vmem:[#allocation10 + $0xac] sm:$0xff]
    %v5117 = vld [vmem:[#allocation10 + $0xc8] sm:$0xff]
    %v5118 = vld [vmem:[#allocation10 + $0xd0] sm:$0xff]
    %v5119 = vld [vmem:[#allocation10 + $0xec] sm:$0xff]
    %v5120 = vld [vmem:[#allocation10 + $0xf4] sm:$0xff]
    %v5121 = vld [vmem:[#allocation10 + $0x110] sm:$0xff]
    %v5122 = vld [vmem:[#allocation10 + $0x118] sm:$0xff]
    %v5123 = vld [vmem:[#allocation10 + $0x134] sm:$0xff]
    %v5124 = vld [vmem:[#allocation10 + $0x13c] sm:$0xff]
    %v5125 = vld [vmem:[#allocation10 + $0x158] sm:$0xff]
    %v5126 = vld [vmem:[#allocation10 + $0x160] sm:$0xff]
    %v5127 = vld [vmem:[#allocation10 + $0x17c] sm:$0xff]
    %v5128 = vld [vmem:[#allocation10 + $0x184] sm:$0xff]
    %v5129 = vld [vmem:[#allocation10 + $0x1a0] sm:$0xff]
    %v5130 = vld [vmem:[#allocation10 + $0x1a8] sm:$0xff]
    %v5131 = vld [vmem:[#allocation10 + $0x1c4] sm:$0xff]
    %v5132 = vld [vmem:[#allocation10 + $0x1cc] sm:$0xff]
    %v5133 = vld [vmem:[#allocation10 + $0x1e8] sm:$0xff]
    %v5134 = vld [vmem:[#allocation10 + $0x1f0] sm:$0xff]
    %v5135 = vld [vmem:[#allocation10 + $0x20c] sm:$0xff]
    %v5136 = vld [vmem:[#allocation10 + $0x214] sm:$0xff]
    %v5137 = vld [vmem:[#allocation10 + $0x230] sm:$0xff]
    %v5138 = vld [vmem:[#allocation10 + $0x238] sm:$0xff]
    %v5139 = vld [vmem:[#allocation10 + $0x254] sm:$0xff]
    %v5140 = vld [vmem:[#allocation10 + $0x25c] sm:$0xff]
    %v5141 = vld [vmem:[#allocation10 + $0x278] sm:$0xff]
    %v5142 = vld [vmem:[#allocation10 + $0x280] sm:$0xff]
    %v5143 = vld [vmem:[#allocation10 + $0x29c] sm:$0xff]
    %v5144 = vld [vmem:[#allocation10 + $0x2a4] sm:$0xff]
    %v5145 = vld [vmem:[#allocation10 + $0x2c0] sm:$0xff]
    %v5146 = vld [vmem:[#allocation10 + $0x2c8] sm:$0xff]
    %v5147 = vld [vmem:[#allocation10 + $0x2e4] sm:$0xff]
    %v5148 = vld [vmem:[#allocation10 + $0x2ec] sm:$0xff]
    %v5149 = vld [vmem:[#allocation10 + $0x308] sm:$0xff]
    %v5150 = vld [vmem:[#allocation10 + $0x310] sm:$0xff]
    %v5151 = vld [vmem:[#allocation10 + $0x32c] sm:$0xff]
    %v5152 = vld [vmem:[#allocation10 + $0x334] sm:$0xff]
    %v5153 = vld [vmem:[#allocation10 + $0x350] sm:$0xff]
    %v5154 = vld [vmem:[#allocation10 + $0x358] sm:$0xff]
    %v5155 = vld [vmem:[#allocation10 + $0x374] sm:$0xff]
    %v5156 = vld [vmem:[#allocation10 + $0x37c] sm:$0xff]
    %v5157 = vld [vmem:[#allocation10 + $0x398] sm:$0xff]
    %v5158 = vld [vmem:[#allocation10 + $0x3a0] sm:$0xff]
    %v5159 = vld [vmem:[#allocation10 + $0x3bc] sm:$0xff]
    %v5160 = vld [vmem:[#allocation10 + $0x3c4] sm:$0xff]
    %v5161 = vld [vmem:[#allocation10 + $0x3e0] sm:$0xff]
    %v5162 = vld [vmem:[#allocation10 + $0x3e8] sm:$0xff]
    %v5163 = vld [vmem:[#allocation10 + $0x404] sm:$0xff]
    %v5164 = vld [vmem:[#allocation10 + $0x40c] sm:$0xff]
    %v5165 = vld [vmem:[#allocation10 + $0x428] sm:$0xff]
    %v5166 = vld [vmem:[#allocation10 + $0x430] sm:$0xff]
    %v5167 = vld [vmem:[#allocation10 + $0x44c] sm:$0xff]
    %v5168 = vld [vmem:[#allocation10 + $0x454] sm:$0xff]
    %v5169 = vld [vmem:[#allocation10 + $0x470] sm:$0xff]
    %v5170 = vld [vmem:[#allocation10 + $0x478] sm:$0xff]
    %v5235 = vunpack.c.l.b16 %v5107
    %v5236 = vunpack.c.h.b16 %v5107
    %v5237 = vunpack.c.l.b16 %v5108
    %v5238 = vunpack.c.h.b16 %v5108
    %v5239 = vunpack.c.l.b16 %v5109
    %v5240 = vunpack.c.h.b16 %v5109
    %v5241 = vunpack.c.l.b16 %v5110
    %v5242 = vunpack.c.h.b16 %v5110
    %v5243 = vunpack.c.l.b16 %v5111
    %v5244 = vunpack.c.h.b16 %v5111
    %v5245 = vunpack.c.l.b16 %v5112
    %v5246 = vunpack.c.h.b16 %v5112
    %v5247 = vunpack.c.l.b16 %v5113
    %v5248 = vunpack.c.h.b16 %v5113
    %v5249 = vunpack.c.l.b16 %v5114
    %v5250 = vunpack.c.h.b16 %v5114
    %v5251 = vunpack.c.l.b16 %v5115
    %v5252 = vunpack.c.h.b16 %v5115
    %v5253 = vunpack.c.l.b16 %v5116
    %v5254 = vunpack.c.h.b16 %v5116
    %v5255 = vunpack.c.l.b16 %v5117
    %v5256 = vunpack.c.h.b16 %v5117
    %v5257 = vunpack.c.l.b16 %v5118
    %v5258 = vunpack.c.h.b16 %v5118
    %v5259 = vunpack.c.l.b16 %v5119
    %v5260 = vunpack.c.h.b16 %v5119
    %v5261 = vunpack.c.l.b16 %v5120
    %v5262 = vunpack.c.h.b16 %v5120
    %v5263 = vunpack.c.l.b16 %v5121
    %v5264 = vunpack.c.h.b16 %v5121
    %v5265 = vunpack.c.l.b16 %v5122
    %v5266 = vunpack.c.h.b16 %v5122
    %v5267 = vunpack.c.l.b16 %v5123
    %v5268 = vunpack.c.h.b16 %v5123
    %v5269 = vunpack.c.l.b16 %v5124
    %v5270 = vunpack.c.h.b16 %v5124
    %v5271 = vunpack.c.l.b16 %v5125
    %v5272 = vunpack.c.h.b16 %v5125
    %v5273 = vunpack.c.l.b16 %v5126
    %v5274 = vunpack.c.h.b16 %v5126
    %v5275 = vunpack.c.l.b16 %v5127
    %v5276 = vunpack.c.h.b16 %v5127
    %v5277 = vunpack.c.l.b16 %v5128
    %v5278 = vunpack.c.h.b16 %v5128
    %v5279 = vunpack.c.l.b16 %v5129
    %v5280 = vunpack.c.h.b16 %v5129
    %v5281 = vunpack.c.l.b16 %v5130
    %v5282 = vunpack.c.h.b16 %v5130
    %v5283 = vunpack.c.l.b16 %v5131
    %v5284 = vunpack.c.h.b16 %v5131
    %v5285 = vunpack.c.l.b16 %v5132
    %v5286 = vunpack.c.h.b16 %v5132
    %v5287 = vunpack.c.l.b16 %v5133
    %v5288 = vunpack.c.h.b16 %v5133
    %v5289 = vunpack.c.l.b16 %v5134
    %v5290 = vunpack.c.h.b16 %v5134
    %v5291 = vunpack.c.l.b16 %v5135
    %v5292 = vunpack.c.h.b16 %v5135
    %v5293 = vunpack.c.l.b16 %v5136
    %v5294 = vunpack.c.h.b16 %v5136
    %v5295 = vunpack.c.l.b16 %v5137
    %v5296 = vunpack.c.h.b16 %v5137
    %v5297 = vunpack.c.l.b16 %v5138
    %v5298 = vunpack.c.h.b16 %v5138
    %v5299 = vunpack.c.l.b16 %v5139
    %v5300 = vunpack.c.h.b16 %v5139
    %v5301 = vunpack.c.l.b16 %v5140
    %v5302 = vunpack.c.h.b16 %v5140
    %v5303 = vunpack.c.l.b16 %v5141
    %v5304 = vunpack.c.h.b16 %v5141
    %v5305 = vunpack.c.l.b16 %v5142
    %v5306 = vunpack.c.h.b16 %v5142
    %v5307 = vunpack.c.l.b16 %v5143
    %v5308 = vunpack.c.h.b16 %v5143
    %v5309 = vunpack.c.l.b16 %v5144
    %v5310 = vunpack.c.h.b16 %v5144
    %v5311 = vunpack.c.l.b16 %v5145
    %v5312 = vunpack.c.h.b16 %v5145
    %v5313 = vunpack.c.l.b16 %v5146
    %v5314 = vunpack.c.h.b16 %v5146
    %v5315 = vunpack.c.l.b16 %v5147
    %v5316 = vunpack.c.h.b16 %v5147
    %v5317 = vunpack.c.l.b16 %v5148
    %v5318 = vunpack.c.h.b16 %v5148
    %v5319 = vunpack.c.l.b16 %v5149
    %v5320 = vunpack.c.h.b16 %v5149
    %v5321 = vunpack.c.l.b16 %v5150
    %v5322 = vunpack.c.h.b16 %v5150
    %v5323 = vunpack.c.l.b16 %v5151
    %v5324 = vunpack.c.h.b16 %v5151
    %v5325 = vunpack.c.l.b16 %v5152
    %v5326 = vunpack.c.h.b16 %v5152
    %v5327 = vunpack.c.l.b16 %v5153
    %v5328 = vunpack.c.h.b16 %v5153
    %v5329 = vunpack.c.l.b16 %v5154
    %v5330 = vunpack.c.h.b16 %v5154
    %v5331 = vunpack.c.l.b16 %v5155
    %v5332 = vunpack.c.h.b16 %v5155
    %v5333 = vunpack.c.l.b16 %v5156
    %v5334 = vunpack.c.h.b16 %v5156
    %v5335 = vunpack.c.l.b16 %v5157
    %v5336 = vunpack.c.h.b16 %v5157
    %v5337 = vunpack.c.l.b16 %v5158
    %v5338 = vunpack.c.h.b16 %v5158
    %v5339 = vunpack.c.l.b16 %v5159
    %v5340 = vunpack.c.h.b16 %v5159
    %v5341 = vunpack.c.l.b16 %v5160
    %v5342 = vunpack.c.h.b16 %v5160
    %v5343 = vunpack.c.l.b16 %v5161
    %v5344 = vunpack.c.h.b16 %v5161
    %v5345 = vunpack.c.l.b16 %v5162
    %v5346 = vunpack.c.h.b16 %v5162
    %v5347 = vunpack.c.l.b16 %v5163
    %v5348 = vunpack.c.h.b16 %v5163
    %v5349 = vunpack.c.l.b16 %v5164
    %v5350 = vunpack.c.h.b16 %v5164
    %v5351 = vunpack.c.l.b16 %v5165
    %v5352 = vunpack.c.h.b16 %v5165
    %v5353 = vunpack.c.l.b16 %v5166
    %v5354 = vunpack.c.h.b16 %v5166
    %v5355 = vunpack.c.l.b16 %v5167
    %v5356 = vunpack.c.h.b16 %v5167
    %v5357 = vunpack.c.l.b16 %v5168
    %v5358 = vunpack.c.h.b16 %v5168
    %v5359 = vunpack.c.l.b16 %v5169
    %v5360 = vunpack.c.h.b16 %v5169
    %v5361 = vunpack.c.l.b16 %v5170
    %v5362 = vunpack.c.h.b16 %v5170
    %v5363 = vpack.c.b16 %v5239, %v5235
    %v5364 = vpack.c.b16 %v5240, %v5236
    %v5365 = vpack.c.b16 %v5241, %v5237
    %v5366 = vpack.c.b16 %v5242, %v5238
    %v5367 = vpack.c.b16 %v5247, %v5243
    %v5368 = vpack.c.b16 %v5248, %v5244
    %v5369 = vpack.c.b16 %v5249, %v5245
    %v5370 = vpack.c.b16 %v5250, %v5246
    %v5371 = vpack.c.b16 %v5255, %v5251
    %v5372 = vpack.c.b16 %v5256, %v5252
    %v5373 = vpack.c.b16 %v5257, %v5253
    %v5374 = vpack.c.b16 %v5258, %v5254
    %v5375 = vpack.c.b16 %v5263, %v5259
    %v5376 = vpack.c.b16 %v5264, %v5260
    %v5377 = vpack.c.b16 %v5265, %v5261
    %v5378 = vpack.c.b16 %v5266, %v5262
    %v5379 = vpack.c.b16 %v5271, %v5267
    %v5380 = vpack.c.b16 %v5272, %v5268
    %v5381 = vpack.c.b16 %v5273, %v5269
    %v5382 = vpack.c.b16 %v5274, %v5270
    %v5383 = vpack.c.b16 %v5279, %v5275
    %v5384 = vpack.c.b16 %v5280, %v5276
    %v5385 = vpack.c.b16 %v5281, %v5277
    %v5386 = vpack.c.b16 %v5282, %v5278
    %v5387 = vpack.c.b16 %v5287, %v5283
    %v5388 = vpack.c.b16 %v5288, %v5284
    %v5389 = vpack.c.b16 %v5289, %v5285
    %v5390 = vpack.c.b16 %v5290, %v5286
    %v5391 = vpack.c.b16 %v5295, %v5291
    %v5392 = vpack.c.b16 %v5296, %v5292
    %v5393 = vpack.c.b16 %v5297, %v5293
    %v5394 = vpack.c.b16 %v5298, %v5294
    %v5395 = vpack.c.b16 %v5303, %v5299
    %v5396 = vpack.c.b16 %v5304, %v5300
    %v5397 = vpack.c.b16 %v5305, %v5301
    %v5398 = vpack.c.b16 %v5306, %v5302
    %v5399 = vpack.c.b16 %v5311, %v5307
    %v5400 = vpack.c.b16 %v5312, %v5308
    %v5401 = vpack.c.b16 %v5313, %v5309
    %v5402 = vpack.c.b16 %v5314, %v5310
    %v5403 = vpack.c.b16 %v5319, %v5315
    %v5404 = vpack.c.b16 %v5320, %v5316
    %v5405 = vpack.c.b16 %v5321, %v5317
    %v5406 = vpack.c.b16 %v5322, %v5318
    %v5407 = vpack.c.b16 %v5327, %v5323
    %v5408 = vpack.c.b16 %v5328, %v5324
    %v5409 = vpack.c.b16 %v5329, %v5325
    %v5410 = vpack.c.b16 %v5330, %v5326
    %v5411 = vpack.c.b16 %v5335, %v5331
    %v5412 = vpack.c.b16 %v5336, %v5332
    %v5413 = vpack.c.b16 %v5337, %v5333
    %v5414 = vpack.c.b16 %v5338, %v5334
    %v5415 = vpack.c.b16 %v5343, %v5339
    %v5416 = vpack.c.b16 %v5344, %v5340
    %v5417 = vpack.c.b16 %v5345, %v5341
    %v5418 = vpack.c.b16 %v5346, %v5342
    %v5419 = vpack.c.b16 %v5351, %v5347
    %v5420 = vpack.c.b16 %v5352, %v5348
    %v5421 = vpack.c.b16 %v5353, %v5349
    %v5422 = vpack.c.b16 %v5354, %v5350
    %v5423 = vpack.c.b16 %v5359, %v5355
    %v5424 = vpack.c.b16 %v5360, %v5356
    %v5425 = vpack.c.b16 %v5361, %v5357
    %v5426 = vpack.c.b16 %v5362, %v5358
    %5491 = vmatprep.subr.bf16.mxu0 %v5364
    %5492 = vmatpush1.bf16.msra.mxu0 %v5363
    %5493 = vmatprep.subr.bf16.mxu0 %v5368
    %5494 = vmatpush1.bf16.msra.mxu0 %v5367
    %5495 = vmatprep.subr.bf16.mxu0 %v5372
    %5496 = vmatpush1.bf16.msra.mxu0 %v5371
    %5497 = vmatprep.subr.bf16.mxu0 %v5376
    %5498 = vmatpush1.bf16.msra.mxu0 %v5375
    %5499 = vmatprep.subr.bf16.mxu0 %v5380
    %5500 = vmatpush1.bf16.msra.mxu0 %v5379
    %5501 = vmatprep.subr.bf16.mxu0 %v5384
    %5502 = vmatpush1.bf16.msra.mxu0 %v5383
    %5503 = vmatprep.subr.bf16.mxu0 %v5388
    %5504 = vmatpush1.bf16.msra.mxu0 %v5387
    %5505 = vmatprep.subr.bf16.mxu0 %v5392
    %5506 = vmatpush1.bf16.msra.mxu0 %v5391
    %5507 = vmatprep.subr.bf16.mxu0 %v5396
    %5508 = vmatpush1.bf16.msra.mxu0 %v5395
    %5509 = vmatprep.subr.bf16.mxu0 %v5400
    %5510 = vmatpush1.bf16.msra.mxu0 %v5399
    %5511 = vmatprep.subr.bf16.mxu0 %v5404
    %5512 = vmatpush1.bf16.msra.mxu0 %v5403
    %5513 = vmatprep.subr.bf16.mxu0 %v5408
    %5514 = vmatpush1.bf16.msra.mxu0 %v5407
    %5515 = vmatprep.subr.bf16.mxu0 %v5412
    %5516 = vmatpush1.bf16.msra.mxu0 %v5411
    %5517 = vmatprep.subr.bf16.mxu0 %v5416
    %5518 = vmatpush1.bf16.msra.mxu0 %v5415
    %5519 = vmatprep.subr.bf16.mxu0 %v5420
    %5520 = vmatpush1.bf16.msra.mxu0 %v5419
    %5521 = vmatprep.subr.bf16.mxu0 %v5424
    %5522 = vmatpush1.bf16.msra.mxu0 %v5423
    %5523 = vmatprep.mubr.bf16.mxu0 %v5106
    %5524 = vmatmul.mubr.bf16.gmra.mrb[0].mxu0 %v5105
    %v5525 = vpop.f32.mrb[0].mxu0
    %v5526 = vadd.f32 0.0, %v5525
    %v5527 = vpop.f32.mrb[0].mxu0
    %v5528 = vadd.f32 0.0, %v5527
    %v5529 = vpop.f32.mrb[0].mxu0
    %v5530 = vpop.f32.mrb[0].mxu0
    %5531 = vdwg.mxu0
    %5532 = vmatprep.subr.bf16.mxu0 %v5366
    %5533 = vmatpush1.bf16.msra.mxu0 %v5365
    %5534 = vmatprep.subr.bf16.mxu0 %v5370
    %5535 = vmatpush1.bf16.msra.mxu0 %v5369
    %5536 = vmatprep.subr.bf16.mxu0 %v5374
    %5537 = vmatpush1.bf16.msra.mxu0 %v5373
    %5538 = vmatprep.subr.bf16.mxu0 %v5378
    %5539 = vmatpush1.bf16.msra.mxu0 %v5377
    %5540 = vmatprep.subr.bf16.mxu0 %v5382
    %5541 = vmatpush1.bf16.msra.mxu0 %v5381
    %5542 = vmatprep.subr.bf16.mxu0 %v5386
    %5543 = vmatpush1.bf16.msra.mxu0 %v5385
    %5544 = vmatprep.subr.bf16.mxu0 %v5390
    %5545 = vmatpush1.bf16.msra.mxu0 %v5389
    %5546 = vmatprep.subr.bf16.mxu0 %v5394
    %5547 = vmatpush1.bf16.msra.mxu0 %v5393
    %5548 = vmatprep.subr.bf16.mxu0 %v5398
    %5549 = vmatpush1.bf16.msra.mxu0 %v5397
    %5550 = vmatprep.subr.bf16.mxu0 %v5402
    %5551 = vmatpush1.bf16.msra.mxu0 %v5401
    %5552 = vmatprep.subr.bf16.mxu0 %v5406
    %5553 = vmatpush1.bf16.msra.mxu0 %v5405
    %5554 = vmatprep.subr.bf16.mxu0 %v5410
    %5555 = vmatpush1.bf16.msra.mxu0 %v5409
    %5556 = vmatprep.subr.bf16.mxu0 %v5414
    %5557 = vmatpush1.bf16.msra.mxu0 %v5413
    %5558 = vmatprep.subr.bf16.mxu0 %v5418
    %5559 = vmatpush1.bf16.msra.mxu0 %v5417
    %5560 = vmatprep.subr.bf16.mxu0 %v5422
    %5561 = vmatpush1.bf16.msra.mxu0 %v5421
    %5562 = vmatprep.subr.bf16.mxu0 %v5426
    %5563 = vmatpush1.bf16.msra.mxu0 %v5425
    %5564 = vmatprep.mubr.bf16.mxu0 %v5106
    %5565 = vmatmul.mubr.bf16.gmra.mrb[0].mxu0 %v5105
    %v5566 = vpop.f32.mrb[0].mxu0
    %v5567 = vadd.f32 0.0, %v5566
    %v5568 = vpop.f32.mrb[0].mxu0
    %v5569 = vadd.f32 0.0, %v5568
    %v5570 = vpop.f32.mrb[0].mxu0
    %v5571 = vpop.f32.mrb[0].mxu0
    %5572 = vdwg.mxu0
    %v5573 = vld [vmem:[#allocation11 + $0x2] sm:$0x1]
    %v5575 = vrot.slane %v5528, 2
    %v5577 = vadd.f32 %v5526, %v5575
    %v5579 = vrot.slane %v5567, 4
    %v5581 = vadd.f32 %v5577, %v5579
    %v5583 = vrot.slane %v5569, 6
    %v5585 = vadd.f32 %v5581, %v5583
    %v5586 = vlaneseq
    %v5587 = vshrl.u32 %v5586, 7
    %v5588 = vsub.s32 0, %v5587
    %v5589 = vrot.slane %v5573, %v5588
    %v5590 = vadd.f32 %v5585, %v5589
    %v5591 = vmax.f32 %v5590, 0.0
    %v5592 = vsel %vm1534, %v5591, 0.0
    %v5593 = vpack.c.bf16 %v5592, %v5592
    %s5594 = sshll.u32 %s1538, 4
    %5595 = dma.done %s615, %s5594
    %v5596 = vld [vmem:[%s614] sm:$0xff]
    %v5597 = vld [vmem:[%s614 + $0x8] sm:$0xff]
    %v5598 = vld [vmem:[%s614 + $0x10] sm:$0xff]
    %v5599 = vld [vmem:[%s614 + $0x18] sm:$0xff]
    %v5600 = vld [vmem:[%s614 + $0x20] sm:$0xff]
    %v5601 = vld [vmem:[%s614 + $0x28] sm:$0xff]
    %v5602 = vld [vmem:[%s614 + $0x30] sm:$0xff]
    %v5603 = vld [vmem:[%s614 + $0x38] sm:$0xff]
    %v5604 = vld [vmem:[%s614 + $0x40] sm:$0xff]
    %v5605 = vld [vmem:[%s614 + $0x48] sm:$0xff]
    %v5606 = vld [vmem:[%s614 + $0x50] sm:$0xff]
    %v5607 = vld [vmem:[%s614 + $0x58] sm:$0xff]
    %v5608 = vld [vmem:[%s614 + $0x60] sm:$0xff]
    %v5609 = vld [vmem:[%s614 + $0x68] sm:$0xff]
    %v5610 = vld [vmem:[%s614 + $0x70] sm:$0xff]
    %v5611 = vld [vmem:[%s614 + $0x78] sm:$0xff]
    %v5612 = vld [vmem:[%s614 + $0x80] sm:$0xff]
    %v5613 = vld [vmem:[%s614 + $0x88] sm:$0xff]
    %v5614 = vld [vmem:[%s614 + $0x90] sm:$0xff]
    %v5615 = vld [vmem:[%s614 + $0x98] sm:$0xff]
    %v5616 = vld [vmem:[%s614 + $0xa0] sm:$0xff]
    %v5617 = vld [vmem:[%s614 + $0xa8] sm:$0xff]
    %v5618 = vld [vmem:[%s614 + $0xb0] sm:$0xff]
    %v5619 = vld [vmem:[%s614 + $0xb8] sm:$0xff]
    %v5620 = vld [vmem:[%s614 + $0xc0] sm:$0xff]
    %v5621 = vld [vmem:[%s614 + $0xc8] sm:$0xff]
    %v5622 = vld [vmem:[%s614 + $0xd0] sm:$0xff]
    %v5623 = vld [vmem:[%s614 + $0xd8] sm:$0xff]
    %v5624 = vld [vmem:[%s614 + $0xe0] sm:$0xff]
    %v5625 = vld [vmem:[%s614 + $0xe8] sm:$0xff]
    %v5626 = vld [vmem:[%s614 + $0xf0] sm:$0xff]
    %v5627 = vld [vmem:[%s614 + $0xf8] sm:$0xff]
    %v5628 = vld [vmem:[%s614 + $0x100] sm:$0xff]
    %v5629 = vld [vmem:[%s614 + $0x108] sm:$0xff]
    %v5630 = vld [vmem:[%s614 + $0x110] sm:$0xff]
    %v5631 = vld [vmem:[%s614 + $0x118] sm:$0xff]
    %v5632 = vld [vmem:[%s614 + $0x120] sm:$0xff]
    %v5633 = vld [vmem:[%s614 + $0x128] sm:$0xff]
    %v5634 = vld [vmem:[%s614 + $0x130] sm:$0xff]
    %v5635 = vld [vmem:[%s614 + $0x138] sm:$0xff]
    %v5636 = vld [vmem:[%s614 + $0x140] sm:$0xff]
    %v5637 = vld [vmem:[%s614 + $0x148] sm:$0xff]
    %v5638 = vld [vmem:[%s614 + $0x150] sm:$0xff]
    %v5639 = vld [vmem:[%s614 + $0x158] sm:$0xff]
    %v5640 = vld [vmem:[%s614 + $0x160] sm:$0xff]
    %v5641 = vld [vmem:[%s614 + $0x168] sm:$0xff]
    %v5642 = vld [vmem:[%s614 + $0x170] sm:$0xff]
    %v5643 = vld [vmem:[%s614 + $0x178] sm:$0xff]
    %v5644 = vld [vmem:[%s614 + $0x180] sm:$0xff]
    %v5645 = vld [vmem:[%s614 + $0x188] sm:$0xff]
    %v5646 = vld [vmem:[%s614 + $0x190] sm:$0xff]
    %v5647 = vld [vmem:[%s614 + $0x198] sm:$0xff]
    %v5648 = vld [vmem:[%s614 + $0x1a0] sm:$0xff]
    %v5649 = vld [vmem:[%s614 + $0x1a8] sm:$0xff]
    %v5650 = vld [vmem:[%s614 + $0x1b0] sm:$0xff]
    %v5651 = vld [vmem:[%s614 + $0x1b8] sm:$0xff]
    %v5652 = vld [vmem:[%s614 + $0x1c0] sm:$0xff]
    %v5653 = vld [vmem:[%s614 + $0x1c8] sm:$0xff]
    %v5654 = vld [vmem:[%s614 + $0x1d0] sm:$0xff]
    %v5655 = vld [vmem:[%s614 + $0x1d8] sm:$0xff]
    %v5656 = vld [vmem:[%s614 + $0x1e0] sm:$0xff]
    %v5657 = vld [vmem:[%s614 + $0x1e8] sm:$0xff]
    %v5658 = vld [vmem:[%s614 + $0x1f0] sm:$0xff]
    %v5659 = vld [vmem:[%s614 + $0x1f8] sm:$0xff]
    %5660 = vmatprep.subr.bf16.mxu0 %v5597
    %5661 = vmatpush1.bf16.msra.mxu0 %v5596
    %5662 = vmatprep.subr.bf16.mxu0 %v5605
    %5663 = vmatpush1.bf16.msra.mxu0 %v5604
    %5664 = vmatprep.subr.bf16.mxu0 %v5613
    %5665 = vmatpush1.bf16.msra.mxu0 %v5612
    %5666 = vmatprep.subr.bf16.mxu0 %v5621
    %5667 = vmatpush1.bf16.msra.mxu0 %v5620
    %5668 = vmatprep.subr.bf16.mxu0 %v5629
    %5669 = vmatpush1.bf16.msra.mxu0 %v5628
    %5670 = vmatprep.subr.bf16.mxu0 %v5637
    %5671 = vmatpush1.bf16.msra.mxu0 %v5636
    %5672 = vmatprep.subr.bf16.mxu0 %v5645
    %5673 = vmatpush1.bf16.msra.mxu0 %v5644
    %5674 = vmatprep.subr.bf16.mxu0 %v5653
    %5675 = vmatpush1.bf16.msra.mxu0 %v5652
    %5676 = vmatprep.subr.bf16.mxu0 0
    %5677 = vmatpush1.bf16.msra.mxu0 0
    %5678 = vmatprep.subr.bf16.mxu0 0
    %5679 = vmatpush1.bf16.msra.mxu0 0
    %5680 = vmatprep.subr.bf16.mxu0 0
    %5681 = vmatpush1.bf16.msra.mxu0 0
    %5682 = vmatprep.subr.bf16.mxu0 0
    %5683 = vmatpush1.bf16.msra.mxu0 0
    %5684 = vmatprep.subr.bf16.mxu0 0
    %5685 = vmatpush1.bf16.msra.mxu0 0
    %5686 = vmatprep.subr.bf16.mxu0 0
    %5687 = vmatpush1.bf16.msra.mxu0 0
    %5688 = vmatprep.subr.bf16.mxu0 0
    %5689 = vmatpush1.bf16.msra.mxu0 0
    %5690 = vmatprep.subr.bf16.mxu0 0
    %5691 = vmatpush1.bf16.msra.mxu0 0
    %5692 = vmatprep.mubr.bf16.mxu0 0
    %5693 = vmatmul.mubr.bf16.gmra.mrb[0].mxu0 %v5593
    %v5694 = vpop.f32.mrb[0].mxu0
    %v5695 = vadd.f32 0.0, %v5694
    %v5696 = vpop.f32.mrb[0].mxu0
    %v5697 = vadd.f32 0.0, %v5696
    %v5698 = vpop.f32.mrb[0].mxu0
    %v5699 = vpop.f32.mrb[0].mxu0
    %5700 = vdwg.mxu0
    %5701 = vmatprep.subr.bf16.mxu0 %v5599
    %5702 = vmatpush1.bf16.msra.mxu0 %v5598
    %5703 = vmatprep.subr.bf16.mxu0 %v5607
    %5704 = vmatpush1.bf16.msra.mxu0 %v5606
    %5705 = vmatprep.subr.bf16.mxu0 %v5615
    %5706 = vmatpush1.bf16.msra.mxu0 %v5614
    %5707 = vmatprep.subr.bf16.mxu0 %v5623
    %5708 = vmatpush1.bf16.msra.mxu0 %v5622
    %5709 = vmatprep.subr.bf16.mxu0 %v5631
    %5710 = vmatpush1.bf16.msra.mxu0 %v5630
    %5711 = vmatprep.subr.bf16.mxu0 %v5639
    %5712 = vmatpush1.bf16.msra.mxu0 %v5638
    %5713 = vmatprep.subr.bf16.mxu0 %v5647
    %5714 = vmatpush1.bf16.msra.mxu0 %v5646
    %5715 = vmatprep.subr.bf16.mxu0 %v5655
    %5716 = vmatpush1.bf16.msra.mxu0 %v5654
    %5717 = vmatprep.subr.bf16.mxu0 0
    %5718 = vmatpush1.bf16.msra.mxu0 0
    %5719 = vmatprep.subr.bf16.mxu0 0
    %5720 = vmatpush1.bf16.msra.mxu0 0
    %5721 = vmatprep.subr.bf16.mxu0 0
    %5722 = vmatpush1.bf16.msra.mxu0 0
    %5723 = vmatprep.subr.bf16.mxu0 0
    %5724 = vmatpush1.bf16.msra.mxu0 0
    %5725 = vmatprep.subr.bf16.mxu0 0
    %5726 = vmatpush1.bf16.msra.mxu0 0
    %5727 = vmatprep.subr.bf16.mxu0 0
    %5728 = vmatpush1.bf16.msra.mxu0 0
    %5729 = vmatprep.subr.bf16.mxu0 0
    %5730 = vmatpush1.bf16.msra.mxu0 0
    %5731 = vmatprep.subr.bf16.mxu0 0
    %5732 = vmatpush1.bf16.msra.mxu0 0
    %5733 = vmatprep.mubr.bf16.mxu0 0
    %5734 = vmatmul.mubr.bf16.gmra.mrb[0].mxu0 %v5593
    %v5735 = vpop.f32.mrb[0].mxu0
    %v5736 = vadd.f32 0.0, %v5735
    %v5737 = vpop.f32.mrb[0].mxu0
    %v5738 = vadd.f32 0.0, %v5737
    %v5739 = vpop.f32.mrb[0].mxu0
    %v5740 = vpop.f32.mrb[0].mxu0
    %5741 = vdwg.mxu0
    %5742 = vmatprep.subr.bf16.mxu0 %v5601
    %5743 = vmatpush1.bf16.msra.mxu0 %v5600
    %5744 = vmatprep.subr.bf16.mxu0 %v5609
    %5745 = vmatpush1.bf16.msra.mxu0 %v5608
    %5746 = vmatprep.subr.bf16.mxu0 %v5617
    %5747 = vmatpush1.bf16.msra.mxu0 %v5616
    %5748 = vmatprep.subr.bf16.mxu0 %v5625
    %5749 = vmatpush1.bf16.msra.mxu0 %v5624
    %5750 = vmatprep.subr.bf16.mxu0 %v5633
    %5751 = vmatpush1.bf16.msra.mxu0 %v5632
    %5752 = vmatprep.subr.bf16.mxu0 %v5641
    %5753 = vmatpush1.bf16.msra.mxu0 %v5640
    %5754 = vmatprep.subr.bf16.mxu0 %v5649
    %5755 = vmatpush1.bf16.msra.mxu0 %v5648
    %5756 = vmatprep.subr.bf16.mxu0 %v5657
    %5757 = vmatpush1.bf16.msra.mxu0 %v5656
    %5758 = vmatprep.subr.bf16.mxu0 0
    %5759 = vmatpush1.bf16.msra.mxu0 0
    %5760 = vmatprep.subr.bf16.mxu0 0
    %5761 = vmatpush1.bf16.msra.mxu0 0
    %5762 = vmatprep.subr.bf16.mxu0 0
    %5763 = vmatpush1.bf16.msra.mxu0 0
    %5764 = vmatprep.subr.bf16.mxu0 0
    %5765 = vmatpush1.bf16.msra.mxu0 0
    %5766 = vmatprep.subr.bf16.mxu0 0
    %5767 = vmatpush1.bf16.msra.mxu0 0
    %5768 = vmatprep.subr.bf16.mxu0 0
    %5769 = vmatpush1.bf16.msra.mxu0 0
    %5770 = vmatprep.subr.bf16.mxu0 0
    %5771 = vmatpush1.bf16.msra.mxu0 0
    %5772 = vmatprep.subr.bf16.mxu0 0
    %5773 = vmatpush1.bf16.msra.mxu0 0
    %5774 = vmatprep.mubr.bf16.mxu0 0
    %5775 = vmatmul.mubr.bf16.gmra.mrb[0].mxu0 %v5593
    %v5776 = vpop.f32.mrb[0].mxu0
    %v5777 = vadd.f32 0.0, %v5776
    %v5778 = vpop.f32.mrb[0].mxu0
    %v5779 = vadd.f32 0.0, %v5778
    %v5780 = vpop.f32.mrb[0].mxu0
    %v5781 = vpop.f32.mrb[0].mxu0
    %5782 = vdwg.mxu0
    %5783 = vmatprep.subr.bf16.mxu0 %v5603
    %5784 = vmatpush1.bf16.msra.mxu0 %v5602
    %5785 = vmatprep.subr.bf16.mxu0 %v5611
    %5786 = vmatpush1.bf16.msra.mxu0 %v5610
    %5787 = vmatprep.subr.bf16.mxu0 %v5619
    %5788 = vmatpush1.bf16.msra.mxu0 %v5618
    %5789 = vmatprep.subr.bf16.mxu0 %v5627
    %5790 = vmatpush1.bf16.msra.mxu0 %v5626
    %5791 = vmatprep.subr.bf16.mxu0 %v5635
    %5792 = vmatpush1.bf16.msra.mxu0 %v5634
    %5793 = vmatprep.subr.bf16.mxu0 %v5643
    %5794 = vmatpush1.bf16.msra.mxu0 %v5642
    %5795 = vmatprep.subr.bf16.mxu0 %v5651
    %5796 = vmatpush1.bf16.msra.mxu0 %v5650
    %5797 = vmatprep.subr.bf16.mxu0 %v5659
    %5798 = vmatpush1.bf16.msra.mxu0 %v5658
    %5799 = vmatprep.subr.bf16.mxu0 0
    %5800 = vmatpush1.bf16.msra.mxu0 0
    %5801 = vmatprep.subr.bf16.mxu0 0
    %5802 = vmatpush1.bf16.msra.mxu0 0
    %5803 = vmatprep.subr.bf16.mxu0 0
    %5804 = vmatpush1.bf16.msra.mxu0 0
    %5805 = vmatprep.subr.bf16.mxu0 0
    %5806 = vmatpush1.bf16.msra.mxu0 0
    %5807 = vmatprep.subr.bf16.mxu0 0
    %5808 = vmatpush1.bf16.msra.mxu0 0
    %5809 = vmatprep.subr.bf16.mxu0 0
    %5810 = vmatpush1.bf16.msra.mxu0 0
    %5811 = vmatprep.subr.bf16.mxu0 0
    %5812 = vmatpush1.bf16.msra.mxu0 0
    %5813 = vmatprep.subr.bf16.mxu0 0
    %5814 = vmatpush1.bf16.msra.mxu0 0
    %5815 = vmatprep.mubr.bf16.mxu0 0
    %5816 = vmatmul.mubr.bf16.gmra.mrb[0].mxu0 %v5593
    %v5817 = vpop.f32.mrb[0].mxu0
    %v5818 = vadd.f32 0.0, %v5817
    %v5819 = vpop.f32.mrb[0].mxu0
    %v5820 = vadd.f32 0.0, %v5819
    %v5821 = vpop.f32.mrb[0].mxu0
    %v5822 = vpop.f32.mrb[0].mxu0
    %5823 = vdwg.mxu0
    %v5824 = vadd.f32 %v5097, %v5695
    %v5825 = vadd.f32 %v5098, %v5697
    %v5826 = vadd.f32 %v5099, %v5736
    %v5827 = vadd.f32 %v5100, %v5738
    %v5828 = vadd.f32 %v5101, %v5777
    %v5829 = vadd.f32 %v5102, %v5779
    %v5830 = vadd.f32 %v5103, %v5818
    %v5831 = vadd.f32 %v5104, %v5820
    %v5832 = vld [vmem:[#allocation13] sm:$0xff]
    %v5834 = vlaneseq
    %v5835 = vshrl.u32 %v5834, 7
    %v5836 = vsub.s32 0, %v5835
    %v5837 = vrot.slane %v5832, %v5836
    %v5838 = vlaneseq
    %v5839 = vshrl.u32 %v5838, 7
    %v5840 = vsub.s32 1, %v5839
    %v5841 = vrot.slane %v5832, %v5840
    %v5842 = vlaneseq
    %v5843 = vshrl.u32 %v5842, 7
    %v5844 = vsub.s32 2, %v5843
    %v5845 = vrot.slane %v5832, %v5844
    %v5846 = vlaneseq
    %v5847 = vshrl.u32 %v5846, 7
    %v5848 = vsub.s32 3, %v5847
    %v5849 = vrot.slane %v5832, %v5848
    %v5850 = vlaneseq
    %v5851 = vshrl.u32 %v5850, 7
    %v5852 = vsub.s32 4, %v5851
    %v5853 = vrot.slane %v5832, %v5852
    %v5854 = vlaneseq
    %v5855 = vshrl.u32 %v5854, 7
    %v5856 = vsub.s32 5, %v5855
    %v5857 = vrot.slane %v5832, %v5856
    %v5858 = vlaneseq
    %v5859 = vshrl.u32 %v5858, 7
    %v5860 = vsub.s32 6, %v5859
    %v5861 = vrot.slane %v5832, %v5860
    %v5862 = vlaneseq
    %v5863 = vshrl.u32 %v5862, 7
    %v5864 = vsub.s32 7, %v5863
    %v5865 = vrot.slane %v5832, %v5864
    %v5874 = vadd.f32 %v5824, %v5837
    %v5875 = vadd.f32 %v5825, %v5841
    %v5876 = vadd.f32 %v5826, %v5845
    %v5877 = vadd.f32 %v5827, %v5849
    %v5878 = vadd.f32 %v5828, %v5853
    %v5879 = vadd.f32 %v5829, %v5857
    %v5880 = vadd.f32 %v5830, %v5861
    %v5881 = vadd.f32 %v5831, %v5865
    %v5882 = vmax.f32 %v5874, 0.0
    %v5883 = vmax.f32 %v5875, 0.0
    %v5884 = vmax.f32 %v5876, 0.0
    %v5885 = vmax.f32 %v5877, 0.0
    %v5886 = vmax.f32 %v5878, 0.0
    %v5887 = vmax.f32 %v5879, 0.0
    %v5888 = vmax.f32 %v5880, 0.0
    %v5889 = vmax.f32 %v5881, 0.0
    %s5890 = smul.u32 4, 128
    %s5891 = smul.u32 %s5890, 1
    %s5892 = sshll.u32 %s5891, 4
    %5893 = dma.done [#allocation5], %s5892
    %v5894 = vpack.c.bf16 %v5882, %v5882
    %v5895 = vpack.c.bf16 %v5883, %v5883
    %v5896 = vpack.c.bf16 %v5884, %v5884
    %v5897 = vpack.c.bf16 %v5885, %v5885
    %v5898 = vpack.c.bf16 %v5886, %v5886
    %v5899 = vpack.c.bf16 %v5887, %v5887
    %v5900 = vpack.c.bf16 %v5888, %v5888
    %v5901 = vpack.c.bf16 %v5889, %v5889
    %v5902 = vld [vmem:[#allocation3] sm:$0xff]
    %v5903 = vld [vmem:[#allocation3 + $0x8] sm:$0xff]
    %v5904 = vld [vmem:[#allocation3 + $0x10] sm:$0xff]
    %v5905 = vld [vmem:[#allocation3 + $0x18] sm:$0xff]
    %v5906 = vld [vmem:[#allocation3 + $0x20] sm:$0xff]
    %v5907 = vld [vmem:[#allocation3 + $0x28] sm:$0xff]
    %v5908 = vld [vmem:[#allocation3 + $0x30] sm:$0xff]
    %v5909 = vld [vmem:[#allocation3 + $0x38] sm:$0xff]
    %v5910 = vld [vmem:[#allocation3 + $0x40] sm:$0xff]
    %v5911 = vld [vmem:[#allocation3 + $0x48] sm:$0xff]
    %v5912 = vld [vmem:[#allocation3 + $0x50] sm:$0xff]
    %v5913 = vld [vmem:[#allocation3 + $0x58] sm:$0xff]
    %v5914 = vld [vmem:[#allocation3 + $0x60] sm:$0xff]
    %v5915 = vld [vmem:[#allocation3 + $0x68] sm:$0xff]
    %v5916 = vld [vmem:[#allocation3 + $0x70] sm:$0xff]
    %v5917 = vld [vmem:[#allocation3 + $0x78] sm:$0xff]
    %v5918 = vld [vmem:[#allocation3 + $0x80] sm:$0xff]
    %v5919 = vld [vmem:[#allocation3 + $0x88] sm:$0xff]
    %v5920 = vld [vmem:[#allocation3 + $0x90] sm:$0xff]
    %v5921 = vld [vmem:[#allocation3 + $0x98] sm:$0xff]
    %v5922 = vld [vmem:[#allocation3 + $0xa0] sm:$0xff]
    %v5923 = vld [vmem:[#allocation3 + $0xa8] sm:$0xff]
    %v5924 = vld [vmem:[#allocation3 + $0xb0] sm:$0xff]
    %v5925 = vld [vmem:[#allocation3 + $0xb8] sm:$0xff]
    %v5926 = vld [vmem:[#allocation3 + $0xc0] sm:$0xff]
    %v5927 = vld [vmem:[#allocation3 + $0xc8] sm:$0xff]
    %v5928 = vld [vmem:[#allocation3 + $0xd0] sm:$0xff]
    %v5929 = vld [vmem:[#allocation3 + $0xd8] sm:$0xff]
    %v5930 = vld [vmem:[#allocation3 + $0xe0] sm:$0xff]
    %v5931 = vld [vmem:[#allocation3 + $0xe8] sm:$0xff]
    %v5932 = vld [vmem:[#allocation3 + $0xf0] sm:$0xff]
    %v5933 = vld [vmem:[#allocation3 + $0xf8] sm:$0xff]
    %v5934 = vld [vmem:[#allocation3 + $0x100] sm:$0xff]
    %v5935 = vld [vmem:[#allocation3 + $0x108] sm:$0xff]
    %v5936 = vld [vmem:[#allocation3 + $0x110] sm:$0xff]
    %v5937 = vld [vmem:[#allocation3 + $0x118] sm:$0xff]
    %v5938 = vld [vmem:[#allocation3 + $0x120] sm:$0xff]
    %v5939 = vld [vmem:[#allocation3 + $0x128] sm:$0xff]
    %v5940 = vld [vmem:[#allocation3 + $0x130] sm:$0xff]
    %v5941 = vld [vmem:[#allocation3 + $0x138] sm:$0xff]
    %v5942 = vld [vmem:[#allocation3 + $0x140] sm:$0xff]
    %v5943 = vld [vmem:[#allocation3 + $0x148] sm:$0xff]
    %v5944 = vld [vmem:[#allocation3 + $0x150] sm:$0xff]
    %v5945 = vld [vmem:[#allocation3 + $0x158] sm:$0xff]
    %v5946 = vld [vmem:[#allocation3 + $0x160] sm:$0xff]
    %v5947 = vld [vmem:[#allocation3 + $0x168] sm:$0xff]
    %v5948 = vld [vmem:[#allocation3 + $0x170] sm:$0xff]
    %v5949 = vld [vmem:[#allocation3 + $0x178] sm:$0xff]
    %v5950 = vld [vmem:[#allocation3 + $0x180] sm:$0xff]
    %v5951 = vld [vmem:[#allocation3 + $0x188] sm:$0xff]
    %v5952 = vld [vmem:[#allocation3 + $0x190] sm:$0xff]
    %v5953 = vld [vmem:[#allocation3 + $0x198] sm:$0xff]
    %v5954 = vld [vmem:[#allocation3 + $0x1a0] sm:$0xff]
    %v5955 = vld [vmem:[#allocation3 + $0x1a8] sm:$0xff]
    %v5956 = vld [vmem:[#allocation3 + $0x1b0] sm:$0xff]
    %v5957 = vld [vmem:[#allocation3 + $0x1b8] sm:$0xff]
    %v5958 = vld [vmem:[#allocation3 + $0x1c0] sm:$0xff]
    %v5959 = vld [vmem:[#allocation3 + $0x1c8] sm:$0xff]
    %v5960 = vld [vmem:[#allocation3 + $0x1d0] sm:$0xff]
    %v5961 = vld [vmem:[#allocation3 + $0x1d8] sm:$0xff]
    %v5962 = vld [vmem:[#allocation3 + $0x1e0] sm:$0xff]
    %v5963 = vld [vmem:[#allocation3 + $0x1e8] sm:$0xff]
    %v5964 = vld [vmem:[#allocation3 + $0x1f0] sm:$0xff]
    %v5965 = vld [vmem:[#allocation3 + $0x1f8] sm:$0xff]
    %v5966 = vld [vmem:[#allocation14] sm:$0x1]
    %v5968 = vlaneseq
    %v5969 = vshrl.u32 %v5968, 7
    %v5970 = vsub.s32 0, %v5969
    %v5971 = vrot.slane %v5966, %v5970
    %5973 = vmatprep.subr.bf16.mxu0 0
    %5974 = vmatpush1.bf16.msra.mxu0 %v5902
    %5975 = vmatprep.subr.bf16.mxu0 0
    %5976 = vmatpush1.bf16.msra.mxu0 %v5903
    %5977 = vmatprep.subr.bf16.mxu0 0
    %5978 = vmatpush1.bf16.msra.mxu0 %v5904
    %5979 = vmatprep.subr.bf16.mxu0 0
    %5980 = vmatpush1.bf16.msra.mxu0 %v5905
    %5981 = vmatprep.subr.bf16.mxu0 0
    %5982 = vmatpush1.bf16.msra.mxu0 %v5906
    %5983 = vmatprep.subr.bf16.mxu0 0
    %5984 = vmatpush1.bf16.msra.mxu0 %v5907
    %5985 = vmatprep.subr.bf16.mxu0 0
    %5986 = vmatpush1.bf16.msra.mxu0 %v5908
    %5987 = vmatprep.subr.bf16.mxu0 0
    %5988 = vmatpush1.bf16.msra.mxu0 %v5909
    %5989 = vmatprep.subr.bf16.mxu0 0
    %5990 = vmatpush1.bf16.msra.mxu0 %v5910
    %5991 = vmatprep.subr.bf16.mxu0 0
    %5992 = vmatpush1.bf16.msra.mxu0 %v5911
    %5993 = vmatprep.subr.bf16.mxu0 0
    %5994 = vmatpush1.bf16.msra.mxu0 %v5912
    %5995 = vmatprep.subr.bf16.mxu0 0
    %5996 = vmatpush1.bf16.msra.mxu0 %v5913
    %5997 = vmatprep.subr.bf16.mxu0 0
    %5998 = vmatpush1.bf16.msra.mxu0 %v5914
    %5999 = vmatprep.subr.bf16.mxu0 0
    %6000 = vmatpush1.bf16.msra.mxu0 %v5915
    %6001 = vmatprep.subr.bf16.mxu0 0
    %6002 = vmatpush1.bf16.msra.mxu0 %v5916
    %6003 = vmatprep.subr.bf16.mxu0 0
    %6004 = vmatpush1.bf16.msra.mxu0 %v5917
    %6005 = vmatprep.mubr.bf16.mxu0 %v5895
    %6006 = vmatmul.mubr.bf16.gmra.mrb[0].mxu0 %v5894
    %v6007 = vpop.f32.mrb[0].mxu0
    %v6008 = vadd.f32 %v5971, %v6007
    %v6009 = vpop.f32.mrb[0].mxu0
    %v6010 = vpop.f32.mrb[0].mxu0
    %v6011 = vpop.f32.mrb[0].mxu0
    %6012 = vdwg.mxu0
    %6013 = vmatprep.subr.bf16.mxu0 0
    %6014 = vmatpush1.bf16.msra.mxu0 %v5918
    %6015 = vmatprep.subr.bf16.mxu0 0
    %6016 = vmatpush1.bf16.msra.mxu0 %v5919
    %6017 = vmatprep.subr.bf16.mxu0 0
    %6018 = vmatpush1.bf16.msra.mxu0 %v5920
    %6019 = vmatprep.subr.bf16.mxu0 0
    %6020 = vmatpush1.bf16.msra.mxu0 %v5921
    %6021 = vmatprep.subr.bf16.mxu0 0
    %6022 = vmatpush1.bf16.msra.mxu0 %v5922
    %6023 = vmatprep.subr.bf16.mxu0 0
    %6024 = vmatpush1.bf16.msra.mxu0 %v5923
    %6025 = vmatprep.subr.bf16.mxu0 0
    %6026 = vmatpush1.bf16.msra.mxu0 %v5924
    %6027 = vmatprep.subr.bf16.mxu0 0
    %6028 = vmatpush1.bf16.msra.mxu0 %v5925
    %6029 = vmatprep.subr.bf16.mxu0 0
    %6030 = vmatpush1.bf16.msra.mxu0 %v5926
    %6031 = vmatprep.subr.bf16.mxu0 0
    %6032 = vmatpush1.bf16.msra.mxu0 %v5927
    %6033 = vmatprep.subr.bf16.mxu0 0
    %6034 = vmatpush1.bf16.msra.mxu0 %v5928
    %6035 = vmatprep.subr.bf16.mxu0 0
    %6036 = vmatpush1.bf16.msra.mxu0 %v5929
    %6037 = vmatprep.subr.bf16.mxu0 0
    %6038 = vmatpush1.bf16.msra.mxu0 %v5930
    %6039 = vmatprep.subr.bf16.mxu0 0
    %6040 = vmatpush1.bf16.msra.mxu0 %v5931
    %6041 = vmatprep.subr.bf16.mxu0 0
    %6042 = vmatpush1.bf16.msra.mxu0 %v5932
    %6043 = vmatprep.subr.bf16.mxu0 0
    %6044 = vmatpush1.bf16.msra.mxu0 %v5933
    %6045 = vmatprep.mubr.bf16.mxu0 %v5897
    %6046 = vmatmul.mubr.bf16.gmra.mrb[0].mxu0 %v5896
    %v6047 = vpop.f32.mrb[0].mxu0
    %v6048 = vadd.f32 %v6008, %v6047
    %v6049 = vpop.f32.mrb[0].mxu0
    %v6050 = vpop.f32.mrb[0].mxu0
    %v6051 = vpop.f32.mrb[0].mxu0
    %6052 = vdwg.mxu0
    %6053 = vmatprep.subr.bf16.mxu0 0
    %6054 = vmatpush1.bf16.msra.mxu0 %v5934
    %6055 = vmatprep.subr.bf16.mxu0 0
    %6056 = vmatpush1.bf16.msra.mxu0 %v5935
    %6057 = vmatprep.subr.bf16.mxu0 0
    %6058 = vmatpush1.bf16.msra.mxu0 %v5936
    %6059 = vmatprep.subr.bf16.mxu0 0
    %6060 = vmatpush1.bf16.msra.mxu0 %v5937
    %6061 = vmatprep.subr.bf16.mxu0 0
    %6062 = vmatpush1.bf16.msra.mxu0 %v5938
    %6063 = vmatprep.subr.bf16.mxu0 0
    %6064 = vmatpush1.bf16.msra.mxu0 %v5939
    %6065 = vmatprep.subr.bf16.mxu0 0
    %6066 = vmatpush1.bf16.msra.mxu0 %v5940
    %6067 = vmatprep.subr.bf16.mxu0 0
    %6068 = vmatpush1.bf16.msra.mxu0 %v5941
    %6069 = vmatprep.subr.bf16.mxu0 0
    %6070 = vmatpush1.bf16.msra.mxu0 %v5942
    %6071 = vmatprep.subr.bf16.mxu0 0
    %6072 = vmatpush1.bf16.msra.mxu0 %v5943
    %6073 = vmatprep.subr.bf16.mxu0 0
    %6074 = vmatpush1.bf16.msra.mxu0 %v5944
    %6075 = vmatprep.subr.bf16.mxu0 0
    %6076 = vmatpush1.bf16.msra.mxu0 %v5945
    %6077 = vmatprep.subr.bf16.mxu0 0
    %6078 = vmatpush1.bf16.msra.mxu0 %v5946
    %6079 = vmatprep.subr.bf16.mxu0 0
    %6080 = vmatpush1.bf16.msra.mxu0 %v5947
    %6081 = vmatprep.subr.bf16.mxu0 0
    %6082 = vmatpush1.bf16.msra.mxu0 %v5948
    %6083 = vmatprep.subr.bf16.mxu0 0
    %6084 = vmatpush1.bf16.msra.mxu0 %v5949
    %6085 = vmatprep.mubr.bf16.mxu0 %v5899
    %6086 = vmatmul.mubr.bf16.gmra.mrb[0].mxu0 %v5898
    %v6087 = vpop.f32.mrb[0].mxu0
    %v6088 = vadd.f32 %v6048, %v6087
    %v6089 = vpop.f32.mrb[0].mxu0
    %v6090 = vpop.f32.mrb[0].mxu0
    %v6091 = vpop.f32.mrb[0].mxu0
    %6092 = vdwg.mxu0
    %6093 = vmatprep.subr.bf16.mxu0 0
    %6094 = vmatpush1.bf16.msra.mxu0 %v5950
    %6095 = vmatprep.subr.bf16.mxu0 0
    %6096 = vmatpush1.bf16.msra.mxu0 %v5951
    %6097 = vmatprep.subr.bf16.mxu0 0
    %6098 = vmatpush1.bf16.msra.mxu0 %v5952
    %6099 = vmatprep.subr.bf16.mxu0 0
    %6100 = vmatpush1.bf16.msra.mxu0 %v5953
    %6101 = vmatprep.subr.bf16.mxu0 0
    %6102 = vmatpush1.bf16.msra.mxu0 %v5954
    %6103 = vmatprep.subr.bf16.mxu0 0
    %6104 = vmatpush1.bf16.msra.mxu0 %v5955
    %6105 = vmatprep.subr.bf16.mxu0 0
    %6106 = vmatpush1.bf16.msra.mxu0 %v5956
    %6107 = vmatprep.subr.bf16.mxu0 0
    %6108 = vmatpush1.bf16.msra.mxu0 %v5957
    %6109 = vmatprep.subr.bf16.mxu0 0
    %6110 = vmatpush1.bf16.msra.mxu0 %v5958
    %6111 = vmatprep.subr.bf16.mxu0 0
    %6112 = vmatpush1.bf16.msra.mxu0 %v5959
    %6113 = vmatprep.subr.bf16.mxu0 0
    %6114 = vmatpush1.bf16.msra.mxu0 %v5960
    %6115 = vmatprep.subr.bf16.mxu0 0
    %6116 = vmatpush1.bf16.msra.mxu0 %v5961
    %6117 = vmatprep.subr.bf16.mxu0 0
    %6118 = vmatpush1.bf16.msra.mxu0 %v5962
    %6119 = vmatprep.subr.bf16.mxu0 0
    %6120 = vmatpush1.bf16.msra.mxu0 %v5963
    %6121 = vmatprep.subr.bf16.mxu0 0
    %6122 = vmatpush1.bf16.msra.mxu0 %v5964
    %6123 = vmatprep.subr.bf16.mxu0 0
    %6124 = vmatpush1.bf16.msra.mxu0 %v5965
    %6125 = vmatprep.mubr.bf16.mxu0 %v5901
    %6126 = vmatmul.mubr.bf16.gmra.mrb[0].mxu0 %v5900
    %v6127 = vpop.f32.mrb[0].mxu0
    %v6128 = vadd.f32 %v6088, %v6127
    %v6129 = vpop.f32.mrb[0].mxu0
    %v6130 = vpop.f32.mrb[0].mxu0
    %v6131 = vpop.f32.mrb[0].mxu0
    %6132 = vdwg.mxu0
    %v6133 = vmax.f32 %v6128, 0.0
    %v6134 = vpack.c.bf16 %v6133, %v6133
    %v6135 = vld [vmem:[#allocation16] sm:$0xf]
    %v6136 = vld [vmem:[#allocation16 + $0x4] sm:$0xf]
    %v6137 = vld [vmem:[#allocation16 + $0x8] sm:$0xf]
    %v6138 = vld [vmem:[#allocation16 + $0xc] sm:$0xf]
    %v6139 = vld [vmem:[#allocation16 + $0x10] sm:$0xf]
    %v6140 = vld [vmem:[#allocation16 + $0x14] sm:$0xf]
    %v6141 = vld [vmem:[#allocation16 + $0x18] sm:$0xf]
    %v6142 = vld [vmem:[#allocation16 + $0x1c] sm:$0xf]
    %v6143 = vld [vmem:[#allocation16 + $0x20] sm:$0xf]
    %v6144 = vld [vmem:[#allocation16 + $0x24] sm:$0xf]
    %v6145 = vld [vmem:[#allocation16 + $0x28] sm:$0xf]
    %v6146 = vld [vmem:[#allocation16 + $0x2c] sm:$0xf]
    %v6147 = vld [vmem:[#allocation16 + $0x30] sm:$0xf]
    %v6148 = vld [vmem:[#allocation16 + $0x34] sm:$0xf]
    %v6149 = vld [vmem:[#allocation16 + $0x38] sm:$0xf]
    %v6150 = vld [vmem:[#allocation16 + $0x3c] sm:$0xf]
    %v6151 = vld [vmem:[#allocation17] sm:$0x1]
    %v6153 = vlaneseq
    %v6154 = vshrl.u32 %v6153, 7
    %v6155 = vsub.s32 0, %v6154
    %v6156 = vrot.slane %v6151, %v6155
    %v6174 = vunpack.c.l.b16 %v6135
    %v6175 = vunpack.c.l.b16 %v6136
    %v6176 = vunpack.c.l.b16 %v6137
    %v6177 = vunpack.c.l.b16 %v6138
    %v6178 = vunpack.c.l.b16 %v6139
    %v6179 = vunpack.c.l.b16 %v6140
    %v6180 = vunpack.c.l.b16 %v6141
    %v6181 = vunpack.c.l.b16 %v6142
    %v6182 = vunpack.c.l.b16 %v6143
    %v6183 = vunpack.c.l.b16 %v6144
    %v6184 = vunpack.c.l.b16 %v6145
    %v6185 = vunpack.c.l.b16 %v6146
    %v6186 = vunpack.c.l.b16 %v6147
    %v6187 = vunpack.c.l.b16 %v6148
    %v6188 = vunpack.c.l.b16 %v6149
    %v6189 = vunpack.c.l.b16 %v6150
    %v6190 = vpack.c.b16 %v6175, %v6174
    %v6191 = vpack.c.b16 %v6177, %v6176
    %v6192 = vpack.c.b16 %v6179, %v6178
    %v6193 = vpack.c.b16 %v6181, %v6180
    %v6194 = vpack.c.b16 %v6183, %v6182
    %v6195 = vpack.c.b16 %v6185, %v6184
    %v6196 = vpack.c.b16 %v6187, %v6186
    %v6197 = vpack.c.b16 %v6189, %v6188
    %6206 = vmatprep.subr.bf16.mxu0 0
    %6207 = vmatpush1.bf16.msra.mxu0 %v6190
    %6208 = vmatprep.subr.bf16.mxu0 0
    %6209 = vmatpush1.bf16.msra.mxu0 %v6191
    %6210 = vmatprep.subr.bf16.mxu0 0
    %6211 = vmatpush1.bf16.msra.mxu0 %v6192
    %6212 = vmatprep.subr.bf16.mxu0 0
    %6213 = vmatpush1.bf16.msra.mxu0 %v6193
    %6214 = vmatprep.subr.bf16.mxu0 0
    %6215 = vmatpush1.bf16.msra.mxu0 %v6194
    %6216 = vmatprep.subr.bf16.mxu0 0
    %6217 = vmatpush1.bf16.msra.mxu0 %v6195
    %6218 = vmatprep.subr.bf16.mxu0 0
    %6219 = vmatpush1.bf16.msra.mxu0 %v6196
    %6220 = vmatprep.subr.bf16.mxu0 0
    %6221 = vmatpush1.bf16.msra.mxu0 %v6197
    %6222 = vmatprep.subr.bf16.mxu0 0
    %6223 = vmatpush1.bf16.msra.mxu0 0
    %6224 = vmatprep.subr.bf16.mxu0 0
    %6225 = vmatpush1.bf16.msra.mxu0 0
    %6226 = vmatprep.subr.bf16.mxu0 0
    %6227 = vmatpush1.bf16.msra.mxu0 0
    %6228 = vmatprep.subr.bf16.mxu0 0
    %6229 = vmatpush1.bf16.msra.mxu0 0
    %6230 = vmatprep.subr.bf16.mxu0 0
    %6231 = vmatpush1.bf16.msra.mxu0 0
    %6232 = vmatprep.subr.bf16.mxu0 0
    %6233 = vmatpush1.bf16.msra.mxu0 0
    %6234 = vmatprep.subr.bf16.mxu0 0
    %6235 = vmatpush1.bf16.msra.mxu0 0
    %6236 = vmatprep.subr.bf16.mxu0 0
    %6237 = vmatpush1.bf16.msra.mxu0 0
    %6238 = vmatprep.mubr.bf16.mxu0 0
    %6239 = vmatmul.mubr.bf16.gmra.mrb[0].mxu0 %v6134
    %v6240 = vpop.f32.mrb[0].mxu0
    %v6241 = vadd.f32 %v6156, %v6240
    %v6242 = vpop.f32.mrb[0].mxu0
    %v6243 = vpop.f32.mrb[0].mxu0
    %v6244 = vpop.f32.mrb[0].mxu0
    %6245 = vdwg.mxu0
    %6246 = vst [vmem:[%s11] sm:$0xff] %v6241
    // Predicated region
    $region74: #{convnet_forward.1} parent=1 // pred_check
      _
    $region75: #{convnet_forward.1} parent=1 // pred_check_branch
      %6248 = sbr.rel (0) target = $region77
    $region76: #{convnet_forward.1} parent=1 // pred_region
      _
    $region77: #{convnet_forward.1} parent=1 // pred_fallthru
      _
    // Predicated region
    $region78: #{convnet_forward.1} parent=1 // pred_check
      _
    $region79: #{convnet_forward.1} parent=1 // pred_check_branch
      %6250 = sbr.rel (0) target = $region81
    $region80: #{convnet_forward.1} parent=1 // pred_region
      _
    $region81: #{convnet_forward.1} parent=1 // pred_fallthru
      _
    %6251 = vsyncpa [#allocation7], 1
    %6252 = vsyncpa [#allocation9], 1
    %6253 = vsyncpa [#allocation12], 1
    %6254 = vsyncpa [#allocation15], 1
    %6255 = vsyncpa [#allocation18], 1
  %6256 = vsyncmov [#allocation4]
  %s6257 = vpop.sfrf %6256
  %p6258 = scmp.eq.s32.totalorder %s6257, 0
  %p6259 = pneg %p6258
  %6261 = shalt.err (%p6259)
  %s6262 = scalar_lea.sflag [#allocation4], 1
  %6263 = vsyncmov %s6262
  %s6264 = vpop.sfrf %6263
  %p6265 = scmp.eq.s32.totalorder %s6264, 0
  %p6266 = pneg %p6265
  %6268 = shalt.err (%p6266)
  %s6269 = scalar_lea.sflag [#allocation4], 2
  %6270 = vsyncmov %s6269
  %s6271 = vpop.sfrf %6270
  %p6272 = scmp.eq.s32.totalorder %s6271, 0
  %p6273 = pneg %p6272
  %6275 = shalt.err (%p6273)
  %s6276 = scalar_lea.sflag [#allocation4], 3
  %6277 = vsyncmov %s6276
  %s6278 = vpop.sfrf %6277
  %p6279 = scmp.eq.s32.totalorder %s6278, 0
  %p6280 = pneg %p6279
  %6282 = shalt.err (%p6280)
  %s6283 = scalar_lea.sflag [#allocation4], 4
  %6284 = vsyncmov %s6283
  %s6285 = vpop.sfrf %6284
  %p6286 = scmp.eq.s32.totalorder %s6285, 0
  %p6287 = pneg %p6286
  %6289 = shalt.err (%p6287)
  %s6290 = scalar_lea.sflag [#allocation4], 5
  %6291 = vsyncmov %s6290
  %s6292 = vpop.sfrf %6291
  %p6293 = scmp.eq.s32.totalorder %s6292, 0
  %p6294 = pneg %p6293
  %6296 = shalt.err (%p6294)
  %s6297 = scalar_lea.sflag [#allocation4], 6
  %6298 = vsyncmov %s6297
  %s6299 = vpop.sfrf %6298
  %p6300 = scmp.eq.s32.totalorder %s6299, 0
  %p6301 = pneg %p6300
  %6303 = shalt.err (%p6301)
  %s6304 = scalar_lea.sflag [#allocation4], 7
  %6305 = vsyncmov %s6304
  %s6306 = vpop.sfrf %6305
  %p6307 = scmp.eq.s32.totalorder %s6306, 0
  %p6308 = pneg %p6307
  %6310 = shalt.err (%p6308)
  %s6311 = scalar_lea.sflag [#allocation4], 8
  %6312 = vsyncmov %s6311
  %s6313 = vpop.sfrf %6312
  %p6314 = scmp.eq.s32.totalorder %s6313, 0
  %p6315 = pneg %p6314
  %6317 = shalt.err (%p6315)
  %s6318 = scalar_lea.sflag [#allocation4], 9
  %6319 = vsyncmov %s6318
  %s6320 = vpop.sfrf %6319
  %p6321 = scmp.eq.s32.totalorder %s6320, 0
  %p6322 = pneg %p6321
  %6324 = shalt.err (%p6322)
  %s6325 = scalar_lea.sflag [#allocation4], 10
  %6326 = vsyncmov %s6325
  %s6327 = vpop.sfrf %6326
  %p6328 = scmp.eq.s32.totalorder %s6327, 0
  %p6329 = pneg %p6328
  %6331 = shalt.err (%p6329)
  %s6332 = scalar_lea.sflag [#allocation4], 11
  %6333 = vsyncmov %s6332
  %s6334 = vpop.sfrf %6333
  %p6335 = scmp.eq.s32.totalorder %s6334, 0
  %p6336 = pneg %p6335
  %6338 = shalt.err (%p6336)
  %s6339 = scalar_lea.sflag [#allocation4], 12
  %6340 = vsyncmov %s6339
  %s6341 = vpop.sfrf %6340
  %p6342 = scmp.eq.s32.totalorder %s6341, 0
  %p6343 = pneg %p6342
  %6345 = shalt.err (%p6343)
  %s6346 = scalar_lea.sflag [#allocation4], 13
  %6347 = vsyncmov %s6346
  %s6348 = vpop.sfrf %6347
  %p6349 = scmp.eq.s32.totalorder %s6348, 0
  %p6350 = pneg %p6349
  %6352 = shalt.err (%p6350)
  %6353 = vsyncmov [#allocation5]
  %s6354 = vpop.sfrf %6353
  %p6355 = scmp.eq.s32.totalorder %s6354, 0
  %p6356 = pneg %p6355
  %6358 = shalt.err (%p6356)

</llo_original>
